<compile_context>
chip_gen: v7x
topology: tpu7x:2x2x1
jax: 0.10.0
libtpu: 0.0.40
codegen_flags: <defaults>
</compile_context>

<pallas_src>
import functools

import jax
import jax.numpy as jnp
from jax import lax
from jax.experimental import pallas as pl
from jax.experimental.pallas import tpu as pltpu

_BF16 = jnp.bfloat16
_VMEM_LIMIT = 32 * 1024 * 1024


# ----------------------------------------------------------------------------- helpers
def _gelu(x):
    # tanh-approximate GELU (transcendental goes to the EUP slot).
    c = 0.7978845608028654  # sqrt(2/pi)
    return 0.5 * x * (1.0 + jnp.tanh(c * (x + 0.044715 * x * x * x)))


def _full_spec(shape):
    nd = len(shape)
    return pl.BlockSpec(shape, lambda i, _nd=nd: (0,) * _nd)


def _num_tensorcores():
    # Heuristic: chips with two (mega)cores benefit from >=2 grid steps.
    try:
        kind = (jax.devices()[0].device_kind or "").lower()
    except Exception:
        return 1
    return 2 if any(t in kind for t in ("v7", "7x", "v4", "v5p")) else 1


def _pick_group(num_items, rows_per_item, target_rows, num_cores):
    # Largest divisor of num_items with group*rows_per_item <= target_rows,
    # but keep >= num_cores grid steps when a multi-TensorCore chip is present.
    cap = max(1, target_rows // max(1, rows_per_item))
    if num_cores > 1:
        cap = min(cap, max(1, num_items // num_cores))
    g = max(1, min(num_items, cap))
    while num_items % g:
        g -= 1
    return g


# ----------------------------------------------------------------------------- MBConv kernel
def _mbconv_kernel(x_ref, w1_ref, b1_ref, wdw_ref, bdw_ref, wpw_ref, bpw_ref,
                   wser_ref, bser_ref, wsee_ref, bsee_ref, w2_ref, b2_ref,
                   o_ref, pad_ref):
    # a group of Gb batch images per grid step
    Gb, H, W, C = x_ref.shape
    M = Gb * H * W

    xf = x_ref[...].reshape(M, C)                     # (M, C) f32 residual

    # BN0 (folded) + 1x1 conv    (bf16 MXU, f32 accumulate)
    y = jnp.dot(xf.astype(_BF16), w1_ref[...],
                preferred_element_type=jnp.float32) + b1_ref[...]

    # zero-pad only along H (major dim -> aligned row writes); W handled by roll
    zrow = jnp.zeros((Gb, 1, W, C), jnp.float32)
    pad_ref[:, 0:1, :, :] = zrow
    pad_ref[:, H + 1:H + 2, :, :] = zrow
    pad_ref[:, 1:H + 1, :, :] = y.reshape(Gb, H, W, C)

    # depthwise 3x3 (stride 1, pad 1) with BN1 folded:
    # per-kw column sums over kh (aligned H slices), then the +/-1 W taps via
    # XLU sublane roll + edge mask instead of misaligned sublane slices.
    col = []
    for kw in range(3):
        s = None
        for kh in range(3):
            term = pad_ref[:, kh:kh + H, :, :] * wdw_ref[kh * 3 + kw]
            s = term if s is None else s + term
        col.append(s)
    w_idx = lax.broadcasted_iota(jnp.int32, (W, C), 0)
    acc = col[1]
    acc = acc + jnp.where(w_idx >= 1, pltpu.roll(col[0], shift=1, axis=2), 0.0)
    acc = acc + jnp.where(w_idx <= W - 2, pltpu.roll(col[2], shift=W - 1, axis=2), 0.0)
    a = _gelu(acc + bdw_ref[...])

    # pointwise 1x1 conv + BN2 folded (no activation), DSConv internal residual
    v = jnp.dot(a.reshape(M, C).astype(_BF16), wpw_ref[...],
                preferred_element_type=jnp.float32) + bpw_ref[...]
    v = v + y

    # SqueezeExcite (rd_ratio = 0.25): per-image pool -> reduce -> ReLU -> expand -> sigmoid
    v3 = v.reshape(Gb, H * W, C)
    se = jnp.mean(v3, axis=1)                                               # (Gb, C)
    r = jnp.maximum(jnp.dot(se, wser_ref[...],
                            preferred_element_type=jnp.float32) + bser_ref[...], 0.0)
    g = jax.nn.sigmoid(jnp.dot(r, wsee_ref[...],
                               preferred_element_type=jnp.float32) + bsee_ref[...])
    v = (v3 * g[:, None, :]).reshape(M, C)

    # final 1x1 conv + outer MBConv skip (downscale=False -> Identity)
    out = jnp.dot(v.astype(_BF16), w2_ref[...],
                  preferred_element_type=jnp.float32) + b2_ref[...]
    out = out + xf
    o_ref[...] = out.reshape(Gb, H, W, C).astype(o_ref.dtype)


def mbconv(x_nhwc, p, num_cores):
    B, H, W, C = x_nhwc.shape
    Crd = p["w_se_r"].shape[1]
    Gb = _pick_group(B, H * W, target_rows=256, num_cores=num_cores)

    flops = int(2 * B * H * W * C * (3 * C + 9) + 4 * B * C * Crd)
    bytes_acc = int(4 * (2 * B * H * W * C + 3 * C * C + 2 * C * Crd + 12 * C))
    cost = pl.CostEstimate(flops=flops, transcendentals=int(B * H * W * C + B * C),
                           bytes_accessed=bytes_acc)

    return pl.pallas_call(
        _mbconv_kernel,
        out_shape=jax.ShapeDtypeStruct((B, H, W, C), x_nhwc.dtype),
        grid=(B // Gb,),
        in_specs=[
            pl.BlockSpec((Gb, H, W, C), lambda i: (i, 0, 0, 0)),
            _full_spec((C, C)), _full_spec((1, C)),        # BN0-folded 1x1
            _full_spec((9, C)), _full_spec((1, C)),        # depthwise (BN1 folded)
            _full_spec((C, C)), _full_spec((1, C)),        # pointwise (BN2 folded)
            _full_spec((C, Crd)), _full_spec((1, Crd)),    # SE reduce
            _full_spec((Crd, C)), _full_spec((1, C)),      # SE expand
            _full_spec((C, C)), _full_spec((1, C)),        # final 1x1
        ],
        out_specs=pl.BlockSpec((Gb, H, W, C), lambda i: (i, 0, 0, 0)),
        scratch_shapes=[pltpu.VMEM((Gb, H + 2, W, C), jnp.float32)],
        compiler_params=pltpu.CompilerParams(
            dimension_semantics=("parallel",), vmem_limit_bytes=_VMEM_LIMIT),
        cost_estimate=cost,
    )(x_nhwc, p["w1f"].astype(_BF16), p["b1f"], p["wdwf"], p["bdwf"],
      p["wpwf"].astype(_BF16), p["bpwf"], p["w_se_r"], p["b_se_r"],
      p["w_se_e"], p["b_se_e"], p["w2"].astype(_BF16), p["b2"])


# ----------------------------------------------------------------------------- transformer kernel
def _transformer_kernel(x_ref, bias_ref, g1_ref, be1_ref, wqkv_ref, bqkv_ref,
                        wproj_ref, bproj_ref, g2_ref, be2_ref,
                        wfc1_ref, bfc1_ref, wfc2_ref, bfc2_ref,
                        o_ref, attn_ref):
    # G windows per grid step: x_ref (G, N, C)
    G, N, C = x_ref.shape
    heads = bias_ref.shape[0]
    hd = C // heads
    M = G * N
    eps = 1e-5

    x = x_ref[...].reshape(M, C)                           # residual stream (f32)

    # ---- LayerNorm 1 (f32 statistics) ----
    mu = jnp.mean(x, axis=-1, keepdims=True)
    var = jnp.mean(jnp.square(x - mu), axis=-1, keepdims=True)
    xn = (x - mu) * lax.rsqrt(var + eps) * g1_ref[...] + be1_ref[...]

    # ---- qkv: one (M, C) @ (C, 3C) matmul over all G windows ----
    qkv = jnp.dot(xn.astype(_BF16), wqkv_ref[...],
                  preferred_element_type=jnp.float32) + bqkv_ref[...]
    qkv = qkv.astype(_BF16)                                # cast once

    # head split done once, outside any compute loop -> (heads*G, N, hd), head-major
    def split_heads(off):
        return jnp.concatenate(
            [qkv[:, off + h * hd:off + (h + 1) * hd].reshape(G, N, hd)
             for h in range(heads)], axis=0)

    q_b = split_heads(0)
    k_b = split_heads(C)
    v_b = split_heads(2 * C)

    # ---- RelativeSelfAttention, batched over all heads*G windows ----
    # (reference never applies self.scale)
    logits = jnp.einsum('bnd,bmd->bnm', q_b, k_b,
                        preferred_element_type=jnp.float32)
    logits = logits.reshape(heads, G, N, N) + bias_ref[...][:, None, :, :]
    logits = logits - jnp.max(logits, axis=-1, keepdims=True)
    e = jnp.exp(logits)
    a4 = e * pl.reciprocal(jnp.sum(e, axis=-1, keepdims=True), approx=True)
    attn_ref[...] = a4                                     # single full-block store

    ctx = jnp.einsum('bnm,bmd->bnd', a4.reshape(heads * G, N, N).astype(_BF16),
                     v_b, preferred_element_type=jnp.float32)
    # concat heads back along lanes -> ONE full-K projection matmul
    ctx_all = jnp.concatenate(
        [ctx[h * G:(h + 1) * G].reshape(M, hd) for h in range(heads)], axis=-1)
    attn_out = jnp.dot(ctx_all.astype(_BF16), wproj_ref[...],
                       preferred_element_type=jnp.float32) + bproj_ref[...]

    y1 = x + attn_out                                      # residual 1

    # ---- LayerNorm 2 + MLP ----
    mu2 = jnp.mean(y1, axis=-1, keepdims=True)
    var2 = jnp.mean(jnp.square(y1 - mu2), axis=-1, keepdims=True)
    y1n = (y1 - mu2) * lax.rsqrt(var2 + eps) * g2_ref[...] + be2_ref[...]
    hmid = _gelu(jnp.dot(y1n.astype(_BF16), wfc1_ref[...],
                         preferred_element_type=jnp.float32) + bfc1_ref[...])
    mlp = jnp.dot(hmid.astype(_BF16), wfc2_ref[...],
                  preferred_element_type=jnp.float32) + bfc2_ref[...]

    o_ref[...] = (y1 + mlp).reshape(G, N, C).astype(o_ref.dtype)


def transformer(tokens, p, bias, heads, num_cores):
    Bw, N, C = tokens.shape
    hidden = p["wfc1"].shape[1]
    hd = C // heads
    G = _pick_group(Bw, N, target_rows=512, num_cores=num_cores)

    M = Bw * N
    flops = int(2 * M * C * (4 * C + 2 * hidden) + 4 * Bw * heads * N * N * hd)
    trans = int(M * hidden + Bw * heads * N * N)
    bytes_acc = int(4 * (2 * M * C + Bw * heads * N * N)
                    + 2 * (4 * C * C + 2 * C * hidden))
    cost = pl.CostEstimate(flops=flops, transcendentals=trans,
                           bytes_accessed=bytes_acc)

    y, attn_hm = pl.pallas_call(
        _transformer_kernel,
        out_shape=(jax.ShapeDtypeStruct((Bw, N, C), tokens.dtype),
                   jax.ShapeDtypeStruct((heads, Bw, N, N), jnp.float32)),
        grid=(Bw // G,),
        in_specs=[
            pl.BlockSpec((G, N, C), lambda i: (i, 0, 0)),
            _full_spec((heads, N, N)),
            _full_spec((1, C)), _full_spec((1, C)),
            _full_spec((C, 3 * C)), _full_spec((1, 3 * C)),
            _full_spec((C, C)), _full_spec((1, C)),
            _full_spec((1, C)), _full_spec((1, C)),
            _full_spec((C, hidden)), _full_spec((1, hidden)),
            _full_spec((hidden, C)), _full_spec((1, C)),
        ],
        out_specs=(pl.BlockSpec((G, N, C), lambda i: (i, 0, 0)),
                   pl.BlockSpec((heads, G, N, N), lambda i: (0, i, 0, 0))),
        compiler_params=pltpu.CompilerParams(
            dimension_semantics=("parallel",), vmem_limit_bytes=_VMEM_LIMIT),
        cost_estimate=cost,
    )(tokens, bias, p["ln1_g"], p["ln1_b"], p["wqkv"].astype(_BF16), p["bqkv"],
      p["wproj"].astype(_BF16), p["bproj"], p["ln2_g"], p["ln2_b"],
      p["wfc1"].astype(_BF16), p["bfc1"], p["wfc2"].astype(_BF16), p["bfc2"])
    # back to the (windows, heads, N, N) layout of the reference (XLA glue)
    return y, jnp.transpose(attn_hm, (1, 0, 2, 3))


# ----------------------------------------------------------------------------- glue (NHWC partitions)
def window_partition(x, ws):
    B, H, W, C = x.shape
    x = x.reshape(B, H // ws[0], ws[0], W // ws[1], ws[1], C)
    x = jnp.transpose(x, (0, 1, 3, 2, 4, 5))
    return x.reshape(-1, ws[0], ws[1], C)


def window_reverse(win, size, ws):
    H, W = size
    C = win.shape[-1]
    B = win.shape[0] // ((H // ws[0]) * (W // ws[1]))
    x = win.reshape(B, H // ws[0], W // ws[1], ws[0], ws[1], C)
    x = jnp.transpose(x, (0, 1, 3, 2, 4, 5))
    return x.reshape(B, H, W, C)


def grid_partition(x, gs):
    B, H, W, C = x.shape
    x = x.reshape(B, gs[0], H // gs[0], gs[1], W // gs[1], C)
    x = jnp.transpose(x, (0, 2, 4, 1, 3, 5))
    return x.reshape(-1, gs[0], gs[1], C)


def grid_reverse(grid, size, gs):
    H, W = size
    C = grid.shape[-1]
    B = grid.shape[0] // ((H // gs[0]) * (W // gs[1]))
    x = grid.reshape(B, H // gs[0], W // gs[1], gs[0], gs[1], C)
    x = jnp.transpose(x, (0, 3, 1, 4, 2, 5))
    return x.reshape(B, H, W, C)


def get_relative_position_index(win_h, win_w):
    coords = jnp.stack(jnp.meshgrid(jnp.arange(win_h), jnp.arange(win_w), indexing="ij"))
    coords_flatten = coords.reshape(2, -1)
    rel = coords_flatten[:, :, None] - coords_flatten[:, None, :]
    rel = jnp.transpose(rel, (1, 2, 0))
    rel = rel.at[:, :, 0].add(win_h - 1)
    rel = rel.at[:, :, 1].add(win_w - 1)
    rel = rel.at[:, :, 0].multiply(2 * win_w - 1)
    return rel.sum(-1)


def rel_pos_bias(table, gw, heads):
    N = gw[0] * gw[1]
    idx = get_relative_position_index(gw[0], gw[1])
    bias = table[idx.reshape(-1)].reshape(N, N, heads)          # gather (XLA glue)
    return jnp.transpose(bias, (2, 0, 1))                       # (heads, N, N)


# ----------------------------------------------------------------------------- parameters
def init_params(key, C, heads, gw):
    hidden = int(4.0 * C)
    Crd = max(1, C // 4)                  # SqueezeExcite rd_ratio=0.25
    ks = iter(jax.random.split(key, 64))
    eps = 1e-5

    def vec(shape, scale=0.05):
        return jax.random.normal(next(ks), shape, jnp.float32) * scale

    # --- MBConv raw parameters (BatchNorm eval-mode stats, then folded) ---
    g0, be0, m0, v0 = 1.0 + vec((C,)), vec((C,)), vec((C,)), 1.0 + jnp.abs(vec((C,)))
    W1, b1 = vec((C, C)), vec((C,))
    Wdw = vec((3, 3, C))
    g1, be1, m1, v1 = 1.0 + vec((C,)), vec((C,)), vec((C,)), 1.0 + jnp.abs(vec((C,)))
    Wpw = vec((C, C))
    g2, be2, m2, v2 = 1.0 + vec((C,)), vec((C,)), vec((C,)), 1.0 + jnp.abs(vec((C,)))
    Wser, bser = vec((C, Crd)), vec((Crd,))
    Wsee, bsee = vec((Crd, C)), vec((C,))
    W2, b2 = vec((C, C)), vec((C,))

    s0 = g0 / jnp.sqrt(v0 + eps); c0 = be0 - m0 * s0
    s1 = g1 / jnp.sqrt(v1 + eps); c1 = be1 - m1 * s1
    s2 = g2 / jnp.sqrt(v2 + eps); c2 = be2 - m2 * s2

    mb = dict(
        w1f=W1 * s0[:, None], b1f=(c0 @ W1 + b1)[None, :],
        wdwf=Wdw.reshape(9, C) * s1[None, :], bdwf=c1[None, :],
        wpwf=Wpw * s2[None, :], bpwf=c2[None, :],
        w_se_r=Wser, b_se_r=bser[None, :],
        w_se_e=Wsee, b_se_e=bsee[None, :],
        w2=W2, b2=b2[None, :],
    )

    def tparams():
        return dict(
            ln1_g=jnp.ones((1, C), jnp.float32), ln1_b=jnp.zeros((1, C), jnp.float32),
            wqkv=vec((C, 3 * C)), bqkv=vec((1, 3 * C)),
            wproj=vec((C, C)), bproj=vec((1, C)),
            ln2_g=jnp.ones((1, C), jnp.float32), ln2_b=jnp.zeros((1, C), jnp.float32),
            wfc1=vec((C, hidden)), bfc1=vec((1, hidden)),
            wfc2=vec((hidden, C)), bfc2=vec((1, C)),
            rpb_table=vec(((2 * gw[0] - 1) * (2 * gw[1] - 1), heads), 0.02),
        )

    return dict(mbconv=mb, block=tparams(), grid=tparams())


# ----------------------------------------------------------------------------- full block
def maxvit_block(x_nchw, params, heads, gw):
    B, C, H, W = x_nchw.shape
    N = gw[0] * gw[1]
    num_cores = _num_tensorcores()
    x = jnp.transpose(x_nchw, (0, 2, 3, 1))                    # NCHW -> NHWC

    y = mbconv(x, params["mbconv"], num_cores)

    # block transformer: window partition
    tok = window_partition(y, gw).reshape(-1, N, C)
    bias_b = rel_pos_bias(params["block"]["rpb_table"], gw, heads)
    tok, block_attn = transformer(tok, params["block"], bias_b, heads, num_cores)
    y = window_reverse(tok.reshape(-1, gw[0], gw[1], C), (H, W), gw)

    # grid transformer: grid partition
    tok = grid_partition(y, gw).reshape(-1, N, C)
    bias_g = rel_pos_bias(params["grid"]["rpb_table"], gw, heads)
    tok, grid_attn = transformer(tok, params["grid"], bias_g, heads, num_cores)
    y = grid_reverse(tok.reshape(-1, gw[0], gw[1], C), (H, W), gw)

    return jnp.transpose(y, (0, 3, 1, 2)), block_attn, grid_attn   # back to NCHW


if __name__ == "__main__":
    B, C, H, W = 2, 32, 8, 8
    num_heads = 4
    grid_window_size = (4, 4)
    N = grid_window_size[0] * grid_window_size[1]

    x_nchw = jax.random.normal(jax.random.PRNGKey(0), (B, C, H, W), dtype=jnp.float32)
    params = init_params(jax.random.PRNGKey(0), C, num_heads, grid_window_size)

    fwd = jax.jit(functools.partial(maxvit_block, heads=num_heads, gw=grid_window_size))
    out, block_attn, grid_attn = fwd(x_nchw, params)
    jax.block_until_ready((out, block_attn, grid_attn))

    assert out.shape == (B, C, H, W)
    assert block_attn.shape == (B * (H // grid_window_size[0]) * (W // grid_window_size[1]),
                                num_heads, N, N)
    assert grid_attn.shape == block_attn.shape
    print("KERNEL_OK")
</pallas_src>

<mosaic_0001>
module attributes {stable_mosaic.version = 11 : i64} {
  func.func @_mbconv_kernel(%arg0: i32, %arg1: memref<2x8x8x32xf32, #tpu.memory_space<vmem>>, %arg2: memref<32x32xbf16, #tpu.memory_space<vmem>>, %arg3: memref<1x32xf32, #tpu.memory_space<vmem>>, %arg4: memref<9x32xf32, #tpu.memory_space<vmem>>, %arg5: memref<1x32xf32, #tpu.memory_space<vmem>>, %arg6: memref<32x32xbf16, #tpu.memory_space<vmem>>, %arg7: memref<1x32xf32, #tpu.memory_space<vmem>>, %arg8: memref<32x8xf32, #tpu.memory_space<vmem>>, %arg9: memref<1x8xf32, #tpu.memory_space<vmem>>, %arg10: memref<8x32xf32, #tpu.memory_space<vmem>>, %arg11: memref<1x32xf32, #tpu.memory_space<vmem>>, %arg12: memref<32x32xbf16, #tpu.memory_space<vmem>>, %arg13: memref<1x32xf32, #tpu.memory_space<vmem>>, %arg14: memref<2x8x8x32xf32, #tpu.memory_space<vmem>>, %arg15: memref<2x10x8x32xf32, #tpu.memory_space<vmem>>) attributes {dimension_semantics = [#tpu.dimension_semantics<parallel>], iteration_bounds = array<i64: 1>, scalar_prefetch = 0 : i64, scratch_operands = 1 : i64, tpu.core_type = #tpu.core_type<tc>, window_params = [{transform_indices = @transform_0, window_bounds = array<i64: 2, 8, 8, 32>}, {pipeline_mode = #tpu.pipeline_mode<synchronous>, transform_indices = @transform_1, window_bounds = array<i64: 32, 32>}, {pipeline_mode = #tpu.pipeline_mode<synchronous>, transform_indices = @transform_2, window_bounds = array<i64: 1, 32>}, {pipeline_mode = #tpu.pipeline_mode<synchronous>, transform_indices = @transform_3, window_bounds = array<i64: 9, 32>}, {pipeline_mode = #tpu.pipeline_mode<synchronous>, transform_indices = @transform_4, window_bounds = array<i64: 1, 32>}, {pipeline_mode = #tpu.pipeline_mode<synchronous>, transform_indices = @transform_5, window_bounds = array<i64: 32, 32>}, {pipeline_mode = #tpu.pipeline_mode<synchronous>, transform_indices = @transform_6, window_bounds = array<i64: 1, 32>}, {pipeline_mode = #tpu.pipeline_mode<synchronous>, transform_indices = @transform_7, window_bounds = array<i64: 32, 8>}, {pipeline_mode = #tpu.pipeline_mode<synchronous>, transform_indices = @transform_8, window_bounds = array<i64: 1, 8>}, {pipeline_mode = #tpu.pipeline_mode<synchronous>, transform_indices = @transform_9, window_bounds = array<i64: 8, 32>}, {pipeline_mode = #tpu.pipeline_mode<synchronous>, transform_indices = @transform_10, window_bounds = array<i64: 1, 32>}, {pipeline_mode = #tpu.pipeline_mode<synchronous>, transform_indices = @transform_11, window_bounds = array<i64: 32, 32>}, {pipeline_mode = #tpu.pipeline_mode<synchronous>, transform_indices = @transform_12, window_bounds = array<i64: 1, 32>}, {transform_indices = @transform_13, window_bounds = array<i64: 2, 8, 8, 32>}]} {
    %c0 = arith.constant 0 : index
    %c0_0 = arith.constant 0 : index
    %c0_1 = arith.constant 0 : index
    %c0_2 = arith.constant 0 : index
    %0 = vector.load %arg1[%c0, %c0_0, %c0_1, %c0_2] : memref<2x8x8x32xf32, #tpu.memory_space<vmem>>, vector<2x8x8x32xf32>
    %1 = vector.shape_cast %0 : vector<2x8x8x32xf32> to vector<128x32xf32>
    %2 = arith.truncf %1 : vector<128x32xf32> to vector<128x32xbf16>
    %c0_3 = arith.constant 0 : index
    %c0_4 = arith.constant 0 : index
    %3 = vector.load %arg2[%c0_3, %c0_4] : memref<32x32xbf16, #tpu.memory_space<vmem>>, vector<32x32xbf16>
    %cst = arith.constant dense<0.000000e+00> : vector<128x32xf32>
    %4 = tpu.matmul %2, %3, %cst {dimension_numbers = #tpu.dot_dimension_numbers<[1], [0], [0], [1], [0, 0, 1, 1], [], []>} : vector<128x32xbf16>, vector<32x32xbf16>, vector<128x32xf32> -> vector<128x32xf32>
    %c0_5 = arith.constant 0 : index
    %c0_6 = arith.constant 0 : index
    %5 = vector.load %arg3[%c0_5, %c0_6] : memref<1x32xf32, #tpu.memory_space<vmem>>, vector<1x32xf32>
    %6 = vector.broadcast %5 : vector<1x32xf32> to vector<128x32xf32>
    %7 = arith.addf %4, %6 : vector<128x32xf32>
    %cst_7 = arith.constant 0.000000e+00 : f32
    %8 = vector.broadcast %cst_7 : f32 to vector<2x1x8x32xf32>
    %c0_8 = arith.constant 0 : index
    %c0_9 = arith.constant 0 : index
    %c0_10 = arith.constant 0 : index
    %c0_11 = arith.constant 0 : index
    %9 = vector.load %arg15[%c0_8, %c0_9, %c0_10, %c0_11] : memref<2x10x8x32xf32, #tpu.memory_space<vmem>>, vector<2x1x8x32xf32>
    tpu.vector_store %arg15[%c0_8, %c0_9, %c0_10, %c0_11], %8 {strides = array<i32>} : memref<2x10x8x32xf32, #tpu.memory_space<vmem>>, vector<2x1x8x32xf32>,
    %c0_12 = arith.constant 0 : index
    %c9 = arith.constant 9 : index
    %c0_13 = arith.constant 0 : index
    %c0_14 = arith.constant 0 : index
    %10 = vector.load %arg15[%c0_12, %c9, %c0_13, %c0_14] : memref<2x10x8x32xf32, #tpu.memory_space<vmem>>, vector<2x1x8x32xf32>
    tpu.vector_store %arg15[%c0_12, %c9, %c0_13, %c0_14], %8 {strides = array<i32>} : memref<2x10x8x32xf32, #tpu.memory_space<vmem>>, vector<2x1x8x32xf32>,
    %11 = vector.shape_cast %7 : vector<128x32xf32> to vector<2x8x8x32xf32>
    %c0_15 = arith.constant 0 : index
    %c1 = arith.constant 1 : index
    %c0_16 = arith.constant 0 : index
    %c0_17 = arith.constant 0 : index
    %12 = vector.load %arg15[%c0_15, %c1, %c0_16, %c0_17] : memref<2x10x8x32xf32, #tpu.memory_space<vmem>>, vector<2x8x8x32xf32>
    tpu.vector_store %arg15[%c0_15, %c1, %c0_16, %c0_17], %11 {strides = array<i32>} : memref<2x10x8x32xf32, #tpu.memory_space<vmem>>, vector<2x8x8x32xf32>,
    %c0_18 = arith.constant 0 : index
    %c0_19 = arith.constant 0 : index
    %c0_20 = arith.constant 0 : index
    %c0_21 = arith.constant 0 : index
    %13 = vector.load %arg15[%c0_18, %c0_19, %c0_20, %c0_21] : memref<2x10x8x32xf32, #tpu.memory_space<vmem>>, vector<2x8x8x32xf32>
    %c0_22 = arith.constant 0 : index
    %c0_23 = arith.constant 0 : index
    %14 = vector.load %arg4[%c0_22, %c0_23] : memref<9x32xf32, #tpu.memory_space<vmem>>, vector<1x32xf32>
    %15 = vector.shape_cast %14 : vector<1x32xf32> to vector<32xf32>
    %16 = vector.shape_cast %15 : vector<32xf32> to vector<1x1x1x32xf32>
    %17 = vector.broadcast %16 : vector<1x1x1x32xf32> to vector<2x8x8x32xf32>
    %18 = arith.mulf %13, %17 : vector<2x8x8x32xf32>
    %c0_24 = arith.constant 0 : index
    %c1_25 = arith.constant 1 : index
    %c0_26 = arith.constant 0 : index
    %c0_27 = arith.constant 0 : index
    %19 = vector.load %arg15[%c0_24, %c1_25, %c0_26, %c0_27] : memref<2x10x8x32xf32, #tpu.memory_space<vmem>>, vector<2x8x8x32xf32>
    %c3 = arith.constant 3 : index
    %c0_28 = arith.constant 0 : index
    %20 = vector.load %arg4[%c3, %c0_28] : memref<9x32xf32, #tpu.memory_space<vmem>>, vector<1x32xf32>
    %21 = vector.shape_cast %20 : vector<1x32xf32> to vector<32xf32>
    %22 = vector.shape_cast %21 : vector<32xf32> to vector<1x1x1x32xf32>
    %23 = vector.broadcast %22 : vector<1x1x1x32xf32> to vector<2x8x8x32xf32>
    %24 = arith.mulf %19, %23 : vector<2x8x8x32xf32>
    %25 = arith.addf %18, %24 : vector<2x8x8x32xf32>
    %c0_29 = arith.constant 0 : index
    %c2 = arith.constant 2 : index
    %c0_30 = arith.constant 0 : index
    %c0_31 = arith.constant 0 : index
    %26 = vector.load %arg15[%c0_29, %c2, %c0_30, %c0_31] : memref<2x10x8x32xf32, #tpu.memory_space<vmem>>, vector<2x8x8x32xf32>
    %c6 = arith.constant 6 : index
    %c0_32 = arith.constant 0 : index
    %27 = vector.load %arg4[%c6, %c0_32] : memref<9x32xf32, #tpu.memory_space<vmem>>, vector<1x32xf32>
    %28 = vector.shape_cast %27 : vector<1x32xf32> to vector<32xf32>
    %29 = vector.shape_cast %28 : vector<32xf32> to vector<1x1x1x32xf32>
    %30 = vector.broadcast %29 : vector<1x1x1x32xf32> to vector<2x8x8x32xf32>
    %31 = arith.mulf %26, %30 : vector<2x8x8x32xf32>
    %32 = arith.addf %25, %31 : vector<2x8x8x32xf32>
    %c0_33 = arith.constant 0 : index
    %c0_34 = arith.constant 0 : index
    %c0_35 = arith.constant 0 : index
    %c0_36 = arith.constant 0 : index
    %33 = vector.load %arg15[%c0_33, %c0_34, %c0_35, %c0_36] : memref<2x10x8x32xf32, #tpu.memory_space<vmem>>, vector<2x8x8x32xf32>
    %c1_37 = arith.constant 1 : index
    %c0_38 = arith.constant 0 : index
    %34 = vector.load %arg4[%c1_37, %c0_38] : memref<9x32xf32, #tpu.memory_space<vmem>>, vector<1x32xf32>
    %35 = vector.shape_cast %34 : vector<1x32xf32> to vector<32xf32>
    %36 = vector.shape_cast %35 : vector<32xf32> to vector<1x1x1x32xf32>
    %37 = vector.broadcast %36 : vector<1x1x1x32xf32> to vector<2x8x8x32xf32>
    %38 = arith.mulf %33, %37 : vector<2x8x8x32xf32>
    %c0_39 = arith.constant 0 : index
    %c1_40 = arith.constant 1 : index
    %c0_41 = arith.constant 0 : index
    %c0_42 = arith.constant 0 : index
    %39 = vector.load %arg15[%c0_39, %c1_40, %c0_41, %c0_42] : memref<2x10x8x32xf32, #tpu.memory_space<vmem>>, vector<2x8x8x32xf32>
    %c4 = arith.constant 4 : index
    %c0_43 = arith.constant 0 : index
    %40 = vector.load %arg4[%c4, %c0_43] : memref<9x32xf32, #tpu.memory_space<vmem>>, vector<1x32xf32>
    %41 = vector.shape_cast %40 : vector<1x32xf32> to vector<32xf32>
    %42 = vector.shape_cast %41 : vector<32xf32> to vector<1x1x1x32xf32>
    %43 = vector.broadcast %42 : vector<1x1x1x32xf32> to vector<2x8x8x32xf32>
    %44 = arith.mulf %39, %43 : vector<2x8x8x32xf32>
    %45 = arith.addf %38, %44 : vector<2x8x8x32xf32>
    %c0_44 = arith.constant 0 : index
    %c2_45 = arith.constant 2 : index
    %c0_46 = arith.constant 0 : index
    %c0_47 = arith.constant 0 : index
    %46 = vector.load %arg15[%c0_44, %c2_45, %c0_46, %c0_47] : memref<2x10x8x32xf32, #tpu.memory_space<vmem>>, vector<2x8x8x32xf32>
    %c7 = arith.constant 7 : index
    %c0_48 = arith.constant 0 : index
    %47 = vector.load %arg4[%c7, %c0_48] : memref<9x32xf32, #tpu.memory_space<vmem>>, vector<1x32xf32>
    %48 = vector.shape_cast %47 : vector<1x32xf32> to vector<32xf32>
    %49 = vector.shape_cast %48 : vector<32xf32> to vector<1x1x1x32xf32>
    %50 = vector.broadcast %49 : vector<1x1x1x32xf32> to vector<2x8x8x32xf32>
    %51 = arith.mulf %46, %50 : vector<2x8x8x32xf32>
    %52 = arith.addf %45, %51 : vector<2x8x8x32xf32>
    %c0_49 = arith.constant 0 : index
    %c0_50 = arith.constant 0 : index
    %c0_51 = arith.constant 0 : index
    %c0_52 = arith.constant 0 : index
    %53 = vector.load %arg15[%c0_49, %c0_50, %c0_51, %c0_52] : memref<2x10x8x32xf32, #tpu.memory_space<vmem>>, vector<2x8x8x32xf32>
    %c2_53 = arith.constant 2 : index
    %c0_54 = arith.constant 0 : index
    %54 = vector.load %arg4[%c2_53, %c0_54] : memref<9x32xf32, #tpu.memory_space<vmem>>, vector<1x32xf32>
    %55 = vector.shape_cast %54 : vector<1x32xf32> to vector<32xf32>
    %56 = vector.shape_cast %55 : vector<32xf32> to vector<1x1x1x32xf32>
    %57 = vector.broadcast %56 : vector<1x1x1x32xf32> to vector<2x8x8x32xf32>
    %58 = arith.mulf %53, %57 : vector<2x8x8x32xf32>
    %c0_55 = arith.constant 0 : index
    %c1_56 = arith.constant 1 : index
    %c0_57 = arith.constant 0 : index
    %c0_58 = arith.constant 0 : index
    %59 = vector.load %arg15[%c0_55, %c1_56, %c0_57, %c0_58] : memref<2x10x8x32xf32, #tpu.memory_space<vmem>>, vector<2x8x8x32xf32>
    %c5 = arith.constant 5 : index
    %c0_59 = arith.constant 0 : index
    %60 = vector.load %arg4[%c5, %c0_59] : memref<9x32xf32, #tpu.memory_space<vmem>>, vector<1x32xf32>
    %61 = vector.shape_cast %60 : vector<1x32xf32> to vector<32xf32>
    %62 = vector.shape_cast %61 : vector<32xf32> to vector<1x1x1x32xf32>
    %63 = vector.broadcast %62 : vector<1x1x1x32xf32> to vector<2x8x8x32xf32>
    %64 = arith.mulf %59, %63 : vector<2x8x8x32xf32>
    %65 = arith.addf %58, %64 : vector<2x8x8x32xf32>
    %c0_60 = arith.constant 0 : index
    %c2_61 = arith.constant 2 : index
    %c0_62 = arith.constant 0 : index
    %c0_63 = arith.constant 0 : index
    %66 = vector.load %arg15[%c0_60, %c2_61, %c0_62, %c0_63] : memref<2x10x8x32xf32, #tpu.memory_space<vmem>>, vector<2x8x8x32xf32>
    %c8 = arith.constant 8 : index
    %c0_64 = arith.constant 0 : index
    %67 = vector.load %arg4[%c8, %c0_64] : memref<9x32xf32, #tpu.memory_space<vmem>>, vector<1x32xf32>
    %68 = vector.shape_cast %67 : vector<1x32xf32> to vector<32xf32>
    %69 = vector.shape_cast %68 : vector<32xf32> to vector<1x1x1x32xf32>
    %70 = vector.broadcast %69 : vector<1x1x1x32xf32> to vector<2x8x8x32xf32>
    %71 = arith.mulf %66, %70 : vector<2x8x8x32xf32>
    %72 = arith.addf %65, %71 : vector<2x8x8x32xf32>
    %73 = tpu.iota {dimensions = array<i32: 0>} : vector<8x32xi32>
    %c1_i32 = arith.constant 1 : i32
    %74 = vector.broadcast %c1_i32 : i32 to vector<8x32xi32>
    %75 = arith.cmpi sge, %73, %74 : vector<8x32xi32>
    %c1_i32_65 = arith.constant 1 : i32
    %76 = tpu.dynamic_rotate %32 by %c1_i32_65 dim 2 : vector<2x8x8x32xf32>, i32 -> vector<2x8x8x32xf32>
    %cst_66 = arith.constant 0.000000e+00 : f32
    %77 = vector.shape_cast %75 : vector<8x32xi1> to vector<1x1x8x32xi1>
    %78 = vector.broadcast %77 : vector<1x1x8x32xi1> to vector<2x8x8x32xi1>
    %79 = vector.broadcast %cst_66 : f32 to vector<2x8x8x32xf32>
    %80 = arith.select %78, %76, %79 : vector<2x8x8x32xi1>, vector<2x8x8x32xf32>
    %81 = arith.addf %52, %80 : vector<2x8x8x32xf32>
    %c6_i32 = arith.constant 6 : i32
    %82 = vector.broadcast %c6_i32 : i32 to vector<8x32xi32>
    %83 = arith.cmpi sle, %73, %82 : vector<8x32xi32>
    %c7_i32 = arith.constant 7 : i32
    %84 = tpu.dynamic_rotate %72 by %c7_i32 dim 2 : vector<2x8x8x32xf32>, i32 -> vector<2x8x8x32xf32>
    %cst_67 = arith.constant 0.000000e+00 : f32
    %85 = vector.shape_cast %83 : vector<8x32xi1> to vector<1x1x8x32xi1>
    %86 = vector.broadcast %85 : vector<1x1x8x32xi1> to vector<2x8x8x32xi1>
    %87 = vector.broadcast %cst_67 : f32 to vector<2x8x8x32xf32>
    %88 = arith.select %86, %84, %87 : vector<2x8x8x32xi1>, vector<2x8x8x32xf32>
    %89 = arith.addf %81, %88 : vector<2x8x8x32xf32>
    %c0_68 = arith.constant 0 : index
    %c0_69 = arith.constant 0 : index
    %90 = vector.load %arg5[%c0_68, %c0_69] : memref<1x32xf32, #tpu.memory_space<vmem>>, vector<1x32xf32>
    %91 = vector.shape_cast %90 : vector<1x32xf32> to vector<1x1x1x32xf32>
    %92 = vector.broadcast %91 : vector<1x1x1x32xf32> to vector<2x8x8x32xf32>
    %93 = arith.addf %89, %92 : vector<2x8x8x32xf32>
    %cst_70 = arith.constant 5.000000e-01 : f32
    %94 = vector.broadcast %cst_70 : f32 to vector<2x8x8x32xf32>
    %95 = arith.mulf %94, %93 : vector<2x8x8x32xf32>
    %cst_71 = arith.constant 4.471500e-02 : f32
    %96 = vector.broadcast %cst_71 : f32 to vector<2x8x8x32xf32>
    %97 = arith.mulf %96, %93 : vector<2x8x8x32xf32>
    %98 = arith.mulf %97, %93 : vector<2x8x8x32xf32>
    %99 = arith.mulf %98, %93 : vector<2x8x8x32xf32>
    %100 = arith.addf %93, %99 : vector<2x8x8x32xf32>
    %cst_72 = arith.constant 0.797884583 : f32
    %101 = vector.broadcast %cst_72 : f32 to vector<2x8x8x32xf32>
    %102 = arith.mulf %101, %100 : vector<2x8x8x32xf32>
    %103 = math.tanh %102 : vector<2x8x8x32xf32>
    %cst_73 = arith.constant 1.000000e+00 : f32
    %104 = vector.broadcast %cst_73 : f32 to vector<2x8x8x32xf32>
    %105 = arith.addf %104, %103 : vector<2x8x8x32xf32>
    %106 = arith.mulf %95, %105 : vector<2x8x8x32xf32>
    %107 = vector.shape_cast %106 : vector<2x8x8x32xf32> to vector<128x32xf32>
    %108 = arith.truncf %107 : vector<128x32xf32> to vector<128x32xbf16>
    %c0_74 = arith.constant 0 : index
    %c0_75 = arith.constant 0 : index
    %109 = vector.load %arg6[%c0_74, %c0_75] : memref<32x32xbf16, #tpu.memory_space<vmem>>, vector<32x32xbf16>
    %cst_76 = arith.constant dense<0.000000e+00> : vector<128x32xf32>
    %110 = tpu.matmul %108, %109, %cst_76 {dimension_numbers = #tpu.dot_dimension_numbers<[1], [0], [0], [1], [0, 0, 1, 1], [], []>} : vector<128x32xbf16>, vector<32x32xbf16>, vector<128x32xf32> -> vector<128x32xf32>
    %c0_77 = arith.constant 0 : index
    %c0_78 = arith.constant 0 : index
    %111 = vector.load %arg7[%c0_77, %c0_78] : memref<1x32xf32, #tpu.memory_space<vmem>>, vector<1x32xf32>
    %112 = vector.broadcast %111 : vector<1x32xf32> to vector<128x32xf32>
    %113 = arith.addf %110, %112 : vector<128x32xf32>
    %114 = arith.addf %113, %7 : vector<128x32xf32>
    %115 = vector.shape_cast %114 : vector<128x32xf32> to vector<2x64x32xf32>
    %cst_79 = arith.constant dense<0.000000e+00> : vector<2x32xf32>
    %116 = vector.multi_reduction <add>, %115, %cst_79 [1] : vector<2x64x32xf32> to vector<2x32xf32>
    %cst_80 = arith.constant 6.400000e+01 : f32
    %117 = vector.broadcast %cst_80 : f32 to vector<2x32xf32>
    %118 = arith.divf %116, %117 : vector<2x32xf32>
    %c0_81 = arith.constant 0 : index
    %c0_82 = arith.constant 0 : index
    %119 = vector.load %arg8[%c0_81, %c0_82] : memref<32x8xf32, #tpu.memory_space<vmem>>, vector<32x8xf32>
    %cst_83 = arith.constant dense<0.000000e+00> : vector<2x8xf32>
    %120 = tpu.matmul %118, %119, %cst_83 {dimension_numbers = #tpu.dot_dimension_numbers<[1], [0], [0], [1], [0, 0, 1, 1], [], []>} : vector<2x32xf32>, vector<32x8xf32>, vector<2x8xf32> -> vector<2x8xf32>
    %c0_84 = arith.constant 0 : index
    %c0_85 = arith.constant 0 : index
    %121 = vector.load %arg9[%c0_84, %c0_85] : memref<1x8xf32, #tpu.memory_space<vmem>>, vector<1x8xf32>
    %122 = vector.broadcast %121 : vector<1x8xf32> to vector<2x8xf32>
    %123 = arith.addf %120, %122 : vector<2x8xf32>
    %cst_86 = arith.constant 0.000000e+00 : f32
    %124 = vector.broadcast %cst_86 : f32 to vector<2x8xf32>
    %125 = arith.maximumf %123, %124 : vector<2x8xf32>
    %c0_87 = arith.constant 0 : index
    %c0_88 = arith.constant 0 : index
    %126 = vector.load %arg10[%c0_87, %c0_88] : memref<8x32xf32, #tpu.memory_space<vmem>>, vector<8x32xf32>
    %cst_89 = arith.constant dense<0.000000e+00> : vector<2x32xf32>
    %127 = tpu.matmul %125, %126, %cst_89 {dimension_numbers = #tpu.dot_dimension_numbers<[1], [0], [0], [1], [0, 0, 1, 1], [], []>} : vector<2x8xf32>, vector<8x32xf32>, vector<2x32xf32> -> vector<2x32xf32>
    %c0_90 = arith.constant 0 : index
    %c0_91 = arith.constant 0 : index
    %128 = vector.load %arg11[%c0_90, %c0_91] : memref<1x32xf32, #tpu.memory_space<vmem>>, vector<1x32xf32>
    %129 = vector.broadcast %128 : vector<1x32xf32> to vector<2x32xf32>
    %130 = arith.addf %127, %129 : vector<2x32xf32>
    %131 = arith.negf %130 : vector<2x32xf32>
    %132 = math.exp %131 : vector<2x32xf32>
    %cst_92 = arith.constant 1.000000e+00 : f32
    %133 = vector.broadcast %cst_92 : f32 to vector<2x32xf32>
    %134 = arith.addf %133, %132 : vector<2x32xf32>
    %135 = arith.divf %133, %134 : vector<2x32xf32>
    %136 = vector.shape_cast %135 : vector<2x32xf32> to vector<2x1x32xf32>
    %137 = vector.broadcast %136 : vector<2x1x32xf32> to vector<2x64x32xf32>
    %138 = arith.mulf %115, %137 : vector<2x64x32xf32>
    %139 = vector.shape_cast %138 : vector<2x64x32xf32> to vector<128x32xf32>
    %140 = arith.truncf %139 : vector<128x32xf32> to vector<128x32xbf16>
    %c0_93 = arith.constant 0 : index
    %c0_94 = arith.constant 0 : index
    %141 = vector.load %arg12[%c0_93, %c0_94] : memref<32x32xbf16, #tpu.memory_space<vmem>>, vector<32x32xbf16>
    %cst_95 = arith.constant dense<0.000000e+00> : vector<128x32xf32>
    %142 = tpu.matmul %140, %141, %cst_95 {dimension_numbers = #tpu.dot_dimension_numbers<[1], [0], [0], [1], [0, 0, 1, 1], [], []>} : vector<128x32xbf16>, vector<32x32xbf16>, vector<128x32xf32> -> vector<128x32xf32>
    %c0_96 = arith.constant 0 : index
    %c0_97 = arith.constant 0 : index
    %143 = vector.load %arg13[%c0_96, %c0_97] : memref<1x32xf32, #tpu.memory_space<vmem>>, vector<1x32xf32>
    %144 = vector.broadcast %143 : vector<1x32xf32> to vector<128x32xf32>
    %145 = arith.addf %142, %144 : vector<128x32xf32>
    %146 = arith.addf %145, %1 : vector<128x32xf32>
    %147 = vector.shape_cast %146 : vector<128x32xf32> to vector<2x8x8x32xf32>
    %c0_98 = arith.constant 0 : index
    %c0_99 = arith.constant 0 : index
    %c0_100 = arith.constant 0 : index
    %c0_101 = arith.constant 0 : index
    %148 = vector.load %arg14[%c0_98, %c0_99, %c0_100, %c0_101] : memref<2x8x8x32xf32, #tpu.memory_space<vmem>>, vector<2x8x8x32xf32>
    tpu.vector_store %arg14[%c0_98, %c0_99, %c0_100, %c0_101], %147 {strides = array<i32>} : memref<2x8x8x32xf32, #tpu.memory_space<vmem>>, vector<2x8x8x32xf32>,
    return
  }
  func.func @transform_0(%arg0: i32) -> (i32, i32, i32, i32) {
    %c0_i32 = arith.constant 0 : i32
    %c0_i32_0 = arith.constant 0 : i32
    %c0_i32_1 = arith.constant 0 : i32
    %c0_i32_2 = arith.constant 0 : i32
    return %arg0, %c0_i32, %c0_i32_0, %c0_i32_1 : i32, i32, i32, i32
  }
  func.func @transform_1(%arg0: i32) -> (i32, i32) {
    %c0_i32 = arith.constant 0 : i32
    %c0_i32_0 = arith.constant 0 : i32
    %c0_i32_1 = arith.constant 0 : i32
    return %c0_i32, %c0_i32_0 : i32, i32
  }
  func.func @transform_2(%arg0: i32) -> (i32, i32) {
    %c0_i32 = arith.constant 0 : i32
    %c0_i32_0 = arith.constant 0 : i32
    %c0_i32_1 = arith.constant 0 : i32
    return %c0_i32, %c0_i32_0 : i32, i32
  }
  func.func @transform_3(%arg0: i32) -> (i32, i32) {
    %c0_i32 = arith.constant 0 : i32
    %c0_i32_0 = arith.constant 0 : i32
    %c0_i32_1 = arith.constant 0 : i32
    return %c0_i32, %c0_i32_0 : i32, i32
  }
  func.func @transform_4(%arg0: i32) -> (i32, i32) {
    %c0_i32 = arith.constant 0 : i32
    %c0_i32_0 = arith.constant 0 : i32
    %c0_i32_1 = arith.constant 0 : i32
    return %c0_i32, %c0_i32_0 : i32, i32
  }
  func.func @transform_5(%arg0: i32) -> (i32, i32) {
    %c0_i32 = arith.constant 0 : i32
    %c0_i32_0 = arith.constant 0 : i32
    %c0_i32_1 = arith.constant 0 : i32
    return %c0_i32, %c0_i32_0 : i32, i32
  }
  func.func @transform_6(%arg0: i32) -> (i32, i32) {
    %c0_i32 = arith.constant 0 : i32
    %c0_i32_0 = arith.constant 0 : i32
    %c0_i32_1 = arith.constant 0 : i32
    return %c0_i32, %c0_i32_0 : i32, i32
  }
  func.func @transform_7(%arg0: i32) -> (i32, i32) {
    %c0_i32 = arith.constant 0 : i32
    %c0_i32_0 = arith.constant 0 : i32
    %c0_i32_1 = arith.constant 0 : i32
    return %c0_i32, %c0_i32_0 : i32, i32
  }
  func.func @transform_8(%arg0: i32) -> (i32, i32) {
    %c0_i32 = arith.constant 0 : i32
    %c0_i32_0 = arith.constant 0 : i32
    %c0_i32_1 = arith.constant 0 : i32
    return %c0_i32, %c0_i32_0 : i32, i32
  }
  func.func @transform_9(%arg0: i32) -> (i32, i32) {
    %c0_i32 = arith.constant 0 : i32
    %c0_i32_0 = arith.constant 0 : i32
    %c0_i32_1 = arith.constant 0 : i32
    return %c0_i32, %c0_i32_0 : i32, i32
  }
  func.func @transform_10(%arg0: i32) -> (i32, i32) {
    %c0_i32 = arith.constant 0 : i32
    %c0_i32_0 = arith.constant 0 : i32
    %c0_i32_1 = arith.constant 0 : i32
    return %c0_i32, %c0_i32_0 : i32, i32
  }
  func.func @transform_11(%arg0: i32) -> (i32, i32) {
    %c0_i32 = arith.constant 0 : i32
    %c0_i32_0 = arith.constant 0 : i32
    %c0_i32_1 = arith.constant 0 : i32
    return %c0_i32, %c0_i32_0 : i32, i32
  }
  func.func @transform_12(%arg0: i32) -> (i32, i32) {
    %c0_i32 = arith.constant 0 : i32
    %c0_i32_0 = arith.constant 0 : i32
    %c0_i32_1 = arith.constant 0 : i32
    return %c0_i32, %c0_i32_0 : i32, i32
  }
  func.func @transform_13(%arg0: i32) -> (i32, i32, i32, i32) {
    %c0_i32 = arith.constant 0 : i32
    %c0_i32_0 = arith.constant 0 : i32
    %c0_i32_1 = arith.constant 0 : i32
    %c0_i32_2 = arith.constant 0 : i32
    return %arg0, %c0_i32, %c0_i32_0, %c0_i32_1 : i32, i32, i32, i32
  }
}

module attributes {stable_mosaic.version = 11 : i64} {
  func.func @_transformer_kernel(%arg0: i32, %arg1: memref<8x16x32xf32, #tpu.memory_space<vmem>>, %arg2: memref<4x16x16xf32, #tpu.memory_space<vmem>>, %arg3: memref<1x32xf32, #tpu.memory_space<vmem>>, %arg4: memref<1x32xf32, #tpu.memory_space<vmem>>, %arg5: memref<32x96xbf16, #tpu.memory_space<vmem>>, %arg6: memref<1x96xf32, #tpu.memory_space<vmem>>, %arg7: memref<32x32xbf16, #tpu.memory_space<vmem>>, %arg8: memref<1x32xf32, #tpu.memory_space<vmem>>, %arg9: memref<1x32xf32, #tpu.memory_space<vmem>>, %arg10: memref<1x32xf32, #tpu.memory_space<vmem>>, %arg11: memref<32x128xbf16, #tpu.memory_space<vmem>>, %arg12: memref<1x128xf32, #tpu.memory_space<vmem>>, %arg13: memref<128x32xbf16, #tpu.memory_space<vmem>>, %arg14: memref<1x32xf32, #tpu.memory_space<vmem>>, %arg15: memref<8x16x32xf32, #tpu.memory_space<vmem>>, %arg16: memref<4x8x16x16xf32, #tpu.memory_space<vmem>>) attributes {dimension_semantics = [#tpu.dimension_semantics<parallel>], iteration_bounds = array<i64: 1>, scalar_prefetch = 0 : i64, scratch_operands = 0 : i64, tpu.core_type = #tpu.core_type<tc>, window_params = [{transform_indices = @transform_0, window_bounds = array<i64: 8, 16, 32>}, {pipeline_mode = #tpu.pipeline_mode<synchronous>, transform_indices = @transform_1, window_bounds = array<i64: 4, 16, 16>}, {pipeline_mode = #tpu.pipeline_mode<synchronous>, transform_indices = @transform_2, window_bounds = array<i64: 1, 32>}, {pipeline_mode = #tpu.pipeline_mode<synchronous>, transform_indices = @transform_3, window_bounds = array<i64: 1, 32>}, {pipeline_mode = #tpu.pipeline_mode<synchronous>, transform_indices = @transform_4, window_bounds = array<i64: 32, 96>}, {pipeline_mode = #tpu.pipeline_mode<synchronous>, transform_indices = @transform_5, window_bounds = array<i64: 1, 96>}, {pipeline_mode = #tpu.pipeline_mode<synchronous>, transform_indices = @transform_6, window_bounds = array<i64: 32, 32>}, {pipeline_mode = #tpu.pipeline_mode<synchronous>, transform_indices = @transform_7, window_bounds = array<i64: 1, 32>}, {pipeline_mode = #tpu.pipeline_mode<synchronous>, transform_indices = @transform_8, window_bounds = array<i64: 1, 32>}, {pipeline_mode = #tpu.pipeline_mode<synchronous>, transform_indices = @transform_9, window_bounds = array<i64: 1, 32>}, {pipeline_mode = #tpu.pipeline_mode<synchronous>, transform_indices = @transform_10, window_bounds = array<i64: 32, 128>}, {pipeline_mode = #tpu.pipeline_mode<synchronous>, transform_indices = @transform_11, window_bounds = array<i64: 1, 128>}, {pipeline_mode = #tpu.pipeline_mode<synchronous>, transform_indices = @transform_12, window_bounds = array<i64: 128, 32>}, {pipeline_mode = #tpu.pipeline_mode<synchronous>, transform_indices = @transform_13, window_bounds = array<i64: 1, 32>}, {transform_indices = @transform_14, window_bounds = array<i64: 8, 16, 32>}, {transform_indices = @transform_15, window_bounds = array<i64: 4, 8, 16, 16>}]} {
    %c0 = arith.constant 0 : index
    %c0_0 = arith.constant 0 : index
    %c0_1 = arith.constant 0 : index
    %0 = vector.load %arg1[%c0, %c0_0, %c0_1] : memref<8x16x32xf32, #tpu.memory_space<vmem>>, vector<8x16x32xf32>
    %1 = vector.shape_cast %0 : vector<8x16x32xf32> to vector<128x32xf32>
    %cst = arith.constant dense<0.000000e+00> : vector<128xf32>
    %2 = vector.multi_reduction <add>, %1, %cst [1] : vector<128x32xf32> to vector<128xf32>
    %3 = vector.shape_cast %2 : vector<128xf32> to vector<128x1xf32>
    %cst_2 = arith.constant 3.200000e+01 : f32
    %4 = vector.broadcast %cst_2 : f32 to vector<128x1xf32>
    %5 = arith.divf %3, %4 : vector<128x1xf32>
    %6 = vector.broadcast %5 : vector<128x1xf32> to vector<128x32xf32>
    %7 = arith.subf %1, %6 : vector<128x32xf32>
    %8 = arith.mulf %7, %7 : vector<128x32xf32>
    %cst_3 = arith.constant dense<0.000000e+00> : vector<128xf32>
    %9 = vector.multi_reduction <add>, %8, %cst_3 [1] : vector<128x32xf32> to vector<128xf32>
    %10 = vector.shape_cast %9 : vector<128xf32> to vector<128x1xf32>
    %cst_4 = arith.constant 3.200000e+01 : f32
    %11 = vector.broadcast %cst_4 : f32 to vector<128x1xf32>
    %12 = arith.divf %10, %11 : vector<128x1xf32>
    %13 = vector.broadcast %5 : vector<128x1xf32> to vector<128x32xf32>
    %14 = arith.subf %1, %13 : vector<128x32xf32>
    %cst_5 = arith.constant 9.99999974E-6 : f32
    %15 = vector.broadcast %cst_5 : f32 to vector<128x1xf32>
    %16 = arith.addf %12, %15 : vector<128x1xf32>
    %17 = math.rsqrt %16 : vector<128x1xf32>
    %18 = vector.broadcast %17 : vector<128x1xf32> to vector<128x32xf32>
    %19 = arith.mulf %14, %18 : vector<128x32xf32>
    %c0_6 = arith.constant 0 : index
    %c0_7 = arith.constant 0 : index
    %20 = vector.load %arg3[%c0_6, %c0_7] : memref<1x32xf32, #tpu.memory_space<vmem>>, vector<1x32xf32>
    %21 = vector.broadcast %20 : vector<1x32xf32> to vector<128x32xf32>
    %22 = arith.mulf %19, %21 : vector<128x32xf32>
    %c0_8 = arith.constant 0 : index
    %c0_9 = arith.constant 0 : index
    %23 = vector.load %arg4[%c0_8, %c0_9] : memref<1x32xf32, #tpu.memory_space<vmem>>, vector<1x32xf32>
    %24 = vector.broadcast %23 : vector<1x32xf32> to vector<128x32xf32>
    %25 = arith.addf %22, %24 : vector<128x32xf32>
    %26 = arith.truncf %25 : vector<128x32xf32> to vector<128x32xbf16>
    %c0_10 = arith.constant 0 : index
    %c0_11 = arith.constant 0 : index
    %27 = vector.load %arg5[%c0_10, %c0_11] : memref<32x96xbf16, #tpu.memory_space<vmem>>, vector<32x96xbf16>
    %cst_12 = arith.constant dense<0.000000e+00> : vector<128x96xf32>
    %28 = tpu.matmul %26, %27, %cst_12 {dimension_numbers = #tpu.dot_dimension_numbers<[1], [0], [0], [1], [0, 0, 1, 1], [], []>} : vector<128x32xbf16>, vector<32x96xbf16>, vector<128x96xf32> -> vector<128x96xf32>
    %c0_13 = arith.constant 0 : index
    %c0_14 = arith.constant 0 : index
    %29 = vector.load %arg6[%c0_13, %c0_14] : memref<1x96xf32, #tpu.memory_space<vmem>>, vector<1x96xf32>
    %30 = vector.broadcast %29 : vector<1x96xf32> to vector<128x96xf32>
    %31 = arith.addf %28, %30 : vector<128x96xf32>
    %32 = arith.truncf %31 : vector<128x96xf32> to vector<128x96xbf16>
    %33 = vector.extract_strided_slice %32 {offsets = [0, 0], sizes = [128, 8], strides = [1, 1]} : vector<128x96xbf16> to vector<128x8xbf16>
    %34 = vector.shape_cast %33 : vector<128x8xbf16> to vector<8x16x8xbf16>
    %35 = vector.extract_strided_slice %32 {offsets = [0, 8], sizes = [128, 8], strides = [1, 1]} : vector<128x96xbf16> to vector<128x8xbf16>
    %36 = vector.shape_cast %35 : vector<128x8xbf16> to vector<8x16x8xbf16>
    %37 = vector.extract_strided_slice %32 {offsets = [0, 16], sizes = [128, 8], strides = [1, 1]} : vector<128x96xbf16> to vector<128x8xbf16>
    %38 = vector.shape_cast %37 : vector<128x8xbf16> to vector<8x16x8xbf16>
    %39 = vector.extract_strided_slice %32 {offsets = [0, 24], sizes = [128, 8], strides = [1, 1]} : vector<128x96xbf16> to vector<128x8xbf16>
    %40 = vector.shape_cast %39 : vector<128x8xbf16> to vector<8x16x8xbf16>
    %41 = tpu.concatenate %34, %36, %38, %40 in 0 : vector<8x16x8xbf16>, vector<8x16x8xbf16>, vector<8x16x8xbf16>, vector<8x16x8xbf16> -> vector<32x16x8xbf16>
    %42 = vector.extract_strided_slice %32 {offsets = [0, 32], sizes = [128, 8], strides = [1, 1]} : vector<128x96xbf16> to vector<128x8xbf16>
    %43 = vector.shape_cast %42 : vector<128x8xbf16> to vector<8x16x8xbf16>
    %44 = vector.extract_strided_slice %32 {offsets = [0, 40], sizes = [128, 8], strides = [1, 1]} : vector<128x96xbf16> to vector<128x8xbf16>
    %45 = vector.shape_cast %44 : vector<128x8xbf16> to vector<8x16x8xbf16>
    %46 = vector.extract_strided_slice %32 {offsets = [0, 48], sizes = [128, 8], strides = [1, 1]} : vector<128x96xbf16> to vector<128x8xbf16>
    %47 = vector.shape_cast %46 : vector<128x8xbf16> to vector<8x16x8xbf16>
    %48 = vector.extract_strided_slice %32 {offsets = [0, 56], sizes = [128, 8], strides = [1, 1]} : vector<128x96xbf16> to vector<128x8xbf16>
    %49 = vector.shape_cast %48 : vector<128x8xbf16> to vector<8x16x8xbf16>
    %50 = tpu.concatenate %43, %45, %47, %49 in 0 : vector<8x16x8xbf16>, vector<8x16x8xbf16>, vector<8x16x8xbf16>, vector<8x16x8xbf16> -> vector<32x16x8xbf16>
    %51 = vector.extract_strided_slice %32 {offsets = [0, 64], sizes = [128, 8], strides = [1, 1]} : vector<128x96xbf16> to vector<128x8xbf16>
    %52 = vector.shape_cast %51 : vector<128x8xbf16> to vector<8x16x8xbf16>
    %53 = vector.extract_strided_slice %32 {offsets = [0, 72], sizes = [128, 8], strides = [1, 1]} : vector<128x96xbf16> to vector<128x8xbf16>
    %54 = vector.shape_cast %53 : vector<128x8xbf16> to vector<8x16x8xbf16>
    %55 = vector.extract_strided_slice %32 {offsets = [0, 80], sizes = [128, 8], strides = [1, 1]} : vector<128x96xbf16> to vector<128x8xbf16>
    %56 = vector.shape_cast %55 : vector<128x8xbf16> to vector<8x16x8xbf16>
    %57 = vector.extract_strided_slice %32 {offsets = [0, 88], sizes = [128, 8], strides = [1, 1]} : vector<128x96xbf16> to vector<128x8xbf16>
    %58 = vector.shape_cast %57 : vector<128x8xbf16> to vector<8x16x8xbf16>
    %59 = tpu.concatenate %52, %54, %56, %58 in 0 : vector<8x16x8xbf16>, vector<8x16x8xbf16>, vector<8x16x8xbf16>, vector<8x16x8xbf16> -> vector<32x16x8xbf16>
    "tpu.trace_start"() <{level = 10 : i32, message = "bnd,bmd->bnm"}> : () -> ()
    %cst_15 = arith.constant dense<0.000000e+00> : vector<32x16x16xf32>
    %60 = tpu.matmul %41, %50, %cst_15 {dimension_numbers = #tpu.dot_dimension_numbers<[2], [2], [1], [1], [0, 0, 0, 1, 1, 1], [0], [0]>} : vector<32x16x8xbf16>, vector<32x16x8xbf16>, vector<32x16x16xf32> -> vector<32x16x16xf32>
    "tpu.trace_stop"() : () -> ()
    %61 = vector.shape_cast %60 : vector<32x16x16xf32> to vector<4x8x16x16xf32>
    %c0_16 = arith.constant 0 : index
    %c0_17 = arith.constant 0 : index
    %c0_18 = arith.constant 0 : index
    %62 = vector.load %arg2[%c0_16, %c0_17, %c0_18] : memref<4x16x16xf32, #tpu.memory_space<vmem>>, vector<4x16x16xf32>
    %63 = vector.shape_cast %62 : vector<4x16x16xf32> to vector<4x1x16x16xf32>
    %64 = vector.broadcast %63 : vector<4x1x16x16xf32> to vector<4x8x16x16xf32>
    %65 = arith.addf %61, %64 : vector<4x8x16x16xf32>
    %cst_19 = arith.constant dense<0xFF800000> : vector<4x8x16xf32>
    %66 = vector.multi_reduction <maximumf>, %65, %cst_19 [3] : vector<4x8x16x16xf32> to vector<4x8x16xf32>
    %67 = vector.shape_cast %66 : vector<4x8x16xf32> to vector<4x8x16x1xf32>
    %68 = vector.broadcast %67 : vector<4x8x16x1xf32> to vector<4x8x16x16xf32>
    %69 = arith.subf %65, %68 : vector<4x8x16x16xf32>
    %70 = math.exp %69 : vector<4x8x16x16xf32>
    %cst_20 = arith.constant dense<0.000000e+00> : vector<4x8x16xf32>
    %71 = vector.multi_reduction <add>, %70, %cst_20 [3] : vector<4x8x16x16xf32> to vector<4x8x16xf32>
    %72 = vector.shape_cast %71 : vector<4x8x16xf32> to vector<4x8x16x1xf32>
    %73 = tpu.reciprocal %72 {approx = true} : vector<4x8x16x1xf32> -> vector<4x8x16x1xf32>
    %74 = vector.broadcast %73 : vector<4x8x16x1xf32> to vector<4x8x16x16xf32>
    %75 = arith.mulf %70, %74 : vector<4x8x16x16xf32>
    %c0_21 = arith.constant 0 : index
    %c0_22 = arith.constant 0 : index
    %c0_23 = arith.constant 0 : index
    %c0_24 = arith.constant 0 : index
    %76 = vector.load %arg16[%c0_21, %c0_22, %c0_23, %c0_24] : memref<4x8x16x16xf32, #tpu.memory_space<vmem>>, vector<4x8x16x16xf32>
    tpu.vector_store %arg16[%c0_21, %c0_22, %c0_23, %c0_24], %75 {strides = array<i32>} : memref<4x8x16x16xf32, #tpu.memory_space<vmem>>, vector<4x8x16x16xf32>,
    %77 = vector.shape_cast %75 : vector<4x8x16x16xf32> to vector<32x16x16xf32>
    %78 = arith.truncf %77 : vector<32x16x16xf32> to vector<32x16x16xbf16>
    "tpu.trace_start"() <{level = 10 : i32, message = "bnm,bmd->bnd"}> : () -> ()
    %cst_25 = arith.constant dense<0.000000e+00> : vector<32x16x8xf32>
    %79 = tpu.matmul %78, %59, %cst_25 {dimension_numbers = #tpu.dot_dimension_numbers<[2], [1], [1], [2], [0, 0, 0, 1, 1, 2], [0], [0]>} : vector<32x16x16xbf16>, vector<32x16x8xbf16>, vector<32x16x8xf32> -> vector<32x16x8xf32>
    "tpu.trace_stop"() : () -> ()
    %80 = vector.extract_strided_slice %79 {offsets = [0, 0, 0], sizes = [8, 16, 8], strides = [1, 1, 1]} : vector<32x16x8xf32> to vector<8x16x8xf32>
    %81 = vector.shape_cast %80 : vector<8x16x8xf32> to vector<128x8xf32>
    %82 = vector.extract_strided_slice %79 {offsets = [8, 0, 0], sizes = [8, 16, 8], strides = [1, 1, 1]} : vector<32x16x8xf32> to vector<8x16x8xf32>
    %83 = vector.shape_cast %82 : vector<8x16x8xf32> to vector<128x8xf32>
    %84 = vector.extract_strided_slice %79 {offsets = [16, 0, 0], sizes = [8, 16, 8], strides = [1, 1, 1]} : vector<32x16x8xf32> to vector<8x16x8xf32>
    %85 = vector.shape_cast %84 : vector<8x16x8xf32> to vector<128x8xf32>
    %86 = vector.extract_strided_slice %79 {offsets = [24, 0, 0], sizes = [8, 16, 8], strides = [1, 1, 1]} : vector<32x16x8xf32> to vector<8x16x8xf32>
    %87 = vector.shape_cast %86 : vector<8x16x8xf32> to vector<128x8xf32>
    %88 = tpu.concatenate %81, %83, %85, %87 in 1 : vector<128x8xf32>, vector<128x8xf32>, vector<128x8xf32>, vector<128x8xf32> -> vector<128x32xf32>
    %89 = arith.truncf %88 : vector<128x32xf32> to vector<128x32xbf16>
    %c0_26 = arith.constant 0 : index
    %c0_27 = arith.constant 0 : index
    %90 = vector.load %arg7[%c0_26, %c0_27] : memref<32x32xbf16, #tpu.memory_space<vmem>>, vector<32x32xbf16>
    %cst_28 = arith.constant dense<0.000000e+00> : vector<128x32xf32>
    %91 = tpu.matmul %89, %90, %cst_28 {dimension_numbers = #tpu.dot_dimension_numbers<[1], [0], [0], [1], [0, 0, 1, 1], [], []>} : vector<128x32xbf16>, vector<32x32xbf16>, vector<128x32xf32> -> vector<128x32xf32>
    %c0_29 = arith.constant 0 : index
    %c0_30 = arith.constant 0 : index
    %92 = vector.load %arg8[%c0_29, %c0_30] : memref<1x32xf32, #tpu.memory_space<vmem>>, vector<1x32xf32>
    %93 = vector.broadcast %92 : vector<1x32xf32> to vector<128x32xf32>
    %94 = arith.addf %91, %93 : vector<128x32xf32>
    %95 = arith.addf %1, %94 : vector<128x32xf32>
    %cst_31 = arith.constant dense<0.000000e+00> : vector<128xf32>
    %96 = vector.multi_reduction <add>, %95, %cst_31 [1] : vector<128x32xf32> to vector<128xf32>
    %97 = vector.shape_cast %96 : vector<128xf32> to vector<128x1xf32>
    %cst_32 = arith.constant 3.200000e+01 : f32
    %98 = vector.broadcast %cst_32 : f32 to vector<128x1xf32>
    %99 = arith.divf %97, %98 : vector<128x1xf32>
    %100 = vector.broadcast %99 : vector<128x1xf32> to vector<128x32xf32>
    %101 = arith.subf %95, %100 : vector<128x32xf32>
    %102 = arith.mulf %101, %101 : vector<128x32xf32>
    %cst_33 = arith.constant dense<0.000000e+00> : vector<128xf32>
    %103 = vector.multi_reduction <add>, %102, %cst_33 [1] : vector<128x32xf32> to vector<128xf32>
    %104 = vector.shape_cast %103 : vector<128xf32> to vector<128x1xf32>
    %cst_34 = arith.constant 3.200000e+01 : f32
    %105 = vector.broadcast %cst_34 : f32 to vector<128x1xf32>
    %106 = arith.divf %104, %105 : vector<128x1xf32>
    %107 = vector.broadcast %99 : vector<128x1xf32> to vector<128x32xf32>
    %108 = arith.subf %95, %107 : vector<128x32xf32>
    %cst_35 = arith.constant 9.99999974E-6 : f32
    %109 = vector.broadcast %cst_35 : f32 to vector<128x1xf32>
    %110 = arith.addf %106, %109 : vector<128x1xf32>
    %111 = math.rsqrt %110 : vector<128x1xf32>
    %112 = vector.broadcast %111 : vector<128x1xf32> to vector<128x32xf32>
    %113 = arith.mulf %108, %112 : vector<128x32xf32>
    %c0_36 = arith.constant 0 : index
    %c0_37 = arith.constant 0 : index
    %114 = vector.load %arg9[%c0_36, %c0_37] : memref<1x32xf32, #tpu.memory_space<vmem>>, vector<1x32xf32>
    %115 = vector.broadcast %114 : vector<1x32xf32> to vector<128x32xf32>
    %116 = arith.mulf %113, %115 : vector<128x32xf32>
    %c0_38 = arith.constant 0 : index
    %c0_39 = arith.constant 0 : index
    %117 = vector.load %arg10[%c0_38, %c0_39] : memref<1x32xf32, #tpu.memory_space<vmem>>, vector<1x32xf32>
    %118 = vector.broadcast %117 : vector<1x32xf32> to vector<128x32xf32>
    %119 = arith.addf %116, %118 : vector<128x32xf32>
    %120 = arith.truncf %119 : vector<128x32xf32> to vector<128x32xbf16>
    %c0_40 = arith.constant 0 : index
    %c0_41 = arith.constant 0 : index
    %121 = vector.load %arg11[%c0_40, %c0_41] : memref<32x128xbf16, #tpu.memory_space<vmem>>, vector<32x128xbf16>
    %cst_42 = arith.constant dense<0.000000e+00> : vector<128x128xf32>
    %122 = tpu.matmul %120, %121, %cst_42 {dimension_numbers = #tpu.dot_dimension_numbers<[1], [0], [0], [1], [0, 0, 1, 1], [], []>} : vector<128x32xbf16>, vector<32x128xbf16>, vector<128x128xf32> -> vector<128x128xf32>
    %c0_43 = arith.constant 0 : index
    %c0_44 = arith.constant 0 : index
    %123 = vector.load %arg12[%c0_43, %c0_44] : memref<1x128xf32, #tpu.memory_space<vmem>>, vector<1x128xf32>
    %124 = vector.broadcast %123 : vector<1x128xf32> to vector<128x128xf32>
    %125 = arith.addf %122, %124 : vector<128x128xf32>
    %cst_45 = arith.constant 5.000000e-01 : f32
    %126 = vector.broadcast %cst_45 : f32 to vector<128x128xf32>
    %127 = arith.mulf %126, %125 : vector<128x128xf32>
    %cst_46 = arith.constant 4.471500e-02 : f32
    %128 = vector.broadcast %cst_46 : f32 to vector<128x128xf32>
    %129 = arith.mulf %128, %125 : vector<128x128xf32>
    %130 = arith.mulf %129, %125 : vector<128x128xf32>
    %131 = arith.mulf %130, %125 : vector<128x128xf32>
    %132 = arith.addf %125, %131 : vector<128x128xf32>
    %cst_47 = arith.constant 0.797884583 : f32
    %133 = vector.broadcast %cst_47 : f32 to vector<128x128xf32>
    %134 = arith.mulf %133, %132 : vector<128x128xf32>
    %135 = math.tanh %134 : vector<128x128xf32>
    %cst_48 = arith.constant 1.000000e+00 : f32
    %136 = vector.broadcast %cst_48 : f32 to vector<128x128xf32>
    %137 = arith.addf %136, %135 : vector<128x128xf32>
    %138 = arith.mulf %127, %137 : vector<128x128xf32>
    %139 = arith.truncf %138 : vector<128x128xf32> to vector<128x128xbf16>
    %c0_49 = arith.constant 0 : index
    %c0_50 = arith.constant 0 : index
    %140 = vector.load %arg13[%c0_49, %c0_50] : memref<128x32xbf16, #tpu.memory_space<vmem>>, vector<128x32xbf16>
    %cst_51 = arith.constant dense<0.000000e+00> : vector<128x32xf32>
    %141 = tpu.matmul %139, %140, %cst_51 {dimension_numbers = #tpu.dot_dimension_numbers<[1], [0], [0], [1], [0, 0, 1, 1], [], []>} : vector<128x128xbf16>, vector<128x32xbf16>, vector<128x32xf32> -> vector<128x32xf32>
    %c0_52 = arith.constant 0 : index
    %c0_53 = arith.constant 0 : index
    %142 = vector.load %arg14[%c0_52, %c0_53] : memref<1x32xf32, #tpu.memory_space<vmem>>, vector<1x32xf32>
    %143 = vector.broadcast %142 : vector<1x32xf32> to vector<128x32xf32>
    %144 = arith.addf %141, %143 : vector<128x32xf32>
    %145 = arith.addf %95, %144 : vector<128x32xf32>
    %146 = vector.shape_cast %145 : vector<128x32xf32> to vector<8x16x32xf32>
    %c0_54 = arith.constant 0 : index
    %c0_55 = arith.constant 0 : index
    %c0_56 = arith.constant 0 : index
    %147 = vector.load %arg15[%c0_54, %c0_55, %c0_56] : memref<8x16x32xf32, #tpu.memory_space<vmem>>, vector<8x16x32xf32>
    tpu.vector_store %arg15[%c0_54, %c0_55, %c0_56], %146 {strides = array<i32>} : memref<8x16x32xf32, #tpu.memory_space<vmem>>, vector<8x16x32xf32>,
    return
  }
  func.func @transform_0(%arg0: i32) -> (i32, i32, i32) {
    %c0_i32 = arith.constant 0 : i32
    %c0_i32_0 = arith.constant 0 : i32
    %c0_i32_1 = arith.constant 0 : i32
    return %arg0, %c0_i32, %c0_i32_0 : i32, i32, i32
  }
  func.func @transform_1(%arg0: i32) -> (i32, i32, i32) {
    %c0_i32 = arith.constant 0 : i32
    %c0_i32_0 = arith.constant 0 : i32
    %c0_i32_1 = arith.constant 0 : i32
    %c0_i32_2 = arith.constant 0 : i32
    return %c0_i32, %c0_i32_0, %c0_i32_1 : i32, i32, i32
  }
  func.func @transform_2(%arg0: i32) -> (i32, i32) {
    %c0_i32 = arith.constant 0 : i32
    %c0_i32_0 = arith.constant 0 : i32
    %c0_i32_1 = arith.constant 0 : i32
    return %c0_i32, %c0_i32_0 : i32, i32
  }
  func.func @transform_3(%arg0: i32) -> (i32, i32) {
    %c0_i32 = arith.constant 0 : i32
    %c0_i32_0 = arith.constant 0 : i32
    %c0_i32_1 = arith.constant 0 : i32
    return %c0_i32, %c0_i32_0 : i32, i32
  }
  func.func @transform_4(%arg0: i32) -> (i32, i32) {
    %c0_i32 = arith.constant 0 : i32
    %c0_i32_0 = arith.constant 0 : i32
    %c0_i32_1 = arith.constant 0 : i32
    return %c0_i32, %c0_i32_0 : i32, i32
  }
  func.func @transform_5(%arg0: i32) -> (i32, i32) {
    %c0_i32 = arith.constant 0 : i32
    %c0_i32_0 = arith.constant 0 : i32
    %c0_i32_1 = arith.constant 0 : i32
    return %c0_i32, %c0_i32_0 : i32, i32
  }
  func.func @transform_6(%arg0: i32) -> (i32, i32) {
    %c0_i32 = arith.constant 0 : i32
    %c0_i32_0 = arith.constant 0 : i32
    %c0_i32_1 = arith.constant 0 : i32
    return %c0_i32, %c0_i32_0 : i32, i32
  }
  func.func @transform_7(%arg0: i32) -> (i32, i32) {
    %c0_i32 = arith.constant 0 : i32
    %c0_i32_0 = arith.constant 0 : i32
    %c0_i32_1 = arith.constant 0 : i32
    return %c0_i32, %c0_i32_0 : i32, i32
  }
  func.func @transform_8(%arg0: i32) -> (i32, i32) {
    %c0_i32 = arith.constant 0 : i32
    %c0_i32_0 = arith.constant 0 : i32
    %c0_i32_1 = arith.constant 0 : i32
    return %c0_i32, %c0_i32_0 : i32, i32
  }
  func.func @transform_9(%arg0: i32) -> (i32, i32) {
    %c0_i32 = arith.constant 0 : i32
    %c0_i32_0 = arith.constant 0 : i32
    %c0_i32_1 = arith.constant 0 : i32
    return %c0_i32, %c0_i32_0 : i32, i32
  }
  func.func @transform_10(%arg0: i32) -> (i32, i32) {
    %c0_i32 = arith.constant 0 : i32
    %c0_i32_0 = arith.constant 0 : i32
    %c0_i32_1 = arith.constant 0 : i32
    return %c0_i32, %c0_i32_0 : i32, i32
  }
  func.func @transform_11(%arg0: i32) -> (i32, i32) {
    %c0_i32 = arith.constant 0 : i32
    %c0_i32_0 = arith.constant 0 : i32
    %c0_i32_1 = arith.constant 0 : i32
    return %c0_i32, %c0_i32_0 : i32, i32
  }
  func.func @transform_12(%arg0: i32) -> (i32, i32) {
    %c0_i32 = arith.constant 0 : i32
    %c0_i32_0 = arith.constant 0 : i32
    %c0_i32_1 = arith.constant 0 : i32
    return %c0_i32, %c0_i32_0 : i32, i32
  }
  func.func @transform_13(%arg0: i32) -> (i32, i32) {
    %c0_i32 = arith.constant 0 : i32
    %c0_i32_0 = arith.constant 0 : i32
    %c0_i32_1 = arith.constant 0 : i32
    return %c0_i32, %c0_i32_0 : i32, i32
  }
  func.func @transform_14(%arg0: i32) -> (i32, i32, i32) {
    %c0_i32 = arith.constant 0 : i32
    %c0_i32_0 = arith.constant 0 : i32
    %c0_i32_1 = arith.constant 0 : i32
    return %arg0, %c0_i32, %c0_i32_0 : i32, i32, i32
  }
  func.func @transform_15(%arg0: i32) -> (i32, i32, i32, i32) {
    %c0_i32 = arith.constant 0 : i32
    %c0_i32_0 = arith.constant 0 : i32
    %c0_i32_1 = arith.constant 0 : i32
    %c0_i32_2 = arith.constant 0 : i32
    return %c0_i32, %arg0, %c0_i32_0, %c0_i32_1 : i32, i32, i32, i32
  }
}

</mosaic_0001>

<llo_original>
// kernel: sub.15
$region0: #{sub.15}
  %s0 = inlined_call_operand.vmem [shape: s32[2,4,4], index: 0, kind: input, shape index: {}]
  %s1 = inlined_call_operand.vmem [shape: s32[2,16], index: 1, kind: output, shape index: {}]
  $region1: #{sub.15} parent=0
    #allocation0 [shape = 'u8[4096]{0}', space=vmem, size = 0x1000, scoped, tag = 'scoped mem for output reshape']
    #allocation1 [shape = 'u8[8192]{0}', space=vmem, size = 0x2000, scoped, tag = 'scoped mem for input reshape']
    %s3 = sshllo.u32 0, 4
    %s4 = scalar_lea.vmem %s0, 4
    %v5 = vld [vmem:[%s4] sm:%s3]
    %s6 = scalar_lea.vmem [#allocation1], 8
    %7 = vst [vmem:[%s6] sm:%s3] %v5
    %v8 = vld [vmem:[%s0] sm:%s3]
    %9 = vst [vmem:[#allocation1] sm:%s3] %v8
    %s10 = smov 3
    %v11 = vld [vmem:[#allocation1] ss:$8 sm:%s10]
    %vm12 = vcmask 31744
    %13 = vst.msk [vmem:[#allocation0] sm:$0x3] %vm12, %v11
    %s14 = scalar_lea.vmem [#allocation1], 3
    %s15 = smov 3
    %v16 = vld [vmem:[%s14] ss:$8 sm:%s15]
    %17 = vrot.lane.b32.xlu0 %v16, 12
    %v18 = vpop.permute.xlu0 %17
    %vm19 = vcmask 130144
    %20 = vst.msk [vmem:[#allocation0] sm:$0x3] %vm19, %v18
    %s21 = scalar_lea.vmem [#allocation1], 2
    %s22 = smov 3
    %v23 = vld [vmem:[%s21] ss:$8 sm:%s22]
    %24 = vrot.lane.b32.xlu0 %v23, 8
    %v25 = vpop.permute.xlu0 %24
    %vm26 = vcmask 97344
    %27 = vst.msk [vmem:[#allocation0] sm:$0x3] %vm26, %v25
    %s28 = scalar_lea.vmem [#allocation1], 1
    %s29 = smov 3
    %v30 = vld [vmem:[%s28] ss:$8 sm:%s29]
    %31 = vrot.lane.b32.xlu0 %v30, 4
    %v32 = vpop.permute.xlu0 %31
    %vm33 = vcmask 64544
    %34 = vst.msk [vmem:[#allocation0] sm:$0x3] %vm33, %v32
    %s36 = sshllo.u32 0, 2
    %v38 = vld [vmem:[#allocation0] sm:%s36]
    %s39 = sshllo.u32 0, 2
    %40 = vst [vmem:[%s1] sm:%s39] %v38

// kernel: maxvit_block.3
$region0: #{maxvit_block.3}
  #allocation0 [shape = 'u32[]', space=smem, size = 0x4, offset = 0x4, fixed_abs, tag = 'smem constant byte address 0x4 - core index']
  #allocation1 [shape = 'u32[144,128]{1,0:T(1,128)}', space=vmem, size = 0x12000, scoped, tag = 'internal scratch']
  #allocation2 [shape = 'f32[2,10,8,32]{3,2,1,0:T(8,128)}', space=vmem, size = 0x14000, scoped, tag = 'scratch operand']
  %s0 = inlined_call_operand.vmem [shape: f32[2,8,8,32], index: 0, kind: input, shape index: {}]
  %s1 = inlined_call_operand.vmem [shape: bf16[32,32], index: 1, kind: input, shape index: {}]
  %s2 = inlined_call_operand.vmem [shape: f32[1,32], index: 2, kind: input, shape index: {}]
  %s3 = inlined_call_operand.vmem [shape: f32[9,32], index: 3, kind: input, shape index: {}]
  %s4 = inlined_call_operand.vmem [shape: f32[1,32], index: 4, kind: input, shape index: {}]
  %s5 = inlined_call_operand.vmem [shape: bf16[32,32], index: 5, kind: input, shape index: {}]
  %s6 = inlined_call_operand.vmem [shape: f32[1,32], index: 6, kind: input, shape index: {}]
  %s7 = inlined_call_operand.vmem [shape: f32[32,8], index: 7, kind: input, shape index: {}]
  %s8 = inlined_call_operand.vmem [shape: f32[1,8], index: 8, kind: input, shape index: {}]
  %s9 = inlined_call_operand.vmem [shape: f32[8,32], index: 9, kind: input, shape index: {}]
  %s10 = inlined_call_operand.vmem [shape: f32[1,32], index: 10, kind: input, shape index: {}]
  %s11 = inlined_call_operand.vmem [shape: bf16[32,32], index: 11, kind: input, shape index: {}]
  %s12 = inlined_call_operand.vmem [shape: f32[1,32], index: 12, kind: input, shape index: {}]
  %s13 = inlined_call_operand.vmem [shape: f32[2,8,8,32], index: 13, kind: output, shape index: {}]
  %s14 = sld [smem:[#allocation0]]
  $region62: #{maxvit_block.3} parent=0
    _
  %s16 = ssub.s32 1, %s14
  %s17 = scalar_select 0, %s16, %s14
  // Predicated region
  $region2: #{maxvit_block.3} parent=0 // pred_check
    _
  $region3: #{maxvit_block.3} parent=0 // pred_check_branch
    %19 = sbr.rel (0) target = $region5
  $region4: #{maxvit_block.3} parent=0 // pred_region
    _
  $region5: #{maxvit_block.3} parent=0 // pred_fallthru
    _
  // Predicated region
  $region6: #{maxvit_block.3} parent=0 // pred_check
    _
  $region7: #{maxvit_block.3} parent=0 // pred_check_branch
    %21 = sbr.rel (0) target = $region9
  $region8: #{maxvit_block.3} parent=0 // pred_region
    _
  $region9: #{maxvit_block.3} parent=0 // pred_fallthru
    _
  // Predicated region
  $region10: #{maxvit_block.3} parent=0 // pred_check
    _
  $region11: #{maxvit_block.3} parent=0 // pred_check_branch
    %23 = sbr.rel (0) target = $region13
  $region12: #{maxvit_block.3} parent=0 // pred_region
    _
  $region13: #{maxvit_block.3} parent=0 // pred_fallthru
    _
  // Predicated region
  $region14: #{maxvit_block.3} parent=0 // pred_check
    _
  $region15: #{maxvit_block.3} parent=0 // pred_check_branch
    %25 = sbr.rel (0) target = $region17
  $region16: #{maxvit_block.3} parent=0 // pred_region
    _
  $region17: #{maxvit_block.3} parent=0 // pred_fallthru
    _
  // Predicated region
  $region18: #{maxvit_block.3} parent=0 // pred_check
    _
  $region19: #{maxvit_block.3} parent=0 // pred_check_branch
    %27 = sbr.rel (0) target = $region21
  $region20: #{maxvit_block.3} parent=0 // pred_region
    _
  $region21: #{maxvit_block.3} parent=0 // pred_fallthru
    _
  // Predicated region
  $region22: #{maxvit_block.3} parent=0 // pred_check
    _
  $region23: #{maxvit_block.3} parent=0 // pred_check_branch
    %29 = sbr.rel (0) target = $region25
  $region24: #{maxvit_block.3} parent=0 // pred_region
    _
  $region25: #{maxvit_block.3} parent=0 // pred_fallthru
    _
  // Predicated region
  $region26: #{maxvit_block.3} parent=0 // pred_check
    _
  $region27: #{maxvit_block.3} parent=0 // pred_check_branch
    %31 = sbr.rel (0) target = $region29
  $region28: #{maxvit_block.3} parent=0 // pred_region
    _
  $region29: #{maxvit_block.3} parent=0 // pred_fallthru
    _
  // Predicated region
  $region30: #{maxvit_block.3} parent=0 // pred_check
    _
  $region31: #{maxvit_block.3} parent=0 // pred_check_branch
    %33 = sbr.rel (0) target = $region33
  $region32: #{maxvit_block.3} parent=0 // pred_region
    _
  $region33: #{maxvit_block.3} parent=0 // pred_fallthru
    _
  // Predicated region
  $region34: #{maxvit_block.3} parent=0 // pred_check
    _
  $region35: #{maxvit_block.3} parent=0 // pred_check_branch
    %35 = sbr.rel (0) target = $region37
  $region36: #{maxvit_block.3} parent=0 // pred_region
    _
  $region37: #{maxvit_block.3} parent=0 // pred_fallthru
    _
  // Predicated region
  $region38: #{maxvit_block.3} parent=0 // pred_check
    _
  $region39: #{maxvit_block.3} parent=0 // pred_check_branch
    %37 = sbr.rel (0) target = $region41
  $region40: #{maxvit_block.3} parent=0 // pred_region
    _
  $region41: #{maxvit_block.3} parent=0 // pred_fallthru
    _
  // Predicated region
  $region42: #{maxvit_block.3} parent=0 // pred_check
    _
  $region43: #{maxvit_block.3} parent=0 // pred_check_branch
    %39 = sbr.rel (0) target = $region45
  $region44: #{maxvit_block.3} parent=0 // pred_region
    _
  $region45: #{maxvit_block.3} parent=0 // pred_fallthru
    _
  // Predicated region
  $region46: #{maxvit_block.3} parent=0 // pred_check
    _
  $region47: #{maxvit_block.3} parent=0 // pred_check_branch
    %41 = sbr.rel (0) target = $region49
  $region48: #{maxvit_block.3} parent=0 // pred_region
    _
  $region49: #{maxvit_block.3} parent=0 // pred_fallthru
    _
  // Predicated region
  $region50: #{maxvit_block.3} parent=0 // pred_check
    _
  $region51: #{maxvit_block.3} parent=0 // pred_check_branch
    %43 = sbr.rel (0) target = $region53
  $region52: #{maxvit_block.3} parent=0 // pred_region
    _
  $region53: #{maxvit_block.3} parent=0 // pred_fallthru
    _
  %v45 = vld [vmem:[%s0] sm:$0xff]
  %v46 = vld [vmem:[%s0 + $0x8] sm:$0xff]
  %v47 = vld [vmem:[%s0 + $0x10] sm:$0xff]
  %v48 = vld [vmem:[%s0 + $0x18] sm:$0xff]
  %v49 = vld [vmem:[%s0 + $0x20] sm:$0xff]
  %v50 = vld [vmem:[%s0 + $0x28] sm:$0xff]
  %v51 = vld [vmem:[%s0 + $0x30] sm:$0xff]
  %v52 = vld [vmem:[%s0 + $0x38] sm:$0xff]
  %v53 = vld [vmem:[%s0 + $0x40] sm:$0xff]
  %v54 = vld [vmem:[%s0 + $0x48] sm:$0xff]
  %v55 = vld [vmem:[%s0 + $0x50] sm:$0xff]
  %v56 = vld [vmem:[%s0 + $0x58] sm:$0xff]
  %v57 = vld [vmem:[%s0 + $0x60] sm:$0xff]
  %v58 = vld [vmem:[%s0 + $0x68] sm:$0xff]
  %v59 = vld [vmem:[%s0 + $0x70] sm:$0xff]
  %v60 = vld [vmem:[%s0 + $0x78] sm:$0xff]
  %v61 = vpack.c.bf16 %v46, %v45
  %v62 = vpack.c.bf16 %v48, %v47
  %v63 = vpack.c.bf16 %v50, %v49
  %v64 = vpack.c.bf16 %v52, %v51
  %v65 = vpack.c.bf16 %v54, %v53
  %v66 = vpack.c.bf16 %v56, %v55
  %v67 = vpack.c.bf16 %v58, %v57
  %v68 = vpack.c.bf16 %v60, %v59
  %v69 = vld [vmem:[%s1] sm:$0xf]
  %v70 = vld [vmem:[%s1 + $0x4] sm:$0xf]
  %v71 = vld [vmem:[%s1 + $0x8] sm:$0xf]
  %v72 = vld [vmem:[%s1 + $0xc] sm:$0xf]
  %v73 = vld [vmem:[%s2] sm:$0x1]
  %v75 = vlaneseq
  %v76 = vshrl.u32 %v75, 7
  %v77 = vsub.s32 0, %v76
  %v78 = vrot.slane %v73, %v77
  %v84 = vunpack.c.l.b16 %v69
  %v85 = vunpack.c.l.b16 %v70
  %v86 = vunpack.c.l.b16 %v71
  %v87 = vunpack.c.l.b16 %v72
  %v88 = vpack.c.b16 %v85, %v84
  %v89 = vpack.c.b16 %v87, %v86
  %vm92 = vcmask 261120
  %v94 = vsel %vm92, %v61, 0
  %v97 = vsel %vm92, %v62, 0
  %v100 = vsel %vm92, %v63, 0
  %v103 = vsel %vm92, %v64, 0
  %v106 = vsel %vm92, %v65, 0
  %v109 = vsel %vm92, %v66, 0
  %v112 = vsel %vm92, %v67, 0
  %v115 = vsel %vm92, %v68, 0
  %117 = vmatprep.subr.bf16.mxu0 0
  %118 = vmatpush1.bf16.msra.mxu0 %v88
  %119 = vmatprep.subr.bf16.mxu0 0
  %120 = vmatpush1.bf16.msra.mxu0 %v89
  %121 = vmatprep.subr.bf16.mxu0 0
  %122 = vmatpush1.bf16.msra.mxu0 0
  %123 = vmatprep.subr.bf16.mxu0 0
  %124 = vmatpush1.bf16.msra.mxu0 0
  %125 = vmatprep.subr.bf16.mxu0 0
  %126 = vmatpush1.bf16.msra.mxu0 0
  %127 = vmatprep.subr.bf16.mxu0 0
  %128 = vmatpush1.bf16.msra.mxu0 0
  %129 = vmatprep.subr.bf16.mxu0 0
  %130 = vmatpush1.bf16.msra.mxu0 0
  %131 = vmatprep.subr.bf16.mxu0 0
  %132 = vmatpush1.bf16.msra.mxu0 0
  %133 = vmatprep.subr.bf16.mxu0 0
  %134 = vmatpush1.bf16.msra.mxu0 0
  %135 = vmatprep.subr.bf16.mxu0 0
  %136 = vmatpush1.bf16.msra.mxu0 0
  %137 = vmatprep.subr.bf16.mxu0 0
  %138 = vmatpush1.bf16.msra.mxu0 0
  %139 = vmatprep.subr.bf16.mxu0 0
  %140 = vmatpush1.bf16.msra.mxu0 0
  %141 = vmatprep.subr.bf16.mxu0 0
  %142 = vmatpush1.bf16.msra.mxu0 0
  %143 = vmatprep.subr.bf16.mxu0 0
  %144 = vmatpush1.bf16.msra.mxu0 0
  %145 = vmatprep.subr.bf16.mxu0 0
  %146 = vmatpush1.bf16.msra.mxu0 0
  %147 = vmatprep.subr.bf16.mxu0 0
  %148 = vmatpush1.bf16.msra.mxu0 0
  %149 = vmatprep.mubr.bf16.mxu0 0
  %150 = vmatmul.mubr.bf16.gmra.mrb[0].mxu0 %v94
  %v151 = vpop.f32.mrb[0].mxu0
  %v152 = vadd.f32 %v78, %v151
  %v153 = vpop.f32.mrb[0].mxu0
  %v154 = vpop.f32.mrb[0].mxu0
  %v155 = vadd.f32 %v78, %v154
  %v156 = vpop.f32.mrb[0].mxu0
  %157 = vmatprep.mubr.bf16.mxu0 0
  %158 = vmatmul.mubr.bf16.gmra.mrb[0].mxu0 %v97
  %v159 = vpop.f32.mrb[0].mxu0
  %v160 = vadd.f32 %v78, %v159
  %v161 = vpop.f32.mrb[0].mxu0
  %v162 = vpop.f32.mrb[0].mxu0
  %v163 = vadd.f32 %v78, %v162
  %v164 = vpop.f32.mrb[0].mxu0
  %165 = vmatprep.mubr.bf16.mxu0 0
  %166 = vmatmul.mubr.bf16.gmra.mrb[0].mxu0 %v100
  %v167 = vpop.f32.mrb[0].mxu0
  %v168 = vadd.f32 %v78, %v167
  %v169 = vpop.f32.mrb[0].mxu0
  %v170 = vpop.f32.mrb[0].mxu0
  %v171 = vadd.f32 %v78, %v170
  %v172 = vpop.f32.mrb[0].mxu0
  %173 = vmatprep.mubr.bf16.mxu0 0
  %174 = vmatmul.mubr.bf16.gmra.mrb[0].mxu0 %v103
  %v175 = vpop.f32.mrb[0].mxu0
  %v176 = vadd.f32 %v78, %v175
  %v177 = vpop.f32.mrb[0].mxu0
  %v178 = vpop.f32.mrb[0].mxu0
  %v179 = vadd.f32 %v78, %v178
  %v180 = vpop.f32.mrb[0].mxu0
  %181 = vmatprep.mubr.bf16.mxu0 0
  %182 = vmatmul.mubr.bf16.gmra.mrb[0].mxu0 %v106
  %v183 = vpop.f32.mrb[0].mxu0
  %v184 = vadd.f32 %v78, %v183
  %v185 = vpop.f32.mrb[0].mxu0
  %v186 = vpop.f32.mrb[0].mxu0
  %v187 = vadd.f32 %v78, %v186
  %v188 = vpop.f32.mrb[0].mxu0
  %189 = vmatprep.mubr.bf16.mxu0 0
  %190 = vmatmul.mubr.bf16.gmra.mrb[0].mxu0 %v109
  %v191 = vpop.f32.mrb[0].mxu0
  %v192 = vadd.f32 %v78, %v191
  %v193 = vpop.f32.mrb[0].mxu0
  %v194 = vpop.f32.mrb[0].mxu0
  %v195 = vadd.f32 %v78, %v194
  %v196 = vpop.f32.mrb[0].mxu0
  %197 = vmatprep.mubr.bf16.mxu0 0
  %198 = vmatmul.mubr.bf16.gmra.mrb[0].mxu0 %v112
  %v199 = vpop.f32.mrb[0].mxu0
  %v200 = vadd.f32 %v78, %v199
  %v201 = vpop.f32.mrb[0].mxu0
  %v202 = vpop.f32.mrb[0].mxu0
  %v203 = vadd.f32 %v78, %v202
  %v204 = vpop.f32.mrb[0].mxu0
  %205 = vmatprep.mubr.bf16.mxu0 0
  %206 = vmatmul.mubr.bf16.gmra.mrb[0].mxu0 %v115
  %v207 = vpop.f32.mrb[0].mxu0
  %v208 = vadd.f32 %v78, %v207
  %v209 = vpop.f32.mrb[0].mxu0
  %v210 = vpop.f32.mrb[0].mxu0
  %v211 = vadd.f32 %v78, %v210
  %v212 = vpop.f32.mrb[0].mxu0
  %213 = vdwg.mxu0
  %214 = vst.msk [vmem:[#allocation2] sm:$0xff] %vm92, 0.0
  %215 = vst.msk [vmem:[#allocation2 + $0x50] sm:$0xff] %vm92, 0.0
  %s216 = scalar_lea.vmem [#allocation2], 72
  %217 = vst.msk [vmem:[%s216] sm:$0xff] %vm92, 0.0
  %218 = vst.msk [vmem:[%s216 + $0x50] sm:$0xff] %vm92, 0.0
  %s219 = scalar_lea.vmem [#allocation2], 8
  %220 = vst.msk [vmem:[%s219] sm:$0xff] %vm92, %v152
  %221 = vst.msk [vmem:[%s219 + $0x8] sm:$0xff] %vm92, %v155
  %222 = vst.msk [vmem:[%s219 + $0x10] sm:$0xff] %vm92, %v160
  %223 = vst.msk [vmem:[%s219 + $0x18] sm:$0xff] %vm92, %v163
  %224 = vst.msk [vmem:[%s219 + $0x20] sm:$0xff] %vm92, %v168
  %225 = vst.msk [vmem:[%s219 + $0x28] sm:$0xff] %vm92, %v171
  %226 = vst.msk [vmem:[%s219 + $0x30] sm:$0xff] %vm92, %v176
  %227 = vst.msk [vmem:[%s219 + $0x38] sm:$0xff] %vm92, %v179
  %228 = vst.msk [vmem:[%s219 + $0x50] sm:$0xff] %vm92, %v184
  %229 = vst.msk [vmem:[%s219 + $0x58] sm:$0xff] %vm92, %v187
  %230 = vst.msk [vmem:[%s219 + $0x60] sm:$0xff] %vm92, %v192
  %231 = vst.msk [vmem:[%s219 + $0x68] sm:$0xff] %vm92, %v195
  %232 = vst.msk [vmem:[%s219 + $0x70] sm:$0xff] %vm92, %v200
  %233 = vst.msk [vmem:[%s219 + $0x78] sm:$0xff] %vm92, %v203
  %234 = vst.msk [vmem:[%s219 + $0x80] sm:$0xff] %vm92, %v208
  %235 = vst.msk [vmem:[%s219 + $0x88] sm:$0xff] %vm92, %v211
  %v236 = vld [vmem:[#allocation2] sm:$0xff]
  %v237 = vld [vmem:[#allocation2 + $0x8] sm:$0xff]
  %v238 = vld [vmem:[#allocation2 + $0x10] sm:$0xff]
  %v239 = vld [vmem:[#allocation2 + $0x18] sm:$0xff]
  %v240 = vld [vmem:[#allocation2 + $0x20] sm:$0xff]
  %v241 = vld [vmem:[#allocation2 + $0x28] sm:$0xff]
  %v242 = vld [vmem:[#allocation2 + $0x30] sm:$0xff]
  %v243 = vld [vmem:[#allocation2 + $0x38] sm:$0xff]
  %v244 = vld [vmem:[#allocation2 + $0x50] sm:$0xff]
  %v245 = vld [vmem:[#allocation2 + $0x58] sm:$0xff]
  %v246 = vld [vmem:[#allocation2 + $0x60] sm:$0xff]
  %v247 = vld [vmem:[#allocation2 + $0x68] sm:$0xff]
  %v248 = vld [vmem:[#allocation2 + $0x70] sm:$0xff]
  %v249 = vld [vmem:[#allocation2 + $0x78] sm:$0xff]
  %v250 = vld [vmem:[#allocation2 + $0x80] sm:$0xff]
  %v251 = vld [vmem:[#allocation2 + $0x88] sm:$0xff]
  %v252 = vld [vmem:[%s3] sm:$0x1]
  %v253 = vlaneseq
  %v254 = vshrl.u32 %v253, 7
  %v255 = vsub.s32 0, %v254
  %v256 = vrot.slane %v252, %v255
  %v257 = vmul.f32 %v236, %v256
  %v258 = vmul.f32 %v237, %v256
  %v259 = vmul.f32 %v238, %v256
  %v260 = vmul.f32 %v239, %v256
  %v261 = vmul.f32 %v240, %v256
  %v262 = vmul.f32 %v241, %v256
  %v263 = vmul.f32 %v242, %v256
  %v264 = vmul.f32 %v243, %v256
  %v265 = vmul.f32 %v244, %v256
  %v266 = vmul.f32 %v245, %v256
  %v267 = vmul.f32 %v246, %v256
  %v268 = vmul.f32 %v247, %v256
  %v269 = vmul.f32 %v248, %v256
  %v270 = vmul.f32 %v249, %v256
  %v271 = vmul.f32 %v250, %v256
  %v272 = vmul.f32 %v251, %v256
  %v273 = vld [vmem:[%s219] sm:$0xff]
  %v274 = vld [vmem:[%s219 + $0x8] sm:$0xff]
  %v275 = vld [vmem:[%s219 + $0x10] sm:$0xff]
  %v276 = vld [vmem:[%s219 + $0x18] sm:$0xff]
  %v277 = vld [vmem:[%s219 + $0x20] sm:$0xff]
  %v278 = vld [vmem:[%s219 + $0x28] sm:$0xff]
  %v279 = vld [vmem:[%s219 + $0x30] sm:$0xff]
  %v280 = vld [vmem:[%s219 + $0x38] sm:$0xff]
  %v281 = vld [vmem:[%s219 + $0x50] sm:$0xff]
  %v282 = vld [vmem:[%s219 + $0x58] sm:$0xff]
  %v283 = vld [vmem:[%s219 + $0x60] sm:$0xff]
  %v284 = vld [vmem:[%s219 + $0x68] sm:$0xff]
  %v285 = vld [vmem:[%s219 + $0x70] sm:$0xff]
  %v286 = vld [vmem:[%s219 + $0x78] sm:$0xff]
  %v287 = vld [vmem:[%s219 + $0x80] sm:$0xff]
  %v288 = vld [vmem:[%s219 + $0x88] sm:$0xff]
  %v289 = vld [vmem:[%s3 + $0x3] sm:$0x1]
  %v290 = vlaneseq
  %v291 = vshrl.u32 %v290, 7
  %v292 = vsub.s32 0, %v291
  %v293 = vrot.slane %v289, %v292
  %v294 = vmul.f32 %v273, %v293
  %v295 = vmul.f32 %v274, %v293
  %v296 = vmul.f32 %v275, %v293
  %v297 = vmul.f32 %v276, %v293
  %v298 = vmul.f32 %v277, %v293
  %v299 = vmul.f32 %v278, %v293
  %v300 = vmul.f32 %v279, %v293
  %v301 = vmul.f32 %v280, %v293
  %v302 = vmul.f32 %v281, %v293
  %v303 = vmul.f32 %v282, %v293
  %v304 = vmul.f32 %v283, %v293
  %v305 = vmul.f32 %v284, %v293
  %v306 = vmul.f32 %v285, %v293
  %v307 = vmul.f32 %v286, %v293
  %v308 = vmul.f32 %v287, %v293
  %v309 = vmul.f32 %v288, %v293
  %v310 = vadd.f32 %v257, %v294
  %v311 = vadd.f32 %v258, %v295
  %v312 = vadd.f32 %v259, %v296
  %v313 = vadd.f32 %v260, %v297
  %v314 = vadd.f32 %v261, %v298
  %v315 = vadd.f32 %v262, %v299
  %v316 = vadd.f32 %v263, %v300
  %v317 = vadd.f32 %v264, %v301
  %v318 = vadd.f32 %v265, %v302
  %v319 = vadd.f32 %v266, %v303
  %v320 = vadd.f32 %v267, %v304
  %v321 = vadd.f32 %v268, %v305
  %v322 = vadd.f32 %v269, %v306
  %v323 = vadd.f32 %v270, %v307
  %v324 = vadd.f32 %v271, %v308
  %v325 = vadd.f32 %v272, %v309
  %s326 = scalar_lea.vmem [#allocation2], 16
  %v327 = vld [vmem:[%s326] sm:$0xff]
  %v328 = vld [vmem:[%s326 + $0x8] sm:$0xff]
  %v329 = vld [vmem:[%s326 + $0x10] sm:$0xff]
  %v330 = vld [vmem:[%s326 + $0x18] sm:$0xff]
  %v331 = vld [vmem:[%s326 + $0x20] sm:$0xff]
  %v332 = vld [vmem:[%s326 + $0x28] sm:$0xff]
  %v333 = vld [vmem:[%s326 + $0x30] sm:$0xff]
  %v334 = vld [vmem:[%s326 + $0x38] sm:$0xff]
  %v335 = vld [vmem:[%s326 + $0x50] sm:$0xff]
  %v336 = vld [vmem:[%s326 + $0x58] sm:$0xff]
  %v337 = vld [vmem:[%s326 + $0x60] sm:$0xff]
  %v338 = vld [vmem:[%s326 + $0x68] sm:$0xff]
  %v339 = vld [vmem:[%s326 + $0x70] sm:$0xff]
  %v340 = vld [vmem:[%s326 + $0x78] sm:$0xff]
  %v341 = vld [vmem:[%s326 + $0x80] sm:$0xff]
  %v342 = vld [vmem:[%s326 + $0x88] sm:$0xff]
  %v343 = vld [vmem:[%s3 + $0x6] sm:$0x1]
  %v344 = vlaneseq
  %v345 = vshrl.u32 %v344, 7
  %v346 = vsub.s32 0, %v345
  %v347 = vrot.slane %v343, %v346
  %v348 = vmul.f32 %v327, %v347
  %v349 = vmul.f32 %v328, %v347
  %v350 = vmul.f32 %v329, %v347
  %v351 = vmul.f32 %v330, %v347
  %v352 = vmul.f32 %v331, %v347
  %v353 = vmul.f32 %v332, %v347
  %v354 = vmul.f32 %v333, %v347
  %v355 = vmul.f32 %v334, %v347
  %v356 = vmul.f32 %v335, %v347
  %v357 = vmul.f32 %v336, %v347
  %v358 = vmul.f32 %v337, %v347
  %v359 = vmul.f32 %v338, %v347
  %v360 = vmul.f32 %v339, %v347
  %v361 = vmul.f32 %v340, %v347
  %v362 = vmul.f32 %v341, %v347
  %v363 = vmul.f32 %v342, %v347
  %v364 = vadd.f32 %v310, %v348
  %v365 = vadd.f32 %v311, %v349
  %v366 = vadd.f32 %v312, %v350
  %v367 = vadd.f32 %v313, %v351
  %v368 = vadd.f32 %v314, %v352
  %v369 = vadd.f32 %v315, %v353
  %v370 = vadd.f32 %v316, %v354
  %v371 = vadd.f32 %v317, %v355
  %v372 = vadd.f32 %v318, %v356
  %v373 = vadd.f32 %v319, %v357
  %v374 = vadd.f32 %v320, %v358
  %v375 = vadd.f32 %v321, %v359
  %v376 = vadd.f32 %v322, %v360
  %v377 = vadd.f32 %v323, %v361
  %v378 = vadd.f32 %v324, %v362
  %v379 = vadd.f32 %v325, %v363
  %v380 = vld [vmem:[%s3 + $0x1] sm:$0x1]
  %v381 = vlaneseq
  %v382 = vshrl.u32 %v381, 7
  %v383 = vsub.s32 0, %v382
  %v384 = vrot.slane %v380, %v383
  %v385 = vmul.f32 %v236, %v384
  %v386 = vmul.f32 %v237, %v384
  %v387 = vmul.f32 %v238, %v384
  %v388 = vmul.f32 %v239, %v384
  %v389 = vmul.f32 %v240, %v384
  %v390 = vmul.f32 %v241, %v384
  %v391 = vmul.f32 %v242, %v384
  %v392 = vmul.f32 %v243, %v384
  %v393 = vmul.f32 %v244, %v384
  %v394 = vmul.f32 %v245, %v384
  %v395 = vmul.f32 %v246, %v384
  %v396 = vmul.f32 %v247, %v384
  %v397 = vmul.f32 %v248, %v384
  %v398 = vmul.f32 %v249, %v384
  %v399 = vmul.f32 %v250, %v384
  %v400 = vmul.f32 %v251, %v384
  %v401 = vld [vmem:[%s3 + $0x4] sm:$0x1]
  %v402 = vlaneseq
  %v403 = vshrl.u32 %v402, 7
  %v404 = vsub.s32 0, %v403
  %v405 = vrot.slane %v401, %v404
  %v406 = vmul.f32 %v273, %v405
  %v407 = vmul.f32 %v274, %v405
  %v408 = vmul.f32 %v275, %v405
  %v409 = vmul.f32 %v276, %v405
  %v410 = vmul.f32 %v277, %v405
  %v411 = vmul.f32 %v278, %v405
  %v412 = vmul.f32 %v279, %v405
  %v413 = vmul.f32 %v280, %v405
  %v414 = vmul.f32 %v281, %v405
  %v415 = vmul.f32 %v282, %v405
  %v416 = vmul.f32 %v283, %v405
  %v417 = vmul.f32 %v284, %v405
  %v418 = vmul.f32 %v285, %v405
  %v419 = vmul.f32 %v286, %v405
  %v420 = vmul.f32 %v287, %v405
  %v421 = vmul.f32 %v288, %v405
  %v422 = vadd.f32 %v385, %v406
  %v423 = vadd.f32 %v386, %v407
  %v424 = vadd.f32 %v387, %v408
  %v425 = vadd.f32 %v388, %v409
  %v426 = vadd.f32 %v389, %v410
  %v427 = vadd.f32 %v390, %v411
  %v428 = vadd.f32 %v391, %v412
  %v429 = vadd.f32 %v392, %v413
  %v430 = vadd.f32 %v393, %v414
  %v431 = vadd.f32 %v394, %v415
  %v432 = vadd.f32 %v395, %v416
  %v433 = vadd.f32 %v396, %v417
  %v434 = vadd.f32 %v397, %v418
  %v435 = vadd.f32 %v398, %v419
  %v436 = vadd.f32 %v399, %v420
  %v437 = vadd.f32 %v400, %v421
  %v438 = vld [vmem:[%s3 + $0x7] sm:$0x1]
  %v439 = vlaneseq
  %v440 = vshrl.u32 %v439, 7
  %v441 = vsub.s32 0, %v440
  %v442 = vrot.slane %v438, %v441
  %v443 = vmul.f32 %v327, %v442
  %v444 = vmul.f32 %v328, %v442
  %v445 = vmul.f32 %v329, %v442
  %v446 = vmul.f32 %v330, %v442
  %v447 = vmul.f32 %v331, %v442
  %v448 = vmul.f32 %v332, %v442
  %v449 = vmul.f32 %v333, %v442
  %v450 = vmul.f32 %v334, %v442
  %v451 = vmul.f32 %v335, %v442
  %v452 = vmul.f32 %v336, %v442
  %v453 = vmul.f32 %v337, %v442
  %v454 = vmul.f32 %v338, %v442
  %v455 = vmul.f32 %v339, %v442
  %v456 = vmul.f32 %v340, %v442
  %v457 = vmul.f32 %v341, %v442
  %v458 = vmul.f32 %v342, %v442
  %v459 = vadd.f32 %v422, %v443
  %v460 = vadd.f32 %v423, %v444
  %v461 = vadd.f32 %v424, %v445
  %v462 = vadd.f32 %v425, %v446
  %v463 = vadd.f32 %v426, %v447
  %v464 = vadd.f32 %v427, %v448
  %v465 = vadd.f32 %v428, %v449
  %v466 = vadd.f32 %v429, %v450
  %v467 = vadd.f32 %v430, %v451
  %v468 = vadd.f32 %v431, %v452
  %v469 = vadd.f32 %v432, %v453
  %v470 = vadd.f32 %v433, %v454
  %v471 = vadd.f32 %v434, %v455
  %v472 = vadd.f32 %v435, %v456
  %v473 = vadd.f32 %v436, %v457
  %v474 = vadd.f32 %v437, %v458
  %v475 = vld [vmem:[%s3 + $0x2] sm:$0x1]
  %v476 = vlaneseq
  %v477 = vshrl.u32 %v476, 7
  %v478 = vsub.s32 0, %v477
  %v479 = vrot.slane %v475, %v478
  %v480 = vmul.f32 %v236, %v479
  %v481 = vmul.f32 %v237, %v479
  %v482 = vmul.f32 %v238, %v479
  %v483 = vmul.f32 %v239, %v479
  %v484 = vmul.f32 %v240, %v479
  %v485 = vmul.f32 %v241, %v479
  %v486 = vmul.f32 %v242, %v479
  %v487 = vmul.f32 %v243, %v479
  %v488 = vmul.f32 %v244, %v479
  %v489 = vmul.f32 %v245, %v479
  %v490 = vmul.f32 %v246, %v479
  %v491 = vmul.f32 %v247, %v479
  %v492 = vmul.f32 %v248, %v479
  %v493 = vmul.f32 %v249, %v479
  %v494 = vmul.f32 %v250, %v479
  %v495 = vmul.f32 %v251, %v479
  %v496 = vld [vmem:[%s3 + $0x5] sm:$0x1]
  %v497 = vlaneseq
  %v498 = vshrl.u32 %v497, 7
  %v499 = vsub.s32 0, %v498
  %v500 = vrot.slane %v496, %v499
  %v501 = vmul.f32 %v273, %v500
  %v502 = vmul.f32 %v274, %v500
  %v503 = vmul.f32 %v275, %v500
  %v504 = vmul.f32 %v276, %v500
  %v505 = vmul.f32 %v277, %v500
  %v506 = vmul.f32 %v278, %v500
  %v507 = vmul.f32 %v279, %v500
  %v508 = vmul.f32 %v280, %v500
  %v509 = vmul.f32 %v281, %v500
  %v510 = vmul.f32 %v282, %v500
  %v511 = vmul.f32 %v283, %v500
  %v512 = vmul.f32 %v284, %v500
  %v513 = vmul.f32 %v285, %v500
  %v514 = vmul.f32 %v286, %v500
  %v515 = vmul.f32 %v287, %v500
  %v516 = vmul.f32 %v288, %v500
  %v517 = vadd.f32 %v480, %v501
  %v518 = vadd.f32 %v481, %v502
  %v519 = vadd.f32 %v482, %v503
  %v520 = vadd.f32 %v483, %v504
  %v521 = vadd.f32 %v484, %v505
  %v522 = vadd.f32 %v485, %v506
  %v523 = vadd.f32 %v486, %v507
  %v524 = vadd.f32 %v487, %v508
  %v525 = vadd.f32 %v488, %v509
  %v526 = vadd.f32 %v489, %v510
  %v527 = vadd.f32 %v490, %v511
  %v528 = vadd.f32 %v491, %v512
  %v529 = vadd.f32 %v492, %v513
  %v530 = vadd.f32 %v493, %v514
  %v531 = vadd.f32 %v494, %v515
  %v532 = vadd.f32 %v495, %v516
  %v533 = vld [vmem:[%s3 + $0x8] sm:$0x1]
  %v534 = vlaneseq
  %v535 = vshrl.u32 %v534, 7
  %v536 = vsub.s32 0, %v535
  %v537 = vrot.slane %v533, %v536
  %v538 = vmul.f32 %v327, %v537
  %v539 = vmul.f32 %v328, %v537
  %v540 = vmul.f32 %v329, %v537
  %v541 = vmul.f32 %v330, %v537
  %v542 = vmul.f32 %v331, %v537
  %v543 = vmul.f32 %v332, %v537
  %v544 = vmul.f32 %v333, %v537
  %v545 = vmul.f32 %v334, %v537
  %v546 = vmul.f32 %v335, %v537
  %v547 = vmul.f32 %v336, %v537
  %v548 = vmul.f32 %v337, %v537
  %v549 = vmul.f32 %v338, %v537
  %v550 = vmul.f32 %v339, %v537
  %v551 = vmul.f32 %v340, %v537
  %v552 = vmul.f32 %v341, %v537
  %v553 = vmul.f32 %v342, %v537
  %v554 = vadd.f32 %v517, %v538
  %v555 = vadd.f32 %v518, %v539
  %v556 = vadd.f32 %v519, %v540
  %v557 = vadd.f32 %v520, %v541
  %v558 = vadd.f32 %v521, %v542
  %v559 = vadd.f32 %v522, %v543
  %v560 = vadd.f32 %v523, %v544
  %v561 = vadd.f32 %v524, %v545
  %v562 = vadd.f32 %v525, %v546
  %v563 = vadd.f32 %v526, %v547
  %v564 = vadd.f32 %v527, %v548
  %v565 = vadd.f32 %v528, %v549
  %v566 = vadd.f32 %v529, %v550
  %v567 = vadd.f32 %v530, %v551
  %v568 = vadd.f32 %v531, %v552
  %v569 = vadd.f32 %v532, %v553
  %v570 = vlaneseq
  %v571 = vshrl.u32 %v570, 7
  %vm572 = vcmp.ge.s32.totalorder %v571, 1
  %v573 = vrot.slane %v364, 7
  %v574 = vrot.slane %v365, 7
  %v575 = vrot.slane %v366, 7
  %v576 = vrot.slane %v367, 7
  %v577 = vrot.slane %v368, 7
  %v578 = vrot.slane %v369, 7
  %v579 = vrot.slane %v370, 7
  %v580 = vrot.slane %v371, 7
  %v581 = vrot.slane %v372, 7
  %v582 = vrot.slane %v373, 7
  %v583 = vrot.slane %v374, 7
  %v584 = vrot.slane %v375, 7
  %v585 = vrot.slane %v376, 7
  %v586 = vrot.slane %v377, 7
  %v587 = vrot.slane %v378, 7
  %v588 = vrot.slane %v379, 7
  %v589 = vsel %vm572, 1, 0
  %vm590 = vcmp.eq.s32.totalorder %v589, 1
  %v591 = vsel %vm590, %v573, 0.0
  %v592 = vsel %vm590, %v574, 0.0
  %v593 = vsel %vm590, %v575, 0.0
  %v594 = vsel %vm590, %v576, 0.0
  %v595 = vsel %vm590, %v577, 0.0
  %v596 = vsel %vm590, %v578, 0.0
  %v597 = vsel %vm590, %v579, 0.0
  %v598 = vsel %vm590, %v580, 0.0
  %v599 = vsel %vm590, %v581, 0.0
  %v600 = vsel %vm590, %v582, 0.0
  %v601 = vsel %vm590, %v583, 0.0
  %v602 = vsel %vm590, %v584, 0.0
  %v603 = vsel %vm590, %v585, 0.0
  %v604 = vsel %vm590, %v586, 0.0
  %v605 = vsel %vm590, %v587, 0.0
  %v606 = vsel %vm590, %v588, 0.0
  %v607 = vadd.f32 %v459, %v591
  %v608 = vadd.f32 %v460, %v592
  %v609 = vadd.f32 %v461, %v593
  %v610 = vadd.f32 %v462, %v594
  %v611 = vadd.f32 %v463, %v595
  %v612 = vadd.f32 %v464, %v596
  %v613 = vadd.f32 %v465, %v597
  %v614 = vadd.f32 %v466, %v598
  %v615 = vadd.f32 %v467, %v599
  %v616 = vadd.f32 %v468, %v600
  %v617 = vadd.f32 %v469, %v601
  %v618 = vadd.f32 %v470, %v602
  %v619 = vadd.f32 %v471, %v603
  %v620 = vadd.f32 %v472, %v604
  %v621 = vadd.f32 %v473, %v605
  %v622 = vadd.f32 %v474, %v606
  %vm623 = vcmp.le.s32.totalorder %v571, 6
  %v624 = vrot.slane %v554, 1
  %v625 = vrot.slane %v555, 1
  %v626 = vrot.slane %v556, 1
  %v627 = vrot.slane %v557, 1
  %v628 = vrot.slane %v558, 1
  %v629 = vrot.slane %v559, 1
  %v630 = vrot.slane %v560, 1
  %v631 = vrot.slane %v561, 1
  %v632 = vrot.slane %v562, 1
  %v633 = vrot.slane %v563, 1
  %v634 = vrot.slane %v564, 1
  %v635 = vrot.slane %v565, 1
  %v636 = vrot.slane %v566, 1
  %v637 = vrot.slane %v567, 1
  %v638 = vrot.slane %v568, 1
  %v639 = vrot.slane %v569, 1
  %v640 = vsel %vm623, 1, 0
  %vm641 = vcmp.eq.s32.totalorder %v640, 1
  %v642 = vsel %vm641, %v624, 0.0
  %v643 = vsel %vm641, %v625, 0.0
  %v644 = vsel %vm641, %v626, 0.0
  %v645 = vsel %vm641, %v627, 0.0
  %v646 = vsel %vm641, %v628, 0.0
  %v647 = vsel %vm641, %v629, 0.0
  %v648 = vsel %vm641, %v630, 0.0
  %v649 = vsel %vm641, %v631, 0.0
  %v650 = vsel %vm641, %v632, 0.0
  %v651 = vsel %vm641, %v633, 0.0
  %v652 = vsel %vm641, %v634, 0.0
  %v653 = vsel %vm641, %v635, 0.0
  %v654 = vsel %vm641, %v636, 0.0
  %v655 = vsel %vm641, %v637, 0.0
  %v656 = vsel %vm641, %v638, 0.0
  %v657 = vsel %vm641, %v639, 0.0
  %v658 = vadd.f32 %v607, %v642
  %v659 = vadd.f32 %v608, %v643
  %v660 = vadd.f32 %v609, %v644
  %v661 = vadd.f32 %v610, %v645
  %v662 = vadd.f32 %v611, %v646
  %v663 = vadd.f32 %v612, %v647
  %v664 = vadd.f32 %v613, %v648
  %v665 = vadd.f32 %v614, %v649
  %v666 = vadd.f32 %v615, %v650
  %v667 = vadd.f32 %v616, %v651
  %v668 = vadd.f32 %v617, %v652
  %v669 = vadd.f32 %v618, %v653
  %v670 = vadd.f32 %v619, %v654
  %v671 = vadd.f32 %v620, %v655
  %v672 = vadd.f32 %v621, %v656
  %v673 = vadd.f32 %v622, %v657
  %v674 = vld [vmem:[%s4] sm:$0x1]
  %v676 = vlaneseq
  %v677 = vshrl.u32 %v676, 7
  %v678 = vsub.s32 0, %v677
  %v679 = vrot.slane %v674, %v678
  %v681 = vadd.f32 %v658, %v679
  %v682 = vadd.f32 %v659, %v679
  %v683 = vadd.f32 %v660, %v679
  %v684 = vadd.f32 %v661, %v679
  %v685 = vadd.f32 %v662, %v679
  %v686 = vadd.f32 %v663, %v679
  %v687 = vadd.f32 %v664, %v679
  %v688 = vadd.f32 %v665, %v679
  %v689 = vadd.f32 %v666, %v679
  %v690 = vadd.f32 %v667, %v679
  %v691 = vadd.f32 %v668, %v679
  %v692 = vadd.f32 %v669, %v679
  %v693 = vadd.f32 %v670, %v679
  %v694 = vadd.f32 %v671, %v679
  %v695 = vadd.f32 %v672, %v679
  %v696 = vadd.f32 %v673, %v679
  %v697 = vmul.f32 %v681, 0.5
  %v698 = vmul.f32 %v682, 0.5
  %v699 = vmul.f32 %v683, 0.5
  %v700 = vmul.f32 %v684, 0.5
  %v701 = vmul.f32 %v685, 0.5
  %v702 = vmul.f32 %v686, 0.5
  %v703 = vmul.f32 %v687, 0.5
  %v704 = vmul.f32 %v688, 0.5
  %v705 = vmul.f32 %v689, 0.5
  %v706 = vmul.f32 %v690, 0.5
  %v707 = vmul.f32 %v691, 0.5
  %v708 = vmul.f32 %v692, 0.5
  %v709 = vmul.f32 %v693, 0.5
  %v710 = vmul.f32 %v694, 0.5
  %v711 = vmul.f32 %v695, 0.5
  %v712 = vmul.f32 %v696, 0.5
  %v713 = vmul.f32 %v681, 0.044715
  %v714 = vmul.f32 %v682, 0.044715
  %v715 = vmul.f32 %v683, 0.044715
  %v716 = vmul.f32 %v684, 0.044715
  %v717 = vmul.f32 %v685, 0.044715
  %v718 = vmul.f32 %v686, 0.044715
  %v719 = vmul.f32 %v687, 0.044715
  %v720 = vmul.f32 %v688, 0.044715
  %v721 = vmul.f32 %v689, 0.044715
  %v722 = vmul.f32 %v690, 0.044715
  %v723 = vmul.f32 %v691, 0.044715
  %v724 = vmul.f32 %v692, 0.044715
  %v725 = vmul.f32 %v693, 0.044715
  %v726 = vmul.f32 %v694, 0.044715
  %v727 = vmul.f32 %v695, 0.044715
  %v728 = vmul.f32 %v696, 0.044715
  %v729 = vmul.f32 %v713, %v681
  %v730 = vmul.f32 %v714, %v682
  %v731 = vmul.f32 %v715, %v683
  %v732 = vmul.f32 %v716, %v684
  %v733 = vmul.f32 %v717, %v685
  %v734 = vmul.f32 %v718, %v686
  %v735 = vmul.f32 %v719, %v687
  %v736 = vmul.f32 %v720, %v688
  %v737 = vmul.f32 %v721, %v689
  %v738 = vmul.f32 %v722, %v690
  %v739 = vmul.f32 %v723, %v691
  %v740 = vmul.f32 %v724, %v692
  %v741 = vmul.f32 %v725, %v693
  %v742 = vmul.f32 %v726, %v694
  %v743 = vmul.f32 %v727, %v695
  %v744 = vmul.f32 %v728, %v696
  %v745 = vmul.f32 %v729, %v681
  %v746 = vmul.f32 %v730, %v682
  %v747 = vmul.f32 %v731, %v683
  %v748 = vmul.f32 %v732, %v684
  %v749 = vmul.f32 %v733, %v685
  %v750 = vmul.f32 %v734, %v686
  %v751 = vmul.f32 %v735, %v687
  %v752 = vmul.f32 %v736, %v688
  %v753 = vmul.f32 %v737, %v689
  %v754 = vmul.f32 %v738, %v690
  %v755 = vmul.f32 %v739, %v691
  %v756 = vmul.f32 %v740, %v692
  %v757 = vmul.f32 %v741, %v693
  %v758 = vmul.f32 %v742, %v694
  %v759 = vmul.f32 %v743, %v695
  %v760 = vmul.f32 %v744, %v696
  %v761 = vadd.f32 %v681, %v745
  %v762 = vadd.f32 %v682, %v746
  %v763 = vadd.f32 %v683, %v747
  %v764 = vadd.f32 %v684, %v748
  %v765 = vadd.f32 %v685, %v749
  %v766 = vadd.f32 %v686, %v750
  %v767 = vadd.f32 %v687, %v751
  %v768 = vadd.f32 %v688, %v752
  %v769 = vadd.f32 %v689, %v753
  %v770 = vadd.f32 %v690, %v754
  %v771 = vadd.f32 %v691, %v755
  %v772 = vadd.f32 %v692, %v756
  %v773 = vadd.f32 %v693, %v757
  %v774 = vadd.f32 %v694, %v758
  %v775 = vadd.f32 %v695, %v759
  %v776 = vadd.f32 %v696, %v760
  %v777 = vmul.f32 %v761, 0.7978846
  %v778 = vmul.f32 %v762, 0.7978846
  %v779 = vmul.f32 %v763, 0.7978846
  %v780 = vmul.f32 %v764, 0.7978846
  %v781 = vmul.f32 %v765, 0.7978846
  %v782 = vmul.f32 %v766, 0.7978846
  %v783 = vmul.f32 %v767, 0.7978846
  %v784 = vmul.f32 %v768, 0.7978846
  %v785 = vmul.f32 %v769, 0.7978846
  %v786 = vmul.f32 %v770, 0.7978846
  %v787 = vmul.f32 %v771, 0.7978846
  %v788 = vmul.f32 %v772, 0.7978846
  %v789 = vmul.f32 %v773, 0.7978846
  %v790 = vmul.f32 %v774, 0.7978846
  %v791 = vmul.f32 %v775, 0.7978846
  %v792 = vmul.f32 %v776, 0.7978846
  %v793 = vtanh.pop %v777
  %v794 = vtanh.pop %v778
  %v795 = vtanh.pop %v779
  %v796 = vtanh.pop %v780
  %v797 = vtanh.pop %v781
  %v798 = vtanh.pop %v782
  %v799 = vtanh.pop %v783
  %v800 = vtanh.pop %v784
  %v801 = vtanh.pop %v785
  %v802 = vtanh.pop %v786
  %v803 = vtanh.pop %v787
  %v804 = vtanh.pop %v788
  %v805 = vtanh.pop %v789
  %v806 = vtanh.pop %v790
  %v807 = vtanh.pop %v791
  %v808 = vtanh.pop %v792
  %v809 = vadd.f32 %v793, 1.0
  %v810 = vadd.f32 %v794, 1.0
  %v811 = vadd.f32 %v795, 1.0
  %v812 = vadd.f32 %v796, 1.0
  %v813 = vadd.f32 %v797, 1.0
  %v814 = vadd.f32 %v798, 1.0
  %v815 = vadd.f32 %v799, 1.0
  %v816 = vadd.f32 %v800, 1.0
  %v817 = vadd.f32 %v801, 1.0
  %v818 = vadd.f32 %v802, 1.0
  %v819 = vadd.f32 %v803, 1.0
  %v820 = vadd.f32 %v804, 1.0
  %v821 = vadd.f32 %v805, 1.0
  %v822 = vadd.f32 %v806, 1.0
  %v823 = vadd.f32 %v807, 1.0
  %v824 = vadd.f32 %v808, 1.0
  %v825 = vmul.f32 %v697, %v809
  %v826 = vmul.f32 %v698, %v810
  %v827 = vmul.f32 %v699, %v811
  %v828 = vmul.f32 %v700, %v812
  %v829 = vmul.f32 %v701, %v813
  %v830 = vmul.f32 %v702, %v814
  %v831 = vmul.f32 %v703, %v815
  %v832 = vmul.f32 %v704, %v816
  %v833 = vmul.f32 %v705, %v817
  %v834 = vmul.f32 %v706, %v818
  %v835 = vmul.f32 %v707, %v819
  %v836 = vmul.f32 %v708, %v820
  %v837 = vmul.f32 %v709, %v821
  %v838 = vmul.f32 %v710, %v822
  %v839 = vmul.f32 %v711, %v823
  %v840 = vmul.f32 %v712, %v824
  %v841 = vpack.c.bf16 %v826, %v825
  %v842 = vpack.c.bf16 %v828, %v827
  %v843 = vpack.c.bf16 %v830, %v829
  %v844 = vpack.c.bf16 %v832, %v831
  %v845 = vpack.c.bf16 %v834, %v833
  %v846 = vpack.c.bf16 %v836, %v835
  %v847 = vpack.c.bf16 %v838, %v837
  %v848 = vpack.c.bf16 %v840, %v839
  %v849 = vld [vmem:[%s5] sm:$0xf]
  %v850 = vld [vmem:[%s5 + $0x4] sm:$0xf]
  %v851 = vld [vmem:[%s5 + $0x8] sm:$0xf]
  %v852 = vld [vmem:[%s5 + $0xc] sm:$0xf]
  %v853 = vld [vmem:[%s6] sm:$0x1]
  %v855 = vlaneseq
  %v856 = vshrl.u32 %v855, 7
  %v857 = vsub.s32 0, %v856
  %v858 = vrot.slane %v853, %v857
  %v864 = vunpack.c.l.b16 %v849
  %v865 = vunpack.c.l.b16 %v850
  %v866 = vunpack.c.l.b16 %v851
  %v867 = vunpack.c.l.b16 %v852
  %v868 = vpack.c.b16 %v865, %v864
  %v869 = vpack.c.b16 %v867, %v866
  %v873 = vsel %vm92, %v841, 0
  %v876 = vsel %vm92, %v842, 0
  %v879 = vsel %vm92, %v843, 0
  %v882 = vsel %vm92, %v844, 0
  %v885 = vsel %vm92, %v845, 0
  %v888 = vsel %vm92, %v846, 0
  %v891 = vsel %vm92, %v847, 0
  %v894 = vsel %vm92, %v848, 0
  %896 = vmatprep.subr.bf16.mxu0 0
  %897 = vmatpush1.bf16.msra.mxu0 %v868
  %898 = vmatprep.subr.bf16.mxu0 0
  %899 = vmatpush1.bf16.msra.mxu0 %v869
  %900 = vmatprep.subr.bf16.mxu0 0
  %901 = vmatpush1.bf16.msra.mxu0 0
  %902 = vmatprep.subr.bf16.mxu0 0
  %903 = vmatpush1.bf16.msra.mxu0 0
  %904 = vmatprep.subr.bf16.mxu0 0
  %905 = vmatpush1.bf16.msra.mxu0 0
  %906 = vmatprep.subr.bf16.mxu0 0
  %907 = vmatpush1.bf16.msra.mxu0 0
  %908 = vmatprep.subr.bf16.mxu0 0
  %909 = vmatpush1.bf16.msra.mxu0 0
  %910 = vmatprep.subr.bf16.mxu0 0
  %911 = vmatpush1.bf16.msra.mxu0 0
  %912 = vmatprep.subr.bf16.mxu0 0
  %913 = vmatpush1.bf16.msra.mxu0 0
  %914 = vmatprep.subr.bf16.mxu0 0
  %915 = vmatpush1.bf16.msra.mxu0 0
  %916 = vmatprep.subr.bf16.mxu0 0
  %917 = vmatpush1.bf16.msra.mxu0 0
  %918 = vmatprep.subr.bf16.mxu0 0
  %919 = vmatpush1.bf16.msra.mxu0 0
  %920 = vmatprep.subr.bf16.mxu0 0
  %921 = vmatpush1.bf16.msra.mxu0 0
  %922 = vmatprep.subr.bf16.mxu0 0
  %923 = vmatpush1.bf16.msra.mxu0 0
  %924 = vmatprep.subr.bf16.mxu0 0
  %925 = vmatpush1.bf16.msra.mxu0 0
  %926 = vmatprep.subr.bf16.mxu0 0
  %927 = vmatpush1.bf16.msra.mxu0 0
  %928 = vmatprep.mubr.bf16.mxu0 0
  %929 = vmatmul.mubr.bf16.gmra.mrb[0].mxu0 %v873
  %v930 = vpop.f32.mrb[0].mxu0
  %v931 = vadd.f32 %v858, %v930
  %v932 = vpop.f32.mrb[0].mxu0
  %v933 = vpop.f32.mrb[0].mxu0
  %v934 = vadd.f32 %v858, %v933
  %v935 = vpop.f32.mrb[0].mxu0
  %936 = vmatprep.mubr.bf16.mxu0 0
  %937 = vmatmul.mubr.bf16.gmra.mrb[0].mxu0 %v876
  %v938 = vpop.f32.mrb[0].mxu0
  %v939 = vadd.f32 %v858, %v938
  %v940 = vpop.f32.mrb[0].mxu0
  %v941 = vpop.f32.mrb[0].mxu0
  %v942 = vadd.f32 %v858, %v941
  %v943 = vpop.f32.mrb[0].mxu0
  %944 = vmatprep.mubr.bf16.mxu0 0
  %945 = vmatmul.mubr.bf16.gmra.mrb[0].mxu0 %v879
  %v946 = vpop.f32.mrb[0].mxu0
  %v947 = vadd.f32 %v858, %v946
  %v948 = vpop.f32.mrb[0].mxu0
  %v949 = vpop.f32.mrb[0].mxu0
  %v950 = vadd.f32 %v858, %v949
  %v951 = vpop.f32.mrb[0].mxu0
  %952 = vmatprep.mubr.bf16.mxu0 0
  %953 = vmatmul.mubr.bf16.gmra.mrb[0].mxu0 %v882
  %v954 = vpop.f32.mrb[0].mxu0
  %v955 = vadd.f32 %v858, %v954
  %v956 = vpop.f32.mrb[0].mxu0
  %v957 = vpop.f32.mrb[0].mxu0
  %v958 = vadd.f32 %v858, %v957
  %v959 = vpop.f32.mrb[0].mxu0
  %960 = vmatprep.mubr.bf16.mxu0 0
  %961 = vmatmul.mubr.bf16.gmra.mrb[0].mxu0 %v885
  %v962 = vpop.f32.mrb[0].mxu0
  %v963 = vadd.f32 %v858, %v962
  %v964 = vpop.f32.mrb[0].mxu0
  %v965 = vpop.f32.mrb[0].mxu0
  %v966 = vadd.f32 %v858, %v965
  %v967 = vpop.f32.mrb[0].mxu0
  %968 = vmatprep.mubr.bf16.mxu0 0
  %969 = vmatmul.mubr.bf16.gmra.mrb[0].mxu0 %v888
  %v970 = vpop.f32.mrb[0].mxu0
  %v971 = vadd.f32 %v858, %v970
  %v972 = vpop.f32.mrb[0].mxu0
  %v973 = vpop.f32.mrb[0].mxu0
  %v974 = vadd.f32 %v858, %v973
  %v975 = vpop.f32.mrb[0].mxu0
  %976 = vmatprep.mubr.bf16.mxu0 0
  %977 = vmatmul.mubr.bf16.gmra.mrb[0].mxu0 %v891
  %v978 = vpop.f32.mrb[0].mxu0
  %v979 = vadd.f32 %v858, %v978
  %v980 = vpop.f32.mrb[0].mxu0
  %v981 = vpop.f32.mrb[0].mxu0
  %v982 = vadd.f32 %v858, %v981
  %v983 = vpop.f32.mrb[0].mxu0
  %984 = vmatprep.mubr.bf16.mxu0 0
  %985 = vmatmul.mubr.bf16.gmra.mrb[0].mxu0 %v894
  %v986 = vpop.f32.mrb[0].mxu0
  %v987 = vadd.f32 %v858, %v986
  %v988 = vpop.f32.mrb[0].mxu0
  %v989 = vpop.f32.mrb[0].mxu0
  %v990 = vadd.f32 %v858, %v989
  %v991 = vpop.f32.mrb[0].mxu0
  %992 = vdwg.mxu0
  %v993 = vadd.f32 %v931, %v152
  %v994 = vadd.f32 %v934, %v155
  %v995 = vadd.f32 %v939, %v160
  %v996 = vadd.f32 %v942, %v163
  %v997 = vadd.f32 %v947, %v168
  %v998 = vadd.f32 %v950, %v171
  %v999 = vadd.f32 %v955, %v176
  %v1000 = vadd.f32 %v958, %v179
  %v1001 = vadd.f32 %v963, %v184
  %v1002 = vadd.f32 %v966, %v187
  %v1003 = vadd.f32 %v971, %v192
  %v1004 = vadd.f32 %v974, %v195
  %v1005 = vadd.f32 %v979, %v200
  %v1006 = vadd.f32 %v982, %v203
  %v1007 = vadd.f32 %v987, %v208
  %v1008 = vadd.f32 %v990, %v211
  %v1009 = vsel %vm92, %v993, 0.0
  %v1010 = vsel %vm92, %v994, 0.0
  %v1011 = vadd.f32 %v1009, %v1010
  %v1012 = vsel %vm92, %v995, 0.0
  %v1013 = vadd.f32 %v1011, %v1012
  %v1014 = vsel %vm92, %v996, 0.0
  %v1015 = vadd.f32 %v1013, %v1014
  %v1016 = vsel %vm92, %v997, 0.0
  %v1017 = vadd.f32 %v1015, %v1016
  %v1018 = vsel %vm92, %v998, 0.0
  %v1019 = vadd.f32 %v1017, %v1018
  %v1020 = vsel %vm92, %v999, 0.0
  %v1021 = vadd.f32 %v1019, %v1020
  %v1022 = vsel %vm92, %v1000, 0.0
  %v1023 = vadd.f32 %v1021, %v1022
  %v1024 = vrot.slane %v1023, 4
  %v1025 = vadd.f32 %v1023, %v1024
  %v1026 = vrot.slane %v1025, 2
  %v1027 = vadd.f32 %v1025, %v1026
  %v1028 = vrot.slane %v1027, 1
  %v1029 = vadd.f32 %v1027, %v1028
  %v1030 = vsel %vm92, %v1001, 0.0
  %v1031 = vsel %vm92, %v1002, 0.0
  %v1032 = vadd.f32 %v1030, %v1031
  %v1033 = vsel %vm92, %v1003, 0.0
  %v1034 = vadd.f32 %v1032, %v1033
  %v1035 = vsel %vm92, %v1004, 0.0
  %v1036 = vadd.f32 %v1034, %v1035
  %v1037 = vsel %vm92, %v1005, 0.0
  %v1038 = vadd.f32 %v1036, %v1037
  %v1039 = vsel %vm92, %v1006, 0.0
  %v1040 = vadd.f32 %v1038, %v1039
  %v1041 = vsel %vm92, %v1007, 0.0
  %v1042 = vadd.f32 %v1040, %v1041
  %v1043 = vsel %vm92, %v1008, 0.0
  %v1044 = vadd.f32 %v1042, %v1043
  %v1045 = vrot.slane %v1044, 4
  %v1046 = vadd.f32 %v1044, %v1045
  %v1047 = vrot.slane %v1046, 2
  %v1048 = vadd.f32 %v1046, %v1047
  %v1049 = vrot.slane %v1048, 1
  %v1050 = vadd.f32 %v1048, %v1049
  %v1051 = vrcp.pop 64.0
  %v1052 = vmul.f32 %v1029, %v1051
  %v1053 = vmul.f32 %v1050, %v1051
  %v1054 = vld [vmem:[%s7] sm:$0xff]
  %v1055 = vld [vmem:[%s7 + $0x8] sm:$0xff]
  %v1056 = vld [vmem:[%s7 + $0x10] sm:$0xff]
  %v1057 = vld [vmem:[%s7 + $0x18] sm:$0xff]
  %v1058 = vld [vmem:[%s8] sm:$0x1]
  %v1060 = vlaneseq
  %v1061 = vshrl.u32 %v1060, 7
  %v1062 = vsub.s32 0, %v1061
  %v1063 = vrot.slane %v1058, %v1062
  %vm1067 = vcmask 1041409
  %v1068 = vsel %vm1067, %v1053, %v1052
  %v1069 = vsel %vm92, %v1068, 0
  %1071 = vmatprep.subr.mxu0 0.0
  %1072 = vmatpush1.msra.mxu0 %v1054
  %1073 = vmatprep.subr.mxu0 0.0
  %1074 = vmatpush1.msra.mxu0 %v1055
  %1075 = vmatprep.subr.mxu0 0.0
  %1076 = vmatpush1.msra.mxu0 %v1056
  %1077 = vmatprep.subr.mxu0 0.0
  %1078 = vmatpush1.msra.mxu0 %v1057
  %1079 = vmatprep.subr.mxu0 0.0
  %1080 = vmatpush1.msra.mxu0 0.0
  %1081 = vmatprep.subr.mxu0 0.0
  %1082 = vmatpush1.msra.mxu0 0.0
  %1083 = vmatprep.subr.mxu0 0.0
  %1084 = vmatpush1.msra.mxu0 0.0
  %1085 = vmatprep.subr.mxu0 0.0
  %1086 = vmatpush1.msra.mxu0 0.0
  %1087 = vmatprep.subr.mxu0 0.0
  %1088 = vmatpush1.msra.mxu0 0.0
  %1089 = vmatprep.subr.mxu0 0.0
  %1090 = vmatpush1.msra.mxu0 0.0
  %1091 = vmatprep.subr.mxu0 0.0
  %1092 = vmatpush1.msra.mxu0 0.0
  %1093 = vmatprep.subr.mxu0 0.0
  %1094 = vmatpush1.msra.mxu0 0.0
  %1095 = vmatprep.subr.mxu0 0.0
  %1096 = vmatpush1.msra.mxu0 0.0
  %1097 = vmatprep.subr.mxu0 0.0
  %1098 = vmatpush1.msra.mxu0 0.0
  %1099 = vmatprep.subr.mxu0 0.0
  %1100 = vmatpush1.msra.mxu0 0.0
  %1101 = vmatprep.subr.mxu0 0.0
  %1102 = vmatpush1.msra.mxu0 0.0
  %1103 = vmatprep.subr.mxu0 0.0
  %1104 = vmatpush1.msra.mxu0 0.0
  %1105 = vmatprep.subr.mxu0 0.0
  %1106 = vmatpush1.msra.mxu0 0.0
  %1107 = vmatprep.subr.mxu0 0.0
  %1108 = vmatpush1.msra.mxu0 0.0
  %1109 = vmatprep.subr.mxu0 0.0
  %1110 = vmatpush1.msra.mxu0 0.0
  %1111 = vmatprep.subr.mxu0 0.0
  %1112 = vmatpush1.msra.mxu0 0.0
  %1113 = vmatprep.subr.mxu0 0.0
  %1114 = vmatpush1.msra.mxu0 0.0
  %1115 = vmatprep.subr.mxu0 0.0
  %1116 = vmatpush1.msra.mxu0 0.0
  %1117 = vmatprep.subr.mxu0 0.0
  %1118 = vmatpush1.msra.mxu0 0.0
  %1119 = vmatprep.subr.mxu0 0.0
  %1120 = vmatpush1.msra.mxu0 0.0
  %1121 = vmatprep.subr.mxu0 0.0
  %1122 = vmatpush1.msra.mxu0 0.0
  %1123 = vmatprep.subr.mxu0 0.0
  %1124 = vmatpush1.msra.mxu0 0.0
  %1125 = vmatprep.subr.mxu0 0.0
  %1126 = vmatpush1.msra.mxu0 0.0
  %1127 = vmatprep.subr.mxu0 0.0
  %1128 = vmatpush1.msra.mxu0 0.0
  %1129 = vmatprep.subr.mxu0 0.0
  %1130 = vmatpush1.msra.mxu0 0.0
  %1131 = vmatprep.subr.mxu0 0.0
  %1132 = vmatpush1.msra.mxu0 0.0
  %1133 = vmatprep.subr.mxu0 0.0
  %1134 = vmatpush1.msra.mxu0 0.0
  %1135 = vmatprep.mubr.f32.mxu0 0.0
  %1136 = vmatmul.mubr.f32.gmra.mrb[0].mxu0 %v1069
  %v1137 = vpop.f32.mrb[0].mxu0
  %v1138 = vadd.f32 %v1063, %v1137
  %v1139 = vpop.f32.mrb[0].mxu0
  %1140 = vdwg.mxu0
  %v1141 = vmax.f32 %v1138, 0.0
  %v1142 = vld [vmem:[%s9] sm:$0xff]
  %v1143 = vld [vmem:[%s10] sm:$0x1]
  %v1145 = vlaneseq
  %v1146 = vshrl.u32 %v1145, 7
  %v1147 = vsub.s32 0, %v1146
  %v1148 = vrot.slane %v1143, %v1147
  %vm1150 = vcmask 64512
  %v1152 = vsel %vm1150, %v1141, 0
  %1154 = vmatprep.subr.mxu0 0.0
  %1155 = vmatpush1.msra.mxu0 %v1142
  %1156 = vmatprep.subr.mxu0 0.0
  %1157 = vmatpush1.msra.mxu0 0.0
  %1158 = vmatprep.subr.mxu0 0.0
  %1159 = vmatpush1.msra.mxu0 0.0
  %1160 = vmatprep.subr.mxu0 0.0
  %1161 = vmatpush1.msra.mxu0 0.0
  %1162 = vmatprep.subr.mxu0 0.0
  %1163 = vmatpush1.msra.mxu0 0.0
  %1164 = vmatprep.subr.mxu0 0.0
  %1165 = vmatpush1.msra.mxu0 0.0
  %1166 = vmatprep.subr.mxu0 0.0
  %1167 = vmatpush1.msra.mxu0 0.0
  %1168 = vmatprep.subr.mxu0 0.0
  %1169 = vmatpush1.msra.mxu0 0.0
  %1170 = vmatprep.subr.mxu0 0.0
  %1171 = vmatpush1.msra.mxu0 0.0
  %1172 = vmatprep.subr.mxu0 0.0
  %1173 = vmatpush1.msra.mxu0 0.0
  %1174 = vmatprep.subr.mxu0 0.0
  %1175 = vmatpush1.msra.mxu0 0.0
  %1176 = vmatprep.subr.mxu0 0.0
  %1177 = vmatpush1.msra.mxu0 0.0
  %1178 = vmatprep.subr.mxu0 0.0
  %1179 = vmatpush1.msra.mxu0 0.0
  %1180 = vmatprep.subr.mxu0 0.0
  %1181 = vmatpush1.msra.mxu0 0.0
  %1182 = vmatprep.subr.mxu0 0.0
  %1183 = vmatpush1.msra.mxu0 0.0
  %1184 = vmatprep.subr.mxu0 0.0
  %1185 = vmatpush1.msra.mxu0 0.0
  %1186 = vmatprep.subr.mxu0 0.0
  %1187 = vmatpush1.msra.mxu0 0.0
  %1188 = vmatprep.subr.mxu0 0.0
  %1189 = vmatpush1.msra.mxu0 0.0
  %1190 = vmatprep.subr.mxu0 0.0
  %1191 = vmatpush1.msra.mxu0 0.0
  %1192 = vmatprep.subr.mxu0 0.0
  %1193 = vmatpush1.msra.mxu0 0.0
  %1194 = vmatprep.subr.mxu0 0.0
  %1195 = vmatpush1.msra.mxu0 0.0
  %1196 = vmatprep.subr.mxu0 0.0
  %1197 = vmatpush1.msra.mxu0 0.0
  %1198 = vmatprep.subr.mxu0 0.0
  %1199 = vmatpush1.msra.mxu0 0.0
  %1200 = vmatprep.subr.mxu0 0.0
  %1201 = vmatpush1.msra.mxu0 0.0
  %1202 = vmatprep.subr.mxu0 0.0
  %1203 = vmatpush1.msra.mxu0 0.0
  %1204 = vmatprep.subr.mxu0 0.0
  %1205 = vmatpush1.msra.mxu0 0.0
  %1206 = vmatprep.subr.mxu0 0.0
  %1207 = vmatpush1.msra.mxu0 0.0
  %1208 = vmatprep.subr.mxu0 0.0
  %1209 = vmatpush1.msra.mxu0 0.0
  %1210 = vmatprep.subr.mxu0 0.0
  %1211 = vmatpush1.msra.mxu0 0.0
  %1212 = vmatprep.subr.mxu0 0.0
  %1213 = vmatpush1.msra.mxu0 0.0
  %1214 = vmatprep.subr.mxu0 0.0
  %1215 = vmatpush1.msra.mxu0 0.0
  %1216 = vmatprep.subr.mxu0 0.0
  %1217 = vmatpush1.msra.mxu0 0.0
  %1218 = vmatprep.mubr.f32.mxu0 0.0
  %1219 = vmatmul.mubr.f32.gmra.mrb[0].mxu0 %v1152
  %v1220 = vpop.f32.mrb[0].mxu0
  %v1221 = vadd.f32 %v1148, %v1220
  %v1222 = vpop.f32.mrb[0].mxu0
  %1223 = vdwg.mxu0
  %v1224 = vxor.u32 %v1221, 2147483648
  %v1225 = vmul.f32 %v1224, 1.442695
  %v1226 = vpow.pop %v1225
  %v1227 = vadd.f32 %v1226, 1.0
  %v1228 = vrcp.pop %v1227
  %v1229 = vmul.f32 1.0, %v1228
  %v1232 = vunpack.c.l.s4 1966171168
  %v1233 = vunpack.c.0.s8 %v1232
  %v1234 = vlaneseq
  %v1235 = vshrl.u32 %v1234, 7
  %v1236 = vsub.s32 %v1233, %v1235
  %v1237 = vrot.slane %v1229, %v1236
  %v1238 = vcombine.high %v1237, %v1237
  %v1240 = vunpack.c.l.s4 1966171168
  %v1241 = vunpack.c.0.s8 %v1240
  %v1242 = vlaneseq
  %v1243 = vshrl.u32 %v1242, 7
  %v1244 = vsub.s32 %v1241, %v1243
  %v1245 = vrot.slane %v1237, %v1244
  %v1247 = vunpack.c.l.s4 1966171168
  %v1248 = vunpack.c.0.s8 %v1247
  %v1249 = vlaneseq
  %v1250 = vshrl.u32 %v1249, 7
  %v1251 = vsub.s32 %v1248, %v1250
  %v1252 = vrot.slane %v1238, %v1251
  %v1253 = vlaneseq
  %v1254 = vshrl.u32 %v1253, 7
  %v1255 = vsub.s32 0, %v1254
  %v1256 = vrot.slane %v1245, %v1255
  %v1257 = vlaneseq
  %v1258 = vshrl.u32 %v1257, 7
  %v1259 = vsub.s32 0, %v1258
  %v1260 = vrot.slane %v1252, %v1259
  %v1263 = vmul.f32 %v993, %v1256
  %v1264 = vmul.f32 %v994, %v1256
  %v1265 = vmul.f32 %v995, %v1256
  %v1266 = vmul.f32 %v996, %v1256
  %v1267 = vmul.f32 %v997, %v1256
  %v1268 = vmul.f32 %v998, %v1256
  %v1269 = vmul.f32 %v999, %v1256
  %v1270 = vmul.f32 %v1000, %v1256
  %v1271 = vmul.f32 %v1001, %v1260
  %v1272 = vmul.f32 %v1002, %v1260
  %v1273 = vmul.f32 %v1003, %v1260
  %v1274 = vmul.f32 %v1004, %v1260
  %v1275 = vmul.f32 %v1005, %v1260
  %v1276 = vmul.f32 %v1006, %v1260
  %v1277 = vmul.f32 %v1007, %v1260
  %v1278 = vmul.f32 %v1008, %v1260
  %v1279 = vpack.c.bf16 %v1264, %v1263
  %v1280 = vpack.c.bf16 %v1266, %v1265
  %v1281 = vpack.c.bf16 %v1268, %v1267
  %v1282 = vpack.c.bf16 %v1270, %v1269
  %v1283 = vpack.c.bf16 %v1272, %v1271
  %v1284 = vpack.c.bf16 %v1274, %v1273
  %v1285 = vpack.c.bf16 %v1276, %v1275
  %v1286 = vpack.c.bf16 %v1278, %v1277
  %v1287 = vld [vmem:[%s11] sm:$0xf]
  %v1288 = vld [vmem:[%s11 + $0x4] sm:$0xf]
  %v1289 = vld [vmem:[%s11 + $0x8] sm:$0xf]
  %v1290 = vld [vmem:[%s11 + $0xc] sm:$0xf]
  %v1291 = vld [vmem:[%s12] sm:$0x1]
  %v1293 = vlaneseq
  %v1294 = vshrl.u32 %v1293, 7
  %v1295 = vsub.s32 0, %v1294
  %v1296 = vrot.slane %v1291, %v1295
  %v1302 = vunpack.c.l.b16 %v1287
  %v1303 = vunpack.c.l.b16 %v1288
  %v1304 = vunpack.c.l.b16 %v1289
  %v1305 = vunpack.c.l.b16 %v1290
  %v1306 = vpack.c.b16 %v1303, %v1302
  %v1307 = vpack.c.b16 %v1305, %v1304
  %v1311 = vsel %vm92, %v1279, 0
  %v1314 = vsel %vm92, %v1280, 0
  %v1317 = vsel %vm92, %v1281, 0
  %v1320 = vsel %vm92, %v1282, 0
  %v1323 = vsel %vm92, %v1283, 0
  %v1326 = vsel %vm92, %v1284, 0
  %v1329 = vsel %vm92, %v1285, 0
  %v1332 = vsel %vm92, %v1286, 0
  %1334 = vmatprep.subr.bf16.mxu0 0
  %1335 = vmatpush1.bf16.msra.mxu0 %v1306
  %1336 = vmatprep.subr.bf16.mxu0 0
  %1337 = vmatpush1.bf16.msra.mxu0 %v1307
  %1338 = vmatprep.subr.bf16.mxu0 0
  %1339 = vmatpush1.bf16.msra.mxu0 0
  %1340 = vmatprep.subr.bf16.mxu0 0
  %1341 = vmatpush1.bf16.msra.mxu0 0
  %1342 = vmatprep.subr.bf16.mxu0 0
  %1343 = vmatpush1.bf16.msra.mxu0 0
  %1344 = vmatprep.subr.bf16.mxu0 0
  %1345 = vmatpush1.bf16.msra.mxu0 0
  %1346 = vmatprep.subr.bf16.mxu0 0
  %1347 = vmatpush1.bf16.msra.mxu0 0
  %1348 = vmatprep.subr.bf16.mxu0 0
  %1349 = vmatpush1.bf16.msra.mxu0 0
  %1350 = vmatprep.subr.bf16.mxu0 0
  %1351 = vmatpush1.bf16.msra.mxu0 0
  %1352 = vmatprep.subr.bf16.mxu0 0
  %1353 = vmatpush1.bf16.msra.mxu0 0
  %1354 = vmatprep.subr.bf16.mxu0 0
  %1355 = vmatpush1.bf16.msra.mxu0 0
  %1356 = vmatprep.subr.bf16.mxu0 0
  %1357 = vmatpush1.bf16.msra.mxu0 0
  %1358 = vmatprep.subr.bf16.mxu0 0
  %1359 = vmatpush1.bf16.msra.mxu0 0
  %1360 = vmatprep.subr.bf16.mxu0 0
  %1361 = vmatpush1.bf16.msra.mxu0 0
  %1362 = vmatprep.subr.bf16.mxu0 0
  %1363 = vmatpush1.bf16.msra.mxu0 0
  %1364 = vmatprep.subr.bf16.mxu0 0
  %1365 = vmatpush1.bf16.msra.mxu0 0
  %1366 = vmatprep.mubr.bf16.mxu0 0
  %1367 = vmatmul.mubr.bf16.gmra.mrb[0].mxu0 %v1311
  %v1368 = vpop.f32.mrb[0].mxu0
  %v1369 = vadd.f32 %v1296, %v1368
  %v1370 = vpop.f32.mrb[0].mxu0
  %v1371 = vpop.f32.mrb[0].mxu0
  %v1372 = vadd.f32 %v1296, %v1371
  %v1373 = vpop.f32.mrb[0].mxu0
  %1374 = vmatprep.mubr.bf16.mxu0 0
  %1375 = vmatmul.mubr.bf16.gmra.mrb[0].mxu0 %v1314
  %v1376 = vpop.f32.mrb[0].mxu0
  %v1377 = vadd.f32 %v1296, %v1376
  %v1378 = vpop.f32.mrb[0].mxu0
  %v1379 = vpop.f32.mrb[0].mxu0
  %v1380 = vadd.f32 %v1296, %v1379
  %v1381 = vpop.f32.mrb[0].mxu0
  %1382 = vmatprep.mubr.bf16.mxu0 0
  %1383 = vmatmul.mubr.bf16.gmra.mrb[0].mxu0 %v1317
  %v1384 = vpop.f32.mrb[0].mxu0
  %v1385 = vadd.f32 %v1296, %v1384
  %v1386 = vpop.f32.mrb[0].mxu0
  %v1387 = vpop.f32.mrb[0].mxu0
  %v1388 = vadd.f32 %v1296, %v1387
  %v1389 = vpop.f32.mrb[0].mxu0
  %1390 = vmatprep.mubr.bf16.mxu0 0
  %1391 = vmatmul.mubr.bf16.gmra.mrb[0].mxu0 %v1320
  %v1392 = vpop.f32.mrb[0].mxu0
  %v1393 = vadd.f32 %v1296, %v1392
  %v1394 = vpop.f32.mrb[0].mxu0
  %v1395 = vpop.f32.mrb[0].mxu0
  %v1396 = vadd.f32 %v1296, %v1395
  %v1397 = vpop.f32.mrb[0].mxu0
  %1398 = vmatprep.mubr.bf16.mxu0 0
  %1399 = vmatmul.mubr.bf16.gmra.mrb[0].mxu0 %v1323
  %v1400 = vpop.f32.mrb[0].mxu0
  %v1401 = vadd.f32 %v1296, %v1400
  %v1402 = vpop.f32.mrb[0].mxu0
  %v1403 = vpop.f32.mrb[0].mxu0
  %v1404 = vadd.f32 %v1296, %v1403
  %v1405 = vpop.f32.mrb[0].mxu0
  %1406 = vmatprep.mubr.bf16.mxu0 0
  %1407 = vmatmul.mubr.bf16.gmra.mrb[0].mxu0 %v1326
  %v1408 = vpop.f32.mrb[0].mxu0
  %v1409 = vadd.f32 %v1296, %v1408
  %v1410 = vpop.f32.mrb[0].mxu0
  %v1411 = vpop.f32.mrb[0].mxu0
  %v1412 = vadd.f32 %v1296, %v1411
  %v1413 = vpop.f32.mrb[0].mxu0
  %1414 = vmatprep.mubr.bf16.mxu0 0
  %1415 = vmatmul.mubr.bf16.gmra.mrb[0].mxu0 %v1329
  %v1416 = vpop.f32.mrb[0].mxu0
  %v1417 = vadd.f32 %v1296, %v1416
  %v1418 = vpop.f32.mrb[0].mxu0
  %v1419 = vpop.f32.mrb[0].mxu0
  %v1420 = vadd.f32 %v1296, %v1419
  %v1421 = vpop.f32.mrb[0].mxu0
  %1422 = vmatprep.mubr.bf16.mxu0 0
  %1423 = vmatmul.mubr.bf16.gmra.mrb[0].mxu0 %v1332
  %v1424 = vpop.f32.mrb[0].mxu0
  %v1425 = vadd.f32 %v1296, %v1424
  %v1426 = vpop.f32.mrb[0].mxu0
  %v1427 = vpop.f32.mrb[0].mxu0
  %v1428 = vadd.f32 %v1296, %v1427
  %v1429 = vpop.f32.mrb[0].mxu0
  %1430 = vdwg.mxu0
  %v1431 = vadd.f32 %v1369, %v45
  %v1432 = vadd.f32 %v1372, %v46
  %v1433 = vadd.f32 %v1377, %v47
  %v1434 = vadd.f32 %v1380, %v48
  %v1435 = vadd.f32 %v1385, %v49
  %v1436 = vadd.f32 %v1388, %v50
  %v1437 = vadd.f32 %v1393, %v51
  %v1438 = vadd.f32 %v1396, %v52
  %v1439 = vadd.f32 %v1401, %v53
  %v1440 = vadd.f32 %v1404, %v54
  %v1441 = vadd.f32 %v1409, %v55
  %v1442 = vadd.f32 %v1412, %v56
  %v1443 = vadd.f32 %v1417, %v57
  %v1444 = vadd.f32 %v1420, %v58
  %v1445 = vadd.f32 %v1425, %v59
  %v1446 = vadd.f32 %v1428, %v60
  %1447 = vst.msk [vmem:[%s13] sm:$0xff] %vm92, %v1431
  %1448 = vst.msk [vmem:[%s13 + $0x8] sm:$0xff] %vm92, %v1432
  %1449 = vst.msk [vmem:[%s13 + $0x10] sm:$0xff] %vm92, %v1433
  %1450 = vst.msk [vmem:[%s13 + $0x18] sm:$0xff] %vm92, %v1434
  %1451 = vst.msk [vmem:[%s13 + $0x20] sm:$0xff] %vm92, %v1435
  %1452 = vst.msk [vmem:[%s13 + $0x28] sm:$0xff] %vm92, %v1436
  %1453 = vst.msk [vmem:[%s13 + $0x30] sm:$0xff] %vm92, %v1437
  %1454 = vst.msk [vmem:[%s13 + $0x38] sm:$0xff] %vm92, %v1438
  %1455 = vst.msk [vmem:[%s13 + $0x40] sm:$0xff] %vm92, %v1439
  %1456 = vst.msk [vmem:[%s13 + $0x48] sm:$0xff] %vm92, %v1440
  %1457 = vst.msk [vmem:[%s13 + $0x50] sm:$0xff] %vm92, %v1441
  %1458 = vst.msk [vmem:[%s13 + $0x58] sm:$0xff] %vm92, %v1442
  %1459 = vst.msk [vmem:[%s13 + $0x60] sm:$0xff] %vm92, %v1443
  %1460 = vst.msk [vmem:[%s13 + $0x68] sm:$0xff] %vm92, %v1444
  %1461 = vst.msk [vmem:[%s13 + $0x70] sm:$0xff] %vm92, %v1445
  %1462 = vst.msk [vmem:[%s13 + $0x78] sm:$0xff] %vm92, %v1446
  // Predicated region
  $region54: #{maxvit_block.3} parent=0 // pred_check
    _
  $region55: #{maxvit_block.3} parent=0 // pred_check_branch
    %1464 = sbr.rel (0) target = $region57
  $region56: #{maxvit_block.3} parent=0 // pred_region
    _
  $region57: #{maxvit_block.3} parent=0 // pred_fallthru
    _
  // Predicated region
  $region58: #{maxvit_block.3} parent=0 // pred_check
    _
  $region59: #{maxvit_block.3} parent=0 // pred_check_branch
    %1466 = sbr.rel (0) target = $region61
  $region60: #{maxvit_block.3} parent=0 // pred_region
    _
  $region61: #{maxvit_block.3} parent=0 // pred_fallthru
    _

// kernel: maxvit_block.4
$region0: #{maxvit_block.4}
  #allocation0 [shape = 'u32[]', space=smem, size = 0x4, offset = 0x4, fixed_abs, tag = 'smem constant byte address 0x4 - core index']
  #allocation1 [shape = 'u32[144,128]{1,0:T(1,128)}', space=vmem, size = 0x12000, scoped, tag = 'internal scratch']
  %s0 = inlined_call_operand.vmem [shape: f32[8,16,32], index: 0, kind: input, shape index: {}]
  %s1 = inlined_call_operand.vmem [shape: f32[4,16,16], index: 1, kind: input, shape index: {}]
  %s2 = inlined_call_operand.vmem [shape: f32[1,32], index: 2, kind: input, shape index: {}]
  %s3 = inlined_call_operand.vmem [shape: f32[1,32], index: 3, kind: input, shape index: {}]
  %s4 = inlined_call_operand.vmem [shape: bf16[32,96], index: 4, kind: input, shape index: {}]
  %s5 = inlined_call_operand.vmem [shape: f32[1,96], index: 5, kind: input, shape index: {}]
  %s6 = inlined_call_operand.vmem [shape: bf16[32,32], index: 6, kind: input, shape index: {}]
  %s7 = inlined_call_operand.vmem [shape: f32[1,32], index: 7, kind: input, shape index: {}]
  %s8 = inlined_call_operand.vmem [shape: f32[1,32], index: 8, kind: input, shape index: {}]
  %s9 = inlined_call_operand.vmem [shape: f32[1,32], index: 9, kind: input, shape index: {}]
  %s10 = inlined_call_operand.vmem [shape: bf16[32,128], index: 10, kind: input, shape index: {}]
  %s11 = inlined_call_operand.vmem [shape: f32[1,128], index: 11, kind: input, shape index: {}]
  %s12 = inlined_call_operand.vmem [shape: bf16[128,32], index: 12, kind: input, shape index: {}]
  %s13 = inlined_call_operand.vmem [shape: f32[1,32], index: 13, kind: input, shape index: {}]
  %s14 = inlined_call_operand.vmem [shape: f32[8,16,32], index: 14, kind: output, shape index: {0}]
  %s15 = inlined_call_operand.vmem [shape: f32[4,8,16,16], index: 15, kind: output, shape index: {1}]
  %16 = xla_tuple %s14, %s15
  %s17 = sld [smem:[#allocation0]]
  $region74: #{maxvit_block.4} parent=0
    _
  %s19 = ssub.s32 1, %s17
  %s20 = scalar_select 0, %s19, %s17
  // Predicated region
  $region2: #{maxvit_block.4} parent=0 // pred_check
    _
  $region3: #{maxvit_block.4} parent=0 // pred_check_branch
    %22 = sbr.rel (0) target = $region5
  $region4: #{maxvit_block.4} parent=0 // pred_region
    _
  $region5: #{maxvit_block.4} parent=0 // pred_fallthru
    _
  // Predicated region
  $region6: #{maxvit_block.4} parent=0 // pred_check
    _
  $region7: #{maxvit_block.4} parent=0 // pred_check_branch
    %24 = sbr.rel (0) target = $region9
  $region8: #{maxvit_block.4} parent=0 // pred_region
    _
  $region9: #{maxvit_block.4} parent=0 // pred_fallthru
    _
  // Predicated region
  $region10: #{maxvit_block.4} parent=0 // pred_check
    _
  $region11: #{maxvit_block.4} parent=0 // pred_check_branch
    %26 = sbr.rel (0) target = $region13
  $region12: #{maxvit_block.4} parent=0 // pred_region
    _
  $region13: #{maxvit_block.4} parent=0 // pred_fallthru
    _
  // Predicated region
  $region14: #{maxvit_block.4} parent=0 // pred_check
    _
  $region15: #{maxvit_block.4} parent=0 // pred_check_branch
    %28 = sbr.rel (0) target = $region17
  $region16: #{maxvit_block.4} parent=0 // pred_region
    _
  $region17: #{maxvit_block.4} parent=0 // pred_fallthru
    _
  // Predicated region
  $region18: #{maxvit_block.4} parent=0 // pred_check
    _
  $region19: #{maxvit_block.4} parent=0 // pred_check_branch
    %30 = sbr.rel (0) target = $region21
  $region20: #{maxvit_block.4} parent=0 // pred_region
    _
  $region21: #{maxvit_block.4} parent=0 // pred_fallthru
    _
  // Predicated region
  $region22: #{maxvit_block.4} parent=0 // pred_check
    _
  $region23: #{maxvit_block.4} parent=0 // pred_check_branch
    %32 = sbr.rel (0) target = $region25
  $region24: #{maxvit_block.4} parent=0 // pred_region
    _
  $region25: #{maxvit_block.4} parent=0 // pred_fallthru
    _
  // Predicated region
  $region26: #{maxvit_block.4} parent=0 // pred_check
    _
  $region27: #{maxvit_block.4} parent=0 // pred_check_branch
    %34 = sbr.rel (0) target = $region29
  $region28: #{maxvit_block.4} parent=0 // pred_region
    _
  $region29: #{maxvit_block.4} parent=0 // pred_fallthru
    _
  // Predicated region
  $region30: #{maxvit_block.4} parent=0 // pred_check
    _
  $region31: #{maxvit_block.4} parent=0 // pred_check_branch
    %36 = sbr.rel (0) target = $region33
  $region32: #{maxvit_block.4} parent=0 // pred_region
    _
  $region33: #{maxvit_block.4} parent=0 // pred_fallthru
    _
  // Predicated region
  $region34: #{maxvit_block.4} parent=0 // pred_check
    _
  $region35: #{maxvit_block.4} parent=0 // pred_check_branch
    %38 = sbr.rel (0) target = $region37
  $region36: #{maxvit_block.4} parent=0 // pred_region
    _
  $region37: #{maxvit_block.4} parent=0 // pred_fallthru
    _
  // Predicated region
  $region38: #{maxvit_block.4} parent=0 // pred_check
    _
  $region39: #{maxvit_block.4} parent=0 // pred_check_branch
    %40 = sbr.rel (0) target = $region41
  $region40: #{maxvit_block.4} parent=0 // pred_region
    _
  $region41: #{maxvit_block.4} parent=0 // pred_fallthru
    _
  // Predicated region
  $region42: #{maxvit_block.4} parent=0 // pred_check
    _
  $region43: #{maxvit_block.4} parent=0 // pred_check_branch
    %42 = sbr.rel (0) target = $region45
  $region44: #{maxvit_block.4} parent=0 // pred_region
    _
  $region45: #{maxvit_block.4} parent=0 // pred_fallthru
    _
  // Predicated region
  $region46: #{maxvit_block.4} parent=0 // pred_check
    _
  $region47: #{maxvit_block.4} parent=0 // pred_check_branch
    %44 = sbr.rel (0) target = $region49
  $region48: #{maxvit_block.4} parent=0 // pred_region
    _
  $region49: #{maxvit_block.4} parent=0 // pred_fallthru
    _
  // Predicated region
  $region50: #{maxvit_block.4} parent=0 // pred_check
    _
  $region51: #{maxvit_block.4} parent=0 // pred_check_branch
    %46 = sbr.rel (0) target = $region53
  $region52: #{maxvit_block.4} parent=0 // pred_region
    _
  $region53: #{maxvit_block.4} parent=0 // pred_fallthru
    _
  // Predicated region
  $region54: #{maxvit_block.4} parent=0 // pred_check
    _
  $region55: #{maxvit_block.4} parent=0 // pred_check_branch
    %48 = sbr.rel (0) target = $region57
  $region56: #{maxvit_block.4} parent=0 // pred_region
    _
  $region57: #{maxvit_block.4} parent=0 // pred_fallthru
    _
  %v50 = vld [vmem:[%s0] sm:$0xff]
  %v51 = vld [vmem:[%s0 + $0x8] sm:$0xff]
  %v52 = vld [vmem:[%s0 + $0x10] sm:$0xff]
  %v53 = vld [vmem:[%s0 + $0x18] sm:$0xff]
  %v54 = vld [vmem:[%s0 + $0x20] sm:$0xff]
  %v55 = vld [vmem:[%s0 + $0x28] sm:$0xff]
  %v56 = vld [vmem:[%s0 + $0x30] sm:$0xff]
  %v57 = vld [vmem:[%s0 + $0x38] sm:$0xff]
  %v58 = vld [vmem:[%s0 + $0x40] sm:$0xff]
  %v59 = vld [vmem:[%s0 + $0x48] sm:$0xff]
  %v60 = vld [vmem:[%s0 + $0x50] sm:$0xff]
  %v61 = vld [vmem:[%s0 + $0x58] sm:$0xff]
  %v62 = vld [vmem:[%s0 + $0x60] sm:$0xff]
  %v63 = vld [vmem:[%s0 + $0x68] sm:$0xff]
  %v64 = vld [vmem:[%s0 + $0x70] sm:$0xff]
  %v65 = vld [vmem:[%s0 + $0x78] sm:$0xff]
  %vm66 = vcmask 261120
  %v67 = vsel %vm66, %v50, 0.0
  %68 = vadd.xlane.f32.xlu0 %v67
  %v69 = vpop.xlane.xlu0 %68
  %v70 = vsel %vm66, %v51, 0.0
  %71 = vadd.xlane.f32.xlu0 %v70
  %v72 = vpop.xlane.xlu0 %71
  %v73 = vsel %vm66, %v52, 0.0
  %74 = vadd.xlane.f32.xlu0 %v73
  %v75 = vpop.xlane.xlu0 %74
  %v76 = vsel %vm66, %v53, 0.0
  %77 = vadd.xlane.f32.xlu0 %v76
  %v78 = vpop.xlane.xlu0 %77
  %v79 = vsel %vm66, %v54, 0.0
  %80 = vadd.xlane.f32.xlu0 %v79
  %v81 = vpop.xlane.xlu0 %80
  %v82 = vsel %vm66, %v55, 0.0
  %83 = vadd.xlane.f32.xlu0 %v82
  %v84 = vpop.xlane.xlu0 %83
  %v85 = vsel %vm66, %v56, 0.0
  %86 = vadd.xlane.f32.xlu0 %v85
  %v87 = vpop.xlane.xlu0 %86
  %v88 = vsel %vm66, %v57, 0.0
  %89 = vadd.xlane.f32.xlu0 %v88
  %v90 = vpop.xlane.xlu0 %89
  %v91 = vsel %vm66, %v58, 0.0
  %92 = vadd.xlane.f32.xlu0 %v91
  %v93 = vpop.xlane.xlu0 %92
  %v94 = vsel %vm66, %v59, 0.0
  %95 = vadd.xlane.f32.xlu0 %v94
  %v96 = vpop.xlane.xlu0 %95
  %v97 = vsel %vm66, %v60, 0.0
  %98 = vadd.xlane.f32.xlu0 %v97
  %v99 = vpop.xlane.xlu0 %98
  %v100 = vsel %vm66, %v61, 0.0
  %101 = vadd.xlane.f32.xlu0 %v100
  %v102 = vpop.xlane.xlu0 %101
  %v103 = vsel %vm66, %v62, 0.0
  %104 = vadd.xlane.f32.xlu0 %v103
  %v105 = vpop.xlane.xlu0 %104
  %v106 = vsel %vm66, %v63, 0.0
  %107 = vadd.xlane.f32.xlu0 %v106
  %v108 = vpop.xlane.xlu0 %107
  %v109 = vsel %vm66, %v64, 0.0
  %110 = vadd.xlane.f32.xlu0 %v109
  %v111 = vpop.xlane.xlu0 %110
  %v112 = vsel %vm66, %v65, 0.0
  %113 = vadd.xlane.f32.xlu0 %v112
  %v114 = vpop.xlane.xlu0 %113
  %v115 = vrcp.pop 32.0
  %v116 = vmul.f32 %v69, %v115
  %v117 = vmul.f32 %v72, %v115
  %v118 = vmul.f32 %v75, %v115
  %v119 = vmul.f32 %v78, %v115
  %v120 = vmul.f32 %v81, %v115
  %v121 = vmul.f32 %v84, %v115
  %v122 = vmul.f32 %v87, %v115
  %v123 = vmul.f32 %v90, %v115
  %v124 = vmul.f32 %v93, %v115
  %v125 = vmul.f32 %v96, %v115
  %v126 = vmul.f32 %v99, %v115
  %v127 = vmul.f32 %v102, %v115
  %v128 = vmul.f32 %v105, %v115
  %v129 = vmul.f32 %v108, %v115
  %v130 = vmul.f32 %v111, %v115
  %v131 = vmul.f32 %v114, %v115
  %v132 = vsub.f32 %v50, %v116
  %v133 = vsub.f32 %v51, %v117
  %v134 = vsub.f32 %v52, %v118
  %v135 = vsub.f32 %v53, %v119
  %v136 = vsub.f32 %v54, %v120
  %v137 = vsub.f32 %v55, %v121
  %v138 = vsub.f32 %v56, %v122
  %v139 = vsub.f32 %v57, %v123
  %v140 = vsub.f32 %v58, %v124
  %v141 = vsub.f32 %v59, %v125
  %v142 = vsub.f32 %v60, %v126
  %v143 = vsub.f32 %v61, %v127
  %v144 = vsub.f32 %v62, %v128
  %v145 = vsub.f32 %v63, %v129
  %v146 = vsub.f32 %v64, %v130
  %v147 = vsub.f32 %v65, %v131
  %v148 = vmul.f32 %v132, %v132
  %v149 = vmul.f32 %v133, %v133
  %v150 = vmul.f32 %v134, %v134
  %v151 = vmul.f32 %v135, %v135
  %v152 = vmul.f32 %v136, %v136
  %v153 = vmul.f32 %v137, %v137
  %v154 = vmul.f32 %v138, %v138
  %v155 = vmul.f32 %v139, %v139
  %v156 = vmul.f32 %v140, %v140
  %v157 = vmul.f32 %v141, %v141
  %v158 = vmul.f32 %v142, %v142
  %v159 = vmul.f32 %v143, %v143
  %v160 = vmul.f32 %v144, %v144
  %v161 = vmul.f32 %v145, %v145
  %v162 = vmul.f32 %v146, %v146
  %v163 = vmul.f32 %v147, %v147
  %v164 = vsel %vm66, %v148, 0.0
  %165 = vadd.xlane.f32.xlu0 %v164
  %v166 = vpop.xlane.xlu0 %165
  %v167 = vsel %vm66, %v149, 0.0
  %168 = vadd.xlane.f32.xlu0 %v167
  %v169 = vpop.xlane.xlu0 %168
  %v170 = vsel %vm66, %v150, 0.0
  %171 = vadd.xlane.f32.xlu0 %v170
  %v172 = vpop.xlane.xlu0 %171
  %v173 = vsel %vm66, %v151, 0.0
  %174 = vadd.xlane.f32.xlu0 %v173
  %v175 = vpop.xlane.xlu0 %174
  %v176 = vsel %vm66, %v152, 0.0
  %177 = vadd.xlane.f32.xlu0 %v176
  %v178 = vpop.xlane.xlu0 %177
  %v179 = vsel %vm66, %v153, 0.0
  %180 = vadd.xlane.f32.xlu0 %v179
  %v181 = vpop.xlane.xlu0 %180
  %v182 = vsel %vm66, %v154, 0.0
  %183 = vadd.xlane.f32.xlu0 %v182
  %v184 = vpop.xlane.xlu0 %183
  %v185 = vsel %vm66, %v155, 0.0
  %186 = vadd.xlane.f32.xlu0 %v185
  %v187 = vpop.xlane.xlu0 %186
  %v188 = vsel %vm66, %v156, 0.0
  %189 = vadd.xlane.f32.xlu0 %v188
  %v190 = vpop.xlane.xlu0 %189
  %v191 = vsel %vm66, %v157, 0.0
  %192 = vadd.xlane.f32.xlu0 %v191
  %v193 = vpop.xlane.xlu0 %192
  %v194 = vsel %vm66, %v158, 0.0
  %195 = vadd.xlane.f32.xlu0 %v194
  %v196 = vpop.xlane.xlu0 %195
  %v197 = vsel %vm66, %v159, 0.0
  %198 = vadd.xlane.f32.xlu0 %v197
  %v199 = vpop.xlane.xlu0 %198
  %v200 = vsel %vm66, %v160, 0.0
  %201 = vadd.xlane.f32.xlu0 %v200
  %v202 = vpop.xlane.xlu0 %201
  %v203 = vsel %vm66, %v161, 0.0
  %204 = vadd.xlane.f32.xlu0 %v203
  %v205 = vpop.xlane.xlu0 %204
  %v206 = vsel %vm66, %v162, 0.0
  %207 = vadd.xlane.f32.xlu0 %v206
  %v208 = vpop.xlane.xlu0 %207
  %v209 = vsel %vm66, %v163, 0.0
  %210 = vadd.xlane.f32.xlu0 %v209
  %v211 = vpop.xlane.xlu0 %210
  %v212 = vmul.f32 %v166, %v115
  %v213 = vmul.f32 %v169, %v115
  %v214 = vmul.f32 %v172, %v115
  %v215 = vmul.f32 %v175, %v115
  %v216 = vmul.f32 %v178, %v115
  %v217 = vmul.f32 %v181, %v115
  %v218 = vmul.f32 %v184, %v115
  %v219 = vmul.f32 %v187, %v115
  %v220 = vmul.f32 %v190, %v115
  %v221 = vmul.f32 %v193, %v115
  %v222 = vmul.f32 %v196, %v115
  %v223 = vmul.f32 %v199, %v115
  %v224 = vmul.f32 %v202, %v115
  %v225 = vmul.f32 %v205, %v115
  %v226 = vmul.f32 %v208, %v115
  %v227 = vmul.f32 %v211, %v115
  %v228 = vadd.f32 %v212, 1e-05
  %v229 = vadd.f32 %v213, 1e-05
  %v230 = vadd.f32 %v214, 1e-05
  %v231 = vadd.f32 %v215, 1e-05
  %v232 = vadd.f32 %v216, 1e-05
  %v233 = vadd.f32 %v217, 1e-05
  %v234 = vadd.f32 %v218, 1e-05
  %v235 = vadd.f32 %v219, 1e-05
  %v236 = vadd.f32 %v220, 1e-05
  %v237 = vadd.f32 %v221, 1e-05
  %v238 = vadd.f32 %v222, 1e-05
  %v239 = vadd.f32 %v223, 1e-05
  %v240 = vadd.f32 %v224, 1e-05
  %v241 = vadd.f32 %v225, 1e-05
  %v242 = vadd.f32 %v226, 1e-05
  %v243 = vadd.f32 %v227, 1e-05
  %v244 = vrsqrt.pop %v228
  %v245 = vrsqrt.pop %v229
  %v246 = vrsqrt.pop %v230
  %v247 = vrsqrt.pop %v231
  %v248 = vrsqrt.pop %v232
  %v249 = vrsqrt.pop %v233
  %v250 = vrsqrt.pop %v234
  %v251 = vrsqrt.pop %v235
  %v252 = vrsqrt.pop %v236
  %v253 = vrsqrt.pop %v237
  %v254 = vrsqrt.pop %v238
  %v255 = vrsqrt.pop %v239
  %v256 = vrsqrt.pop %v240
  %v257 = vrsqrt.pop %v241
  %v258 = vrsqrt.pop %v242
  %v259 = vrsqrt.pop %v243
  %v260 = vmul.f32 %v132, %v244
  %v261 = vmul.f32 %v133, %v245
  %v262 = vmul.f32 %v134, %v246
  %v263 = vmul.f32 %v135, %v247
  %v264 = vmul.f32 %v136, %v248
  %v265 = vmul.f32 %v137, %v249
  %v266 = vmul.f32 %v138, %v250
  %v267 = vmul.f32 %v139, %v251
  %v268 = vmul.f32 %v140, %v252
  %v269 = vmul.f32 %v141, %v253
  %v270 = vmul.f32 %v142, %v254
  %v271 = vmul.f32 %v143, %v255
  %v272 = vmul.f32 %v144, %v256
  %v273 = vmul.f32 %v145, %v257
  %v274 = vmul.f32 %v146, %v258
  %v275 = vmul.f32 %v147, %v259
  %v276 = vld [vmem:[%s2] sm:$0x1]
  %v278 = vlaneseq
  %v279 = vshrl.u32 %v278, 7
  %v280 = vsub.s32 0, %v279
  %v281 = vrot.slane %v276, %v280
  %v283 = vmul.f32 %v260, %v281
  %v284 = vmul.f32 %v261, %v281
  %v285 = vmul.f32 %v262, %v281
  %v286 = vmul.f32 %v263, %v281
  %v287 = vmul.f32 %v264, %v281
  %v288 = vmul.f32 %v265, %v281
  %v289 = vmul.f32 %v266, %v281
  %v290 = vmul.f32 %v267, %v281
  %v291 = vmul.f32 %v268, %v281
  %v292 = vmul.f32 %v269, %v281
  %v293 = vmul.f32 %v270, %v281
  %v294 = vmul.f32 %v271, %v281
  %v295 = vmul.f32 %v272, %v281
  %v296 = vmul.f32 %v273, %v281
  %v297 = vmul.f32 %v274, %v281
  %v298 = vmul.f32 %v275, %v281
  %v299 = vld [vmem:[%s3] sm:$0x1]
  %v301 = vlaneseq
  %v302 = vshrl.u32 %v301, 7
  %v303 = vsub.s32 0, %v302
  %v304 = vrot.slane %v299, %v303
  %v306 = vadd.f32 %v283, %v304
  %v307 = vadd.f32 %v284, %v304
  %v308 = vadd.f32 %v285, %v304
  %v309 = vadd.f32 %v286, %v304
  %v310 = vadd.f32 %v287, %v304
  %v311 = vadd.f32 %v288, %v304
  %v312 = vadd.f32 %v289, %v304
  %v313 = vadd.f32 %v290, %v304
  %v314 = vadd.f32 %v291, %v304
  %v315 = vadd.f32 %v292, %v304
  %v316 = vadd.f32 %v293, %v304
  %v317 = vadd.f32 %v294, %v304
  %v318 = vadd.f32 %v295, %v304
  %v319 = vadd.f32 %v296, %v304
  %v320 = vadd.f32 %v297, %v304
  %v321 = vadd.f32 %v298, %v304
  %v322 = vpack.c.bf16 %v307, %v306
  %v323 = vpack.c.bf16 %v309, %v308
  %v324 = vpack.c.bf16 %v311, %v310
  %v325 = vpack.c.bf16 %v313, %v312
  %v326 = vpack.c.bf16 %v315, %v314
  %v327 = vpack.c.bf16 %v317, %v316
  %v328 = vpack.c.bf16 %v319, %v318
  %v329 = vpack.c.bf16 %v321, %v320
  %v330 = vld [vmem:[%s4] sm:$0xf]
  %v331 = vld [vmem:[%s4 + $0x4] sm:$0xf]
  %v332 = vld [vmem:[%s4 + $0x8] sm:$0xf]
  %v333 = vld [vmem:[%s4 + $0xc] sm:$0xf]
  %v334 = vld [vmem:[%s5] sm:$0x1]
  %v336 = vlaneseq
  %v337 = vshrl.u32 %v336, 7
  %v338 = vsub.s32 0, %v337
  %v339 = vrot.slane %v334, %v338
  %v345 = vunpack.c.l.b16 %v330
  %v346 = vunpack.c.l.b16 %v331
  %v347 = vunpack.c.l.b16 %v332
  %v348 = vunpack.c.l.b16 %v333
  %v349 = vpack.c.b16 %v346, %v345
  %v350 = vpack.c.b16 %v348, %v347
  %v354 = vsel %vm66, %v322, 0
  %v357 = vsel %vm66, %v323, 0
  %v360 = vsel %vm66, %v324, 0
  %v363 = vsel %vm66, %v325, 0
  %v366 = vsel %vm66, %v326, 0
  %v369 = vsel %vm66, %v327, 0
  %v372 = vsel %vm66, %v328, 0
  %v375 = vsel %vm66, %v329, 0
  %377 = vmatprep.subr.bf16.mxu0 0
  %378 = vmatpush1.bf16.msra.mxu0 %v349
  %379 = vmatprep.subr.bf16.mxu0 0
  %380 = vmatpush1.bf16.msra.mxu0 %v350
  %381 = vmatprep.subr.bf16.mxu0 0
  %382 = vmatpush1.bf16.msra.mxu0 0
  %383 = vmatprep.subr.bf16.mxu0 0
  %384 = vmatpush1.bf16.msra.mxu0 0
  %385 = vmatprep.subr.bf16.mxu0 0
  %386 = vmatpush1.bf16.msra.mxu0 0
  %387 = vmatprep.subr.bf16.mxu0 0
  %388 = vmatpush1.bf16.msra.mxu0 0
  %389 = vmatprep.subr.bf16.mxu0 0
  %390 = vmatpush1.bf16.msra.mxu0 0
  %391 = vmatprep.subr.bf16.mxu0 0
  %392 = vmatpush1.bf16.msra.mxu0 0
  %393 = vmatprep.subr.bf16.mxu0 0
  %394 = vmatpush1.bf16.msra.mxu0 0
  %395 = vmatprep.subr.bf16.mxu0 0
  %396 = vmatpush1.bf16.msra.mxu0 0
  %397 = vmatprep.subr.bf16.mxu0 0
  %398 = vmatpush1.bf16.msra.mxu0 0
  %399 = vmatprep.subr.bf16.mxu0 0
  %400 = vmatpush1.bf16.msra.mxu0 0
  %401 = vmatprep.subr.bf16.mxu0 0
  %402 = vmatpush1.bf16.msra.mxu0 0
  %403 = vmatprep.subr.bf16.mxu0 0
  %404 = vmatpush1.bf16.msra.mxu0 0
  %405 = vmatprep.subr.bf16.mxu0 0
  %406 = vmatpush1.bf16.msra.mxu0 0
  %407 = vmatprep.subr.bf16.mxu0 0
  %408 = vmatpush1.bf16.msra.mxu0 0
  %409 = vmatprep.mubr.bf16.mxu0 0
  %410 = vmatmul.mubr.bf16.gmra.mrb[0].mxu0 %v354
  %v411 = vpop.f32.mrb[0].mxu0
  %v412 = vadd.f32 %v339, %v411
  %v413 = vpop.f32.mrb[0].mxu0
  %v414 = vpop.f32.mrb[0].mxu0
  %v415 = vadd.f32 %v339, %v414
  %v416 = vpop.f32.mrb[0].mxu0
  %417 = vmatprep.mubr.bf16.mxu0 0
  %418 = vmatmul.mubr.bf16.gmra.mrb[0].mxu0 %v357
  %v419 = vpop.f32.mrb[0].mxu0
  %v420 = vadd.f32 %v339, %v419
  %v421 = vpop.f32.mrb[0].mxu0
  %v422 = vpop.f32.mrb[0].mxu0
  %v423 = vadd.f32 %v339, %v422
  %v424 = vpop.f32.mrb[0].mxu0
  %425 = vmatprep.mubr.bf16.mxu0 0
  %426 = vmatmul.mubr.bf16.gmra.mrb[0].mxu0 %v360
  %v427 = vpop.f32.mrb[0].mxu0
  %v428 = vadd.f32 %v339, %v427
  %v429 = vpop.f32.mrb[0].mxu0
  %v430 = vpop.f32.mrb[0].mxu0
  %v431 = vadd.f32 %v339, %v430
  %v432 = vpop.f32.mrb[0].mxu0
  %433 = vmatprep.mubr.bf16.mxu0 0
  %434 = vmatmul.mubr.bf16.gmra.mrb[0].mxu0 %v363
  %v435 = vpop.f32.mrb[0].mxu0
  %v436 = vadd.f32 %v339, %v435
  %v437 = vpop.f32.mrb[0].mxu0
  %v438 = vpop.f32.mrb[0].mxu0
  %v439 = vadd.f32 %v339, %v438
  %v440 = vpop.f32.mrb[0].mxu0
  %441 = vmatprep.mubr.bf16.mxu0 0
  %442 = vmatmul.mubr.bf16.gmra.mrb[0].mxu0 %v366
  %v443 = vpop.f32.mrb[0].mxu0
  %v444 = vadd.f32 %v339, %v443
  %v445 = vpop.f32.mrb[0].mxu0
  %v446 = vpop.f32.mrb[0].mxu0
  %v447 = vadd.f32 %v339, %v446
  %v448 = vpop.f32.mrb[0].mxu0
  %449 = vmatprep.mubr.bf16.mxu0 0
  %450 = vmatmul.mubr.bf16.gmra.mrb[0].mxu0 %v369
  %v451 = vpop.f32.mrb[0].mxu0
  %v452 = vadd.f32 %v339, %v451
  %v453 = vpop.f32.mrb[0].mxu0
  %v454 = vpop.f32.mrb[0].mxu0
  %v455 = vadd.f32 %v339, %v454
  %v456 = vpop.f32.mrb[0].mxu0
  %457 = vmatprep.mubr.bf16.mxu0 0
  %458 = vmatmul.mubr.bf16.gmra.mrb[0].mxu0 %v372
  %v459 = vpop.f32.mrb[0].mxu0
  %v460 = vadd.f32 %v339, %v459
  %v461 = vpop.f32.mrb[0].mxu0
  %v462 = vpop.f32.mrb[0].mxu0
  %v463 = vadd.f32 %v339, %v462
  %v464 = vpop.f32.mrb[0].mxu0
  %465 = vmatprep.mubr.bf16.mxu0 0
  %466 = vmatmul.mubr.bf16.gmra.mrb[0].mxu0 %v375
  %v467 = vpop.f32.mrb[0].mxu0
  %v468 = vadd.f32 %v339, %v467
  %v469 = vpop.f32.mrb[0].mxu0
  %v470 = vpop.f32.mrb[0].mxu0
  %v471 = vadd.f32 %v339, %v470
  %v472 = vpop.f32.mrb[0].mxu0
  %473 = vdwg.mxu0
  %v474 = vpack.c.bf16 %v415, %v412
  %v475 = vpack.c.bf16 %v423, %v420
  %v476 = vpack.c.bf16 %v431, %v428
  %v477 = vpack.c.bf16 %v439, %v436
  %v478 = vpack.c.bf16 %v447, %v444
  %v479 = vpack.c.bf16 %v455, %v452
  %v480 = vpack.c.bf16 %v463, %v460
  %v481 = vpack.c.bf16 %v471, %v468
  %490 = vrot.lane.b32.xlu0 %v474, 120
  %v491 = vpop.permute.xlu0 %490
  %492 = vrot.lane.b32.xlu0 %v475, 120
  %v493 = vpop.permute.xlu0 %492
  %494 = vrot.lane.b32.xlu0 %v476, 120
  %v495 = vpop.permute.xlu0 %494
  %496 = vrot.lane.b32.xlu0 %v477, 120
  %v497 = vpop.permute.xlu0 %496
  %498 = vrot.lane.b32.xlu0 %v478, 120
  %v499 = vpop.permute.xlu0 %498
  %500 = vrot.lane.b32.xlu0 %v479, 120
  %v501 = vpop.permute.xlu0 %500
  %502 = vrot.lane.b32.xlu0 %v480, 120
  %v503 = vpop.permute.xlu0 %502
  %504 = vrot.lane.b32.xlu0 %v481, 120
  %v505 = vpop.permute.xlu0 %504
  %506 = vrot.lane.b32.xlu0 %v474, 112
  %v507 = vpop.permute.xlu0 %506
  %508 = vrot.lane.b32.xlu0 %v475, 112
  %v509 = vpop.permute.xlu0 %508
  %510 = vrot.lane.b32.xlu0 %v476, 112
  %v511 = vpop.permute.xlu0 %510
  %512 = vrot.lane.b32.xlu0 %v477, 112
  %v513 = vpop.permute.xlu0 %512
  %514 = vrot.lane.b32.xlu0 %v478, 112
  %v515 = vpop.permute.xlu0 %514
  %516 = vrot.lane.b32.xlu0 %v479, 112
  %v517 = vpop.permute.xlu0 %516
  %518 = vrot.lane.b32.xlu0 %v480, 112
  %v519 = vpop.permute.xlu0 %518
  %520 = vrot.lane.b32.xlu0 %v481, 112
  %v521 = vpop.permute.xlu0 %520
  %522 = vrot.lane.b32.xlu0 %v474, 104
  %v523 = vpop.permute.xlu0 %522
  %524 = vrot.lane.b32.xlu0 %v475, 104
  %v525 = vpop.permute.xlu0 %524
  %526 = vrot.lane.b32.xlu0 %v476, 104
  %v527 = vpop.permute.xlu0 %526
  %528 = vrot.lane.b32.xlu0 %v477, 104
  %v529 = vpop.permute.xlu0 %528
  %530 = vrot.lane.b32.xlu0 %v478, 104
  %v531 = vpop.permute.xlu0 %530
  %532 = vrot.lane.b32.xlu0 %v479, 104
  %v533 = vpop.permute.xlu0 %532
  %534 = vrot.lane.b32.xlu0 %v480, 104
  %v535 = vpop.permute.xlu0 %534
  %536 = vrot.lane.b32.xlu0 %v481, 104
  %v537 = vpop.permute.xlu0 %536
  %538 = vrot.lane.b32.xlu0 %v474, 96
  %v539 = vpop.permute.xlu0 %538
  %vm540 = vcmask 64512
  %v542 = vsel %vm540, %v474, 0
  %v545 = vsel %vm540, %v539, 0
  %547 = vmatprep.subr.bf16.mxu0 0
  %548 = vmatpush1.bf16.xpose.msra.mxu0 %v545
  %549 = vmatprep.subr.bf16.mxu0 0
  %550 = vmatpush1.bf16.xpose.msra.mxu0 0
  %551 = vmatprep.subr.bf16.mxu0 0
  %552 = vmatpush1.bf16.xpose.msra.mxu0 0
  %553 = vmatprep.subr.bf16.mxu0 0
  %554 = vmatpush1.bf16.xpose.msra.mxu0 0
  %555 = vmatprep.subr.bf16.mxu0 0
  %556 = vmatpush1.bf16.xpose.msra.mxu0 0
  %557 = vmatprep.subr.bf16.mxu0 0
  %558 = vmatpush1.bf16.xpose.msra.mxu0 0
  %559 = vmatprep.subr.bf16.mxu0 0
  %560 = vmatpush1.bf16.xpose.msra.mxu0 0
  %561 = vmatprep.subr.bf16.mxu0 0
  %562 = vmatpush1.bf16.xpose.msra.mxu0 0
  %563 = vmatprep.subr.bf16.mxu0 0
  %564 = vmatpush1.bf16.xpose.msra.mxu0 0
  %565 = vmatprep.subr.bf16.mxu0 0
  %566 = vmatpush1.bf16.xpose.msra.mxu0 0
  %567 = vmatprep.subr.bf16.mxu0 0
  %568 = vmatpush1.bf16.xpose.msra.mxu0 0
  %569 = vmatprep.subr.bf16.mxu0 0
  %570 = vmatpush1.bf16.xpose.msra.mxu0 0
  %571 = vmatprep.subr.bf16.mxu0 0
  %572 = vmatpush1.bf16.xpose.msra.mxu0 0
  %573 = vmatprep.subr.bf16.mxu0 0
  %574 = vmatpush1.bf16.xpose.msra.mxu0 0
  %575 = vmatprep.subr.bf16.mxu0 0
  %576 = vmatpush1.bf16.xpose.msra.mxu0 0
  %577 = vmatprep.subr.bf16.mxu0 0
  %578 = vmatpush1.bf16.xpose.msra.mxu0 0
  %579 = vmatprep.mubr.bf16.mxu0 0
  %580 = vmatmul.mubr.bf16.gmra.mrb[0].mxu0 %v542
  %v581 = vpop.f32.mrb[0].mxu0
  %v582 = vadd.f32 0.0, %v581
  %v583 = vpop.f32.mrb[0].mxu0
  %v584 = vpop.f32.mrb[0].mxu0
  %v585 = vadd.f32 0.0, %v584
  %v586 = vpop.f32.mrb[0].mxu0
  %587 = vdwg.mxu0
  %588 = vrot.lane.b32.xlu0 %v475, 96
  %v589 = vpop.permute.xlu0 %588
  %v591 = vsel %vm540, %v475, 0
  %v594 = vsel %vm540, %v589, 0
  %596 = vmatprep.subr.bf16.mxu0 0
  %597 = vmatpush1.bf16.xpose.msra.mxu0 %v594
  %598 = vmatprep.subr.bf16.mxu0 0
  %599 = vmatpush1.bf16.xpose.msra.mxu0 0
  %600 = vmatprep.subr.bf16.mxu0 0
  %601 = vmatpush1.bf16.xpose.msra.mxu0 0
  %602 = vmatprep.subr.bf16.mxu0 0
  %603 = vmatpush1.bf16.xpose.msra.mxu0 0
  %604 = vmatprep.subr.bf16.mxu0 0
  %605 = vmatpush1.bf16.xpose.msra.mxu0 0
  %606 = vmatprep.subr.bf16.mxu0 0
  %607 = vmatpush1.bf16.xpose.msra.mxu0 0
  %608 = vmatprep.subr.bf16.mxu0 0
  %609 = vmatpush1.bf16.xpose.msra.mxu0 0
  %610 = vmatprep.subr.bf16.mxu0 0
  %611 = vmatpush1.bf16.xpose.msra.mxu0 0
  %612 = vmatprep.subr.bf16.mxu0 0
  %613 = vmatpush1.bf16.xpose.msra.mxu0 0
  %614 = vmatprep.subr.bf16.mxu0 0
  %615 = vmatpush1.bf16.xpose.msra.mxu0 0
  %616 = vmatprep.subr.bf16.mxu0 0
  %617 = vmatpush1.bf16.xpose.msra.mxu0 0
  %618 = vmatprep.subr.bf16.mxu0 0
  %619 = vmatpush1.bf16.xpose.msra.mxu0 0
  %620 = vmatprep.subr.bf16.mxu0 0
  %621 = vmatpush1.bf16.xpose.msra.mxu0 0
  %622 = vmatprep.subr.bf16.mxu0 0
  %623 = vmatpush1.bf16.xpose.msra.mxu0 0
  %624 = vmatprep.subr.bf16.mxu0 0
  %625 = vmatpush1.bf16.xpose.msra.mxu0 0
  %626 = vmatprep.subr.bf16.mxu0 0
  %627 = vmatpush1.bf16.xpose.msra.mxu0 0
  %628 = vmatprep.mubr.bf16.mxu0 0
  %629 = vmatmul.mubr.bf16.gmra.mrb[0].mxu0 %v591
  %v630 = vpop.f32.mrb[0].mxu0
  %v631 = vadd.f32 0.0, %v630
  %v632 = vpop.f32.mrb[0].mxu0
  %v633 = vpop.f32.mrb[0].mxu0
  %v634 = vadd.f32 0.0, %v633
  %v635 = vpop.f32.mrb[0].mxu0
  %636 = vdwg.mxu0
  %637 = vrot.lane.b32.xlu0 %v476, 96
  %v638 = vpop.permute.xlu0 %637
  %v640 = vsel %vm540, %v476, 0
  %v643 = vsel %vm540, %v638, 0
  %645 = vmatprep.subr.bf16.mxu0 0
  %646 = vmatpush1.bf16.xpose.msra.mxu0 %v643
  %647 = vmatprep.subr.bf16.mxu0 0
  %648 = vmatpush1.bf16.xpose.msra.mxu0 0
  %649 = vmatprep.subr.bf16.mxu0 0
  %650 = vmatpush1.bf16.xpose.msra.mxu0 0
  %651 = vmatprep.subr.bf16.mxu0 0
  %652 = vmatpush1.bf16.xpose.msra.mxu0 0
  %653 = vmatprep.subr.bf16.mxu0 0
  %654 = vmatpush1.bf16.xpose.msra.mxu0 0
  %655 = vmatprep.subr.bf16.mxu0 0
  %656 = vmatpush1.bf16.xpose.msra.mxu0 0
  %657 = vmatprep.subr.bf16.mxu0 0
  %658 = vmatpush1.bf16.xpose.msra.mxu0 0
  %659 = vmatprep.subr.bf16.mxu0 0
  %660 = vmatpush1.bf16.xpose.msra.mxu0 0
  %661 = vmatprep.subr.bf16.mxu0 0
  %662 = vmatpush1.bf16.xpose.msra.mxu0 0
  %663 = vmatprep.subr.bf16.mxu0 0
  %664 = vmatpush1.bf16.xpose.msra.mxu0 0
  %665 = vmatprep.subr.bf16.mxu0 0
  %666 = vmatpush1.bf16.xpose.msra.mxu0 0
  %667 = vmatprep.subr.bf16.mxu0 0
  %668 = vmatpush1.bf16.xpose.msra.mxu0 0
  %669 = vmatprep.subr.bf16.mxu0 0
  %670 = vmatpush1.bf16.xpose.msra.mxu0 0
  %671 = vmatprep.subr.bf16.mxu0 0
  %672 = vmatpush1.bf16.xpose.msra.mxu0 0
  %673 = vmatprep.subr.bf16.mxu0 0
  %674 = vmatpush1.bf16.xpose.msra.mxu0 0
  %675 = vmatprep.subr.bf16.mxu0 0
  %676 = vmatpush1.bf16.xpose.msra.mxu0 0
  %677 = vmatprep.mubr.bf16.mxu0 0
  %678 = vmatmul.mubr.bf16.gmra.mrb[0].mxu0 %v640
  %v679 = vpop.f32.mrb[0].mxu0
  %v680 = vadd.f32 0.0, %v679
  %v681 = vpop.f32.mrb[0].mxu0
  %v682 = vpop.f32.mrb[0].mxu0
  %v683 = vadd.f32 0.0, %v682
  %v684 = vpop.f32.mrb[0].mxu0
  %685 = vdwg.mxu0
  %686 = vrot.lane.b32.xlu0 %v477, 96
  %v687 = vpop.permute.xlu0 %686
  %v689 = vsel %vm540, %v477, 0
  %v692 = vsel %vm540, %v687, 0
  %694 = vmatprep.subr.bf16.mxu0 0
  %695 = vmatpush1.bf16.xpose.msra.mxu0 %v692
  %696 = vmatprep.subr.bf16.mxu0 0
  %697 = vmatpush1.bf16.xpose.msra.mxu0 0
  %698 = vmatprep.subr.bf16.mxu0 0
  %699 = vmatpush1.bf16.xpose.msra.mxu0 0
  %700 = vmatprep.subr.bf16.mxu0 0
  %701 = vmatpush1.bf16.xpose.msra.mxu0 0
  %702 = vmatprep.subr.bf16.mxu0 0
  %703 = vmatpush1.bf16.xpose.msra.mxu0 0
  %704 = vmatprep.subr.bf16.mxu0 0
  %705 = vmatpush1.bf16.xpose.msra.mxu0 0
  %706 = vmatprep.subr.bf16.mxu0 0
  %707 = vmatpush1.bf16.xpose.msra.mxu0 0
  %708 = vmatprep.subr.bf16.mxu0 0
  %709 = vmatpush1.bf16.xpose.msra.mxu0 0
  %710 = vmatprep.subr.bf16.mxu0 0
  %711 = vmatpush1.bf16.xpose.msra.mxu0 0
  %712 = vmatprep.subr.bf16.mxu0 0
  %713 = vmatpush1.bf16.xpose.msra.mxu0 0
  %714 = vmatprep.subr.bf16.mxu0 0
  %715 = vmatpush1.bf16.xpose.msra.mxu0 0
  %716 = vmatprep.subr.bf16.mxu0 0
  %717 = vmatpush1.bf16.xpose.msra.mxu0 0
  %718 = vmatprep.subr.bf16.mxu0 0
  %719 = vmatpush1.bf16.xpose.msra.mxu0 0
  %720 = vmatprep.subr.bf16.mxu0 0
  %721 = vmatpush1.bf16.xpose.msra.mxu0 0
  %722 = vmatprep.subr.bf16.mxu0 0
  %723 = vmatpush1.bf16.xpose.msra.mxu0 0
  %724 = vmatprep.subr.bf16.mxu0 0
  %725 = vmatpush1.bf16.xpose.msra.mxu0 0
  %726 = vmatprep.mubr.bf16.mxu0 0
  %727 = vmatmul.mubr.bf16.gmra.mrb[0].mxu0 %v689
  %v728 = vpop.f32.mrb[0].mxu0
  %v729 = vadd.f32 0.0, %v728
  %v730 = vpop.f32.mrb[0].mxu0
  %v731 = vpop.f32.mrb[0].mxu0
  %v732 = vadd.f32 0.0, %v731
  %v733 = vpop.f32.mrb[0].mxu0
  %734 = vdwg.mxu0
  %735 = vrot.lane.b32.xlu0 %v478, 96
  %v736 = vpop.permute.xlu0 %735
  %v738 = vsel %vm540, %v478, 0
  %v741 = vsel %vm540, %v736, 0
  %743 = vmatprep.subr.bf16.mxu0 0
  %744 = vmatpush1.bf16.xpose.msra.mxu0 %v741
  %745 = vmatprep.subr.bf16.mxu0 0
  %746 = vmatpush1.bf16.xpose.msra.mxu0 0
  %747 = vmatprep.subr.bf16.mxu0 0
  %748 = vmatpush1.bf16.xpose.msra.mxu0 0
  %749 = vmatprep.subr.bf16.mxu0 0
  %750 = vmatpush1.bf16.xpose.msra.mxu0 0
  %751 = vmatprep.subr.bf16.mxu0 0
  %752 = vmatpush1.bf16.xpose.msra.mxu0 0
  %753 = vmatprep.subr.bf16.mxu0 0
  %754 = vmatpush1.bf16.xpose.msra.mxu0 0
  %755 = vmatprep.subr.bf16.mxu0 0
  %756 = vmatpush1.bf16.xpose.msra.mxu0 0
  %757 = vmatprep.subr.bf16.mxu0 0
  %758 = vmatpush1.bf16.xpose.msra.mxu0 0
  %759 = vmatprep.subr.bf16.mxu0 0
  %760 = vmatpush1.bf16.xpose.msra.mxu0 0
  %761 = vmatprep.subr.bf16.mxu0 0
  %762 = vmatpush1.bf16.xpose.msra.mxu0 0
  %763 = vmatprep.subr.bf16.mxu0 0
  %764 = vmatpush1.bf16.xpose.msra.mxu0 0
  %765 = vmatprep.subr.bf16.mxu0 0
  %766 = vmatpush1.bf16.xpose.msra.mxu0 0
  %767 = vmatprep.subr.bf16.mxu0 0
  %768 = vmatpush1.bf16.xpose.msra.mxu0 0
  %769 = vmatprep.subr.bf16.mxu0 0
  %770 = vmatpush1.bf16.xpose.msra.mxu0 0
  %771 = vmatprep.subr.bf16.mxu0 0
  %772 = vmatpush1.bf16.xpose.msra.mxu0 0
  %773 = vmatprep.subr.bf16.mxu0 0
  %774 = vmatpush1.bf16.xpose.msra.mxu0 0
  %775 = vmatprep.mubr.bf16.mxu0 0
  %776 = vmatmul.mubr.bf16.gmra.mrb[0].mxu0 %v738
  %v777 = vpop.f32.mrb[0].mxu0
  %v778 = vadd.f32 0.0, %v777
  %v779 = vpop.f32.mrb[0].mxu0
  %v780 = vpop.f32.mrb[0].mxu0
  %v781 = vadd.f32 0.0, %v780
  %v782 = vpop.f32.mrb[0].mxu0
  %783 = vdwg.mxu0
  %784 = vrot.lane.b32.xlu0 %v479, 96
  %v785 = vpop.permute.xlu0 %784
  %v787 = vsel %vm540, %v479, 0
  %v790 = vsel %vm540, %v785, 0
  %792 = vmatprep.subr.bf16.mxu0 0
  %793 = vmatpush1.bf16.xpose.msra.mxu0 %v790
  %794 = vmatprep.subr.bf16.mxu0 0
  %795 = vmatpush1.bf16.xpose.msra.mxu0 0
  %796 = vmatprep.subr.bf16.mxu0 0
  %797 = vmatpush1.bf16.xpose.msra.mxu0 0
  %798 = vmatprep.subr.bf16.mxu0 0
  %799 = vmatpush1.bf16.xpose.msra.mxu0 0
  %800 = vmatprep.subr.bf16.mxu0 0
  %801 = vmatpush1.bf16.xpose.msra.mxu0 0
  %802 = vmatprep.subr.bf16.mxu0 0
  %803 = vmatpush1.bf16.xpose.msra.mxu0 0
  %804 = vmatprep.subr.bf16.mxu0 0
  %805 = vmatpush1.bf16.xpose.msra.mxu0 0
  %806 = vmatprep.subr.bf16.mxu0 0
  %807 = vmatpush1.bf16.xpose.msra.mxu0 0
  %808 = vmatprep.subr.bf16.mxu0 0
  %809 = vmatpush1.bf16.xpose.msra.mxu0 0
  %810 = vmatprep.subr.bf16.mxu0 0
  %811 = vmatpush1.bf16.xpose.msra.mxu0 0
  %812 = vmatprep.subr.bf16.mxu0 0
  %813 = vmatpush1.bf16.xpose.msra.mxu0 0
  %814 = vmatprep.subr.bf16.mxu0 0
  %815 = vmatpush1.bf16.xpose.msra.mxu0 0
  %816 = vmatprep.subr.bf16.mxu0 0
  %817 = vmatpush1.bf16.xpose.msra.mxu0 0
  %818 = vmatprep.subr.bf16.mxu0 0
  %819 = vmatpush1.bf16.xpose.msra.mxu0 0
  %820 = vmatprep.subr.bf16.mxu0 0
  %821 = vmatpush1.bf16.xpose.msra.mxu0 0
  %822 = vmatprep.subr.bf16.mxu0 0
  %823 = vmatpush1.bf16.xpose.msra.mxu0 0
  %824 = vmatprep.mubr.bf16.mxu0 0
  %825 = vmatmul.mubr.bf16.gmra.mrb[0].mxu0 %v787
  %v826 = vpop.f32.mrb[0].mxu0
  %v827 = vadd.f32 0.0, %v826
  %v828 = vpop.f32.mrb[0].mxu0
  %v829 = vpop.f32.mrb[0].mxu0
  %v830 = vadd.f32 0.0, %v829
  %v831 = vpop.f32.mrb[0].mxu0
  %832 = vdwg.mxu0
  %833 = vrot.lane.b32.xlu0 %v480, 96
  %v834 = vpop.permute.xlu0 %833
  %v836 = vsel %vm540, %v480, 0
  %v839 = vsel %vm540, %v834, 0
  %841 = vmatprep.subr.bf16.mxu0 0
  %842 = vmatpush1.bf16.xpose.msra.mxu0 %v839
  %843 = vmatprep.subr.bf16.mxu0 0
  %844 = vmatpush1.bf16.xpose.msra.mxu0 0
  %845 = vmatprep.subr.bf16.mxu0 0
  %846 = vmatpush1.bf16.xpose.msra.mxu0 0
  %847 = vmatprep.subr.bf16.mxu0 0
  %848 = vmatpush1.bf16.xpose.msra.mxu0 0
  %849 = vmatprep.subr.bf16.mxu0 0
  %850 = vmatpush1.bf16.xpose.msra.mxu0 0
  %851 = vmatprep.subr.bf16.mxu0 0
  %852 = vmatpush1.bf16.xpose.msra.mxu0 0
  %853 = vmatprep.subr.bf16.mxu0 0
  %854 = vmatpush1.bf16.xpose.msra.mxu0 0
  %855 = vmatprep.subr.bf16.mxu0 0
  %856 = vmatpush1.bf16.xpose.msra.mxu0 0
  %857 = vmatprep.subr.bf16.mxu0 0
  %858 = vmatpush1.bf16.xpose.msra.mxu0 0
  %859 = vmatprep.subr.bf16.mxu0 0
  %860 = vmatpush1.bf16.xpose.msra.mxu0 0
  %861 = vmatprep.subr.bf16.mxu0 0
  %862 = vmatpush1.bf16.xpose.msra.mxu0 0
  %863 = vmatprep.subr.bf16.mxu0 0
  %864 = vmatpush1.bf16.xpose.msra.mxu0 0
  %865 = vmatprep.subr.bf16.mxu0 0
  %866 = vmatpush1.bf16.xpose.msra.mxu0 0
  %867 = vmatprep.subr.bf16.mxu0 0
  %868 = vmatpush1.bf16.xpose.msra.mxu0 0
  %869 = vmatprep.subr.bf16.mxu0 0
  %870 = vmatpush1.bf16.xpose.msra.mxu0 0
  %871 = vmatprep.subr.bf16.mxu0 0
  %872 = vmatpush1.bf16.xpose.msra.mxu0 0
  %873 = vmatprep.mubr.bf16.mxu0 0
  %874 = vmatmul.mubr.bf16.gmra.mrb[0].mxu0 %v836
  %v875 = vpop.f32.mrb[0].mxu0
  %v876 = vadd.f32 0.0, %v875
  %v877 = vpop.f32.mrb[0].mxu0
  %v878 = vpop.f32.mrb[0].mxu0
  %v879 = vadd.f32 0.0, %v878
  %v880 = vpop.f32.mrb[0].mxu0
  %881 = vdwg.mxu0
  %882 = vrot.lane.b32.xlu0 %v481, 96
  %v883 = vpop.permute.xlu0 %882
  %v885 = vsel %vm540, %v481, 0
  %v888 = vsel %vm540, %v883, 0
  %890 = vmatprep.subr.bf16.mxu0 0
  %891 = vmatpush1.bf16.xpose.msra.mxu0 %v888
  %892 = vmatprep.subr.bf16.mxu0 0
  %893 = vmatpush1.bf16.xpose.msra.mxu0 0
  %894 = vmatprep.subr.bf16.mxu0 0
  %895 = vmatpush1.bf16.xpose.msra.mxu0 0
  %896 = vmatprep.subr.bf16.mxu0 0
  %897 = vmatpush1.bf16.xpose.msra.mxu0 0
  %898 = vmatprep.subr.bf16.mxu0 0
  %899 = vmatpush1.bf16.xpose.msra.mxu0 0
  %900 = vmatprep.subr.bf16.mxu0 0
  %901 = vmatpush1.bf16.xpose.msra.mxu0 0
  %902 = vmatprep.subr.bf16.mxu0 0
  %903 = vmatpush1.bf16.xpose.msra.mxu0 0
  %904 = vmatprep.subr.bf16.mxu0 0
  %905 = vmatpush1.bf16.xpose.msra.mxu0 0
  %906 = vmatprep.subr.bf16.mxu0 0
  %907 = vmatpush1.bf16.xpose.msra.mxu0 0
  %908 = vmatprep.subr.bf16.mxu0 0
  %909 = vmatpush1.bf16.xpose.msra.mxu0 0
  %910 = vmatprep.subr.bf16.mxu0 0
  %911 = vmatpush1.bf16.xpose.msra.mxu0 0
  %912 = vmatprep.subr.bf16.mxu0 0
  %913 = vmatpush1.bf16.xpose.msra.mxu0 0
  %914 = vmatprep.subr.bf16.mxu0 0
  %915 = vmatpush1.bf16.xpose.msra.mxu0 0
  %916 = vmatprep.subr.bf16.mxu0 0
  %917 = vmatpush1.bf16.xpose.msra.mxu0 0
  %918 = vmatprep.subr.bf16.mxu0 0
  %919 = vmatpush1.bf16.xpose.msra.mxu0 0
  %920 = vmatprep.subr.bf16.mxu0 0
  %921 = vmatpush1.bf16.xpose.msra.mxu0 0
  %922 = vmatprep.mubr.bf16.mxu0 0
  %923 = vmatmul.mubr.bf16.gmra.mrb[0].mxu0 %v885
  %v924 = vpop.f32.mrb[0].mxu0
  %v925 = vadd.f32 0.0, %v924
  %v926 = vpop.f32.mrb[0].mxu0
  %v927 = vpop.f32.mrb[0].mxu0
  %v928 = vadd.f32 0.0, %v927
  %v929 = vpop.f32.mrb[0].mxu0
  %930 = vdwg.mxu0
  %931 = vrot.lane.b32.xlu0 %v491, 96
  %v932 = vpop.permute.xlu0 %931
  %v934 = vsel %vm540, %v491, 0
  %v937 = vsel %vm540, %v932, 0
  %939 = vmatprep.subr.bf16.mxu0 0
  %940 = vmatpush1.bf16.xpose.msra.mxu0 %v937
  %941 = vmatprep.subr.bf16.mxu0 0
  %942 = vmatpush1.bf16.xpose.msra.mxu0 0
  %943 = vmatprep.subr.bf16.mxu0 0
  %944 = vmatpush1.bf16.xpose.msra.mxu0 0
  %945 = vmatprep.subr.bf16.mxu0 0
  %946 = vmatpush1.bf16.xpose.msra.mxu0 0
  %947 = vmatprep.subr.bf16.mxu0 0
  %948 = vmatpush1.bf16.xpose.msra.mxu0 0
  %949 = vmatprep.subr.bf16.mxu0 0
  %950 = vmatpush1.bf16.xpose.msra.mxu0 0
  %951 = vmatprep.subr.bf16.mxu0 0
  %952 = vmatpush1.bf16.xpose.msra.mxu0 0
  %953 = vmatprep.subr.bf16.mxu0 0
  %954 = vmatpush1.bf16.xpose.msra.mxu0 0
  %955 = vmatprep.subr.bf16.mxu0 0
  %956 = vmatpush1.bf16.xpose.msra.mxu0 0
  %957 = vmatprep.subr.bf16.mxu0 0
  %958 = vmatpush1.bf16.xpose.msra.mxu0 0
  %959 = vmatprep.subr.bf16.mxu0 0
  %960 = vmatpush1.bf16.xpose.msra.mxu0 0
  %961 = vmatprep.subr.bf16.mxu0 0
  %962 = vmatpush1.bf16.xpose.msra.mxu0 0
  %963 = vmatprep.subr.bf16.mxu0 0
  %964 = vmatpush1.bf16.xpose.msra.mxu0 0
  %965 = vmatprep.subr.bf16.mxu0 0
  %966 = vmatpush1.bf16.xpose.msra.mxu0 0
  %967 = vmatprep.subr.bf16.mxu0 0
  %968 = vmatpush1.bf16.xpose.msra.mxu0 0
  %969 = vmatprep.subr.bf16.mxu0 0
  %970 = vmatpush1.bf16.xpose.msra.mxu0 0
  %971 = vmatprep.mubr.bf16.mxu0 0
  %972 = vmatmul.mubr.bf16.gmra.mrb[0].mxu0 %v934
  %v973 = vpop.f32.mrb[0].mxu0
  %v974 = vadd.f32 0.0, %v973
  %v975 = vpop.f32.mrb[0].mxu0
  %v976 = vpop.f32.mrb[0].mxu0
  %v977 = vadd.f32 0.0, %v976
  %v978 = vpop.f32.mrb[0].mxu0
  %979 = vdwg.mxu0
  %980 = vrot.lane.b32.xlu0 %v493, 96
  %v981 = vpop.permute.xlu0 %980
  %v983 = vsel %vm540, %v493, 0
  %v986 = vsel %vm540, %v981, 0
  %988 = vmatprep.subr.bf16.mxu0 0
  %989 = vmatpush1.bf16.xpose.msra.mxu0 %v986
  %990 = vmatprep.subr.bf16.mxu0 0
  %991 = vmatpush1.bf16.xpose.msra.mxu0 0
  %992 = vmatprep.subr.bf16.mxu0 0
  %993 = vmatpush1.bf16.xpose.msra.mxu0 0
  %994 = vmatprep.subr.bf16.mxu0 0
  %995 = vmatpush1.bf16.xpose.msra.mxu0 0
  %996 = vmatprep.subr.bf16.mxu0 0
  %997 = vmatpush1.bf16.xpose.msra.mxu0 0
  %998 = vmatprep.subr.bf16.mxu0 0
  %999 = vmatpush1.bf16.xpose.msra.mxu0 0
  %1000 = vmatprep.subr.bf16.mxu0 0
  %1001 = vmatpush1.bf16.xpose.msra.mxu0 0
  %1002 = vmatprep.subr.bf16.mxu0 0
  %1003 = vmatpush1.bf16.xpose.msra.mxu0 0
  %1004 = vmatprep.subr.bf16.mxu0 0
  %1005 = vmatpush1.bf16.xpose.msra.mxu0 0
  %1006 = vmatprep.subr.bf16.mxu0 0
  %1007 = vmatpush1.bf16.xpose.msra.mxu0 0
  %1008 = vmatprep.subr.bf16.mxu0 0
  %1009 = vmatpush1.bf16.xpose.msra.mxu0 0
  %1010 = vmatprep.subr.bf16.mxu0 0
  %1011 = vmatpush1.bf16.xpose.msra.mxu0 0
  %1012 = vmatprep.subr.bf16.mxu0 0
  %1013 = vmatpush1.bf16.xpose.msra.mxu0 0
  %1014 = vmatprep.subr.bf16.mxu0 0
  %1015 = vmatpush1.bf16.xpose.msra.mxu0 0
  %1016 = vmatprep.subr.bf16.mxu0 0
  %1017 = vmatpush1.bf16.xpose.msra.mxu0 0
  %1018 = vmatprep.subr.bf16.mxu0 0
  %1019 = vmatpush1.bf16.xpose.msra.mxu0 0
  %1020 = vmatprep.mubr.bf16.mxu0 0
  %1021 = vmatmul.mubr.bf16.gmra.mrb[0].mxu0 %v983
  %v1022 = vpop.f32.mrb[0].mxu0
  %v1023 = vadd.f32 0.0, %v1022
  %v1024 = vpop.f32.mrb[0].mxu0
  %v1025 = vpop.f32.mrb[0].mxu0
  %v1026 = vadd.f32 0.0, %v1025
  %v1027 = vpop.f32.mrb[0].mxu0
  %1028 = vdwg.mxu0
  %1029 = vrot.lane.b32.xlu0 %v495, 96
  %v1030 = vpop.permute.xlu0 %1029
  %v1032 = vsel %vm540, %v495, 0
  %v1035 = vsel %vm540, %v1030, 0
  %1037 = vmatprep.subr.bf16.mxu0 0
  %1038 = vmatpush1.bf16.xpose.msra.mxu0 %v1035
  %1039 = vmatprep.subr.bf16.mxu0 0
  %1040 = vmatpush1.bf16.xpose.msra.mxu0 0
  %1041 = vmatprep.subr.bf16.mxu0 0
  %1042 = vmatpush1.bf16.xpose.msra.mxu0 0
  %1043 = vmatprep.subr.bf16.mxu0 0
  %1044 = vmatpush1.bf16.xpose.msra.mxu0 0
  %1045 = vmatprep.subr.bf16.mxu0 0
  %1046 = vmatpush1.bf16.xpose.msra.mxu0 0
  %1047 = vmatprep.subr.bf16.mxu0 0
  %1048 = vmatpush1.bf16.xpose.msra.mxu0 0
  %1049 = vmatprep.subr.bf16.mxu0 0
  %1050 = vmatpush1.bf16.xpose.msra.mxu0 0
  %1051 = vmatprep.subr.bf16.mxu0 0
  %1052 = vmatpush1.bf16.xpose.msra.mxu0 0
  %1053 = vmatprep.subr.bf16.mxu0 0
  %1054 = vmatpush1.bf16.xpose.msra.mxu0 0
  %1055 = vmatprep.subr.bf16.mxu0 0
  %1056 = vmatpush1.bf16.xpose.msra.mxu0 0
  %1057 = vmatprep.subr.bf16.mxu0 0
  %1058 = vmatpush1.bf16.xpose.msra.mxu0 0
  %1059 = vmatprep.subr.bf16.mxu0 0
  %1060 = vmatpush1.bf16.xpose.msra.mxu0 0
  %1061 = vmatprep.subr.bf16.mxu0 0
  %1062 = vmatpush1.bf16.xpose.msra.mxu0 0
  %1063 = vmatprep.subr.bf16.mxu0 0
  %1064 = vmatpush1.bf16.xpose.msra.mxu0 0
  %1065 = vmatprep.subr.bf16.mxu0 0
  %1066 = vmatpush1.bf16.xpose.msra.mxu0 0
  %1067 = vmatprep.subr.bf16.mxu0 0
  %1068 = vmatpush1.bf16.xpose.msra.mxu0 0
  %1069 = vmatprep.mubr.bf16.mxu0 0
  %1070 = vmatmul.mubr.bf16.gmra.mrb[0].mxu0 %v1032
  %v1071 = vpop.f32.mrb[0].mxu0
  %v1072 = vadd.f32 0.0, %v1071
  %v1073 = vpop.f32.mrb[0].mxu0
  %v1074 = vpop.f32.mrb[0].mxu0
  %v1075 = vadd.f32 0.0, %v1074
  %v1076 = vpop.f32.mrb[0].mxu0
  %1077 = vdwg.mxu0
  %1078 = vrot.lane.b32.xlu0 %v497, 96
  %v1079 = vpop.permute.xlu0 %1078
  %v1081 = vsel %vm540, %v497, 0
  %v1084 = vsel %vm540, %v1079, 0
  %1086 = vmatprep.subr.bf16.mxu0 0
  %1087 = vmatpush1.bf16.xpose.msra.mxu0 %v1084
  %1088 = vmatprep.subr.bf16.mxu0 0
  %1089 = vmatpush1.bf16.xpose.msra.mxu0 0
  %1090 = vmatprep.subr.bf16.mxu0 0
  %1091 = vmatpush1.bf16.xpose.msra.mxu0 0
  %1092 = vmatprep.subr.bf16.mxu0 0
  %1093 = vmatpush1.bf16.xpose.msra.mxu0 0
  %1094 = vmatprep.subr.bf16.mxu0 0
  %1095 = vmatpush1.bf16.xpose.msra.mxu0 0
  %1096 = vmatprep.subr.bf16.mxu0 0
  %1097 = vmatpush1.bf16.xpose.msra.mxu0 0
  %1098 = vmatprep.subr.bf16.mxu0 0
  %1099 = vmatpush1.bf16.xpose.msra.mxu0 0
  %1100 = vmatprep.subr.bf16.mxu0 0
  %1101 = vmatpush1.bf16.xpose.msra.mxu0 0
  %1102 = vmatprep.subr.bf16.mxu0 0
  %1103 = vmatpush1.bf16.xpose.msra.mxu0 0
  %1104 = vmatprep.subr.bf16.mxu0 0
  %1105 = vmatpush1.bf16.xpose.msra.mxu0 0
  %1106 = vmatprep.subr.bf16.mxu0 0
  %1107 = vmatpush1.bf16.xpose.msra.mxu0 0
  %1108 = vmatprep.subr.bf16.mxu0 0
  %1109 = vmatpush1.bf16.xpose.msra.mxu0 0
  %1110 = vmatprep.subr.bf16.mxu0 0
  %1111 = vmatpush1.bf16.xpose.msra.mxu0 0
  %1112 = vmatprep.subr.bf16.mxu0 0
  %1113 = vmatpush1.bf16.xpose.msra.mxu0 0
  %1114 = vmatprep.subr.bf16.mxu0 0
  %1115 = vmatpush1.bf16.xpose.msra.mxu0 0
  %1116 = vmatprep.subr.bf16.mxu0 0
  %1117 = vmatpush1.bf16.xpose.msra.mxu0 0
  %1118 = vmatprep.mubr.bf16.mxu0 0
  %1119 = vmatmul.mubr.bf16.gmra.mrb[0].mxu0 %v1081
  %v1120 = vpop.f32.mrb[0].mxu0
  %v1121 = vadd.f32 0.0, %v1120
  %v1122 = vpop.f32.mrb[0].mxu0
  %v1123 = vpop.f32.mrb[0].mxu0
  %v1124 = vadd.f32 0.0, %v1123
  %v1125 = vpop.f32.mrb[0].mxu0
  %1126 = vdwg.mxu0
  %1127 = vrot.lane.b32.xlu0 %v499, 96
  %v1128 = vpop.permute.xlu0 %1127
  %v1130 = vsel %vm540, %v499, 0
  %v1133 = vsel %vm540, %v1128, 0
  %1135 = vmatprep.subr.bf16.mxu0 0
  %1136 = vmatpush1.bf16.xpose.msra.mxu0 %v1133
  %1137 = vmatprep.subr.bf16.mxu0 0
  %1138 = vmatpush1.bf16.xpose.msra.mxu0 0
  %1139 = vmatprep.subr.bf16.mxu0 0
  %1140 = vmatpush1.bf16.xpose.msra.mxu0 0
  %1141 = vmatprep.subr.bf16.mxu0 0
  %1142 = vmatpush1.bf16.xpose.msra.mxu0 0
  %1143 = vmatprep.subr.bf16.mxu0 0
  %1144 = vmatpush1.bf16.xpose.msra.mxu0 0
  %1145 = vmatprep.subr.bf16.mxu0 0
  %1146 = vmatpush1.bf16.xpose.msra.mxu0 0
  %1147 = vmatprep.subr.bf16.mxu0 0
  %1148 = vmatpush1.bf16.xpose.msra.mxu0 0
  %1149 = vmatprep.subr.bf16.mxu0 0
  %1150 = vmatpush1.bf16.xpose.msra.mxu0 0
  %1151 = vmatprep.subr.bf16.mxu0 0
  %1152 = vmatpush1.bf16.xpose.msra.mxu0 0
  %1153 = vmatprep.subr.bf16.mxu0 0
  %1154 = vmatpush1.bf16.xpose.msra.mxu0 0
  %1155 = vmatprep.subr.bf16.mxu0 0
  %1156 = vmatpush1.bf16.xpose.msra.mxu0 0
  %1157 = vmatprep.subr.bf16.mxu0 0
  %1158 = vmatpush1.bf16.xpose.msra.mxu0 0
  %1159 = vmatprep.subr.bf16.mxu0 0
  %1160 = vmatpush1.bf16.xpose.msra.mxu0 0
  %1161 = vmatprep.subr.bf16.mxu0 0
  %1162 = vmatpush1.bf16.xpose.msra.mxu0 0
  %1163 = vmatprep.subr.bf16.mxu0 0
  %1164 = vmatpush1.bf16.xpose.msra.mxu0 0
  %1165 = vmatprep.subr.bf16.mxu0 0
  %1166 = vmatpush1.bf16.xpose.msra.mxu0 0
  %1167 = vmatprep.mubr.bf16.mxu0 0
  %1168 = vmatmul.mubr.bf16.gmra.mrb[0].mxu0 %v1130
  %v1169 = vpop.f32.mrb[0].mxu0
  %v1170 = vadd.f32 0.0, %v1169
  %v1171 = vpop.f32.mrb[0].mxu0
  %v1172 = vpop.f32.mrb[0].mxu0
  %v1173 = vadd.f32 0.0, %v1172
  %v1174 = vpop.f32.mrb[0].mxu0
  %1175 = vdwg.mxu0
  %1176 = vrot.lane.b32.xlu0 %v501, 96
  %v1177 = vpop.permute.xlu0 %1176
  %v1179 = vsel %vm540, %v501, 0
  %v1182 = vsel %vm540, %v1177, 0
  %1184 = vmatprep.subr.bf16.mxu0 0
  %1185 = vmatpush1.bf16.xpose.msra.mxu0 %v1182
  %1186 = vmatprep.subr.bf16.mxu0 0
  %1187 = vmatpush1.bf16.xpose.msra.mxu0 0
  %1188 = vmatprep.subr.bf16.mxu0 0
  %1189 = vmatpush1.bf16.xpose.msra.mxu0 0
  %1190 = vmatprep.subr.bf16.mxu0 0
  %1191 = vmatpush1.bf16.xpose.msra.mxu0 0
  %1192 = vmatprep.subr.bf16.mxu0 0
  %1193 = vmatpush1.bf16.xpose.msra.mxu0 0
  %1194 = vmatprep.subr.bf16.mxu0 0
  %1195 = vmatpush1.bf16.xpose.msra.mxu0 0
  %1196 = vmatprep.subr.bf16.mxu0 0
  %1197 = vmatpush1.bf16.xpose.msra.mxu0 0
  %1198 = vmatprep.subr.bf16.mxu0 0
  %1199 = vmatpush1.bf16.xpose.msra.mxu0 0
  %1200 = vmatprep.subr.bf16.mxu0 0
  %1201 = vmatpush1.bf16.xpose.msra.mxu0 0
  %1202 = vmatprep.subr.bf16.mxu0 0
  %1203 = vmatpush1.bf16.xpose.msra.mxu0 0
  %1204 = vmatprep.subr.bf16.mxu0 0
  %1205 = vmatpush1.bf16.xpose.msra.mxu0 0
  %1206 = vmatprep.subr.bf16.mxu0 0
  %1207 = vmatpush1.bf16.xpose.msra.mxu0 0
  %1208 = vmatprep.subr.bf16.mxu0 0
  %1209 = vmatpush1.bf16.xpose.msra.mxu0 0
  %1210 = vmatprep.subr.bf16.mxu0 0
  %1211 = vmatpush1.bf16.xpose.msra.mxu0 0
  %1212 = vmatprep.subr.bf16.mxu0 0
  %1213 = vmatpush1.bf16.xpose.msra.mxu0 0
  %1214 = vmatprep.subr.bf16.mxu0 0
  %1215 = vmatpush1.bf16.xpose.msra.mxu0 0
  %1216 = vmatprep.mubr.bf16.mxu0 0
  %1217 = vmatmul.mubr.bf16.gmra.mrb[0].mxu0 %v1179
  %v1218 = vpop.f32.mrb[0].mxu0
  %v1219 = vadd.f32 0.0, %v1218
  %v1220 = vpop.f32.mrb[0].mxu0
  %v1221 = vpop.f32.mrb[0].mxu0
  %v1222 = vadd.f32 0.0, %v1221
  %v1223 = vpop.f32.mrb[0].mxu0
  %1224 = vdwg.mxu0
  %1225 = vrot.lane.b32.xlu0 %v503, 96
  %v1226 = vpop.permute.xlu0 %1225
  %v1228 = vsel %vm540, %v503, 0
  %v1231 = vsel %vm540, %v1226, 0
  %1233 = vmatprep.subr.bf16.mxu0 0
  %1234 = vmatpush1.bf16.xpose.msra.mxu0 %v1231
  %1235 = vmatprep.subr.bf16.mxu0 0
  %1236 = vmatpush1.bf16.xpose.msra.mxu0 0
  %1237 = vmatprep.subr.bf16.mxu0 0
  %1238 = vmatpush1.bf16.xpose.msra.mxu0 0
  %1239 = vmatprep.subr.bf16.mxu0 0
  %1240 = vmatpush1.bf16.xpose.msra.mxu0 0
  %1241 = vmatprep.subr.bf16.mxu0 0
  %1242 = vmatpush1.bf16.xpose.msra.mxu0 0
  %1243 = vmatprep.subr.bf16.mxu0 0
  %1244 = vmatpush1.bf16.xpose.msra.mxu0 0
  %1245 = vmatprep.subr.bf16.mxu0 0
  %1246 = vmatpush1.bf16.xpose.msra.mxu0 0
  %1247 = vmatprep.subr.bf16.mxu0 0
  %1248 = vmatpush1.bf16.xpose.msra.mxu0 0
  %1249 = vmatprep.subr.bf16.mxu0 0
  %1250 = vmatpush1.bf16.xpose.msra.mxu0 0
  %1251 = vmatprep.subr.bf16.mxu0 0
  %1252 = vmatpush1.bf16.xpose.msra.mxu0 0
  %1253 = vmatprep.subr.bf16.mxu0 0
  %1254 = vmatpush1.bf16.xpose.msra.mxu0 0
  %1255 = vmatprep.subr.bf16.mxu0 0
  %1256 = vmatpush1.bf16.xpose.msra.mxu0 0
  %1257 = vmatprep.subr.bf16.mxu0 0
  %1258 = vmatpush1.bf16.xpose.msra.mxu0 0
  %1259 = vmatprep.subr.bf16.mxu0 0
  %1260 = vmatpush1.bf16.xpose.msra.mxu0 0
  %1261 = vmatprep.subr.bf16.mxu0 0
  %1262 = vmatpush1.bf16.xpose.msra.mxu0 0
  %1263 = vmatprep.subr.bf16.mxu0 0
  %1264 = vmatpush1.bf16.xpose.msra.mxu0 0
  %1265 = vmatprep.mubr.bf16.mxu0 0
  %1266 = vmatmul.mubr.bf16.gmra.mrb[0].mxu0 %v1228
  %v1267 = vpop.f32.mrb[0].mxu0
  %v1268 = vadd.f32 0.0, %v1267
  %v1269 = vpop.f32.mrb[0].mxu0
  %v1270 = vpop.f32.mrb[0].mxu0
  %v1271 = vadd.f32 0.0, %v1270
  %v1272 = vpop.f32.mrb[0].mxu0
  %1273 = vdwg.mxu0
  %1274 = vrot.lane.b32.xlu0 %v505, 96
  %v1275 = vpop.permute.xlu0 %1274
  %v1277 = vsel %vm540, %v505, 0
  %v1280 = vsel %vm540, %v1275, 0
  %1282 = vmatprep.subr.bf16.mxu0 0
  %1283 = vmatpush1.bf16.xpose.msra.mxu0 %v1280
  %1284 = vmatprep.subr.bf16.mxu0 0
  %1285 = vmatpush1.bf16.xpose.msra.mxu0 0
  %1286 = vmatprep.subr.bf16.mxu0 0
  %1287 = vmatpush1.bf16.xpose.msra.mxu0 0
  %1288 = vmatprep.subr.bf16.mxu0 0
  %1289 = vmatpush1.bf16.xpose.msra.mxu0 0
  %1290 = vmatprep.subr.bf16.mxu0 0
  %1291 = vmatpush1.bf16.xpose.msra.mxu0 0
  %1292 = vmatprep.subr.bf16.mxu0 0
  %1293 = vmatpush1.bf16.xpose.msra.mxu0 0
  %1294 = vmatprep.subr.bf16.mxu0 0
  %1295 = vmatpush1.bf16.xpose.msra.mxu0 0
  %1296 = vmatprep.subr.bf16.mxu0 0
  %1297 = vmatpush1.bf16.xpose.msra.mxu0 0
  %1298 = vmatprep.subr.bf16.mxu0 0
  %1299 = vmatpush1.bf16.xpose.msra.mxu0 0
  %1300 = vmatprep.subr.bf16.mxu0 0
  %1301 = vmatpush1.bf16.xpose.msra.mxu0 0
  %1302 = vmatprep.subr.bf16.mxu0 0
  %1303 = vmatpush1.bf16.xpose.msra.mxu0 0
  %1304 = vmatprep.subr.bf16.mxu0 0
  %1305 = vmatpush1.bf16.xpose.msra.mxu0 0
  %1306 = vmatprep.subr.bf16.mxu0 0
  %1307 = vmatpush1.bf16.xpose.msra.mxu0 0
  %1308 = vmatprep.subr.bf16.mxu0 0
  %1309 = vmatpush1.bf16.xpose.msra.mxu0 0
  %1310 = vmatprep.subr.bf16.mxu0 0
  %1311 = vmatpush1.bf16.xpose.msra.mxu0 0
  %1312 = vmatprep.subr.bf16.mxu0 0
  %1313 = vmatpush1.bf16.xpose.msra.mxu0 0
  %1314 = vmatprep.mubr.bf16.mxu0 0
  %1315 = vmatmul.mubr.bf16.gmra.mrb[0].mxu0 %v1277
  %v1316 = vpop.f32.mrb[0].mxu0
  %v1317 = vadd.f32 0.0, %v1316
  %v1318 = vpop.f32.mrb[0].mxu0
  %v1319 = vpop.f32.mrb[0].mxu0
  %v1320 = vadd.f32 0.0, %v1319
  %v1321 = vpop.f32.mrb[0].mxu0
  %1322 = vdwg.mxu0
  %1323 = vrot.lane.b32.xlu0 %v507, 96
  %v1324 = vpop.permute.xlu0 %1323
  %v1326 = vsel %vm540, %v507, 0
  %v1329 = vsel %vm540, %v1324, 0
  %1331 = vmatprep.subr.bf16.mxu0 0
  %1332 = vmatpush1.bf16.xpose.msra.mxu0 %v1329
  %1333 = vmatprep.subr.bf16.mxu0 0
  %1334 = vmatpush1.bf16.xpose.msra.mxu0 0
  %1335 = vmatprep.subr.bf16.mxu0 0
  %1336 = vmatpush1.bf16.xpose.msra.mxu0 0
  %1337 = vmatprep.subr.bf16.mxu0 0
  %1338 = vmatpush1.bf16.xpose.msra.mxu0 0
  %1339 = vmatprep.subr.bf16.mxu0 0
  %1340 = vmatpush1.bf16.xpose.msra.mxu0 0
  %1341 = vmatprep.subr.bf16.mxu0 0
  %1342 = vmatpush1.bf16.xpose.msra.mxu0 0
  %1343 = vmatprep.subr.bf16.mxu0 0
  %1344 = vmatpush1.bf16.xpose.msra.mxu0 0
  %1345 = vmatprep.subr.bf16.mxu0 0
  %1346 = vmatpush1.bf16.xpose.msra.mxu0 0
  %1347 = vmatprep.subr.bf16.mxu0 0
  %1348 = vmatpush1.bf16.xpose.msra.mxu0 0
  %1349 = vmatprep.subr.bf16.mxu0 0
  %1350 = vmatpush1.bf16.xpose.msra.mxu0 0
  %1351 = vmatprep.subr.bf16.mxu0 0
  %1352 = vmatpush1.bf16.xpose.msra.mxu0 0
  %1353 = vmatprep.subr.bf16.mxu0 0
  %1354 = vmatpush1.bf16.xpose.msra.mxu0 0
  %1355 = vmatprep.subr.bf16.mxu0 0
  %1356 = vmatpush1.bf16.xpose.msra.mxu0 0
  %1357 = vmatprep.subr.bf16.mxu0 0
  %1358 = vmatpush1.bf16.xpose.msra.mxu0 0
  %1359 = vmatprep.subr.bf16.mxu0 0
  %1360 = vmatpush1.bf16.xpose.msra.mxu0 0
  %1361 = vmatprep.subr.bf16.mxu0 0
  %1362 = vmatpush1.bf16.xpose.msra.mxu0 0
  %1363 = vmatprep.mubr.bf16.mxu0 0
  %1364 = vmatmul.mubr.bf16.gmra.mrb[0].mxu0 %v1326
  %v1365 = vpop.f32.mrb[0].mxu0
  %v1366 = vadd.f32 0.0, %v1365
  %v1367 = vpop.f32.mrb[0].mxu0
  %v1368 = vpop.f32.mrb[0].mxu0
  %v1369 = vadd.f32 0.0, %v1368
  %v1370 = vpop.f32.mrb[0].mxu0
  %1371 = vdwg.mxu0
  %1372 = vrot.lane.b32.xlu0 %v509, 96
  %v1373 = vpop.permute.xlu0 %1372
  %v1375 = vsel %vm540, %v509, 0
  %v1378 = vsel %vm540, %v1373, 0
  %1380 = vmatprep.subr.bf16.mxu0 0
  %1381 = vmatpush1.bf16.xpose.msra.mxu0 %v1378
  %1382 = vmatprep.subr.bf16.mxu0 0
  %1383 = vmatpush1.bf16.xpose.msra.mxu0 0
  %1384 = vmatprep.subr.bf16.mxu0 0
  %1385 = vmatpush1.bf16.xpose.msra.mxu0 0
  %1386 = vmatprep.subr.bf16.mxu0 0
  %1387 = vmatpush1.bf16.xpose.msra.mxu0 0
  %1388 = vmatprep.subr.bf16.mxu0 0
  %1389 = vmatpush1.bf16.xpose.msra.mxu0 0
  %1390 = vmatprep.subr.bf16.mxu0 0
  %1391 = vmatpush1.bf16.xpose.msra.mxu0 0
  %1392 = vmatprep.subr.bf16.mxu0 0
  %1393 = vmatpush1.bf16.xpose.msra.mxu0 0
  %1394 = vmatprep.subr.bf16.mxu0 0
  %1395 = vmatpush1.bf16.xpose.msra.mxu0 0
  %1396 = vmatprep.subr.bf16.mxu0 0
  %1397 = vmatpush1.bf16.xpose.msra.mxu0 0
  %1398 = vmatprep.subr.bf16.mxu0 0
  %1399 = vmatpush1.bf16.xpose.msra.mxu0 0
  %1400 = vmatprep.subr.bf16.mxu0 0
  %1401 = vmatpush1.bf16.xpose.msra.mxu0 0
  %1402 = vmatprep.subr.bf16.mxu0 0
  %1403 = vmatpush1.bf16.xpose.msra.mxu0 0
  %1404 = vmatprep.subr.bf16.mxu0 0
  %1405 = vmatpush1.bf16.xpose.msra.mxu0 0
  %1406 = vmatprep.subr.bf16.mxu0 0
  %1407 = vmatpush1.bf16.xpose.msra.mxu0 0
  %1408 = vmatprep.subr.bf16.mxu0 0
  %1409 = vmatpush1.bf16.xpose.msra.mxu0 0
  %1410 = vmatprep.subr.bf16.mxu0 0
  %1411 = vmatpush1.bf16.xpose.msra.mxu0 0
  %1412 = vmatprep.mubr.bf16.mxu0 0
  %1413 = vmatmul.mubr.bf16.gmra.mrb[0].mxu0 %v1375
  %v1414 = vpop.f32.mrb[0].mxu0
  %v1415 = vadd.f32 0.0, %v1414
  %v1416 = vpop.f32.mrb[0].mxu0
  %v1417 = vpop.f32.mrb[0].mxu0
  %v1418 = vadd.f32 0.0, %v1417
  %v1419 = vpop.f32.mrb[0].mxu0
  %1420 = vdwg.mxu0
  %1421 = vrot.lane.b32.xlu0 %v511, 96
  %v1422 = vpop.permute.xlu0 %1421
  %v1424 = vsel %vm540, %v511, 0
  %v1427 = vsel %vm540, %v1422, 0
  %1429 = vmatprep.subr.bf16.mxu0 0
  %1430 = vmatpush1.bf16.xpose.msra.mxu0 %v1427
  %1431 = vmatprep.subr.bf16.mxu0 0
  %1432 = vmatpush1.bf16.xpose.msra.mxu0 0
  %1433 = vmatprep.subr.bf16.mxu0 0
  %1434 = vmatpush1.bf16.xpose.msra.mxu0 0
  %1435 = vmatprep.subr.bf16.mxu0 0
  %1436 = vmatpush1.bf16.xpose.msra.mxu0 0
  %1437 = vmatprep.subr.bf16.mxu0 0
  %1438 = vmatpush1.bf16.xpose.msra.mxu0 0
  %1439 = vmatprep.subr.bf16.mxu0 0
  %1440 = vmatpush1.bf16.xpose.msra.mxu0 0
  %1441 = vmatprep.subr.bf16.mxu0 0
  %1442 = vmatpush1.bf16.xpose.msra.mxu0 0
  %1443 = vmatprep.subr.bf16.mxu0 0
  %1444 = vmatpush1.bf16.xpose.msra.mxu0 0
  %1445 = vmatprep.subr.bf16.mxu0 0
  %1446 = vmatpush1.bf16.xpose.msra.mxu0 0
  %1447 = vmatprep.subr.bf16.mxu0 0
  %1448 = vmatpush1.bf16.xpose.msra.mxu0 0
  %1449 = vmatprep.subr.bf16.mxu0 0
  %1450 = vmatpush1.bf16.xpose.msra.mxu0 0
  %1451 = vmatprep.subr.bf16.mxu0 0
  %1452 = vmatpush1.bf16.xpose.msra.mxu0 0
  %1453 = vmatprep.subr.bf16.mxu0 0
  %1454 = vmatpush1.bf16.xpose.msra.mxu0 0
  %1455 = vmatprep.subr.bf16.mxu0 0
  %1456 = vmatpush1.bf16.xpose.msra.mxu0 0
  %1457 = vmatprep.subr.bf16.mxu0 0
  %1458 = vmatpush1.bf16.xpose.msra.mxu0 0
  %1459 = vmatprep.subr.bf16.mxu0 0
  %1460 = vmatpush1.bf16.xpose.msra.mxu0 0
  %1461 = vmatprep.mubr.bf16.mxu0 0
  %1462 = vmatmul.mubr.bf16.gmra.mrb[0].mxu0 %v1424
  %v1463 = vpop.f32.mrb[0].mxu0
  %v1464 = vadd.f32 0.0, %v1463
  %v1465 = vpop.f32.mrb[0].mxu0
  %v1466 = vpop.f32.mrb[0].mxu0
  %v1467 = vadd.f32 0.0, %v1466
  %v1468 = vpop.f32.mrb[0].mxu0
  %1469 = vdwg.mxu0
  %1470 = vrot.lane.b32.xlu0 %v513, 96
  %v1471 = vpop.permute.xlu0 %1470
  %v1473 = vsel %vm540, %v513, 0
  %v1476 = vsel %vm540, %v1471, 0
  %1478 = vmatprep.subr.bf16.mxu0 0
  %1479 = vmatpush1.bf16.xpose.msra.mxu0 %v1476
  %1480 = vmatprep.subr.bf16.mxu0 0
  %1481 = vmatpush1.bf16.xpose.msra.mxu0 0
  %1482 = vmatprep.subr.bf16.mxu0 0
  %1483 = vmatpush1.bf16.xpose.msra.mxu0 0
  %1484 = vmatprep.subr.bf16.mxu0 0
  %1485 = vmatpush1.bf16.xpose.msra.mxu0 0
  %1486 = vmatprep.subr.bf16.mxu0 0
  %1487 = vmatpush1.bf16.xpose.msra.mxu0 0
  %1488 = vmatprep.subr.bf16.mxu0 0
  %1489 = vmatpush1.bf16.xpose.msra.mxu0 0
  %1490 = vmatprep.subr.bf16.mxu0 0
  %1491 = vmatpush1.bf16.xpose.msra.mxu0 0
  %1492 = vmatprep.subr.bf16.mxu0 0
  %1493 = vmatpush1.bf16.xpose.msra.mxu0 0
  %1494 = vmatprep.subr.bf16.mxu0 0
  %1495 = vmatpush1.bf16.xpose.msra.mxu0 0
  %1496 = vmatprep.subr.bf16.mxu0 0
  %1497 = vmatpush1.bf16.xpose.msra.mxu0 0
  %1498 = vmatprep.subr.bf16.mxu0 0
  %1499 = vmatpush1.bf16.xpose.msra.mxu0 0
  %1500 = vmatprep.subr.bf16.mxu0 0
  %1501 = vmatpush1.bf16.xpose.msra.mxu0 0
  %1502 = vmatprep.subr.bf16.mxu0 0
  %1503 = vmatpush1.bf16.xpose.msra.mxu0 0
  %1504 = vmatprep.subr.bf16.mxu0 0
  %1505 = vmatpush1.bf16.xpose.msra.mxu0 0
  %1506 = vmatprep.subr.bf16.mxu0 0
  %1507 = vmatpush1.bf16.xpose.msra.mxu0 0
  %1508 = vmatprep.subr.bf16.mxu0 0
  %1509 = vmatpush1.bf16.xpose.msra.mxu0 0
  %1510 = vmatprep.mubr.bf16.mxu0 0
  %1511 = vmatmul.mubr.bf16.gmra.mrb[0].mxu0 %v1473
  %v1512 = vpop.f32.mrb[0].mxu0
  %v1513 = vadd.f32 0.0, %v1512
  %v1514 = vpop.f32.mrb[0].mxu0
  %v1515 = vpop.f32.mrb[0].mxu0
  %v1516 = vadd.f32 0.0, %v1515
  %v1517 = vpop.f32.mrb[0].mxu0
  %1518 = vdwg.mxu0
  %1519 = vrot.lane.b32.xlu0 %v515, 96
  %v1520 = vpop.permute.xlu0 %1519
  %v1522 = vsel %vm540, %v515, 0
  %v1525 = vsel %vm540, %v1520, 0
  %1527 = vmatprep.subr.bf16.mxu0 0
  %1528 = vmatpush1.bf16.xpose.msra.mxu0 %v1525
  %1529 = vmatprep.subr.bf16.mxu0 0
  %1530 = vmatpush1.bf16.xpose.msra.mxu0 0
  %1531 = vmatprep.subr.bf16.mxu0 0
  %1532 = vmatpush1.bf16.xpose.msra.mxu0 0
  %1533 = vmatprep.subr.bf16.mxu0 0
  %1534 = vmatpush1.bf16.xpose.msra.mxu0 0
  %1535 = vmatprep.subr.bf16.mxu0 0
  %1536 = vmatpush1.bf16.xpose.msra.mxu0 0
  %1537 = vmatprep.subr.bf16.mxu0 0
  %1538 = vmatpush1.bf16.xpose.msra.mxu0 0
  %1539 = vmatprep.subr.bf16.mxu0 0
  %1540 = vmatpush1.bf16.xpose.msra.mxu0 0
  %1541 = vmatprep.subr.bf16.mxu0 0
  %1542 = vmatpush1.bf16.xpose.msra.mxu0 0
  %1543 = vmatprep.subr.bf16.mxu0 0
  %1544 = vmatpush1.bf16.xpose.msra.mxu0 0
  %1545 = vmatprep.subr.bf16.mxu0 0
  %1546 = vmatpush1.bf16.xpose.msra.mxu0 0
  %1547 = vmatprep.subr.bf16.mxu0 0
  %1548 = vmatpush1.bf16.xpose.msra.mxu0 0
  %1549 = vmatprep.subr.bf16.mxu0 0
  %1550 = vmatpush1.bf16.xpose.msra.mxu0 0
  %1551 = vmatprep.subr.bf16.mxu0 0
  %1552 = vmatpush1.bf16.xpose.msra.mxu0 0
  %1553 = vmatprep.subr.bf16.mxu0 0
  %1554 = vmatpush1.bf16.xpose.msra.mxu0 0
  %1555 = vmatprep.subr.bf16.mxu0 0
  %1556 = vmatpush1.bf16.xpose.msra.mxu0 0
  %1557 = vmatprep.subr.bf16.mxu0 0
  %1558 = vmatpush1.bf16.xpose.msra.mxu0 0
  %1559 = vmatprep.mubr.bf16.mxu0 0
  %1560 = vmatmul.mubr.bf16.gmra.mrb[0].mxu0 %v1522
  %v1561 = vpop.f32.mrb[0].mxu0
  %v1562 = vadd.f32 0.0, %v1561
  %v1563 = vpop.f32.mrb[0].mxu0
  %v1564 = vpop.f32.mrb[0].mxu0
  %v1565 = vadd.f32 0.0, %v1564
  %v1566 = vpop.f32.mrb[0].mxu0
  %1567 = vdwg.mxu0
  %1568 = vrot.lane.b32.xlu0 %v517, 96
  %v1569 = vpop.permute.xlu0 %1568
  %v1571 = vsel %vm540, %v517, 0
  %v1574 = vsel %vm540, %v1569, 0
  %1576 = vmatprep.subr.bf16.mxu0 0
  %1577 = vmatpush1.bf16.xpose.msra.mxu0 %v1574
  %1578 = vmatprep.subr.bf16.mxu0 0
  %1579 = vmatpush1.bf16.xpose.msra.mxu0 0
  %1580 = vmatprep.subr.bf16.mxu0 0
  %1581 = vmatpush1.bf16.xpose.msra.mxu0 0
  %1582 = vmatprep.subr.bf16.mxu0 0
  %1583 = vmatpush1.bf16.xpose.msra.mxu0 0
  %1584 = vmatprep.subr.bf16.mxu0 0
  %1585 = vmatpush1.bf16.xpose.msra.mxu0 0
  %1586 = vmatprep.subr.bf16.mxu0 0
  %1587 = vmatpush1.bf16.xpose.msra.mxu0 0
  %1588 = vmatprep.subr.bf16.mxu0 0
  %1589 = vmatpush1.bf16.xpose.msra.mxu0 0
  %1590 = vmatprep.subr.bf16.mxu0 0
  %1591 = vmatpush1.bf16.xpose.msra.mxu0 0
  %1592 = vmatprep.subr.bf16.mxu0 0
  %1593 = vmatpush1.bf16.xpose.msra.mxu0 0
  %1594 = vmatprep.subr.bf16.mxu0 0
  %1595 = vmatpush1.bf16.xpose.msra.mxu0 0
  %1596 = vmatprep.subr.bf16.mxu0 0
  %1597 = vmatpush1.bf16.xpose.msra.mxu0 0
  %1598 = vmatprep.subr.bf16.mxu0 0
  %1599 = vmatpush1.bf16.xpose.msra.mxu0 0
  %1600 = vmatprep.subr.bf16.mxu0 0
  %1601 = vmatpush1.bf16.xpose.msra.mxu0 0
  %1602 = vmatprep.subr.bf16.mxu0 0
  %1603 = vmatpush1.bf16.xpose.msra.mxu0 0
  %1604 = vmatprep.subr.bf16.mxu0 0
  %1605 = vmatpush1.bf16.xpose.msra.mxu0 0
  %1606 = vmatprep.subr.bf16.mxu0 0
  %1607 = vmatpush1.bf16.xpose.msra.mxu0 0
  %1608 = vmatprep.mubr.bf16.mxu0 0
  %1609 = vmatmul.mubr.bf16.gmra.mrb[0].mxu0 %v1571
  %v1610 = vpop.f32.mrb[0].mxu0
  %v1611 = vadd.f32 0.0, %v1610
  %v1612 = vpop.f32.mrb[0].mxu0
  %v1613 = vpop.f32.mrb[0].mxu0
  %v1614 = vadd.f32 0.0, %v1613
  %v1615 = vpop.f32.mrb[0].mxu0
  %1616 = vdwg.mxu0
  %1617 = vrot.lane.b32.xlu0 %v519, 96
  %v1618 = vpop.permute.xlu0 %1617
  %v1620 = vsel %vm540, %v519, 0
  %v1623 = vsel %vm540, %v1618, 0
  %1625 = vmatprep.subr.bf16.mxu0 0
  %1626 = vmatpush1.bf16.xpose.msra.mxu0 %v1623
  %1627 = vmatprep.subr.bf16.mxu0 0
  %1628 = vmatpush1.bf16.xpose.msra.mxu0 0
  %1629 = vmatprep.subr.bf16.mxu0 0
  %1630 = vmatpush1.bf16.xpose.msra.mxu0 0
  %1631 = vmatprep.subr.bf16.mxu0 0
  %1632 = vmatpush1.bf16.xpose.msra.mxu0 0
  %1633 = vmatprep.subr.bf16.mxu0 0
  %1634 = vmatpush1.bf16.xpose.msra.mxu0 0
  %1635 = vmatprep.subr.bf16.mxu0 0
  %1636 = vmatpush1.bf16.xpose.msra.mxu0 0
  %1637 = vmatprep.subr.bf16.mxu0 0
  %1638 = vmatpush1.bf16.xpose.msra.mxu0 0
  %1639 = vmatprep.subr.bf16.mxu0 0
  %1640 = vmatpush1.bf16.xpose.msra.mxu0 0
  %1641 = vmatprep.subr.bf16.mxu0 0
  %1642 = vmatpush1.bf16.xpose.msra.mxu0 0
  %1643 = vmatprep.subr.bf16.mxu0 0
  %1644 = vmatpush1.bf16.xpose.msra.mxu0 0
  %1645 = vmatprep.subr.bf16.mxu0 0
  %1646 = vmatpush1.bf16.xpose.msra.mxu0 0
  %1647 = vmatprep.subr.bf16.mxu0 0
  %1648 = vmatpush1.bf16.xpose.msra.mxu0 0
  %1649 = vmatprep.subr.bf16.mxu0 0
  %1650 = vmatpush1.bf16.xpose.msra.mxu0 0
  %1651 = vmatprep.subr.bf16.mxu0 0
  %1652 = vmatpush1.bf16.xpose.msra.mxu0 0
  %1653 = vmatprep.subr.bf16.mxu0 0
  %1654 = vmatpush1.bf16.xpose.msra.mxu0 0
  %1655 = vmatprep.subr.bf16.mxu0 0
  %1656 = vmatpush1.bf16.xpose.msra.mxu0 0
  %1657 = vmatprep.mubr.bf16.mxu0 0
  %1658 = vmatmul.mubr.bf16.gmra.mrb[0].mxu0 %v1620
  %v1659 = vpop.f32.mrb[0].mxu0
  %v1660 = vadd.f32 0.0, %v1659
  %v1661 = vpop.f32.mrb[0].mxu0
  %v1662 = vpop.f32.mrb[0].mxu0
  %v1663 = vadd.f32 0.0, %v1662
  %v1664 = vpop.f32.mrb[0].mxu0
  %1665 = vdwg.mxu0
  %1666 = vrot.lane.b32.xlu0 %v521, 96
  %v1667 = vpop.permute.xlu0 %1666
  %v1669 = vsel %vm540, %v521, 0
  %v1672 = vsel %vm540, %v1667, 0
  %1674 = vmatprep.subr.bf16.mxu0 0
  %1675 = vmatpush1.bf16.xpose.msra.mxu0 %v1672
  %1676 = vmatprep.subr.bf16.mxu0 0
  %1677 = vmatpush1.bf16.xpose.msra.mxu0 0
  %1678 = vmatprep.subr.bf16.mxu0 0
  %1679 = vmatpush1.bf16.xpose.msra.mxu0 0
  %1680 = vmatprep.subr.bf16.mxu0 0
  %1681 = vmatpush1.bf16.xpose.msra.mxu0 0
  %1682 = vmatprep.subr.bf16.mxu0 0
  %1683 = vmatpush1.bf16.xpose.msra.mxu0 0
  %1684 = vmatprep.subr.bf16.mxu0 0
  %1685 = vmatpush1.bf16.xpose.msra.mxu0 0
  %1686 = vmatprep.subr.bf16.mxu0 0
  %1687 = vmatpush1.bf16.xpose.msra.mxu0 0
  %1688 = vmatprep.subr.bf16.mxu0 0
  %1689 = vmatpush1.bf16.xpose.msra.mxu0 0
  %1690 = vmatprep.subr.bf16.mxu0 0
  %1691 = vmatpush1.bf16.xpose.msra.mxu0 0
  %1692 = vmatprep.subr.bf16.mxu0 0
  %1693 = vmatpush1.bf16.xpose.msra.mxu0 0
  %1694 = vmatprep.subr.bf16.mxu0 0
  %1695 = vmatpush1.bf16.xpose.msra.mxu0 0
  %1696 = vmatprep.subr.bf16.mxu0 0
  %1697 = vmatpush1.bf16.xpose.msra.mxu0 0
  %1698 = vmatprep.subr.bf16.mxu0 0
  %1699 = vmatpush1.bf16.xpose.msra.mxu0 0
  %1700 = vmatprep.subr.bf16.mxu0 0
  %1701 = vmatpush1.bf16.xpose.msra.mxu0 0
  %1702 = vmatprep.subr.bf16.mxu0 0
  %1703 = vmatpush1.bf16.xpose.msra.mxu0 0
  %1704 = vmatprep.subr.bf16.mxu0 0
  %1705 = vmatpush1.bf16.xpose.msra.mxu0 0
  %1706 = vmatprep.mubr.bf16.mxu0 0
  %1707 = vmatmul.mubr.bf16.gmra.mrb[0].mxu0 %v1669
  %v1708 = vpop.f32.mrb[0].mxu0
  %v1709 = vadd.f32 0.0, %v1708
  %v1710 = vpop.f32.mrb[0].mxu0
  %v1711 = vpop.f32.mrb[0].mxu0
  %v1712 = vadd.f32 0.0, %v1711
  %v1713 = vpop.f32.mrb[0].mxu0
  %1714 = vdwg.mxu0
  %1715 = vrot.lane.b32.xlu0 %v523, 96
  %v1716 = vpop.permute.xlu0 %1715
  %v1718 = vsel %vm540, %v523, 0
  %v1721 = vsel %vm540, %v1716, 0
  %1723 = vmatprep.subr.bf16.mxu0 0
  %1724 = vmatpush1.bf16.xpose.msra.mxu0 %v1721
  %1725 = vmatprep.subr.bf16.mxu0 0
  %1726 = vmatpush1.bf16.xpose.msra.mxu0 0
  %1727 = vmatprep.subr.bf16.mxu0 0
  %1728 = vmatpush1.bf16.xpose.msra.mxu0 0
  %1729 = vmatprep.subr.bf16.mxu0 0
  %1730 = vmatpush1.bf16.xpose.msra.mxu0 0
  %1731 = vmatprep.subr.bf16.mxu0 0
  %1732 = vmatpush1.bf16.xpose.msra.mxu0 0
  %1733 = vmatprep.subr.bf16.mxu0 0
  %1734 = vmatpush1.bf16.xpose.msra.mxu0 0
  %1735 = vmatprep.subr.bf16.mxu0 0
  %1736 = vmatpush1.bf16.xpose.msra.mxu0 0
  %1737 = vmatprep.subr.bf16.mxu0 0
  %1738 = vmatpush1.bf16.xpose.msra.mxu0 0
  %1739 = vmatprep.subr.bf16.mxu0 0
  %1740 = vmatpush1.bf16.xpose.msra.mxu0 0
  %1741 = vmatprep.subr.bf16.mxu0 0
  %1742 = vmatpush1.bf16.xpose.msra.mxu0 0
  %1743 = vmatprep.subr.bf16.mxu0 0
  %1744 = vmatpush1.bf16.xpose.msra.mxu0 0
  %1745 = vmatprep.subr.bf16.mxu0 0
  %1746 = vmatpush1.bf16.xpose.msra.mxu0 0
  %1747 = vmatprep.subr.bf16.mxu0 0
  %1748 = vmatpush1.bf16.xpose.msra.mxu0 0
  %1749 = vmatprep.subr.bf16.mxu0 0
  %1750 = vmatpush1.bf16.xpose.msra.mxu0 0
  %1751 = vmatprep.subr.bf16.mxu0 0
  %1752 = vmatpush1.bf16.xpose.msra.mxu0 0
  %1753 = vmatprep.subr.bf16.mxu0 0
  %1754 = vmatpush1.bf16.xpose.msra.mxu0 0
  %1755 = vmatprep.mubr.bf16.mxu0 0
  %1756 = vmatmul.mubr.bf16.gmra.mrb[0].mxu0 %v1718
  %v1757 = vpop.f32.mrb[0].mxu0
  %v1758 = vadd.f32 0.0, %v1757
  %v1759 = vpop.f32.mrb[0].mxu0
  %v1760 = vpop.f32.mrb[0].mxu0
  %v1761 = vadd.f32 0.0, %v1760
  %v1762 = vpop.f32.mrb[0].mxu0
  %1763 = vdwg.mxu0
  %1764 = vrot.lane.b32.xlu0 %v525, 96
  %v1765 = vpop.permute.xlu0 %1764
  %v1767 = vsel %vm540, %v525, 0
  %v1770 = vsel %vm540, %v1765, 0
  %1772 = vmatprep.subr.bf16.mxu0 0
  %1773 = vmatpush1.bf16.xpose.msra.mxu0 %v1770
  %1774 = vmatprep.subr.bf16.mxu0 0
  %1775 = vmatpush1.bf16.xpose.msra.mxu0 0
  %1776 = vmatprep.subr.bf16.mxu0 0
  %1777 = vmatpush1.bf16.xpose.msra.mxu0 0
  %1778 = vmatprep.subr.bf16.mxu0 0
  %1779 = vmatpush1.bf16.xpose.msra.mxu0 0
  %1780 = vmatprep.subr.bf16.mxu0 0
  %1781 = vmatpush1.bf16.xpose.msra.mxu0 0
  %1782 = vmatprep.subr.bf16.mxu0 0
  %1783 = vmatpush1.bf16.xpose.msra.mxu0 0
  %1784 = vmatprep.subr.bf16.mxu0 0
  %1785 = vmatpush1.bf16.xpose.msra.mxu0 0
  %1786 = vmatprep.subr.bf16.mxu0 0
  %1787 = vmatpush1.bf16.xpose.msra.mxu0 0
  %1788 = vmatprep.subr.bf16.mxu0 0
  %1789 = vmatpush1.bf16.xpose.msra.mxu0 0
  %1790 = vmatprep.subr.bf16.mxu0 0
  %1791 = vmatpush1.bf16.xpose.msra.mxu0 0
  %1792 = vmatprep.subr.bf16.mxu0 0
  %1793 = vmatpush1.bf16.xpose.msra.mxu0 0
  %1794 = vmatprep.subr.bf16.mxu0 0
  %1795 = vmatpush1.bf16.xpose.msra.mxu0 0
  %1796 = vmatprep.subr.bf16.mxu0 0
  %1797 = vmatpush1.bf16.xpose.msra.mxu0 0
  %1798 = vmatprep.subr.bf16.mxu0 0
  %1799 = vmatpush1.bf16.xpose.msra.mxu0 0
  %1800 = vmatprep.subr.bf16.mxu0 0
  %1801 = vmatpush1.bf16.xpose.msra.mxu0 0
  %1802 = vmatprep.subr.bf16.mxu0 0
  %1803 = vmatpush1.bf16.xpose.msra.mxu0 0
  %1804 = vmatprep.mubr.bf16.mxu0 0
  %1805 = vmatmul.mubr.bf16.gmra.mrb[0].mxu0 %v1767
  %v1806 = vpop.f32.mrb[0].mxu0
  %v1807 = vadd.f32 0.0, %v1806
  %v1808 = vpop.f32.mrb[0].mxu0
  %v1809 = vpop.f32.mrb[0].mxu0
  %v1810 = vadd.f32 0.0, %v1809
  %v1811 = vpop.f32.mrb[0].mxu0
  %1812 = vdwg.mxu0
  %1813 = vrot.lane.b32.xlu0 %v527, 96
  %v1814 = vpop.permute.xlu0 %1813
  %v1816 = vsel %vm540, %v527, 0
  %v1819 = vsel %vm540, %v1814, 0
  %1821 = vmatprep.subr.bf16.mxu0 0
  %1822 = vmatpush1.bf16.xpose.msra.mxu0 %v1819
  %1823 = vmatprep.subr.bf16.mxu0 0
  %1824 = vmatpush1.bf16.xpose.msra.mxu0 0
  %1825 = vmatprep.subr.bf16.mxu0 0
  %1826 = vmatpush1.bf16.xpose.msra.mxu0 0
  %1827 = vmatprep.subr.bf16.mxu0 0
  %1828 = vmatpush1.bf16.xpose.msra.mxu0 0
  %1829 = vmatprep.subr.bf16.mxu0 0
  %1830 = vmatpush1.bf16.xpose.msra.mxu0 0
  %1831 = vmatprep.subr.bf16.mxu0 0
  %1832 = vmatpush1.bf16.xpose.msra.mxu0 0
  %1833 = vmatprep.subr.bf16.mxu0 0
  %1834 = vmatpush1.bf16.xpose.msra.mxu0 0
  %1835 = vmatprep.subr.bf16.mxu0 0
  %1836 = vmatpush1.bf16.xpose.msra.mxu0 0
  %1837 = vmatprep.subr.bf16.mxu0 0
  %1838 = vmatpush1.bf16.xpose.msra.mxu0 0
  %1839 = vmatprep.subr.bf16.mxu0 0
  %1840 = vmatpush1.bf16.xpose.msra.mxu0 0
  %1841 = vmatprep.subr.bf16.mxu0 0
  %1842 = vmatpush1.bf16.xpose.msra.mxu0 0
  %1843 = vmatprep.subr.bf16.mxu0 0
  %1844 = vmatpush1.bf16.xpose.msra.mxu0 0
  %1845 = vmatprep.subr.bf16.mxu0 0
  %1846 = vmatpush1.bf16.xpose.msra.mxu0 0
  %1847 = vmatprep.subr.bf16.mxu0 0
  %1848 = vmatpush1.bf16.xpose.msra.mxu0 0
  %1849 = vmatprep.subr.bf16.mxu0 0
  %1850 = vmatpush1.bf16.xpose.msra.mxu0 0
  %1851 = vmatprep.subr.bf16.mxu0 0
  %1852 = vmatpush1.bf16.xpose.msra.mxu0 0
  %1853 = vmatprep.mubr.bf16.mxu0 0
  %1854 = vmatmul.mubr.bf16.gmra.mrb[0].mxu0 %v1816
  %v1855 = vpop.f32.mrb[0].mxu0
  %v1856 = vadd.f32 0.0, %v1855
  %v1857 = vpop.f32.mrb[0].mxu0
  %v1858 = vpop.f32.mrb[0].mxu0
  %v1859 = vadd.f32 0.0, %v1858
  %v1860 = vpop.f32.mrb[0].mxu0
  %1861 = vdwg.mxu0
  %1862 = vrot.lane.b32.xlu0 %v529, 96
  %v1863 = vpop.permute.xlu0 %1862
  %v1865 = vsel %vm540, %v529, 0
  %v1868 = vsel %vm540, %v1863, 0
  %1870 = vmatprep.subr.bf16.mxu0 0
  %1871 = vmatpush1.bf16.xpose.msra.mxu0 %v1868
  %1872 = vmatprep.subr.bf16.mxu0 0
  %1873 = vmatpush1.bf16.xpose.msra.mxu0 0
  %1874 = vmatprep.subr.bf16.mxu0 0
  %1875 = vmatpush1.bf16.xpose.msra.mxu0 0
  %1876 = vmatprep.subr.bf16.mxu0 0
  %1877 = vmatpush1.bf16.xpose.msra.mxu0 0
  %1878 = vmatprep.subr.bf16.mxu0 0
  %1879 = vmatpush1.bf16.xpose.msra.mxu0 0
  %1880 = vmatprep.subr.bf16.mxu0 0
  %1881 = vmatpush1.bf16.xpose.msra.mxu0 0
  %1882 = vmatprep.subr.bf16.mxu0 0
  %1883 = vmatpush1.bf16.xpose.msra.mxu0 0
  %1884 = vmatprep.subr.bf16.mxu0 0
  %1885 = vmatpush1.bf16.xpose.msra.mxu0 0
  %1886 = vmatprep.subr.bf16.mxu0 0
  %1887 = vmatpush1.bf16.xpose.msra.mxu0 0
  %1888 = vmatprep.subr.bf16.mxu0 0
  %1889 = vmatpush1.bf16.xpose.msra.mxu0 0
  %1890 = vmatprep.subr.bf16.mxu0 0
  %1891 = vmatpush1.bf16.xpose.msra.mxu0 0
  %1892 = vmatprep.subr.bf16.mxu0 0
  %1893 = vmatpush1.bf16.xpose.msra.mxu0 0
  %1894 = vmatprep.subr.bf16.mxu0 0
  %1895 = vmatpush1.bf16.xpose.msra.mxu0 0
  %1896 = vmatprep.subr.bf16.mxu0 0
  %1897 = vmatpush1.bf16.xpose.msra.mxu0 0
  %1898 = vmatprep.subr.bf16.mxu0 0
  %1899 = vmatpush1.bf16.xpose.msra.mxu0 0
  %1900 = vmatprep.subr.bf16.mxu0 0
  %1901 = vmatpush1.bf16.xpose.msra.mxu0 0
  %1902 = vmatprep.mubr.bf16.mxu0 0
  %1903 = vmatmul.mubr.bf16.gmra.mrb[0].mxu0 %v1865
  %v1904 = vpop.f32.mrb[0].mxu0
  %v1905 = vadd.f32 0.0, %v1904
  %v1906 = vpop.f32.mrb[0].mxu0
  %v1907 = vpop.f32.mrb[0].mxu0
  %v1908 = vadd.f32 0.0, %v1907
  %v1909 = vpop.f32.mrb[0].mxu0
  %1910 = vdwg.mxu0
  %1911 = vrot.lane.b32.xlu0 %v531, 96
  %v1912 = vpop.permute.xlu0 %1911
  %v1914 = vsel %vm540, %v531, 0
  %v1917 = vsel %vm540, %v1912, 0
  %1919 = vmatprep.subr.bf16.mxu0 0
  %1920 = vmatpush1.bf16.xpose.msra.mxu0 %v1917
  %1921 = vmatprep.subr.bf16.mxu0 0
  %1922 = vmatpush1.bf16.xpose.msra.mxu0 0
  %1923 = vmatprep.subr.bf16.mxu0 0
  %1924 = vmatpush1.bf16.xpose.msra.mxu0 0
  %1925 = vmatprep.subr.bf16.mxu0 0
  %1926 = vmatpush1.bf16.xpose.msra.mxu0 0
  %1927 = vmatprep.subr.bf16.mxu0 0
  %1928 = vmatpush1.bf16.xpose.msra.mxu0 0
  %1929 = vmatprep.subr.bf16.mxu0 0
  %1930 = vmatpush1.bf16.xpose.msra.mxu0 0
  %1931 = vmatprep.subr.bf16.mxu0 0
  %1932 = vmatpush1.bf16.xpose.msra.mxu0 0
  %1933 = vmatprep.subr.bf16.mxu0 0
  %1934 = vmatpush1.bf16.xpose.msra.mxu0 0
  %1935 = vmatprep.subr.bf16.mxu0 0
  %1936 = vmatpush1.bf16.xpose.msra.mxu0 0
  %1937 = vmatprep.subr.bf16.mxu0 0
  %1938 = vmatpush1.bf16.xpose.msra.mxu0 0
  %1939 = vmatprep.subr.bf16.mxu0 0
  %1940 = vmatpush1.bf16.xpose.msra.mxu0 0
  %1941 = vmatprep.subr.bf16.mxu0 0
  %1942 = vmatpush1.bf16.xpose.msra.mxu0 0
  %1943 = vmatprep.subr.bf16.mxu0 0
  %1944 = vmatpush1.bf16.xpose.msra.mxu0 0
  %1945 = vmatprep.subr.bf16.mxu0 0
  %1946 = vmatpush1.bf16.xpose.msra.mxu0 0
  %1947 = vmatprep.subr.bf16.mxu0 0
  %1948 = vmatpush1.bf16.xpose.msra.mxu0 0
  %1949 = vmatprep.subr.bf16.mxu0 0
  %1950 = vmatpush1.bf16.xpose.msra.mxu0 0
  %1951 = vmatprep.mubr.bf16.mxu0 0
  %1952 = vmatmul.mubr.bf16.gmra.mrb[0].mxu0 %v1914
  %v1953 = vpop.f32.mrb[0].mxu0
  %v1954 = vadd.f32 0.0, %v1953
  %v1955 = vpop.f32.mrb[0].mxu0
  %v1956 = vpop.f32.mrb[0].mxu0
  %v1957 = vadd.f32 0.0, %v1956
  %v1958 = vpop.f32.mrb[0].mxu0
  %1959 = vdwg.mxu0
  %1960 = vrot.lane.b32.xlu0 %v533, 96
  %v1961 = vpop.permute.xlu0 %1960
  %v1963 = vsel %vm540, %v533, 0
  %v1966 = vsel %vm540, %v1961, 0
  %1968 = vmatprep.subr.bf16.mxu0 0
  %1969 = vmatpush1.bf16.xpose.msra.mxu0 %v1966
  %1970 = vmatprep.subr.bf16.mxu0 0
  %1971 = vmatpush1.bf16.xpose.msra.mxu0 0
  %1972 = vmatprep.subr.bf16.mxu0 0
  %1973 = vmatpush1.bf16.xpose.msra.mxu0 0
  %1974 = vmatprep.subr.bf16.mxu0 0
  %1975 = vmatpush1.bf16.xpose.msra.mxu0 0
  %1976 = vmatprep.subr.bf16.mxu0 0
  %1977 = vmatpush1.bf16.xpose.msra.mxu0 0
  %1978 = vmatprep.subr.bf16.mxu0 0
  %1979 = vmatpush1.bf16.xpose.msra.mxu0 0
  %1980 = vmatprep.subr.bf16.mxu0 0
  %1981 = vmatpush1.bf16.xpose.msra.mxu0 0
  %1982 = vmatprep.subr.bf16.mxu0 0
  %1983 = vmatpush1.bf16.xpose.msra.mxu0 0
  %1984 = vmatprep.subr.bf16.mxu0 0
  %1985 = vmatpush1.bf16.xpose.msra.mxu0 0
  %1986 = vmatprep.subr.bf16.mxu0 0
  %1987 = vmatpush1.bf16.xpose.msra.mxu0 0
  %1988 = vmatprep.subr.bf16.mxu0 0
  %1989 = vmatpush1.bf16.xpose.msra.mxu0 0
  %1990 = vmatprep.subr.bf16.mxu0 0
  %1991 = vmatpush1.bf16.xpose.msra.mxu0 0
  %1992 = vmatprep.subr.bf16.mxu0 0
  %1993 = vmatpush1.bf16.xpose.msra.mxu0 0
  %1994 = vmatprep.subr.bf16.mxu0 0
  %1995 = vmatpush1.bf16.xpose.msra.mxu0 0
  %1996 = vmatprep.subr.bf16.mxu0 0
  %1997 = vmatpush1.bf16.xpose.msra.mxu0 0
  %1998 = vmatprep.subr.bf16.mxu0 0
  %1999 = vmatpush1.bf16.xpose.msra.mxu0 0
  %2000 = vmatprep.mubr.bf16.mxu0 0
  %2001 = vmatmul.mubr.bf16.gmra.mrb[0].mxu0 %v1963
  %v2002 = vpop.f32.mrb[0].mxu0
  %v2003 = vadd.f32 0.0, %v2002
  %v2004 = vpop.f32.mrb[0].mxu0
  %v2005 = vpop.f32.mrb[0].mxu0
  %v2006 = vadd.f32 0.0, %v2005
  %v2007 = vpop.f32.mrb[0].mxu0
  %2008 = vdwg.mxu0
  %2009 = vrot.lane.b32.xlu0 %v535, 96
  %v2010 = vpop.permute.xlu0 %2009
  %v2012 = vsel %vm540, %v535, 0
  %v2015 = vsel %vm540, %v2010, 0
  %2017 = vmatprep.subr.bf16.mxu0 0
  %2018 = vmatpush1.bf16.xpose.msra.mxu0 %v2015
  %2019 = vmatprep.subr.bf16.mxu0 0
  %2020 = vmatpush1.bf16.xpose.msra.mxu0 0
  %2021 = vmatprep.subr.bf16.mxu0 0
  %2022 = vmatpush1.bf16.xpose.msra.mxu0 0
  %2023 = vmatprep.subr.bf16.mxu0 0
  %2024 = vmatpush1.bf16.xpose.msra.mxu0 0
  %2025 = vmatprep.subr.bf16.mxu0 0
  %2026 = vmatpush1.bf16.xpose.msra.mxu0 0
  %2027 = vmatprep.subr.bf16.mxu0 0
  %2028 = vmatpush1.bf16.xpose.msra.mxu0 0
  %2029 = vmatprep.subr.bf16.mxu0 0
  %2030 = vmatpush1.bf16.xpose.msra.mxu0 0
  %2031 = vmatprep.subr.bf16.mxu0 0
  %2032 = vmatpush1.bf16.xpose.msra.mxu0 0
  %2033 = vmatprep.subr.bf16.mxu0 0
  %2034 = vmatpush1.bf16.xpose.msra.mxu0 0
  %2035 = vmatprep.subr.bf16.mxu0 0
  %2036 = vmatpush1.bf16.xpose.msra.mxu0 0
  %2037 = vmatprep.subr.bf16.mxu0 0
  %2038 = vmatpush1.bf16.xpose.msra.mxu0 0
  %2039 = vmatprep.subr.bf16.mxu0 0
  %2040 = vmatpush1.bf16.xpose.msra.mxu0 0
  %2041 = vmatprep.subr.bf16.mxu0 0
  %2042 = vmatpush1.bf16.xpose.msra.mxu0 0
  %2043 = vmatprep.subr.bf16.mxu0 0
  %2044 = vmatpush1.bf16.xpose.msra.mxu0 0
  %2045 = vmatprep.subr.bf16.mxu0 0
  %2046 = vmatpush1.bf16.xpose.msra.mxu0 0
  %2047 = vmatprep.subr.bf16.mxu0 0
  %2048 = vmatpush1.bf16.xpose.msra.mxu0 0
  %2049 = vmatprep.mubr.bf16.mxu0 0
  %2050 = vmatmul.mubr.bf16.gmra.mrb[0].mxu0 %v2012
  %v2051 = vpop.f32.mrb[0].mxu0
  %v2052 = vadd.f32 0.0, %v2051
  %v2053 = vpop.f32.mrb[0].mxu0
  %v2054 = vpop.f32.mrb[0].mxu0
  %v2055 = vadd.f32 0.0, %v2054
  %v2056 = vpop.f32.mrb[0].mxu0
  %2057 = vdwg.mxu0
  %2058 = vrot.lane.b32.xlu0 %v537, 96
  %v2059 = vpop.permute.xlu0 %2058
  %v2061 = vsel %vm540, %v537, 0
  %v2064 = vsel %vm540, %v2059, 0
  %2066 = vmatprep.subr.bf16.mxu0 0
  %2067 = vmatpush1.bf16.xpose.msra.mxu0 %v2064
  %2068 = vmatprep.subr.bf16.mxu0 0
  %2069 = vmatpush1.bf16.xpose.msra.mxu0 0
  %2070 = vmatprep.subr.bf16.mxu0 0
  %2071 = vmatpush1.bf16.xpose.msra.mxu0 0
  %2072 = vmatprep.subr.bf16.mxu0 0
  %2073 = vmatpush1.bf16.xpose.msra.mxu0 0
  %2074 = vmatprep.subr.bf16.mxu0 0
  %2075 = vmatpush1.bf16.xpose.msra.mxu0 0
  %2076 = vmatprep.subr.bf16.mxu0 0
  %2077 = vmatpush1.bf16.xpose.msra.mxu0 0
  %2078 = vmatprep.subr.bf16.mxu0 0
  %2079 = vmatpush1.bf16.xpose.msra.mxu0 0
  %2080 = vmatprep.subr.bf16.mxu0 0
  %2081 = vmatpush1.bf16.xpose.msra.mxu0 0
  %2082 = vmatprep.subr.bf16.mxu0 0
  %2083 = vmatpush1.bf16.xpose.msra.mxu0 0
  %2084 = vmatprep.subr.bf16.mxu0 0
  %2085 = vmatpush1.bf16.xpose.msra.mxu0 0
  %2086 = vmatprep.subr.bf16.mxu0 0
  %2087 = vmatpush1.bf16.xpose.msra.mxu0 0
  %2088 = vmatprep.subr.bf16.mxu0 0
  %2089 = vmatpush1.bf16.xpose.msra.mxu0 0
  %2090 = vmatprep.subr.bf16.mxu0 0
  %2091 = vmatpush1.bf16.xpose.msra.mxu0 0
  %2092 = vmatprep.subr.bf16.mxu0 0
  %2093 = vmatpush1.bf16.xpose.msra.mxu0 0
  %2094 = vmatprep.subr.bf16.mxu0 0
  %2095 = vmatpush1.bf16.xpose.msra.mxu0 0
  %2096 = vmatprep.subr.bf16.mxu0 0
  %2097 = vmatpush1.bf16.xpose.msra.mxu0 0
  %2098 = vmatprep.mubr.bf16.mxu0 0
  %2099 = vmatmul.mubr.bf16.gmra.mrb[0].mxu0 %v2061
  %v2100 = vpop.f32.mrb[0].mxu0
  %v2101 = vadd.f32 0.0, %v2100
  %v2102 = vpop.f32.mrb[0].mxu0
  %v2103 = vpop.f32.mrb[0].mxu0
  %v2104 = vadd.f32 0.0, %v2103
  %v2105 = vpop.f32.mrb[0].mxu0
  %2106 = vdwg.mxu0
  %v2107 = vld [vmem:[%s1] sm:$0xff]
  %v2108 = vld [vmem:[%s1 + $0x8] sm:$0xff]
  %v2109 = vld [vmem:[%s1 + $0x10] sm:$0xff]
  %v2110 = vld [vmem:[%s1 + $0x18] sm:$0xff]
  %v2111 = vld [vmem:[%s1 + $0x20] sm:$0xff]
  %v2112 = vld [vmem:[%s1 + $0x28] sm:$0xff]
  %v2113 = vld [vmem:[%s1 + $0x30] sm:$0xff]
  %v2114 = vld [vmem:[%s1 + $0x38] sm:$0xff]
  %v2115 = vadd.f32 %v582, %v2107
  %v2116 = vadd.f32 %v585, %v2108
  %v2117 = vadd.f32 %v631, %v2107
  %v2118 = vadd.f32 %v634, %v2108
  %v2119 = vadd.f32 %v680, %v2107
  %v2120 = vadd.f32 %v683, %v2108
  %v2121 = vadd.f32 %v729, %v2107
  %v2122 = vadd.f32 %v732, %v2108
  %v2123 = vadd.f32 %v778, %v2107
  %v2124 = vadd.f32 %v781, %v2108
  %v2125 = vadd.f32 %v827, %v2107
  %v2126 = vadd.f32 %v830, %v2108
  %v2127 = vadd.f32 %v876, %v2107
  %v2128 = vadd.f32 %v879, %v2108
  %v2129 = vadd.f32 %v925, %v2107
  %v2130 = vadd.f32 %v928, %v2108
  %v2131 = vadd.f32 %v974, %v2109
  %v2132 = vadd.f32 %v977, %v2110
  %v2133 = vadd.f32 %v1023, %v2109
  %v2134 = vadd.f32 %v1026, %v2110
  %v2135 = vadd.f32 %v1072, %v2109
  %v2136 = vadd.f32 %v1075, %v2110
  %v2137 = vadd.f32 %v1121, %v2109
  %v2138 = vadd.f32 %v1124, %v2110
  %v2139 = vadd.f32 %v1170, %v2109
  %v2140 = vadd.f32 %v1173, %v2110
  %v2141 = vadd.f32 %v1219, %v2109
  %v2142 = vadd.f32 %v1222, %v2110
  %v2143 = vadd.f32 %v1268, %v2109
  %v2144 = vadd.f32 %v1271, %v2110
  %v2145 = vadd.f32 %v1317, %v2109
  %v2146 = vadd.f32 %v1320, %v2110
  %v2147 = vadd.f32 %v1366, %v2111
  %v2148 = vadd.f32 %v1369, %v2112
  %v2149 = vadd.f32 %v1415, %v2111
  %v2150 = vadd.f32 %v1418, %v2112
  %v2151 = vadd.f32 %v1464, %v2111
  %v2152 = vadd.f32 %v1467, %v2112
  %v2153 = vadd.f32 %v1513, %v2111
  %v2154 = vadd.f32 %v1516, %v2112
  %v2155 = vadd.f32 %v1562, %v2111
  %v2156 = vadd.f32 %v1565, %v2112
  %v2157 = vadd.f32 %v1611, %v2111
  %v2158 = vadd.f32 %v1614, %v2112
  %v2159 = vadd.f32 %v1660, %v2111
  %v2160 = vadd.f32 %v1663, %v2112
  %v2161 = vadd.f32 %v1709, %v2111
  %v2162 = vadd.f32 %v1712, %v2112
  %v2163 = vadd.f32 %v1758, %v2113
  %v2164 = vadd.f32 %v1761, %v2114
  %v2165 = vadd.f32 %v1807, %v2113
  %v2166 = vadd.f32 %v1810, %v2114
  %v2167 = vadd.f32 %v1856, %v2113
  %v2168 = vadd.f32 %v1859, %v2114
  %v2169 = vadd.f32 %v1905, %v2113
  %v2170 = vadd.f32 %v1908, %v2114
  %v2171 = vadd.f32 %v1954, %v2113
  %v2172 = vadd.f32 %v1957, %v2114
  %v2173 = vadd.f32 %v2003, %v2113
  %v2174 = vadd.f32 %v2006, %v2114
  %v2175 = vadd.f32 %v2052, %v2113
  %v2176 = vadd.f32 %v2055, %v2114
  %v2177 = vadd.f32 %v2101, %v2113
  %v2178 = vadd.f32 %v2104, %v2114
  %vm2179 = vcmask 130048
  %v2180 = vsel %vm2179, %v2115, -inf
  %2181 = vmax.xlane.f32.xlu0 %v2180
  %v2182 = vpop.xlane.xlu0 %2181
  %v2183 = vsel %vm2179, %v2116, -inf
  %2184 = vmax.xlane.f32.xlu0 %v2183
  %v2185 = vpop.xlane.xlu0 %2184
  %v2186 = vsel %vm2179, %v2117, -inf
  %2187 = vmax.xlane.f32.xlu0 %v2186
  %v2188 = vpop.xlane.xlu0 %2187
  %v2189 = vsel %vm2179, %v2118, -inf
  %2190 = vmax.xlane.f32.xlu0 %v2189
  %v2191 = vpop.xlane.xlu0 %2190
  %v2192 = vsel %vm2179, %v2119, -inf
  %2193 = vmax.xlane.f32.xlu0 %v2192
  %v2194 = vpop.xlane.xlu0 %2193
  %v2195 = vsel %vm2179, %v2120, -inf
  %2196 = vmax.xlane.f32.xlu0 %v2195
  %v2197 = vpop.xlane.xlu0 %2196
  %v2198 = vsel %vm2179, %v2121, -inf
  %2199 = vmax.xlane.f32.xlu0 %v2198
  %v2200 = vpop.xlane.xlu0 %2199
  %v2201 = vsel %vm2179, %v2122, -inf
  %2202 = vmax.xlane.f32.xlu0 %v2201
  %v2203 = vpop.xlane.xlu0 %2202
  %v2204 = vsel %vm2179, %v2123, -inf
  %2205 = vmax.xlane.f32.xlu0 %v2204
  %v2206 = vpop.xlane.xlu0 %2205
  %v2207 = vsel %vm2179, %v2124, -inf
  %2208 = vmax.xlane.f32.xlu0 %v2207
  %v2209 = vpop.xlane.xlu0 %2208
  %v2210 = vsel %vm2179, %v2125, -inf
  %2211 = vmax.xlane.f32.xlu0 %v2210
  %v2212 = vpop.xlane.xlu0 %2211
  %v2213 = vsel %vm2179, %v2126, -inf
  %2214 = vmax.xlane.f32.xlu0 %v2213
  %v2215 = vpop.xlane.xlu0 %2214
  %v2216 = vsel %vm2179, %v2127, -inf
  %2217 = vmax.xlane.f32.xlu0 %v2216
  %v2218 = vpop.xlane.xlu0 %2217
  %v2219 = vsel %vm2179, %v2128, -inf
  %2220 = vmax.xlane.f32.xlu0 %v2219
  %v2221 = vpop.xlane.xlu0 %2220
  %v2222 = vsel %vm2179, %v2129, -inf
  %2223 = vmax.xlane.f32.xlu0 %v2222
  %v2224 = vpop.xlane.xlu0 %2223
  %v2225 = vsel %vm2179, %v2130, -inf
  %2226 = vmax.xlane.f32.xlu0 %v2225
  %v2227 = vpop.xlane.xlu0 %2226
  %v2228 = vsel %vm2179, %v2131, -inf
  %2229 = vmax.xlane.f32.xlu0 %v2228
  %v2230 = vpop.xlane.xlu0 %2229
  %v2231 = vsel %vm2179, %v2132, -inf
  %2232 = vmax.xlane.f32.xlu0 %v2231
  %v2233 = vpop.xlane.xlu0 %2232
  %v2234 = vsel %vm2179, %v2133, -inf
  %2235 = vmax.xlane.f32.xlu0 %v2234
  %v2236 = vpop.xlane.xlu0 %2235
  %v2237 = vsel %vm2179, %v2134, -inf
  %2238 = vmax.xlane.f32.xlu0 %v2237
  %v2239 = vpop.xlane.xlu0 %2238
  %v2240 = vsel %vm2179, %v2135, -inf
  %2241 = vmax.xlane.f32.xlu0 %v2240
  %v2242 = vpop.xlane.xlu0 %2241
  %v2243 = vsel %vm2179, %v2136, -inf
  %2244 = vmax.xlane.f32.xlu0 %v2243
  %v2245 = vpop.xlane.xlu0 %2244
  %v2246 = vsel %vm2179, %v2137, -inf
  %2247 = vmax.xlane.f32.xlu0 %v2246
  %v2248 = vpop.xlane.xlu0 %2247
  %v2249 = vsel %vm2179, %v2138, -inf
  %2250 = vmax.xlane.f32.xlu0 %v2249
  %v2251 = vpop.xlane.xlu0 %2250
  %v2252 = vsel %vm2179, %v2139, -inf
  %2253 = vmax.xlane.f32.xlu0 %v2252
  %v2254 = vpop.xlane.xlu0 %2253
  %v2255 = vsel %vm2179, %v2140, -inf
  %2256 = vmax.xlane.f32.xlu0 %v2255
  %v2257 = vpop.xlane.xlu0 %2256
  %v2258 = vsel %vm2179, %v2141, -inf
  %2259 = vmax.xlane.f32.xlu0 %v2258
  %v2260 = vpop.xlane.xlu0 %2259
  %v2261 = vsel %vm2179, %v2142, -inf
  %2262 = vmax.xlane.f32.xlu0 %v2261
  %v2263 = vpop.xlane.xlu0 %2262
  %v2264 = vsel %vm2179, %v2143, -inf
  %2265 = vmax.xlane.f32.xlu0 %v2264
  %v2266 = vpop.xlane.xlu0 %2265
  %v2267 = vsel %vm2179, %v2144, -inf
  %2268 = vmax.xlane.f32.xlu0 %v2267
  %v2269 = vpop.xlane.xlu0 %2268
  %v2270 = vsel %vm2179, %v2145, -inf
  %2271 = vmax.xlane.f32.xlu0 %v2270
  %v2272 = vpop.xlane.xlu0 %2271
  %v2273 = vsel %vm2179, %v2146, -inf
  %2274 = vmax.xlane.f32.xlu0 %v2273
  %v2275 = vpop.xlane.xlu0 %2274
  %v2276 = vsel %vm2179, %v2147, -inf
  %2277 = vmax.xlane.f32.xlu0 %v2276
  %v2278 = vpop.xlane.xlu0 %2277
  %v2279 = vsel %vm2179, %v2148, -inf
  %2280 = vmax.xlane.f32.xlu0 %v2279
  %v2281 = vpop.xlane.xlu0 %2280
  %v2282 = vsel %vm2179, %v2149, -inf
  %2283 = vmax.xlane.f32.xlu0 %v2282
  %v2284 = vpop.xlane.xlu0 %2283
  %v2285 = vsel %vm2179, %v2150, -inf
  %2286 = vmax.xlane.f32.xlu0 %v2285
  %v2287 = vpop.xlane.xlu0 %2286
  %v2288 = vsel %vm2179, %v2151, -inf
  %2289 = vmax.xlane.f32.xlu0 %v2288
  %v2290 = vpop.xlane.xlu0 %2289
  %v2291 = vsel %vm2179, %v2152, -inf
  %2292 = vmax.xlane.f32.xlu0 %v2291
  %v2293 = vpop.xlane.xlu0 %2292
  %v2294 = vsel %vm2179, %v2153, -inf
  %2295 = vmax.xlane.f32.xlu0 %v2294
  %v2296 = vpop.xlane.xlu0 %2295
  %v2297 = vsel %vm2179, %v2154, -inf
  %2298 = vmax.xlane.f32.xlu0 %v2297
  %v2299 = vpop.xlane.xlu0 %2298
  %v2300 = vsel %vm2179, %v2155, -inf
  %2301 = vmax.xlane.f32.xlu0 %v2300
  %v2302 = vpop.xlane.xlu0 %2301
  %v2303 = vsel %vm2179, %v2156, -inf
  %2304 = vmax.xlane.f32.xlu0 %v2303
  %v2305 = vpop.xlane.xlu0 %2304
  %v2306 = vsel %vm2179, %v2157, -inf
  %2307 = vmax.xlane.f32.xlu0 %v2306
  %v2308 = vpop.xlane.xlu0 %2307
  %v2309 = vsel %vm2179, %v2158, -inf
  %2310 = vmax.xlane.f32.xlu0 %v2309
  %v2311 = vpop.xlane.xlu0 %2310
  %v2312 = vsel %vm2179, %v2159, -inf
  %2313 = vmax.xlane.f32.xlu0 %v2312
  %v2314 = vpop.xlane.xlu0 %2313
  %v2315 = vsel %vm2179, %v2160, -inf
  %2316 = vmax.xlane.f32.xlu0 %v2315
  %v2317 = vpop.xlane.xlu0 %2316
  %v2318 = vsel %vm2179, %v2161, -inf
  %2319 = vmax.xlane.f32.xlu0 %v2318
  %v2320 = vpop.xlane.xlu0 %2319
  %v2321 = vsel %vm2179, %v2162, -inf
  %2322 = vmax.xlane.f32.xlu0 %v2321
  %v2323 = vpop.xlane.xlu0 %2322
  %v2324 = vsel %vm2179, %v2163, -inf
  %2325 = vmax.xlane.f32.xlu0 %v2324
  %v2326 = vpop.xlane.xlu0 %2325
  %v2327 = vsel %vm2179, %v2164, -inf
  %2328 = vmax.xlane.f32.xlu0 %v2327
  %v2329 = vpop.xlane.xlu0 %2328
  %v2330 = vsel %vm2179, %v2165, -inf
  %2331 = vmax.xlane.f32.xlu0 %v2330
  %v2332 = vpop.xlane.xlu0 %2331
  %v2333 = vsel %vm2179, %v2166, -inf
  %2334 = vmax.xlane.f32.xlu0 %v2333
  %v2335 = vpop.xlane.xlu0 %2334
  %v2336 = vsel %vm2179, %v2167, -inf
  %2337 = vmax.xlane.f32.xlu0 %v2336
  %v2338 = vpop.xlane.xlu0 %2337
  %v2339 = vsel %vm2179, %v2168, -inf
  %2340 = vmax.xlane.f32.xlu0 %v2339
  %v2341 = vpop.xlane.xlu0 %2340
  %v2342 = vsel %vm2179, %v2169, -inf
  %2343 = vmax.xlane.f32.xlu0 %v2342
  %v2344 = vpop.xlane.xlu0 %2343
  %v2345 = vsel %vm2179, %v2170, -inf
  %2346 = vmax.xlane.f32.xlu0 %v2345
  %v2347 = vpop.xlane.xlu0 %2346
  %v2348 = vsel %vm2179, %v2171, -inf
  %2349 = vmax.xlane.f32.xlu0 %v2348
  %v2350 = vpop.xlane.xlu0 %2349
  %v2351 = vsel %vm2179, %v2172, -inf
  %2352 = vmax.xlane.f32.xlu0 %v2351
  %v2353 = vpop.xlane.xlu0 %2352
  %v2354 = vsel %vm2179, %v2173, -inf
  %2355 = vmax.xlane.f32.xlu0 %v2354
  %v2356 = vpop.xlane.xlu0 %2355
  %v2357 = vsel %vm2179, %v2174, -inf
  %2358 = vmax.xlane.f32.xlu0 %v2357
  %v2359 = vpop.xlane.xlu0 %2358
  %v2360 = vsel %vm2179, %v2175, -inf
  %2361 = vmax.xlane.f32.xlu0 %v2360
  %v2362 = vpop.xlane.xlu0 %2361
  %v2363 = vsel %vm2179, %v2176, -inf
  %2364 = vmax.xlane.f32.xlu0 %v2363
  %v2365 = vpop.xlane.xlu0 %2364
  %v2366 = vsel %vm2179, %v2177, -inf
  %2367 = vmax.xlane.f32.xlu0 %v2366
  %v2368 = vpop.xlane.xlu0 %2367
  %v2369 = vsel %vm2179, %v2178, -inf
  %2370 = vmax.xlane.f32.xlu0 %v2369
  %v2371 = vpop.xlane.xlu0 %2370
  %v2372 = vsub.f32 %v2115, %v2182
  %v2373 = vsub.f32 %v2116, %v2185
  %v2374 = vsub.f32 %v2117, %v2188
  %v2375 = vsub.f32 %v2118, %v2191
  %v2376 = vsub.f32 %v2119, %v2194
  %v2377 = vsub.f32 %v2120, %v2197
  %v2378 = vsub.f32 %v2121, %v2200
  %v2379 = vsub.f32 %v2122, %v2203
  %v2380 = vsub.f32 %v2123, %v2206
  %v2381 = vsub.f32 %v2124, %v2209
  %v2382 = vsub.f32 %v2125, %v2212
  %v2383 = vsub.f32 %v2126, %v2215
  %v2384 = vsub.f32 %v2127, %v2218
  %v2385 = vsub.f32 %v2128, %v2221
  %v2386 = vsub.f32 %v2129, %v2224
  %v2387 = vsub.f32 %v2130, %v2227
  %v2388 = vsub.f32 %v2131, %v2230
  %v2389 = vsub.f32 %v2132, %v2233
  %v2390 = vsub.f32 %v2133, %v2236
  %v2391 = vsub.f32 %v2134, %v2239
  %v2392 = vsub.f32 %v2135, %v2242
  %v2393 = vsub.f32 %v2136, %v2245
  %v2394 = vsub.f32 %v2137, %v2248
  %v2395 = vsub.f32 %v2138, %v2251
  %v2396 = vsub.f32 %v2139, %v2254
  %v2397 = vsub.f32 %v2140, %v2257
  %v2398 = vsub.f32 %v2141, %v2260
  %v2399 = vsub.f32 %v2142, %v2263
  %v2400 = vsub.f32 %v2143, %v2266
  %v2401 = vsub.f32 %v2144, %v2269
  %v2402 = vsub.f32 %v2145, %v2272
  %v2403 = vsub.f32 %v2146, %v2275
  %v2404 = vsub.f32 %v2147, %v2278
  %v2405 = vsub.f32 %v2148, %v2281
  %v2406 = vsub.f32 %v2149, %v2284
  %v2407 = vsub.f32 %v2150, %v2287
  %v2408 = vsub.f32 %v2151, %v2290
  %v2409 = vsub.f32 %v2152, %v2293
  %v2410 = vsub.f32 %v2153, %v2296
  %v2411 = vsub.f32 %v2154, %v2299
  %v2412 = vsub.f32 %v2155, %v2302
  %v2413 = vsub.f32 %v2156, %v2305
  %v2414 = vsub.f32 %v2157, %v2308
  %v2415 = vsub.f32 %v2158, %v2311
  %v2416 = vsub.f32 %v2159, %v2314
  %v2417 = vsub.f32 %v2160, %v2317
  %v2418 = vsub.f32 %v2161, %v2320
  %v2419 = vsub.f32 %v2162, %v2323
  %v2420 = vsub.f32 %v2163, %v2326
  %v2421 = vsub.f32 %v2164, %v2329
  %v2422 = vsub.f32 %v2165, %v2332
  %v2423 = vsub.f32 %v2166, %v2335
  %v2424 = vsub.f32 %v2167, %v2338
  %v2425 = vsub.f32 %v2168, %v2341
  %v2426 = vsub.f32 %v2169, %v2344
  %v2427 = vsub.f32 %v2170, %v2347
  %v2428 = vsub.f32 %v2171, %v2350
  %v2429 = vsub.f32 %v2172, %v2353
  %v2430 = vsub.f32 %v2173, %v2356
  %v2431 = vsub.f32 %v2174, %v2359
  %v2432 = vsub.f32 %v2175, %v2362
  %v2433 = vsub.f32 %v2176, %v2365
  %v2434 = vsub.f32 %v2177, %v2368
  %v2435 = vsub.f32 %v2178, %v2371
  %v2436 = vmul.f32 %v2372, 1.442695
  %v2437 = vpow.pop %v2436
  %v2438 = vmul.f32 %v2373, 1.442695
  %v2439 = vpow.pop %v2438
  %v2440 = vmul.f32 %v2374, 1.442695
  %v2441 = vpow.pop %v2440
  %v2442 = vmul.f32 %v2375, 1.442695
  %v2443 = vpow.pop %v2442
  %v2444 = vmul.f32 %v2376, 1.442695
  %v2445 = vpow.pop %v2444
  %v2446 = vmul.f32 %v2377, 1.442695
  %v2447 = vpow.pop %v2446
  %v2448 = vmul.f32 %v2378, 1.442695
  %v2449 = vpow.pop %v2448
  %v2450 = vmul.f32 %v2379, 1.442695
  %v2451 = vpow.pop %v2450
  %v2452 = vmul.f32 %v2380, 1.442695
  %v2453 = vpow.pop %v2452
  %v2454 = vmul.f32 %v2381, 1.442695
  %v2455 = vpow.pop %v2454
  %v2456 = vmul.f32 %v2382, 1.442695
  %v2457 = vpow.pop %v2456
  %v2458 = vmul.f32 %v2383, 1.442695
  %v2459 = vpow.pop %v2458
  %v2460 = vmul.f32 %v2384, 1.442695
  %v2461 = vpow.pop %v2460
  %v2462 = vmul.f32 %v2385, 1.442695
  %v2463 = vpow.pop %v2462
  %v2464 = vmul.f32 %v2386, 1.442695
  %v2465 = vpow.pop %v2464
  %v2466 = vmul.f32 %v2387, 1.442695
  %v2467 = vpow.pop %v2466
  %v2468 = vmul.f32 %v2388, 1.442695
  %v2469 = vpow.pop %v2468
  %v2470 = vmul.f32 %v2389, 1.442695
  %v2471 = vpow.pop %v2470
  %v2472 = vmul.f32 %v2390, 1.442695
  %v2473 = vpow.pop %v2472
  %v2474 = vmul.f32 %v2391, 1.442695
  %v2475 = vpow.pop %v2474
  %v2476 = vmul.f32 %v2392, 1.442695
  %v2477 = vpow.pop %v2476
  %v2478 = vmul.f32 %v2393, 1.442695
  %v2479 = vpow.pop %v2478
  %v2480 = vmul.f32 %v2394, 1.442695
  %v2481 = vpow.pop %v2480
  %v2482 = vmul.f32 %v2395, 1.442695
  %v2483 = vpow.pop %v2482
  %v2484 = vmul.f32 %v2396, 1.442695
  %v2485 = vpow.pop %v2484
  %v2486 = vmul.f32 %v2397, 1.442695
  %v2487 = vpow.pop %v2486
  %v2488 = vmul.f32 %v2398, 1.442695
  %v2489 = vpow.pop %v2488
  %v2490 = vmul.f32 %v2399, 1.442695
  %v2491 = vpow.pop %v2490
  %v2492 = vmul.f32 %v2400, 1.442695
  %v2493 = vpow.pop %v2492
  %v2494 = vmul.f32 %v2401, 1.442695
  %v2495 = vpow.pop %v2494
  %v2496 = vmul.f32 %v2402, 1.442695
  %v2497 = vpow.pop %v2496
  %v2498 = vmul.f32 %v2403, 1.442695
  %v2499 = vpow.pop %v2498
  %v2500 = vmul.f32 %v2404, 1.442695
  %v2501 = vpow.pop %v2500
  %v2502 = vmul.f32 %v2405, 1.442695
  %v2503 = vpow.pop %v2502
  %v2504 = vmul.f32 %v2406, 1.442695
  %v2505 = vpow.pop %v2504
  %v2506 = vmul.f32 %v2407, 1.442695
  %v2507 = vpow.pop %v2506
  %v2508 = vmul.f32 %v2408, 1.442695
  %v2509 = vpow.pop %v2508
  %v2510 = vmul.f32 %v2409, 1.442695
  %v2511 = vpow.pop %v2510
  %v2512 = vmul.f32 %v2410, 1.442695
  %v2513 = vpow.pop %v2512
  %v2514 = vmul.f32 %v2411, 1.442695
  %v2515 = vpow.pop %v2514
  %v2516 = vmul.f32 %v2412, 1.442695
  %v2517 = vpow.pop %v2516
  %v2518 = vmul.f32 %v2413, 1.442695
  %v2519 = vpow.pop %v2518
  %v2520 = vmul.f32 %v2414, 1.442695
  %v2521 = vpow.pop %v2520
  %v2522 = vmul.f32 %v2415, 1.442695
  %v2523 = vpow.pop %v2522
  %v2524 = vmul.f32 %v2416, 1.442695
  %v2525 = vpow.pop %v2524
  %v2526 = vmul.f32 %v2417, 1.442695
  %v2527 = vpow.pop %v2526
  %v2528 = vmul.f32 %v2418, 1.442695
  %v2529 = vpow.pop %v2528
  %v2530 = vmul.f32 %v2419, 1.442695
  %v2531 = vpow.pop %v2530
  %v2532 = vmul.f32 %v2420, 1.442695
  %v2533 = vpow.pop %v2532
  %v2534 = vmul.f32 %v2421, 1.442695
  %v2535 = vpow.pop %v2534
  %v2536 = vmul.f32 %v2422, 1.442695
  %v2537 = vpow.pop %v2536
  %v2538 = vmul.f32 %v2423, 1.442695
  %v2539 = vpow.pop %v2538
  %v2540 = vmul.f32 %v2424, 1.442695
  %v2541 = vpow.pop %v2540
  %v2542 = vmul.f32 %v2425, 1.442695
  %v2543 = vpow.pop %v2542
  %v2544 = vmul.f32 %v2426, 1.442695
  %v2545 = vpow.pop %v2544
  %v2546 = vmul.f32 %v2427, 1.442695
  %v2547 = vpow.pop %v2546
  %v2548 = vmul.f32 %v2428, 1.442695
  %v2549 = vpow.pop %v2548
  %v2550 = vmul.f32 %v2429, 1.442695
  %v2551 = vpow.pop %v2550
  %v2552 = vmul.f32 %v2430, 1.442695
  %v2553 = vpow.pop %v2552
  %v2554 = vmul.f32 %v2431, 1.442695
  %v2555 = vpow.pop %v2554
  %v2556 = vmul.f32 %v2432, 1.442695
  %v2557 = vpow.pop %v2556
  %v2558 = vmul.f32 %v2433, 1.442695
  %v2559 = vpow.pop %v2558
  %v2560 = vmul.f32 %v2434, 1.442695
  %v2561 = vpow.pop %v2560
  %v2562 = vmul.f32 %v2435, 1.442695
  %v2563 = vpow.pop %v2562
  %v2564 = vsel %vm2179, %v2437, 0.0
  %2565 = vadd.xlane.f32.xlu0 %v2564
  %v2566 = vpop.xlane.xlu0 %2565
  %v2567 = vsel %vm2179, %v2439, 0.0
  %2568 = vadd.xlane.f32.xlu0 %v2567
  %v2569 = vpop.xlane.xlu0 %2568
  %v2570 = vsel %vm2179, %v2441, 0.0
  %2571 = vadd.xlane.f32.xlu0 %v2570
  %v2572 = vpop.xlane.xlu0 %2571
  %v2573 = vsel %vm2179, %v2443, 0.0
  %2574 = vadd.xlane.f32.xlu0 %v2573
  %v2575 = vpop.xlane.xlu0 %2574
  %v2576 = vsel %vm2179, %v2445, 0.0
  %2577 = vadd.xlane.f32.xlu0 %v2576
  %v2578 = vpop.xlane.xlu0 %2577
  %v2579 = vsel %vm2179, %v2447, 0.0
  %2580 = vadd.xlane.f32.xlu0 %v2579
  %v2581 = vpop.xlane.xlu0 %2580
  %v2582 = vsel %vm2179, %v2449, 0.0
  %2583 = vadd.xlane.f32.xlu0 %v2582
  %v2584 = vpop.xlane.xlu0 %2583
  %v2585 = vsel %vm2179, %v2451, 0.0
  %2586 = vadd.xlane.f32.xlu0 %v2585
  %v2587 = vpop.xlane.xlu0 %2586
  %v2588 = vsel %vm2179, %v2453, 0.0
  %2589 = vadd.xlane.f32.xlu0 %v2588
  %v2590 = vpop.xlane.xlu0 %2589
  %v2591 = vsel %vm2179, %v2455, 0.0
  %2592 = vadd.xlane.f32.xlu0 %v2591
  %v2593 = vpop.xlane.xlu0 %2592
  %v2594 = vsel %vm2179, %v2457, 0.0
  %2595 = vadd.xlane.f32.xlu0 %v2594
  %v2596 = vpop.xlane.xlu0 %2595
  %v2597 = vsel %vm2179, %v2459, 0.0
  %2598 = vadd.xlane.f32.xlu0 %v2597
  %v2599 = vpop.xlane.xlu0 %2598
  %v2600 = vsel %vm2179, %v2461, 0.0
  %2601 = vadd.xlane.f32.xlu0 %v2600
  %v2602 = vpop.xlane.xlu0 %2601
  %v2603 = vsel %vm2179, %v2463, 0.0
  %2604 = vadd.xlane.f32.xlu0 %v2603
  %v2605 = vpop.xlane.xlu0 %2604
  %v2606 = vsel %vm2179, %v2465, 0.0
  %2607 = vadd.xlane.f32.xlu0 %v2606
  %v2608 = vpop.xlane.xlu0 %2607
  %v2609 = vsel %vm2179, %v2467, 0.0
  %2610 = vadd.xlane.f32.xlu0 %v2609
  %v2611 = vpop.xlane.xlu0 %2610
  %v2612 = vsel %vm2179, %v2469, 0.0
  %2613 = vadd.xlane.f32.xlu0 %v2612
  %v2614 = vpop.xlane.xlu0 %2613
  %v2615 = vsel %vm2179, %v2471, 0.0
  %2616 = vadd.xlane.f32.xlu0 %v2615
  %v2617 = vpop.xlane.xlu0 %2616
  %v2618 = vsel %vm2179, %v2473, 0.0
  %2619 = vadd.xlane.f32.xlu0 %v2618
  %v2620 = vpop.xlane.xlu0 %2619
  %v2621 = vsel %vm2179, %v2475, 0.0
  %2622 = vadd.xlane.f32.xlu0 %v2621
  %v2623 = vpop.xlane.xlu0 %2622
  %v2624 = vsel %vm2179, %v2477, 0.0
  %2625 = vadd.xlane.f32.xlu0 %v2624
  %v2626 = vpop.xlane.xlu0 %2625
  %v2627 = vsel %vm2179, %v2479, 0.0
  %2628 = vadd.xlane.f32.xlu0 %v2627
  %v2629 = vpop.xlane.xlu0 %2628
  %v2630 = vsel %vm2179, %v2481, 0.0
  %2631 = vadd.xlane.f32.xlu0 %v2630
  %v2632 = vpop.xlane.xlu0 %2631
  %v2633 = vsel %vm2179, %v2483, 0.0
  %2634 = vadd.xlane.f32.xlu0 %v2633
  %v2635 = vpop.xlane.xlu0 %2634
  %v2636 = vsel %vm2179, %v2485, 0.0
  %2637 = vadd.xlane.f32.xlu0 %v2636
  %v2638 = vpop.xlane.xlu0 %2637
  %v2639 = vsel %vm2179, %v2487, 0.0
  %2640 = vadd.xlane.f32.xlu0 %v2639
  %v2641 = vpop.xlane.xlu0 %2640
  %v2642 = vsel %vm2179, %v2489, 0.0
  %2643 = vadd.xlane.f32.xlu0 %v2642
  %v2644 = vpop.xlane.xlu0 %2643
  %v2645 = vsel %vm2179, %v2491, 0.0
  %2646 = vadd.xlane.f32.xlu0 %v2645
  %v2647 = vpop.xlane.xlu0 %2646
  %v2648 = vsel %vm2179, %v2493, 0.0
  %2649 = vadd.xlane.f32.xlu0 %v2648
  %v2650 = vpop.xlane.xlu0 %2649
  %v2651 = vsel %vm2179, %v2495, 0.0
  %2652 = vadd.xlane.f32.xlu0 %v2651
  %v2653 = vpop.xlane.xlu0 %2652
  %v2654 = vsel %vm2179, %v2497, 0.0
  %2655 = vadd.xlane.f32.xlu0 %v2654
  %v2656 = vpop.xlane.xlu0 %2655
  %v2657 = vsel %vm2179, %v2499, 0.0
  %2658 = vadd.xlane.f32.xlu0 %v2657
  %v2659 = vpop.xlane.xlu0 %2658
  %v2660 = vsel %vm2179, %v2501, 0.0
  %2661 = vadd.xlane.f32.xlu0 %v2660
  %v2662 = vpop.xlane.xlu0 %2661
  %v2663 = vsel %vm2179, %v2503, 0.0
  %2664 = vadd.xlane.f32.xlu0 %v2663
  %v2665 = vpop.xlane.xlu0 %2664
  %v2666 = vsel %vm2179, %v2505, 0.0
  %2667 = vadd.xlane.f32.xlu0 %v2666
  %v2668 = vpop.xlane.xlu0 %2667
  %v2669 = vsel %vm2179, %v2507, 0.0
  %2670 = vadd.xlane.f32.xlu0 %v2669
  %v2671 = vpop.xlane.xlu0 %2670
  %v2672 = vsel %vm2179, %v2509, 0.0
  %2673 = vadd.xlane.f32.xlu0 %v2672
  %v2674 = vpop.xlane.xlu0 %2673
  %v2675 = vsel %vm2179, %v2511, 0.0
  %2676 = vadd.xlane.f32.xlu0 %v2675
  %v2677 = vpop.xlane.xlu0 %2676
  %v2678 = vsel %vm2179, %v2513, 0.0
  %2679 = vadd.xlane.f32.xlu0 %v2678
  %v2680 = vpop.xlane.xlu0 %2679
  %v2681 = vsel %vm2179, %v2515, 0.0
  %2682 = vadd.xlane.f32.xlu0 %v2681
  %v2683 = vpop.xlane.xlu0 %2682
  %v2684 = vsel %vm2179, %v2517, 0.0
  %2685 = vadd.xlane.f32.xlu0 %v2684
  %v2686 = vpop.xlane.xlu0 %2685
  %v2687 = vsel %vm2179, %v2519, 0.0
  %2688 = vadd.xlane.f32.xlu0 %v2687
  %v2689 = vpop.xlane.xlu0 %2688
  %v2690 = vsel %vm2179, %v2521, 0.0
  %2691 = vadd.xlane.f32.xlu0 %v2690
  %v2692 = vpop.xlane.xlu0 %2691
  %v2693 = vsel %vm2179, %v2523, 0.0
  %2694 = vadd.xlane.f32.xlu0 %v2693
  %v2695 = vpop.xlane.xlu0 %2694
  %v2696 = vsel %vm2179, %v2525, 0.0
  %2697 = vadd.xlane.f32.xlu0 %v2696
  %v2698 = vpop.xlane.xlu0 %2697
  %v2699 = vsel %vm2179, %v2527, 0.0
  %2700 = vadd.xlane.f32.xlu0 %v2699
  %v2701 = vpop.xlane.xlu0 %2700
  %v2702 = vsel %vm2179, %v2529, 0.0
  %2703 = vadd.xlane.f32.xlu0 %v2702
  %v2704 = vpop.xlane.xlu0 %2703
  %v2705 = vsel %vm2179, %v2531, 0.0
  %2706 = vadd.xlane.f32.xlu0 %v2705
  %v2707 = vpop.xlane.xlu0 %2706
  %v2708 = vsel %vm2179, %v2533, 0.0
  %2709 = vadd.xlane.f32.xlu0 %v2708
  %v2710 = vpop.xlane.xlu0 %2709
  %v2711 = vsel %vm2179, %v2535, 0.0
  %2712 = vadd.xlane.f32.xlu0 %v2711
  %v2713 = vpop.xlane.xlu0 %2712
  %v2714 = vsel %vm2179, %v2537, 0.0
  %2715 = vadd.xlane.f32.xlu0 %v2714
  %v2716 = vpop.xlane.xlu0 %2715
  %v2717 = vsel %vm2179, %v2539, 0.0
  %2718 = vadd.xlane.f32.xlu0 %v2717
  %v2719 = vpop.xlane.xlu0 %2718
  %v2720 = vsel %vm2179, %v2541, 0.0
  %2721 = vadd.xlane.f32.xlu0 %v2720
  %v2722 = vpop.xlane.xlu0 %2721
  %v2723 = vsel %vm2179, %v2543, 0.0
  %2724 = vadd.xlane.f32.xlu0 %v2723
  %v2725 = vpop.xlane.xlu0 %2724
  %v2726 = vsel %vm2179, %v2545, 0.0
  %2727 = vadd.xlane.f32.xlu0 %v2726
  %v2728 = vpop.xlane.xlu0 %2727
  %v2729 = vsel %vm2179, %v2547, 0.0
  %2730 = vadd.xlane.f32.xlu0 %v2729
  %v2731 = vpop.xlane.xlu0 %2730
  %v2732 = vsel %vm2179, %v2549, 0.0
  %2733 = vadd.xlane.f32.xlu0 %v2732
  %v2734 = vpop.xlane.xlu0 %2733
  %v2735 = vsel %vm2179, %v2551, 0.0
  %2736 = vadd.xlane.f32.xlu0 %v2735
  %v2737 = vpop.xlane.xlu0 %2736
  %v2738 = vsel %vm2179, %v2553, 0.0
  %2739 = vadd.xlane.f32.xlu0 %v2738
  %v2740 = vpop.xlane.xlu0 %2739
  %v2741 = vsel %vm2179, %v2555, 0.0
  %2742 = vadd.xlane.f32.xlu0 %v2741
  %v2743 = vpop.xlane.xlu0 %2742
  %v2744 = vsel %vm2179, %v2557, 0.0
  %2745 = vadd.xlane.f32.xlu0 %v2744
  %v2746 = vpop.xlane.xlu0 %2745
  %v2747 = vsel %vm2179, %v2559, 0.0
  %2748 = vadd.xlane.f32.xlu0 %v2747
  %v2749 = vpop.xlane.xlu0 %2748
  %v2750 = vsel %vm2179, %v2561, 0.0
  %2751 = vadd.xlane.f32.xlu0 %v2750
  %v2752 = vpop.xlane.xlu0 %2751
  %v2753 = vsel %vm2179, %v2563, 0.0
  %2754 = vadd.xlane.f32.xlu0 %v2753
  %v2755 = vpop.xlane.xlu0 %2754
  %v2756 = vrcp.pop %v2566
  %v2757 = vrcp.pop %v2569
  %v2758 = vrcp.pop %v2572
  %v2759 = vrcp.pop %v2575
  %v2760 = vrcp.pop %v2578
  %v2761 = vrcp.pop %v2581
  %v2762 = vrcp.pop %v2584
  %v2763 = vrcp.pop %v2587
  %v2764 = vrcp.pop %v2590
  %v2765 = vrcp.pop %v2593
  %v2766 = vrcp.pop %v2596
  %v2767 = vrcp.pop %v2599
  %v2768 = vrcp.pop %v2602
  %v2769 = vrcp.pop %v2605
  %v2770 = vrcp.pop %v2608
  %v2771 = vrcp.pop %v2611
  %v2772 = vrcp.pop %v2614
  %v2773 = vrcp.pop %v2617
  %v2774 = vrcp.pop %v2620
  %v2775 = vrcp.pop %v2623
  %v2776 = vrcp.pop %v2626
  %v2777 = vrcp.pop %v2629
  %v2778 = vrcp.pop %v2632
  %v2779 = vrcp.pop %v2635
  %v2780 = vrcp.pop %v2638
  %v2781 = vrcp.pop %v2641
  %v2782 = vrcp.pop %v2644
  %v2783 = vrcp.pop %v2647
  %v2784 = vrcp.pop %v2650
  %v2785 = vrcp.pop %v2653
  %v2786 = vrcp.pop %v2656
  %v2787 = vrcp.pop %v2659
  %v2788 = vrcp.pop %v2662
  %v2789 = vrcp.pop %v2665
  %v2790 = vrcp.pop %v2668
  %v2791 = vrcp.pop %v2671
  %v2792 = vrcp.pop %v2674
  %v2793 = vrcp.pop %v2677
  %v2794 = vrcp.pop %v2680
  %v2795 = vrcp.pop %v2683
  %v2796 = vrcp.pop %v2686
  %v2797 = vrcp.pop %v2689
  %v2798 = vrcp.pop %v2692
  %v2799 = vrcp.pop %v2695
  %v2800 = vrcp.pop %v2698
  %v2801 = vrcp.pop %v2701
  %v2802 = vrcp.pop %v2704
  %v2803 = vrcp.pop %v2707
  %v2804 = vrcp.pop %v2710
  %v2805 = vrcp.pop %v2713
  %v2806 = vrcp.pop %v2716
  %v2807 = vrcp.pop %v2719
  %v2808 = vrcp.pop %v2722
  %v2809 = vrcp.pop %v2725
  %v2810 = vrcp.pop %v2728
  %v2811 = vrcp.pop %v2731
  %v2812 = vrcp.pop %v2734
  %v2813 = vrcp.pop %v2737
  %v2814 = vrcp.pop %v2740
  %v2815 = vrcp.pop %v2743
  %v2816 = vrcp.pop %v2746
  %v2817 = vrcp.pop %v2749
  %v2818 = vrcp.pop %v2752
  %v2819 = vrcp.pop %v2755
  %v2820 = vmul.f32 %v2437, %v2756
  %v2821 = vmul.f32 %v2439, %v2757
  %v2822 = vmul.f32 %v2441, %v2758
  %v2823 = vmul.f32 %v2443, %v2759
  %v2824 = vmul.f32 %v2445, %v2760
  %v2825 = vmul.f32 %v2447, %v2761
  %v2826 = vmul.f32 %v2449, %v2762
  %v2827 = vmul.f32 %v2451, %v2763
  %v2828 = vmul.f32 %v2453, %v2764
  %v2829 = vmul.f32 %v2455, %v2765
  %v2830 = vmul.f32 %v2457, %v2766
  %v2831 = vmul.f32 %v2459, %v2767
  %v2832 = vmul.f32 %v2461, %v2768
  %v2833 = vmul.f32 %v2463, %v2769
  %v2834 = vmul.f32 %v2465, %v2770
  %v2835 = vmul.f32 %v2467, %v2771
  %v2836 = vmul.f32 %v2469, %v2772
  %v2837 = vmul.f32 %v2471, %v2773
  %v2838 = vmul.f32 %v2473, %v2774
  %v2839 = vmul.f32 %v2475, %v2775
  %v2840 = vmul.f32 %v2477, %v2776
  %v2841 = vmul.f32 %v2479, %v2777
  %v2842 = vmul.f32 %v2481, %v2778
  %v2843 = vmul.f32 %v2483, %v2779
  %v2844 = vmul.f32 %v2485, %v2780
  %v2845 = vmul.f32 %v2487, %v2781
  %v2846 = vmul.f32 %v2489, %v2782
  %v2847 = vmul.f32 %v2491, %v2783
  %v2848 = vmul.f32 %v2493, %v2784
  %v2849 = vmul.f32 %v2495, %v2785
  %v2850 = vmul.f32 %v2497, %v2786
  %v2851 = vmul.f32 %v2499, %v2787
  %v2852 = vmul.f32 %v2501, %v2788
  %v2853 = vmul.f32 %v2503, %v2789
  %v2854 = vmul.f32 %v2505, %v2790
  %v2855 = vmul.f32 %v2507, %v2791
  %v2856 = vmul.f32 %v2509, %v2792
  %v2857 = vmul.f32 %v2511, %v2793
  %v2858 = vmul.f32 %v2513, %v2794
  %v2859 = vmul.f32 %v2515, %v2795
  %v2860 = vmul.f32 %v2517, %v2796
  %v2861 = vmul.f32 %v2519, %v2797
  %v2862 = vmul.f32 %v2521, %v2798
  %v2863 = vmul.f32 %v2523, %v2799
  %v2864 = vmul.f32 %v2525, %v2800
  %v2865 = vmul.f32 %v2527, %v2801
  %v2866 = vmul.f32 %v2529, %v2802
  %v2867 = vmul.f32 %v2531, %v2803
  %v2868 = vmul.f32 %v2533, %v2804
  %v2869 = vmul.f32 %v2535, %v2805
  %v2870 = vmul.f32 %v2537, %v2806
  %v2871 = vmul.f32 %v2539, %v2807
  %v2872 = vmul.f32 %v2541, %v2808
  %v2873 = vmul.f32 %v2543, %v2809
  %v2874 = vmul.f32 %v2545, %v2810
  %v2875 = vmul.f32 %v2547, %v2811
  %v2876 = vmul.f32 %v2549, %v2812
  %v2877 = vmul.f32 %v2551, %v2813
  %v2878 = vmul.f32 %v2553, %v2814
  %v2879 = vmul.f32 %v2555, %v2815
  %v2880 = vmul.f32 %v2557, %v2816
  %v2881 = vmul.f32 %v2559, %v2817
  %v2882 = vmul.f32 %v2561, %v2818
  %v2883 = vmul.f32 %v2563, %v2819
  %2884 = vst.msk [vmem:[%s15] sm:$0xff] %vm2179, %v2820
  %2885 = vst.msk [vmem:[%s15 + $0x8] sm:$0xff] %vm2179, %v2821
  %2886 = vst.msk [vmem:[%s15 + $0x10] sm:$0xff] %vm2179, %v2822
  %2887 = vst.msk [vmem:[%s15 + $0x18] sm:$0xff] %vm2179, %v2823
  %2888 = vst.msk [vmem:[%s15 + $0x20] sm:$0xff] %vm2179, %v2824
  %2889 = vst.msk [vmem:[%s15 + $0x28] sm:$0xff] %vm2179, %v2825
  %2890 = vst.msk [vmem:[%s15 + $0x30] sm:$0xff] %vm2179, %v2826
  %2891 = vst.msk [vmem:[%s15 + $0x38] sm:$0xff] %vm2179, %v2827
  %2892 = vst.msk [vmem:[%s15 + $0x40] sm:$0xff] %vm2179, %v2828
  %2893 = vst.msk [vmem:[%s15 + $0x48] sm:$0xff] %vm2179, %v2829
  %2894 = vst.msk [vmem:[%s15 + $0x50] sm:$0xff] %vm2179, %v2830
  %2895 = vst.msk [vmem:[%s15 + $0x58] sm:$0xff] %vm2179, %v2831
  %2896 = vst.msk [vmem:[%s15 + $0x60] sm:$0xff] %vm2179, %v2832
  %2897 = vst.msk [vmem:[%s15 + $0x68] sm:$0xff] %vm2179, %v2833
  %2898 = vst.msk [vmem:[%s15 + $0x70] sm:$0xff] %vm2179, %v2834
  %2899 = vst.msk [vmem:[%s15 + $0x78] sm:$0xff] %vm2179, %v2835
  %2900 = vst.msk [vmem:[%s15 + $0x80] sm:$0xff] %vm2179, %v2836
  %2901 = vst.msk [vmem:[%s15 + $0x88] sm:$0xff] %vm2179, %v2837
  %2902 = vst.msk [vmem:[%s15 + $0x90] sm:$0xff] %vm2179, %v2838
  %2903 = vst.msk [vmem:[%s15 + $0x98] sm:$0xff] %vm2179, %v2839
  %2904 = vst.msk [vmem:[%s15 + $0xa0] sm:$0xff] %vm2179, %v2840
  %2905 = vst.msk [vmem:[%s15 + $0xa8] sm:$0xff] %vm2179, %v2841
  %2906 = vst.msk [vmem:[%s15 + $0xb0] sm:$0xff] %vm2179, %v2842
  %2907 = vst.msk [vmem:[%s15 + $0xb8] sm:$0xff] %vm2179, %v2843
  %2908 = vst.msk [vmem:[%s15 + $0xc0] sm:$0xff] %vm2179, %v2844
  %2909 = vst.msk [vmem:[%s15 + $0xc8] sm:$0xff] %vm2179, %v2845
  %2910 = vst.msk [vmem:[%s15 + $0xd0] sm:$0xff] %vm2179, %v2846
  %2911 = vst.msk [vmem:[%s15 + $0xd8] sm:$0xff] %vm2179, %v2847
  %2912 = vst.msk [vmem:[%s15 + $0xe0] sm:$0xff] %vm2179, %v2848
  %2913 = vst.msk [vmem:[%s15 + $0xe8] sm:$0xff] %vm2179, %v2849
  %2914 = vst.msk [vmem:[%s15 + $0xf0] sm:$0xff] %vm2179, %v2850
  %2915 = vst.msk [vmem:[%s15 + $0xf8] sm:$0xff] %vm2179, %v2851
  %2916 = vst.msk [vmem:[%s15 + $0x100] sm:$0xff] %vm2179, %v2852
  %2917 = vst.msk [vmem:[%s15 + $0x108] sm:$0xff] %vm2179, %v2853
  %2918 = vst.msk [vmem:[%s15 + $0x110] sm:$0xff] %vm2179, %v2854
  %2919 = vst.msk [vmem:[%s15 + $0x118] sm:$0xff] %vm2179, %v2855
  %2920 = vst.msk [vmem:[%s15 + $0x120] sm:$0xff] %vm2179, %v2856
  %2921 = vst.msk [vmem:[%s15 + $0x128] sm:$0xff] %vm2179, %v2857
  %2922 = vst.msk [vmem:[%s15 + $0x130] sm:$0xff] %vm2179, %v2858
  %2923 = vst.msk [vmem:[%s15 + $0x138] sm:$0xff] %vm2179, %v2859
  %2924 = vst.msk [vmem:[%s15 + $0x140] sm:$0xff] %vm2179, %v2860
  %2925 = vst.msk [vmem:[%s15 + $0x148] sm:$0xff] %vm2179, %v2861
  %2926 = vst.msk [vmem:[%s15 + $0x150] sm:$0xff] %vm2179, %v2862
  %2927 = vst.msk [vmem:[%s15 + $0x158] sm:$0xff] %vm2179, %v2863
  %2928 = vst.msk [vmem:[%s15 + $0x160] sm:$0xff] %vm2179, %v2864
  %2929 = vst.msk [vmem:[%s15 + $0x168] sm:$0xff] %vm2179, %v2865
  %2930 = vst.msk [vmem:[%s15 + $0x170] sm:$0xff] %vm2179, %v2866
  %2931 = vst.msk [vmem:[%s15 + $0x178] sm:$0xff] %vm2179, %v2867
  %2932 = vst.msk [vmem:[%s15 + $0x180] sm:$0xff] %vm2179, %v2868
  %2933 = vst.msk [vmem:[%s15 + $0x188] sm:$0xff] %vm2179, %v2869
  %2934 = vst.msk [vmem:[%s15 + $0x190] sm:$0xff] %vm2179, %v2870
  %2935 = vst.msk [vmem:[%s15 + $0x198] sm:$0xff] %vm2179, %v2871
  %2936 = vst.msk [vmem:[%s15 + $0x1a0] sm:$0xff] %vm2179, %v2872
  %2937 = vst.msk [vmem:[%s15 + $0x1a8] sm:$0xff] %vm2179, %v2873
  %2938 = vst.msk [vmem:[%s15 + $0x1b0] sm:$0xff] %vm2179, %v2874
  %2939 = vst.msk [vmem:[%s15 + $0x1b8] sm:$0xff] %vm2179, %v2875
  %2940 = vst.msk [vmem:[%s15 + $0x1c0] sm:$0xff] %vm2179, %v2876
  %2941 = vst.msk [vmem:[%s15 + $0x1c8] sm:$0xff] %vm2179, %v2877
  %2942 = vst.msk [vmem:[%s15 + $0x1d0] sm:$0xff] %vm2179, %v2878
  %2943 = vst.msk [vmem:[%s15 + $0x1d8] sm:$0xff] %vm2179, %v2879
  %2944 = vst.msk [vmem:[%s15 + $0x1e0] sm:$0xff] %vm2179, %v2880
  %2945 = vst.msk [vmem:[%s15 + $0x1e8] sm:$0xff] %vm2179, %v2881
  %2946 = vst.msk [vmem:[%s15 + $0x1f0] sm:$0xff] %vm2179, %v2882
  %2947 = vst.msk [vmem:[%s15 + $0x1f8] sm:$0xff] %vm2179, %v2883
  %v2948 = vpack.c.bf16 %v2821, %v2820
  %v2949 = vpack.c.bf16 %v2823, %v2822
  %v2950 = vpack.c.bf16 %v2825, %v2824
  %v2951 = vpack.c.bf16 %v2827, %v2826
  %v2952 = vpack.c.bf16 %v2829, %v2828
  %v2953 = vpack.c.bf16 %v2831, %v2830
  %v2954 = vpack.c.bf16 %v2833, %v2832
  %v2955 = vpack.c.bf16 %v2835, %v2834
  %v2956 = vpack.c.bf16 %v2837, %v2836
  %v2957 = vpack.c.bf16 %v2839, %v2838
  %v2958 = vpack.c.bf16 %v2841, %v2840
  %v2959 = vpack.c.bf16 %v2843, %v2842
  %v2960 = vpack.c.bf16 %v2845, %v2844
  %v2961 = vpack.c.bf16 %v2847, %v2846
  %v2962 = vpack.c.bf16 %v2849, %v2848
  %v2963 = vpack.c.bf16 %v2851, %v2850
  %v2964 = vpack.c.bf16 %v2853, %v2852
  %v2965 = vpack.c.bf16 %v2855, %v2854
  %v2966 = vpack.c.bf16 %v2857, %v2856
  %v2967 = vpack.c.bf16 %v2859, %v2858
  %v2968 = vpack.c.bf16 %v2861, %v2860
  %v2969 = vpack.c.bf16 %v2863, %v2862
  %v2970 = vpack.c.bf16 %v2865, %v2864
  %v2971 = vpack.c.bf16 %v2867, %v2866
  %v2972 = vpack.c.bf16 %v2869, %v2868
  %v2973 = vpack.c.bf16 %v2871, %v2870
  %v2974 = vpack.c.bf16 %v2873, %v2872
  %v2975 = vpack.c.bf16 %v2875, %v2874
  %v2976 = vpack.c.bf16 %v2877, %v2876
  %v2977 = vpack.c.bf16 %v2879, %v2878
  %v2978 = vpack.c.bf16 %v2881, %v2880
  %v2979 = vpack.c.bf16 %v2883, %v2882
  %2980 = vrot.lane.b32.xlu0 %v474, 64
  %v2981 = vpop.permute.xlu0 %2980
  %v2984 = vsel %vm2179, %v2948, 0
  %2986 = vmatprep.subr.bf16.mxu0 0
  %2987 = vmatpush1.bf16.msra.mxu0 %v2981
  %2988 = vmatprep.subr.bf16.mxu0 0
  %2989 = vmatpush1.bf16.msra.mxu0 0
  %2990 = vmatprep.subr.bf16.mxu0 0
  %2991 = vmatpush1.bf16.msra.mxu0 0
  %2992 = vmatprep.subr.bf16.mxu0 0
  %2993 = vmatpush1.bf16.msra.mxu0 0
  %2994 = vmatprep.subr.bf16.mxu0 0
  %2995 = vmatpush1.bf16.msra.mxu0 0
  %2996 = vmatprep.subr.bf16.mxu0 0
  %2997 = vmatpush1.bf16.msra.mxu0 0
  %2998 = vmatprep.subr.bf16.mxu0 0
  %2999 = vmatpush1.bf16.msra.mxu0 0
  %3000 = vmatprep.subr.bf16.mxu0 0
  %3001 = vmatpush1.bf16.msra.mxu0 0
  %3002 = vmatprep.subr.bf16.mxu0 0
  %3003 = vmatpush1.bf16.msra.mxu0 0
  %3004 = vmatprep.subr.bf16.mxu0 0
  %3005 = vmatpush1.bf16.msra.mxu0 0
  %3006 = vmatprep.subr.bf16.mxu0 0
  %3007 = vmatpush1.bf16.msra.mxu0 0
  %3008 = vmatprep.subr.bf16.mxu0 0
  %3009 = vmatpush1.bf16.msra.mxu0 0
  %3010 = vmatprep.subr.bf16.mxu0 0
  %3011 = vmatpush1.bf16.msra.mxu0 0
  %3012 = vmatprep.subr.bf16.mxu0 0
  %3013 = vmatpush1.bf16.msra.mxu0 0
  %3014 = vmatprep.subr.bf16.mxu0 0
  %3015 = vmatpush1.bf16.msra.mxu0 0
  %3016 = vmatprep.subr.bf16.mxu0 0
  %3017 = vmatpush1.bf16.msra.mxu0 0
  %3018 = vmatprep.mubr.bf16.mxu0 0
  %3019 = vmatmul.mubr.bf16.gmra.mrb[0].mxu0 %v2984
  %v3020 = vpop.f32.mrb[0].mxu0
  %v3021 = vadd.f32 0.0, %v3020
  %v3022 = vpop.f32.mrb[0].mxu0
  %v3023 = vpop.f32.mrb[0].mxu0
  %v3024 = vadd.f32 0.0, %v3023
  %v3025 = vpop.f32.mrb[0].mxu0
  %3026 = vdwg.mxu0
  %3027 = vrot.lane.b32.xlu0 %v475, 64
  %v3028 = vpop.permute.xlu0 %3027
  %v3031 = vsel %vm2179, %v2949, 0
  %3033 = vmatprep.subr.bf16.mxu0 0
  %3034 = vmatpush1.bf16.msra.mxu0 %v3028
  %3035 = vmatprep.subr.bf16.mxu0 0
  %3036 = vmatpush1.bf16.msra.mxu0 0
  %3037 = vmatprep.subr.bf16.mxu0 0
  %3038 = vmatpush1.bf16.msra.mxu0 0
  %3039 = vmatprep.subr.bf16.mxu0 0
  %3040 = vmatpush1.bf16.msra.mxu0 0
  %3041 = vmatprep.subr.bf16.mxu0 0
  %3042 = vmatpush1.bf16.msra.mxu0 0
  %3043 = vmatprep.subr.bf16.mxu0 0
  %3044 = vmatpush1.bf16.msra.mxu0 0
  %3045 = vmatprep.subr.bf16.mxu0 0
  %3046 = vmatpush1.bf16.msra.mxu0 0
  %3047 = vmatprep.subr.bf16.mxu0 0
  %3048 = vmatpush1.bf16.msra.mxu0 0
  %3049 = vmatprep.subr.bf16.mxu0 0
  %3050 = vmatpush1.bf16.msra.mxu0 0
  %3051 = vmatprep.subr.bf16.mxu0 0
  %3052 = vmatpush1.bf16.msra.mxu0 0
  %3053 = vmatprep.subr.bf16.mxu0 0
  %3054 = vmatpush1.bf16.msra.mxu0 0
  %3055 = vmatprep.subr.bf16.mxu0 0
  %3056 = vmatpush1.bf16.msra.mxu0 0
  %3057 = vmatprep.subr.bf16.mxu0 0
  %3058 = vmatpush1.bf16.msra.mxu0 0
  %3059 = vmatprep.subr.bf16.mxu0 0
  %3060 = vmatpush1.bf16.msra.mxu0 0
  %3061 = vmatprep.subr.bf16.mxu0 0
  %3062 = vmatpush1.bf16.msra.mxu0 0
  %3063 = vmatprep.subr.bf16.mxu0 0
  %3064 = vmatpush1.bf16.msra.mxu0 0
  %3065 = vmatprep.mubr.bf16.mxu0 0
  %3066 = vmatmul.mubr.bf16.gmra.mrb[0].mxu0 %v3031
  %v3067 = vpop.f32.mrb[0].mxu0
  %v3068 = vadd.f32 0.0, %v3067
  %v3069 = vpop.f32.mrb[0].mxu0
  %v3070 = vpop.f32.mrb[0].mxu0
  %v3071 = vadd.f32 0.0, %v3070
  %v3072 = vpop.f32.mrb[0].mxu0
  %3073 = vdwg.mxu0
  %3074 = vrot.lane.b32.xlu0 %v476, 64
  %v3075 = vpop.permute.xlu0 %3074
  %v3078 = vsel %vm2179, %v2950, 0
  %3080 = vmatprep.subr.bf16.mxu0 0
  %3081 = vmatpush1.bf16.msra.mxu0 %v3075
  %3082 = vmatprep.subr.bf16.mxu0 0
  %3083 = vmatpush1.bf16.msra.mxu0 0
  %3084 = vmatprep.subr.bf16.mxu0 0
  %3085 = vmatpush1.bf16.msra.mxu0 0
  %3086 = vmatprep.subr.bf16.mxu0 0
  %3087 = vmatpush1.bf16.msra.mxu0 0
  %3088 = vmatprep.subr.bf16.mxu0 0
  %3089 = vmatpush1.bf16.msra.mxu0 0
  %3090 = vmatprep.subr.bf16.mxu0 0
  %3091 = vmatpush1.bf16.msra.mxu0 0
  %3092 = vmatprep.subr.bf16.mxu0 0
  %3093 = vmatpush1.bf16.msra.mxu0 0
  %3094 = vmatprep.subr.bf16.mxu0 0
  %3095 = vmatpush1.bf16.msra.mxu0 0
  %3096 = vmatprep.subr.bf16.mxu0 0
  %3097 = vmatpush1.bf16.msra.mxu0 0
  %3098 = vmatprep.subr.bf16.mxu0 0
  %3099 = vmatpush1.bf16.msra.mxu0 0
  %3100 = vmatprep.subr.bf16.mxu0 0
  %3101 = vmatpush1.bf16.msra.mxu0 0
  %3102 = vmatprep.subr.bf16.mxu0 0
  %3103 = vmatpush1.bf16.msra.mxu0 0
  %3104 = vmatprep.subr.bf16.mxu0 0
  %3105 = vmatpush1.bf16.msra.mxu0 0
  %3106 = vmatprep.subr.bf16.mxu0 0
  %3107 = vmatpush1.bf16.msra.mxu0 0
  %3108 = vmatprep.subr.bf16.mxu0 0
  %3109 = vmatpush1.bf16.msra.mxu0 0
  %3110 = vmatprep.subr.bf16.mxu0 0
  %3111 = vmatpush1.bf16.msra.mxu0 0
  %3112 = vmatprep.mubr.bf16.mxu0 0
  %3113 = vmatmul.mubr.bf16.gmra.mrb[0].mxu0 %v3078
  %v3114 = vpop.f32.mrb[0].mxu0
  %v3115 = vadd.f32 0.0, %v3114
  %v3116 = vpop.f32.mrb[0].mxu0
  %v3117 = vpop.f32.mrb[0].mxu0
  %v3118 = vadd.f32 0.0, %v3117
  %v3119 = vpop.f32.mrb[0].mxu0
  %3120 = vdwg.mxu0
  %3121 = vrot.lane.b32.xlu0 %v477, 64
  %v3122 = vpop.permute.xlu0 %3121
  %v3125 = vsel %vm2179, %v2951, 0
  %3127 = vmatprep.subr.bf16.mxu0 0
  %3128 = vmatpush1.bf16.msra.mxu0 %v3122
  %3129 = vmatprep.subr.bf16.mxu0 0
  %3130 = vmatpush1.bf16.msra.mxu0 0
  %3131 = vmatprep.subr.bf16.mxu0 0
  %3132 = vmatpush1.bf16.msra.mxu0 0
  %3133 = vmatprep.subr.bf16.mxu0 0
  %3134 = vmatpush1.bf16.msra.mxu0 0
  %3135 = vmatprep.subr.bf16.mxu0 0
  %3136 = vmatpush1.bf16.msra.mxu0 0
  %3137 = vmatprep.subr.bf16.mxu0 0
  %3138 = vmatpush1.bf16.msra.mxu0 0
  %3139 = vmatprep.subr.bf16.mxu0 0
  %3140 = vmatpush1.bf16.msra.mxu0 0
  %3141 = vmatprep.subr.bf16.mxu0 0
  %3142 = vmatpush1.bf16.msra.mxu0 0
  %3143 = vmatprep.subr.bf16.mxu0 0
  %3144 = vmatpush1.bf16.msra.mxu0 0
  %3145 = vmatprep.subr.bf16.mxu0 0
  %3146 = vmatpush1.bf16.msra.mxu0 0
  %3147 = vmatprep.subr.bf16.mxu0 0
  %3148 = vmatpush1.bf16.msra.mxu0 0
  %3149 = vmatprep.subr.bf16.mxu0 0
  %3150 = vmatpush1.bf16.msra.mxu0 0
  %3151 = vmatprep.subr.bf16.mxu0 0
  %3152 = vmatpush1.bf16.msra.mxu0 0
  %3153 = vmatprep.subr.bf16.mxu0 0
  %3154 = vmatpush1.bf16.msra.mxu0 0
  %3155 = vmatprep.subr.bf16.mxu0 0
  %3156 = vmatpush1.bf16.msra.mxu0 0
  %3157 = vmatprep.subr.bf16.mxu0 0
  %3158 = vmatpush1.bf16.msra.mxu0 0
  %3159 = vmatprep.mubr.bf16.mxu0 0
  %3160 = vmatmul.mubr.bf16.gmra.mrb[0].mxu0 %v3125
  %v3161 = vpop.f32.mrb[0].mxu0
  %v3162 = vadd.f32 0.0, %v3161
  %v3163 = vpop.f32.mrb[0].mxu0
  %v3164 = vpop.f32.mrb[0].mxu0
  %v3165 = vadd.f32 0.0, %v3164
  %v3166 = vpop.f32.mrb[0].mxu0
  %3167 = vdwg.mxu0
  %3168 = vrot.lane.b32.xlu0 %v478, 64
  %v3169 = vpop.permute.xlu0 %3168
  %v3172 = vsel %vm2179, %v2952, 0
  %3174 = vmatprep.subr.bf16.mxu0 0
  %3175 = vmatpush1.bf16.msra.mxu0 %v3169
  %3176 = vmatprep.subr.bf16.mxu0 0
  %3177 = vmatpush1.bf16.msra.mxu0 0
  %3178 = vmatprep.subr.bf16.mxu0 0
  %3179 = vmatpush1.bf16.msra.mxu0 0
  %3180 = vmatprep.subr.bf16.mxu0 0
  %3181 = vmatpush1.bf16.msra.mxu0 0
  %3182 = vmatprep.subr.bf16.mxu0 0
  %3183 = vmatpush1.bf16.msra.mxu0 0
  %3184 = vmatprep.subr.bf16.mxu0 0
  %3185 = vmatpush1.bf16.msra.mxu0 0
  %3186 = vmatprep.subr.bf16.mxu0 0
  %3187 = vmatpush1.bf16.msra.mxu0 0
  %3188 = vmatprep.subr.bf16.mxu0 0
  %3189 = vmatpush1.bf16.msra.mxu0 0
  %3190 = vmatprep.subr.bf16.mxu0 0
  %3191 = vmatpush1.bf16.msra.mxu0 0
  %3192 = vmatprep.subr.bf16.mxu0 0
  %3193 = vmatpush1.bf16.msra.mxu0 0
  %3194 = vmatprep.subr.bf16.mxu0 0
  %3195 = vmatpush1.bf16.msra.mxu0 0
  %3196 = vmatprep.subr.bf16.mxu0 0
  %3197 = vmatpush1.bf16.msra.mxu0 0
  %3198 = vmatprep.subr.bf16.mxu0 0
  %3199 = vmatpush1.bf16.msra.mxu0 0
  %3200 = vmatprep.subr.bf16.mxu0 0
  %3201 = vmatpush1.bf16.msra.mxu0 0
  %3202 = vmatprep.subr.bf16.mxu0 0
  %3203 = vmatpush1.bf16.msra.mxu0 0
  %3204 = vmatprep.subr.bf16.mxu0 0
  %3205 = vmatpush1.bf16.msra.mxu0 0
  %3206 = vmatprep.mubr.bf16.mxu0 0
  %3207 = vmatmul.mubr.bf16.gmra.mrb[0].mxu0 %v3172
  %v3208 = vpop.f32.mrb[0].mxu0
  %v3209 = vadd.f32 0.0, %v3208
  %v3210 = vpop.f32.mrb[0].mxu0
  %v3211 = vpop.f32.mrb[0].mxu0
  %v3212 = vadd.f32 0.0, %v3211
  %v3213 = vpop.f32.mrb[0].mxu0
  %3214 = vdwg.mxu0
  %3215 = vrot.lane.b32.xlu0 %v479, 64
  %v3216 = vpop.permute.xlu0 %3215
  %v3219 = vsel %vm2179, %v2953, 0
  %3221 = vmatprep.subr.bf16.mxu0 0
  %3222 = vmatpush1.bf16.msra.mxu0 %v3216
  %3223 = vmatprep.subr.bf16.mxu0 0
  %3224 = vmatpush1.bf16.msra.mxu0 0
  %3225 = vmatprep.subr.bf16.mxu0 0
  %3226 = vmatpush1.bf16.msra.mxu0 0
  %3227 = vmatprep.subr.bf16.mxu0 0
  %3228 = vmatpush1.bf16.msra.mxu0 0
  %3229 = vmatprep.subr.bf16.mxu0 0
  %3230 = vmatpush1.bf16.msra.mxu0 0
  %3231 = vmatprep.subr.bf16.mxu0 0
  %3232 = vmatpush1.bf16.msra.mxu0 0
  %3233 = vmatprep.subr.bf16.mxu0 0
  %3234 = vmatpush1.bf16.msra.mxu0 0
  %3235 = vmatprep.subr.bf16.mxu0 0
  %3236 = vmatpush1.bf16.msra.mxu0 0
  %3237 = vmatprep.subr.bf16.mxu0 0
  %3238 = vmatpush1.bf16.msra.mxu0 0
  %3239 = vmatprep.subr.bf16.mxu0 0
  %3240 = vmatpush1.bf16.msra.mxu0 0
  %3241 = vmatprep.subr.bf16.mxu0 0
  %3242 = vmatpush1.bf16.msra.mxu0 0
  %3243 = vmatprep.subr.bf16.mxu0 0
  %3244 = vmatpush1.bf16.msra.mxu0 0
  %3245 = vmatprep.subr.bf16.mxu0 0
  %3246 = vmatpush1.bf16.msra.mxu0 0
  %3247 = vmatprep.subr.bf16.mxu0 0
  %3248 = vmatpush1.bf16.msra.mxu0 0
  %3249 = vmatprep.subr.bf16.mxu0 0
  %3250 = vmatpush1.bf16.msra.mxu0 0
  %3251 = vmatprep.subr.bf16.mxu0 0
  %3252 = vmatpush1.bf16.msra.mxu0 0
  %3253 = vmatprep.mubr.bf16.mxu0 0
  %3254 = vmatmul.mubr.bf16.gmra.mrb[0].mxu0 %v3219
  %v3255 = vpop.f32.mrb[0].mxu0
  %v3256 = vadd.f32 0.0, %v3255
  %v3257 = vpop.f32.mrb[0].mxu0
  %v3258 = vpop.f32.mrb[0].mxu0
  %v3259 = vadd.f32 0.0, %v3258
  %v3260 = vpop.f32.mrb[0].mxu0
  %3261 = vdwg.mxu0
  %3262 = vrot.lane.b32.xlu0 %v480, 64
  %v3263 = vpop.permute.xlu0 %3262
  %v3266 = vsel %vm2179, %v2954, 0
  %3268 = vmatprep.subr.bf16.mxu0 0
  %3269 = vmatpush1.bf16.msra.mxu0 %v3263
  %3270 = vmatprep.subr.bf16.mxu0 0
  %3271 = vmatpush1.bf16.msra.mxu0 0
  %3272 = vmatprep.subr.bf16.mxu0 0
  %3273 = vmatpush1.bf16.msra.mxu0 0
  %3274 = vmatprep.subr.bf16.mxu0 0
  %3275 = vmatpush1.bf16.msra.mxu0 0
  %3276 = vmatprep.subr.bf16.mxu0 0
  %3277 = vmatpush1.bf16.msra.mxu0 0
  %3278 = vmatprep.subr.bf16.mxu0 0
  %3279 = vmatpush1.bf16.msra.mxu0 0
  %3280 = vmatprep.subr.bf16.mxu0 0
  %3281 = vmatpush1.bf16.msra.mxu0 0
  %3282 = vmatprep.subr.bf16.mxu0 0
  %3283 = vmatpush1.bf16.msra.mxu0 0
  %3284 = vmatprep.subr.bf16.mxu0 0
  %3285 = vmatpush1.bf16.msra.mxu0 0
  %3286 = vmatprep.subr.bf16.mxu0 0
  %3287 = vmatpush1.bf16.msra.mxu0 0
  %3288 = vmatprep.subr.bf16.mxu0 0
  %3289 = vmatpush1.bf16.msra.mxu0 0
  %3290 = vmatprep.subr.bf16.mxu0 0
  %3291 = vmatpush1.bf16.msra.mxu0 0
  %3292 = vmatprep.subr.bf16.mxu0 0
  %3293 = vmatpush1.bf16.msra.mxu0 0
  %3294 = vmatprep.subr.bf16.mxu0 0
  %3295 = vmatpush1.bf16.msra.mxu0 0
  %3296 = vmatprep.subr.bf16.mxu0 0
  %3297 = vmatpush1.bf16.msra.mxu0 0
  %3298 = vmatprep.subr.bf16.mxu0 0
  %3299 = vmatpush1.bf16.msra.mxu0 0
  %3300 = vmatprep.mubr.bf16.mxu0 0
  %3301 = vmatmul.mubr.bf16.gmra.mrb[0].mxu0 %v3266
  %v3302 = vpop.f32.mrb[0].mxu0
  %v3303 = vadd.f32 0.0, %v3302
  %v3304 = vpop.f32.mrb[0].mxu0
  %v3305 = vpop.f32.mrb[0].mxu0
  %v3306 = vadd.f32 0.0, %v3305
  %v3307 = vpop.f32.mrb[0].mxu0
  %3308 = vdwg.mxu0
  %3309 = vrot.lane.b32.xlu0 %v481, 64
  %v3310 = vpop.permute.xlu0 %3309
  %v3313 = vsel %vm2179, %v2955, 0
  %3315 = vmatprep.subr.bf16.mxu0 0
  %3316 = vmatpush1.bf16.msra.mxu0 %v3310
  %3317 = vmatprep.subr.bf16.mxu0 0
  %3318 = vmatpush1.bf16.msra.mxu0 0
  %3319 = vmatprep.subr.bf16.mxu0 0
  %3320 = vmatpush1.bf16.msra.mxu0 0
  %3321 = vmatprep.subr.bf16.mxu0 0
  %3322 = vmatpush1.bf16.msra.mxu0 0
  %3323 = vmatprep.subr.bf16.mxu0 0
  %3324 = vmatpush1.bf16.msra.mxu0 0
  %3325 = vmatprep.subr.bf16.mxu0 0
  %3326 = vmatpush1.bf16.msra.mxu0 0
  %3327 = vmatprep.subr.bf16.mxu0 0
  %3328 = vmatpush1.bf16.msra.mxu0 0
  %3329 = vmatprep.subr.bf16.mxu0 0
  %3330 = vmatpush1.bf16.msra.mxu0 0
  %3331 = vmatprep.subr.bf16.mxu0 0
  %3332 = vmatpush1.bf16.msra.mxu0 0
  %3333 = vmatprep.subr.bf16.mxu0 0
  %3334 = vmatpush1.bf16.msra.mxu0 0
  %3335 = vmatprep.subr.bf16.mxu0 0
  %3336 = vmatpush1.bf16.msra.mxu0 0
  %3337 = vmatprep.subr.bf16.mxu0 0
  %3338 = vmatpush1.bf16.msra.mxu0 0
  %3339 = vmatprep.subr.bf16.mxu0 0
  %3340 = vmatpush1.bf16.msra.mxu0 0
  %3341 = vmatprep.subr.bf16.mxu0 0
  %3342 = vmatpush1.bf16.msra.mxu0 0
  %3343 = vmatprep.subr.bf16.mxu0 0
  %3344 = vmatpush1.bf16.msra.mxu0 0
  %3345 = vmatprep.subr.bf16.mxu0 0
  %3346 = vmatpush1.bf16.msra.mxu0 0
  %3347 = vmatprep.mubr.bf16.mxu0 0
  %3348 = vmatmul.mubr.bf16.gmra.mrb[0].mxu0 %v3313
  %v3349 = vpop.f32.mrb[0].mxu0
  %v3350 = vadd.f32 0.0, %v3349
  %v3351 = vpop.f32.mrb[0].mxu0
  %v3352 = vpop.f32.mrb[0].mxu0
  %v3353 = vadd.f32 0.0, %v3352
  %v3354 = vpop.f32.mrb[0].mxu0
  %3355 = vdwg.mxu0
  %3356 = vrot.lane.b32.xlu0 %v491, 64
  %v3357 = vpop.permute.xlu0 %3356
  %v3360 = vsel %vm2179, %v2956, 0
  %3362 = vmatprep.subr.bf16.mxu0 0
  %3363 = vmatpush1.bf16.msra.mxu0 %v3357
  %3364 = vmatprep.subr.bf16.mxu0 0
  %3365 = vmatpush1.bf16.msra.mxu0 0
  %3366 = vmatprep.subr.bf16.mxu0 0
  %3367 = vmatpush1.bf16.msra.mxu0 0
  %3368 = vmatprep.subr.bf16.mxu0 0
  %3369 = vmatpush1.bf16.msra.mxu0 0
  %3370 = vmatprep.subr.bf16.mxu0 0
  %3371 = vmatpush1.bf16.msra.mxu0 0
  %3372 = vmatprep.subr.bf16.mxu0 0
  %3373 = vmatpush1.bf16.msra.mxu0 0
  %3374 = vmatprep.subr.bf16.mxu0 0
  %3375 = vmatpush1.bf16.msra.mxu0 0
  %3376 = vmatprep.subr.bf16.mxu0 0
  %3377 = vmatpush1.bf16.msra.mxu0 0
  %3378 = vmatprep.subr.bf16.mxu0 0
  %3379 = vmatpush1.bf16.msra.mxu0 0
  %3380 = vmatprep.subr.bf16.mxu0 0
  %3381 = vmatpush1.bf16.msra.mxu0 0
  %3382 = vmatprep.subr.bf16.mxu0 0
  %3383 = vmatpush1.bf16.msra.mxu0 0
  %3384 = vmatprep.subr.bf16.mxu0 0
  %3385 = vmatpush1.bf16.msra.mxu0 0
  %3386 = vmatprep.subr.bf16.mxu0 0
  %3387 = vmatpush1.bf16.msra.mxu0 0
  %3388 = vmatprep.subr.bf16.mxu0 0
  %3389 = vmatpush1.bf16.msra.mxu0 0
  %3390 = vmatprep.subr.bf16.mxu0 0
  %3391 = vmatpush1.bf16.msra.mxu0 0
  %3392 = vmatprep.subr.bf16.mxu0 0
  %3393 = vmatpush1.bf16.msra.mxu0 0
  %3394 = vmatprep.mubr.bf16.mxu0 0
  %3395 = vmatmul.mubr.bf16.gmra.mrb[0].mxu0 %v3360
  %v3396 = vpop.f32.mrb[0].mxu0
  %v3397 = vadd.f32 0.0, %v3396
  %v3398 = vpop.f32.mrb[0].mxu0
  %v3399 = vpop.f32.mrb[0].mxu0
  %v3400 = vadd.f32 0.0, %v3399
  %v3401 = vpop.f32.mrb[0].mxu0
  %3402 = vdwg.mxu0
  %3403 = vrot.lane.b32.xlu0 %v493, 64
  %v3404 = vpop.permute.xlu0 %3403
  %v3407 = vsel %vm2179, %v2957, 0
  %3409 = vmatprep.subr.bf16.mxu0 0
  %3410 = vmatpush1.bf16.msra.mxu0 %v3404
  %3411 = vmatprep.subr.bf16.mxu0 0
  %3412 = vmatpush1.bf16.msra.mxu0 0
  %3413 = vmatprep.subr.bf16.mxu0 0
  %3414 = vmatpush1.bf16.msra.mxu0 0
  %3415 = vmatprep.subr.bf16.mxu0 0
  %3416 = vmatpush1.bf16.msra.mxu0 0
  %3417 = vmatprep.subr.bf16.mxu0 0
  %3418 = vmatpush1.bf16.msra.mxu0 0
  %3419 = vmatprep.subr.bf16.mxu0 0
  %3420 = vmatpush1.bf16.msra.mxu0 0
  %3421 = vmatprep.subr.bf16.mxu0 0
  %3422 = vmatpush1.bf16.msra.mxu0 0
  %3423 = vmatprep.subr.bf16.mxu0 0
  %3424 = vmatpush1.bf16.msra.mxu0 0
  %3425 = vmatprep.subr.bf16.mxu0 0
  %3426 = vmatpush1.bf16.msra.mxu0 0
  %3427 = vmatprep.subr.bf16.mxu0 0
  %3428 = vmatpush1.bf16.msra.mxu0 0
  %3429 = vmatprep.subr.bf16.mxu0 0
  %3430 = vmatpush1.bf16.msra.mxu0 0
  %3431 = vmatprep.subr.bf16.mxu0 0
  %3432 = vmatpush1.bf16.msra.mxu0 0
  %3433 = vmatprep.subr.bf16.mxu0 0
  %3434 = vmatpush1.bf16.msra.mxu0 0
  %3435 = vmatprep.subr.bf16.mxu0 0
  %3436 = vmatpush1.bf16.msra.mxu0 0
  %3437 = vmatprep.subr.bf16.mxu0 0
  %3438 = vmatpush1.bf16.msra.mxu0 0
  %3439 = vmatprep.subr.bf16.mxu0 0
  %3440 = vmatpush1.bf16.msra.mxu0 0
  %3441 = vmatprep.mubr.bf16.mxu0 0
  %3442 = vmatmul.mubr.bf16.gmra.mrb[0].mxu0 %v3407
  %v3443 = vpop.f32.mrb[0].mxu0
  %v3444 = vadd.f32 0.0, %v3443
  %v3445 = vpop.f32.mrb[0].mxu0
  %v3446 = vpop.f32.mrb[0].mxu0
  %v3447 = vadd.f32 0.0, %v3446
  %v3448 = vpop.f32.mrb[0].mxu0
  %3449 = vdwg.mxu0
  %3450 = vrot.lane.b32.xlu0 %v495, 64
  %v3451 = vpop.permute.xlu0 %3450
  %v3454 = vsel %vm2179, %v2958, 0
  %3456 = vmatprep.subr.bf16.mxu0 0
  %3457 = vmatpush1.bf16.msra.mxu0 %v3451
  %3458 = vmatprep.subr.bf16.mxu0 0
  %3459 = vmatpush1.bf16.msra.mxu0 0
  %3460 = vmatprep.subr.bf16.mxu0 0
  %3461 = vmatpush1.bf16.msra.mxu0 0
  %3462 = vmatprep.subr.bf16.mxu0 0
  %3463 = vmatpush1.bf16.msra.mxu0 0
  %3464 = vmatprep.subr.bf16.mxu0 0
  %3465 = vmatpush1.bf16.msra.mxu0 0
  %3466 = vmatprep.subr.bf16.mxu0 0
  %3467 = vmatpush1.bf16.msra.mxu0 0
  %3468 = vmatprep.subr.bf16.mxu0 0
  %3469 = vmatpush1.bf16.msra.mxu0 0
  %3470 = vmatprep.subr.bf16.mxu0 0
  %3471 = vmatpush1.bf16.msra.mxu0 0
  %3472 = vmatprep.subr.bf16.mxu0 0
  %3473 = vmatpush1.bf16.msra.mxu0 0
  %3474 = vmatprep.subr.bf16.mxu0 0
  %3475 = vmatpush1.bf16.msra.mxu0 0
  %3476 = vmatprep.subr.bf16.mxu0 0
  %3477 = vmatpush1.bf16.msra.mxu0 0
  %3478 = vmatprep.subr.bf16.mxu0 0
  %3479 = vmatpush1.bf16.msra.mxu0 0
  %3480 = vmatprep.subr.bf16.mxu0 0
  %3481 = vmatpush1.bf16.msra.mxu0 0
  %3482 = vmatprep.subr.bf16.mxu0 0
  %3483 = vmatpush1.bf16.msra.mxu0 0
  %3484 = vmatprep.subr.bf16.mxu0 0
  %3485 = vmatpush1.bf16.msra.mxu0 0
  %3486 = vmatprep.subr.bf16.mxu0 0
  %3487 = vmatpush1.bf16.msra.mxu0 0
  %3488 = vmatprep.mubr.bf16.mxu0 0
  %3489 = vmatmul.mubr.bf16.gmra.mrb[0].mxu0 %v3454
  %v3490 = vpop.f32.mrb[0].mxu0
  %v3491 = vadd.f32 0.0, %v3490
  %v3492 = vpop.f32.mrb[0].mxu0
  %v3493 = vpop.f32.mrb[0].mxu0
  %v3494 = vadd.f32 0.0, %v3493
  %v3495 = vpop.f32.mrb[0].mxu0
  %3496 = vdwg.mxu0
  %3497 = vrot.lane.b32.xlu0 %v497, 64
  %v3498 = vpop.permute.xlu0 %3497
  %v3501 = vsel %vm2179, %v2959, 0
  %3503 = vmatprep.subr.bf16.mxu0 0
  %3504 = vmatpush1.bf16.msra.mxu0 %v3498
  %3505 = vmatprep.subr.bf16.mxu0 0
  %3506 = vmatpush1.bf16.msra.mxu0 0
  %3507 = vmatprep.subr.bf16.mxu0 0
  %3508 = vmatpush1.bf16.msra.mxu0 0
  %3509 = vmatprep.subr.bf16.mxu0 0
  %3510 = vmatpush1.bf16.msra.mxu0 0
  %3511 = vmatprep.subr.bf16.mxu0 0
  %3512 = vmatpush1.bf16.msra.mxu0 0
  %3513 = vmatprep.subr.bf16.mxu0 0
  %3514 = vmatpush1.bf16.msra.mxu0 0
  %3515 = vmatprep.subr.bf16.mxu0 0
  %3516 = vmatpush1.bf16.msra.mxu0 0
  %3517 = vmatprep.subr.bf16.mxu0 0
  %3518 = vmatpush1.bf16.msra.mxu0 0
  %3519 = vmatprep.subr.bf16.mxu0 0
  %3520 = vmatpush1.bf16.msra.mxu0 0
  %3521 = vmatprep.subr.bf16.mxu0 0
  %3522 = vmatpush1.bf16.msra.mxu0 0
  %3523 = vmatprep.subr.bf16.mxu0 0
  %3524 = vmatpush1.bf16.msra.mxu0 0
  %3525 = vmatprep.subr.bf16.mxu0 0
  %3526 = vmatpush1.bf16.msra.mxu0 0
  %3527 = vmatprep.subr.bf16.mxu0 0
  %3528 = vmatpush1.bf16.msra.mxu0 0
  %3529 = vmatprep.subr.bf16.mxu0 0
  %3530 = vmatpush1.bf16.msra.mxu0 0
  %3531 = vmatprep.subr.bf16.mxu0 0
  %3532 = vmatpush1.bf16.msra.mxu0 0
  %3533 = vmatprep.subr.bf16.mxu0 0
  %3534 = vmatpush1.bf16.msra.mxu0 0
  %3535 = vmatprep.mubr.bf16.mxu0 0
  %3536 = vmatmul.mubr.bf16.gmra.mrb[0].mxu0 %v3501
  %v3537 = vpop.f32.mrb[0].mxu0
  %v3538 = vadd.f32 0.0, %v3537
  %v3539 = vpop.f32.mrb[0].mxu0
  %v3540 = vpop.f32.mrb[0].mxu0
  %v3541 = vadd.f32 0.0, %v3540
  %v3542 = vpop.f32.mrb[0].mxu0
  %3543 = vdwg.mxu0
  %3544 = vrot.lane.b32.xlu0 %v499, 64
  %v3545 = vpop.permute.xlu0 %3544
  %v3548 = vsel %vm2179, %v2960, 0
  %3550 = vmatprep.subr.bf16.mxu0 0
  %3551 = vmatpush1.bf16.msra.mxu0 %v3545
  %3552 = vmatprep.subr.bf16.mxu0 0
  %3553 = vmatpush1.bf16.msra.mxu0 0
  %3554 = vmatprep.subr.bf16.mxu0 0
  %3555 = vmatpush1.bf16.msra.mxu0 0
  %3556 = vmatprep.subr.bf16.mxu0 0
  %3557 = vmatpush1.bf16.msra.mxu0 0
  %3558 = vmatprep.subr.bf16.mxu0 0
  %3559 = vmatpush1.bf16.msra.mxu0 0
  %3560 = vmatprep.subr.bf16.mxu0 0
  %3561 = vmatpush1.bf16.msra.mxu0 0
  %3562 = vmatprep.subr.bf16.mxu0 0
  %3563 = vmatpush1.bf16.msra.mxu0 0
  %3564 = vmatprep.subr.bf16.mxu0 0
  %3565 = vmatpush1.bf16.msra.mxu0 0
  %3566 = vmatprep.subr.bf16.mxu0 0
  %3567 = vmatpush1.bf16.msra.mxu0 0
  %3568 = vmatprep.subr.bf16.mxu0 0
  %3569 = vmatpush1.bf16.msra.mxu0 0
  %3570 = vmatprep.subr.bf16.mxu0 0
  %3571 = vmatpush1.bf16.msra.mxu0 0
  %3572 = vmatprep.subr.bf16.mxu0 0
  %3573 = vmatpush1.bf16.msra.mxu0 0
  %3574 = vmatprep.subr.bf16.mxu0 0
  %3575 = vmatpush1.bf16.msra.mxu0 0
  %3576 = vmatprep.subr.bf16.mxu0 0
  %3577 = vmatpush1.bf16.msra.mxu0 0
  %3578 = vmatprep.subr.bf16.mxu0 0
  %3579 = vmatpush1.bf16.msra.mxu0 0
  %3580 = vmatprep.subr.bf16.mxu0 0
  %3581 = vmatpush1.bf16.msra.mxu0 0
  %3582 = vmatprep.mubr.bf16.mxu0 0
  %3583 = vmatmul.mubr.bf16.gmra.mrb[0].mxu0 %v3548
  %v3584 = vpop.f32.mrb[0].mxu0
  %v3585 = vadd.f32 0.0, %v3584
  %v3586 = vpop.f32.mrb[0].mxu0
  %v3587 = vpop.f32.mrb[0].mxu0
  %v3588 = vadd.f32 0.0, %v3587
  %v3589 = vpop.f32.mrb[0].mxu0
  %3590 = vdwg.mxu0
  %3591 = vrot.lane.b32.xlu0 %v501, 64
  %v3592 = vpop.permute.xlu0 %3591
  %v3595 = vsel %vm2179, %v2961, 0
  %3597 = vmatprep.subr.bf16.mxu0 0
  %3598 = vmatpush1.bf16.msra.mxu0 %v3592
  %3599 = vmatprep.subr.bf16.mxu0 0
  %3600 = vmatpush1.bf16.msra.mxu0 0
  %3601 = vmatprep.subr.bf16.mxu0 0
  %3602 = vmatpush1.bf16.msra.mxu0 0
  %3603 = vmatprep.subr.bf16.mxu0 0
  %3604 = vmatpush1.bf16.msra.mxu0 0
  %3605 = vmatprep.subr.bf16.mxu0 0
  %3606 = vmatpush1.bf16.msra.mxu0 0
  %3607 = vmatprep.subr.bf16.mxu0 0
  %3608 = vmatpush1.bf16.msra.mxu0 0
  %3609 = vmatprep.subr.bf16.mxu0 0
  %3610 = vmatpush1.bf16.msra.mxu0 0
  %3611 = vmatprep.subr.bf16.mxu0 0
  %3612 = vmatpush1.bf16.msra.mxu0 0
  %3613 = vmatprep.subr.bf16.mxu0 0
  %3614 = vmatpush1.bf16.msra.mxu0 0
  %3615 = vmatprep.subr.bf16.mxu0 0
  %3616 = vmatpush1.bf16.msra.mxu0 0
  %3617 = vmatprep.subr.bf16.mxu0 0
  %3618 = vmatpush1.bf16.msra.mxu0 0
  %3619 = vmatprep.subr.bf16.mxu0 0
  %3620 = vmatpush1.bf16.msra.mxu0 0
  %3621 = vmatprep.subr.bf16.mxu0 0
  %3622 = vmatpush1.bf16.msra.mxu0 0
  %3623 = vmatprep.subr.bf16.mxu0 0
  %3624 = vmatpush1.bf16.msra.mxu0 0
  %3625 = vmatprep.subr.bf16.mxu0 0
  %3626 = vmatpush1.bf16.msra.mxu0 0
  %3627 = vmatprep.subr.bf16.mxu0 0
  %3628 = vmatpush1.bf16.msra.mxu0 0
  %3629 = vmatprep.mubr.bf16.mxu0 0
  %3630 = vmatmul.mubr.bf16.gmra.mrb[0].mxu0 %v3595
  %v3631 = vpop.f32.mrb[0].mxu0
  %v3632 = vadd.f32 0.0, %v3631
  %v3633 = vpop.f32.mrb[0].mxu0
  %v3634 = vpop.f32.mrb[0].mxu0
  %v3635 = vadd.f32 0.0, %v3634
  %v3636 = vpop.f32.mrb[0].mxu0
  %3637 = vdwg.mxu0
  %3638 = vrot.lane.b32.xlu0 %v503, 64
  %v3639 = vpop.permute.xlu0 %3638
  %v3642 = vsel %vm2179, %v2962, 0
  %3644 = vmatprep.subr.bf16.mxu0 0
  %3645 = vmatpush1.bf16.msra.mxu0 %v3639
  %3646 = vmatprep.subr.bf16.mxu0 0
  %3647 = vmatpush1.bf16.msra.mxu0 0
  %3648 = vmatprep.subr.bf16.mxu0 0
  %3649 = vmatpush1.bf16.msra.mxu0 0
  %3650 = vmatprep.subr.bf16.mxu0 0
  %3651 = vmatpush1.bf16.msra.mxu0 0
  %3652 = vmatprep.subr.bf16.mxu0 0
  %3653 = vmatpush1.bf16.msra.mxu0 0
  %3654 = vmatprep.subr.bf16.mxu0 0
  %3655 = vmatpush1.bf16.msra.mxu0 0
  %3656 = vmatprep.subr.bf16.mxu0 0
  %3657 = vmatpush1.bf16.msra.mxu0 0
  %3658 = vmatprep.subr.bf16.mxu0 0
  %3659 = vmatpush1.bf16.msra.mxu0 0
  %3660 = vmatprep.subr.bf16.mxu0 0
  %3661 = vmatpush1.bf16.msra.mxu0 0
  %3662 = vmatprep.subr.bf16.mxu0 0
  %3663 = vmatpush1.bf16.msra.mxu0 0
  %3664 = vmatprep.subr.bf16.mxu0 0
  %3665 = vmatpush1.bf16.msra.mxu0 0
  %3666 = vmatprep.subr.bf16.mxu0 0
  %3667 = vmatpush1.bf16.msra.mxu0 0
  %3668 = vmatprep.subr.bf16.mxu0 0
  %3669 = vmatpush1.bf16.msra.mxu0 0
  %3670 = vmatprep.subr.bf16.mxu0 0
  %3671 = vmatpush1.bf16.msra.mxu0 0
  %3672 = vmatprep.subr.bf16.mxu0 0
  %3673 = vmatpush1.bf16.msra.mxu0 0
  %3674 = vmatprep.subr.bf16.mxu0 0
  %3675 = vmatpush1.bf16.msra.mxu0 0
  %3676 = vmatprep.mubr.bf16.mxu0 0
  %3677 = vmatmul.mubr.bf16.gmra.mrb[0].mxu0 %v3642
  %v3678 = vpop.f32.mrb[0].mxu0
  %v3679 = vadd.f32 0.0, %v3678
  %v3680 = vpop.f32.mrb[0].mxu0
  %v3681 = vpop.f32.mrb[0].mxu0
  %v3682 = vadd.f32 0.0, %v3681
  %v3683 = vpop.f32.mrb[0].mxu0
  %3684 = vdwg.mxu0
  %3685 = vrot.lane.b32.xlu0 %v505, 64
  %v3686 = vpop.permute.xlu0 %3685
  %v3689 = vsel %vm2179, %v2963, 0
  %3691 = vmatprep.subr.bf16.mxu0 0
  %3692 = vmatpush1.bf16.msra.mxu0 %v3686
  %3693 = vmatprep.subr.bf16.mxu0 0
  %3694 = vmatpush1.bf16.msra.mxu0 0
  %3695 = vmatprep.subr.bf16.mxu0 0
  %3696 = vmatpush1.bf16.msra.mxu0 0
  %3697 = vmatprep.subr.bf16.mxu0 0
  %3698 = vmatpush1.bf16.msra.mxu0 0
  %3699 = vmatprep.subr.bf16.mxu0 0
  %3700 = vmatpush1.bf16.msra.mxu0 0
  %3701 = vmatprep.subr.bf16.mxu0 0
  %3702 = vmatpush1.bf16.msra.mxu0 0
  %3703 = vmatprep.subr.bf16.mxu0 0
  %3704 = vmatpush1.bf16.msra.mxu0 0
  %3705 = vmatprep.subr.bf16.mxu0 0
  %3706 = vmatpush1.bf16.msra.mxu0 0
  %3707 = vmatprep.subr.bf16.mxu0 0
  %3708 = vmatpush1.bf16.msra.mxu0 0
  %3709 = vmatprep.subr.bf16.mxu0 0
  %3710 = vmatpush1.bf16.msra.mxu0 0
  %3711 = vmatprep.subr.bf16.mxu0 0
  %3712 = vmatpush1.bf16.msra.mxu0 0
  %3713 = vmatprep.subr.bf16.mxu0 0
  %3714 = vmatpush1.bf16.msra.mxu0 0
  %3715 = vmatprep.subr.bf16.mxu0 0
  %3716 = vmatpush1.bf16.msra.mxu0 0
  %3717 = vmatprep.subr.bf16.mxu0 0
  %3718 = vmatpush1.bf16.msra.mxu0 0
  %3719 = vmatprep.subr.bf16.mxu0 0
  %3720 = vmatpush1.bf16.msra.mxu0 0
  %3721 = vmatprep.subr.bf16.mxu0 0
  %3722 = vmatpush1.bf16.msra.mxu0 0
  %3723 = vmatprep.mubr.bf16.mxu0 0
  %3724 = vmatmul.mubr.bf16.gmra.mrb[0].mxu0 %v3689
  %v3725 = vpop.f32.mrb[0].mxu0
  %v3726 = vadd.f32 0.0, %v3725
  %v3727 = vpop.f32.mrb[0].mxu0
  %v3728 = vpop.f32.mrb[0].mxu0
  %v3729 = vadd.f32 0.0, %v3728
  %v3730 = vpop.f32.mrb[0].mxu0
  %3731 = vdwg.mxu0
  %3732 = vrot.lane.b32.xlu0 %v507, 64
  %v3733 = vpop.permute.xlu0 %3732
  %v3736 = vsel %vm2179, %v2964, 0
  %3738 = vmatprep.subr.bf16.mxu0 0
  %3739 = vmatpush1.bf16.msra.mxu0 %v3733
  %3740 = vmatprep.subr.bf16.mxu0 0
  %3741 = vmatpush1.bf16.msra.mxu0 0
  %3742 = vmatprep.subr.bf16.mxu0 0
  %3743 = vmatpush1.bf16.msra.mxu0 0
  %3744 = vmatprep.subr.bf16.mxu0 0
  %3745 = vmatpush1.bf16.msra.mxu0 0
  %3746 = vmatprep.subr.bf16.mxu0 0
  %3747 = vmatpush1.bf16.msra.mxu0 0
  %3748 = vmatprep.subr.bf16.mxu0 0
  %3749 = vmatpush1.bf16.msra.mxu0 0
  %3750 = vmatprep.subr.bf16.mxu0 0
  %3751 = vmatpush1.bf16.msra.mxu0 0
  %3752 = vmatprep.subr.bf16.mxu0 0
  %3753 = vmatpush1.bf16.msra.mxu0 0
  %3754 = vmatprep.subr.bf16.mxu0 0
  %3755 = vmatpush1.bf16.msra.mxu0 0
  %3756 = vmatprep.subr.bf16.mxu0 0
  %3757 = vmatpush1.bf16.msra.mxu0 0
  %3758 = vmatprep.subr.bf16.mxu0 0
  %3759 = vmatpush1.bf16.msra.mxu0 0
  %3760 = vmatprep.subr.bf16.mxu0 0
  %3761 = vmatpush1.bf16.msra.mxu0 0
  %3762 = vmatprep.subr.bf16.mxu0 0
  %3763 = vmatpush1.bf16.msra.mxu0 0
  %3764 = vmatprep.subr.bf16.mxu0 0
  %3765 = vmatpush1.bf16.msra.mxu0 0
  %3766 = vmatprep.subr.bf16.mxu0 0
  %3767 = vmatpush1.bf16.msra.mxu0 0
  %3768 = vmatprep.subr.bf16.mxu0 0
  %3769 = vmatpush1.bf16.msra.mxu0 0
  %3770 = vmatprep.mubr.bf16.mxu0 0
  %3771 = vmatmul.mubr.bf16.gmra.mrb[0].mxu0 %v3736
  %v3772 = vpop.f32.mrb[0].mxu0
  %v3773 = vadd.f32 0.0, %v3772
  %v3774 = vpop.f32.mrb[0].mxu0
  %v3775 = vpop.f32.mrb[0].mxu0
  %v3776 = vadd.f32 0.0, %v3775
  %v3777 = vpop.f32.mrb[0].mxu0
  %3778 = vdwg.mxu0
  %3779 = vrot.lane.b32.xlu0 %v509, 64
  %v3780 = vpop.permute.xlu0 %3779
  %v3783 = vsel %vm2179, %v2965, 0
  %3785 = vmatprep.subr.bf16.mxu0 0
  %3786 = vmatpush1.bf16.msra.mxu0 %v3780
  %3787 = vmatprep.subr.bf16.mxu0 0
  %3788 = vmatpush1.bf16.msra.mxu0 0
  %3789 = vmatprep.subr.bf16.mxu0 0
  %3790 = vmatpush1.bf16.msra.mxu0 0
  %3791 = vmatprep.subr.bf16.mxu0 0
  %3792 = vmatpush1.bf16.msra.mxu0 0
  %3793 = vmatprep.subr.bf16.mxu0 0
  %3794 = vmatpush1.bf16.msra.mxu0 0
  %3795 = vmatprep.subr.bf16.mxu0 0
  %3796 = vmatpush1.bf16.msra.mxu0 0
  %3797 = vmatprep.subr.bf16.mxu0 0
  %3798 = vmatpush1.bf16.msra.mxu0 0
  %3799 = vmatprep.subr.bf16.mxu0 0
  %3800 = vmatpush1.bf16.msra.mxu0 0
  %3801 = vmatprep.subr.bf16.mxu0 0
  %3802 = vmatpush1.bf16.msra.mxu0 0
  %3803 = vmatprep.subr.bf16.mxu0 0
  %3804 = vmatpush1.bf16.msra.mxu0 0
  %3805 = vmatprep.subr.bf16.mxu0 0
  %3806 = vmatpush1.bf16.msra.mxu0 0
  %3807 = vmatprep.subr.bf16.mxu0 0
  %3808 = vmatpush1.bf16.msra.mxu0 0
  %3809 = vmatprep.subr.bf16.mxu0 0
  %3810 = vmatpush1.bf16.msra.mxu0 0
  %3811 = vmatprep.subr.bf16.mxu0 0
  %3812 = vmatpush1.bf16.msra.mxu0 0
  %3813 = vmatprep.subr.bf16.mxu0 0
  %3814 = vmatpush1.bf16.msra.mxu0 0
  %3815 = vmatprep.subr.bf16.mxu0 0
  %3816 = vmatpush1.bf16.msra.mxu0 0
  %3817 = vmatprep.mubr.bf16.mxu0 0
  %3818 = vmatmul.mubr.bf16.gmra.mrb[0].mxu0 %v3783
  %v3819 = vpop.f32.mrb[0].mxu0
  %v3820 = vadd.f32 0.0, %v3819
  %v3821 = vpop.f32.mrb[0].mxu0
  %v3822 = vpop.f32.mrb[0].mxu0
  %v3823 = vadd.f32 0.0, %v3822
  %v3824 = vpop.f32.mrb[0].mxu0
  %3825 = vdwg.mxu0
  %3826 = vrot.lane.b32.xlu0 %v511, 64
  %v3827 = vpop.permute.xlu0 %3826
  %v3830 = vsel %vm2179, %v2966, 0
  %3832 = vmatprep.subr.bf16.mxu0 0
  %3833 = vmatpush1.bf16.msra.mxu0 %v3827
  %3834 = vmatprep.subr.bf16.mxu0 0
  %3835 = vmatpush1.bf16.msra.mxu0 0
  %3836 = vmatprep.subr.bf16.mxu0 0
  %3837 = vmatpush1.bf16.msra.mxu0 0
  %3838 = vmatprep.subr.bf16.mxu0 0
  %3839 = vmatpush1.bf16.msra.mxu0 0
  %3840 = vmatprep.subr.bf16.mxu0 0
  %3841 = vmatpush1.bf16.msra.mxu0 0
  %3842 = vmatprep.subr.bf16.mxu0 0
  %3843 = vmatpush1.bf16.msra.mxu0 0
  %3844 = vmatprep.subr.bf16.mxu0 0
  %3845 = vmatpush1.bf16.msra.mxu0 0
  %3846 = vmatprep.subr.bf16.mxu0 0
  %3847 = vmatpush1.bf16.msra.mxu0 0
  %3848 = vmatprep.subr.bf16.mxu0 0
  %3849 = vmatpush1.bf16.msra.mxu0 0
  %3850 = vmatprep.subr.bf16.mxu0 0
  %3851 = vmatpush1.bf16.msra.mxu0 0
  %3852 = vmatprep.subr.bf16.mxu0 0
  %3853 = vmatpush1.bf16.msra.mxu0 0
  %3854 = vmatprep.subr.bf16.mxu0 0
  %3855 = vmatpush1.bf16.msra.mxu0 0
  %3856 = vmatprep.subr.bf16.mxu0 0
  %3857 = vmatpush1.bf16.msra.mxu0 0
  %3858 = vmatprep.subr.bf16.mxu0 0
  %3859 = vmatpush1.bf16.msra.mxu0 0
  %3860 = vmatprep.subr.bf16.mxu0 0
  %3861 = vmatpush1.bf16.msra.mxu0 0
  %3862 = vmatprep.subr.bf16.mxu0 0
  %3863 = vmatpush1.bf16.msra.mxu0 0
  %3864 = vmatprep.mubr.bf16.mxu0 0
  %3865 = vmatmul.mubr.bf16.gmra.mrb[0].mxu0 %v3830
  %v3866 = vpop.f32.mrb[0].mxu0
  %v3867 = vadd.f32 0.0, %v3866
  %v3868 = vpop.f32.mrb[0].mxu0
  %v3869 = vpop.f32.mrb[0].mxu0
  %v3870 = vadd.f32 0.0, %v3869
  %v3871 = vpop.f32.mrb[0].mxu0
  %3872 = vdwg.mxu0
  %3873 = vrot.lane.b32.xlu0 %v513, 64
  %v3874 = vpop.permute.xlu0 %3873
  %v3877 = vsel %vm2179, %v2967, 0
  %3879 = vmatprep.subr.bf16.mxu0 0
  %3880 = vmatpush1.bf16.msra.mxu0 %v3874
  %3881 = vmatprep.subr.bf16.mxu0 0
  %3882 = vmatpush1.bf16.msra.mxu0 0
  %3883 = vmatprep.subr.bf16.mxu0 0
  %3884 = vmatpush1.bf16.msra.mxu0 0
  %3885 = vmatprep.subr.bf16.mxu0 0
  %3886 = vmatpush1.bf16.msra.mxu0 0
  %3887 = vmatprep.subr.bf16.mxu0 0
  %3888 = vmatpush1.bf16.msra.mxu0 0
  %3889 = vmatprep.subr.bf16.mxu0 0
  %3890 = vmatpush1.bf16.msra.mxu0 0
  %3891 = vmatprep.subr.bf16.mxu0 0
  %3892 = vmatpush1.bf16.msra.mxu0 0
  %3893 = vmatprep.subr.bf16.mxu0 0
  %3894 = vmatpush1.bf16.msra.mxu0 0
  %3895 = vmatprep.subr.bf16.mxu0 0
  %3896 = vmatpush1.bf16.msra.mxu0 0
  %3897 = vmatprep.subr.bf16.mxu0 0
  %3898 = vmatpush1.bf16.msra.mxu0 0
  %3899 = vmatprep.subr.bf16.mxu0 0
  %3900 = vmatpush1.bf16.msra.mxu0 0
  %3901 = vmatprep.subr.bf16.mxu0 0
  %3902 = vmatpush1.bf16.msra.mxu0 0
  %3903 = vmatprep.subr.bf16.mxu0 0
  %3904 = vmatpush1.bf16.msra.mxu0 0
  %3905 = vmatprep.subr.bf16.mxu0 0
  %3906 = vmatpush1.bf16.msra.mxu0 0
  %3907 = vmatprep.subr.bf16.mxu0 0
  %3908 = vmatpush1.bf16.msra.mxu0 0
  %3909 = vmatprep.subr.bf16.mxu0 0
  %3910 = vmatpush1.bf16.msra.mxu0 0
  %3911 = vmatprep.mubr.bf16.mxu0 0
  %3912 = vmatmul.mubr.bf16.gmra.mrb[0].mxu0 %v3877
  %v3913 = vpop.f32.mrb[0].mxu0
  %v3914 = vadd.f32 0.0, %v3913
  %v3915 = vpop.f32.mrb[0].mxu0
  %v3916 = vpop.f32.mrb[0].mxu0
  %v3917 = vadd.f32 0.0, %v3916
  %v3918 = vpop.f32.mrb[0].mxu0
  %3919 = vdwg.mxu0
  %3920 = vrot.lane.b32.xlu0 %v515, 64
  %v3921 = vpop.permute.xlu0 %3920
  %v3924 = vsel %vm2179, %v2968, 0
  %3926 = vmatprep.subr.bf16.mxu0 0
  %3927 = vmatpush1.bf16.msra.mxu0 %v3921
  %3928 = vmatprep.subr.bf16.mxu0 0
  %3929 = vmatpush1.bf16.msra.mxu0 0
  %3930 = vmatprep.subr.bf16.mxu0 0
  %3931 = vmatpush1.bf16.msra.mxu0 0
  %3932 = vmatprep.subr.bf16.mxu0 0
  %3933 = vmatpush1.bf16.msra.mxu0 0
  %3934 = vmatprep.subr.bf16.mxu0 0
  %3935 = vmatpush1.bf16.msra.mxu0 0
  %3936 = vmatprep.subr.bf16.mxu0 0
  %3937 = vmatpush1.bf16.msra.mxu0 0
  %3938 = vmatprep.subr.bf16.mxu0 0
  %3939 = vmatpush1.bf16.msra.mxu0 0
  %3940 = vmatprep.subr.bf16.mxu0 0
  %3941 = vmatpush1.bf16.msra.mxu0 0
  %3942 = vmatprep.subr.bf16.mxu0 0
  %3943 = vmatpush1.bf16.msra.mxu0 0
  %3944 = vmatprep.subr.bf16.mxu0 0
  %3945 = vmatpush1.bf16.msra.mxu0 0
  %3946 = vmatprep.subr.bf16.mxu0 0
  %3947 = vmatpush1.bf16.msra.mxu0 0
  %3948 = vmatprep.subr.bf16.mxu0 0
  %3949 = vmatpush1.bf16.msra.mxu0 0
  %3950 = vmatprep.subr.bf16.mxu0 0
  %3951 = vmatpush1.bf16.msra.mxu0 0
  %3952 = vmatprep.subr.bf16.mxu0 0
  %3953 = vmatpush1.bf16.msra.mxu0 0
  %3954 = vmatprep.subr.bf16.mxu0 0
  %3955 = vmatpush1.bf16.msra.mxu0 0
  %3956 = vmatprep.subr.bf16.mxu0 0
  %3957 = vmatpush1.bf16.msra.mxu0 0
  %3958 = vmatprep.mubr.bf16.mxu0 0
  %3959 = vmatmul.mubr.bf16.gmra.mrb[0].mxu0 %v3924
  %v3960 = vpop.f32.mrb[0].mxu0
  %v3961 = vadd.f32 0.0, %v3960
  %v3962 = vpop.f32.mrb[0].mxu0
  %v3963 = vpop.f32.mrb[0].mxu0
  %v3964 = vadd.f32 0.0, %v3963
  %v3965 = vpop.f32.mrb[0].mxu0
  %3966 = vdwg.mxu0
  %3967 = vrot.lane.b32.xlu0 %v517, 64
  %v3968 = vpop.permute.xlu0 %3967
  %v3971 = vsel %vm2179, %v2969, 0
  %3973 = vmatprep.subr.bf16.mxu0 0
  %3974 = vmatpush1.bf16.msra.mxu0 %v3968
  %3975 = vmatprep.subr.bf16.mxu0 0
  %3976 = vmatpush1.bf16.msra.mxu0 0
  %3977 = vmatprep.subr.bf16.mxu0 0
  %3978 = vmatpush1.bf16.msra.mxu0 0
  %3979 = vmatprep.subr.bf16.mxu0 0
  %3980 = vmatpush1.bf16.msra.mxu0 0
  %3981 = vmatprep.subr.bf16.mxu0 0
  %3982 = vmatpush1.bf16.msra.mxu0 0
  %3983 = vmatprep.subr.bf16.mxu0 0
  %3984 = vmatpush1.bf16.msra.mxu0 0
  %3985 = vmatprep.subr.bf16.mxu0 0
  %3986 = vmatpush1.bf16.msra.mxu0 0
  %3987 = vmatprep.subr.bf16.mxu0 0
  %3988 = vmatpush1.bf16.msra.mxu0 0
  %3989 = vmatprep.subr.bf16.mxu0 0
  %3990 = vmatpush1.bf16.msra.mxu0 0
  %3991 = vmatprep.subr.bf16.mxu0 0
  %3992 = vmatpush1.bf16.msra.mxu0 0
  %3993 = vmatprep.subr.bf16.mxu0 0
  %3994 = vmatpush1.bf16.msra.mxu0 0
  %3995 = vmatprep.subr.bf16.mxu0 0
  %3996 = vmatpush1.bf16.msra.mxu0 0
  %3997 = vmatprep.subr.bf16.mxu0 0
  %3998 = vmatpush1.bf16.msra.mxu0 0
  %3999 = vmatprep.subr.bf16.mxu0 0
  %4000 = vmatpush1.bf16.msra.mxu0 0
  %4001 = vmatprep.subr.bf16.mxu0 0
  %4002 = vmatpush1.bf16.msra.mxu0 0
  %4003 = vmatprep.subr.bf16.mxu0 0
  %4004 = vmatpush1.bf16.msra.mxu0 0
  %4005 = vmatprep.mubr.bf16.mxu0 0
  %4006 = vmatmul.mubr.bf16.gmra.mrb[0].mxu0 %v3971
  %v4007 = vpop.f32.mrb[0].mxu0
  %v4008 = vadd.f32 0.0, %v4007
  %v4009 = vpop.f32.mrb[0].mxu0
  %v4010 = vpop.f32.mrb[0].mxu0
  %v4011 = vadd.f32 0.0, %v4010
  %v4012 = vpop.f32.mrb[0].mxu0
  %4013 = vdwg.mxu0
  %4014 = vrot.lane.b32.xlu0 %v519, 64
  %v4015 = vpop.permute.xlu0 %4014
  %v4018 = vsel %vm2179, %v2970, 0
  %4020 = vmatprep.subr.bf16.mxu0 0
  %4021 = vmatpush1.bf16.msra.mxu0 %v4015
  %4022 = vmatprep.subr.bf16.mxu0 0
  %4023 = vmatpush1.bf16.msra.mxu0 0
  %4024 = vmatprep.subr.bf16.mxu0 0
  %4025 = vmatpush1.bf16.msra.mxu0 0
  %4026 = vmatprep.subr.bf16.mxu0 0
  %4027 = vmatpush1.bf16.msra.mxu0 0
  %4028 = vmatprep.subr.bf16.mxu0 0
  %4029 = vmatpush1.bf16.msra.mxu0 0
  %4030 = vmatprep.subr.bf16.mxu0 0
  %4031 = vmatpush1.bf16.msra.mxu0 0
  %4032 = vmatprep.subr.bf16.mxu0 0
  %4033 = vmatpush1.bf16.msra.mxu0 0
  %4034 = vmatprep.subr.bf16.mxu0 0
  %4035 = vmatpush1.bf16.msra.mxu0 0
  %4036 = vmatprep.subr.bf16.mxu0 0
  %4037 = vmatpush1.bf16.msra.mxu0 0
  %4038 = vmatprep.subr.bf16.mxu0 0
  %4039 = vmatpush1.bf16.msra.mxu0 0
  %4040 = vmatprep.subr.bf16.mxu0 0
  %4041 = vmatpush1.bf16.msra.mxu0 0
  %4042 = vmatprep.subr.bf16.mxu0 0
  %4043 = vmatpush1.bf16.msra.mxu0 0
  %4044 = vmatprep.subr.bf16.mxu0 0
  %4045 = vmatpush1.bf16.msra.mxu0 0
  %4046 = vmatprep.subr.bf16.mxu0 0
  %4047 = vmatpush1.bf16.msra.mxu0 0
  %4048 = vmatprep.subr.bf16.mxu0 0
  %4049 = vmatpush1.bf16.msra.mxu0 0
  %4050 = vmatprep.subr.bf16.mxu0 0
  %4051 = vmatpush1.bf16.msra.mxu0 0
  %4052 = vmatprep.mubr.bf16.mxu0 0
  %4053 = vmatmul.mubr.bf16.gmra.mrb[0].mxu0 %v4018
  %v4054 = vpop.f32.mrb[0].mxu0
  %v4055 = vadd.f32 0.0, %v4054
  %v4056 = vpop.f32.mrb[0].mxu0
  %v4057 = vpop.f32.mrb[0].mxu0
  %v4058 = vadd.f32 0.0, %v4057
  %v4059 = vpop.f32.mrb[0].mxu0
  %4060 = vdwg.mxu0
  %4061 = vrot.lane.b32.xlu0 %v521, 64
  %v4062 = vpop.permute.xlu0 %4061
  %v4065 = vsel %vm2179, %v2971, 0
  %4067 = vmatprep.subr.bf16.mxu0 0
  %4068 = vmatpush1.bf16.msra.mxu0 %v4062
  %4069 = vmatprep.subr.bf16.mxu0 0
  %4070 = vmatpush1.bf16.msra.mxu0 0
  %4071 = vmatprep.subr.bf16.mxu0 0
  %4072 = vmatpush1.bf16.msra.mxu0 0
  %4073 = vmatprep.subr.bf16.mxu0 0
  %4074 = vmatpush1.bf16.msra.mxu0 0
  %4075 = vmatprep.subr.bf16.mxu0 0
  %4076 = vmatpush1.bf16.msra.mxu0 0
  %4077 = vmatprep.subr.bf16.mxu0 0
  %4078 = vmatpush1.bf16.msra.mxu0 0
  %4079 = vmatprep.subr.bf16.mxu0 0
  %4080 = vmatpush1.bf16.msra.mxu0 0
  %4081 = vmatprep.subr.bf16.mxu0 0
  %4082 = vmatpush1.bf16.msra.mxu0 0
  %4083 = vmatprep.subr.bf16.mxu0 0
  %4084 = vmatpush1.bf16.msra.mxu0 0
  %4085 = vmatprep.subr.bf16.mxu0 0
  %4086 = vmatpush1.bf16.msra.mxu0 0
  %4087 = vmatprep.subr.bf16.mxu0 0
  %4088 = vmatpush1.bf16.msra.mxu0 0
  %4089 = vmatprep.subr.bf16.mxu0 0
  %4090 = vmatpush1.bf16.msra.mxu0 0
  %4091 = vmatprep.subr.bf16.mxu0 0
  %4092 = vmatpush1.bf16.msra.mxu0 0
  %4093 = vmatprep.subr.bf16.mxu0 0
  %4094 = vmatpush1.bf16.msra.mxu0 0
  %4095 = vmatprep.subr.bf16.mxu0 0
  %4096 = vmatpush1.bf16.msra.mxu0 0
  %4097 = vmatprep.subr.bf16.mxu0 0
  %4098 = vmatpush1.bf16.msra.mxu0 0
  %4099 = vmatprep.mubr.bf16.mxu0 0
  %4100 = vmatmul.mubr.bf16.gmra.mrb[0].mxu0 %v4065
  %v4101 = vpop.f32.mrb[0].mxu0
  %v4102 = vadd.f32 0.0, %v4101
  %v4103 = vpop.f32.mrb[0].mxu0
  %v4104 = vpop.f32.mrb[0].mxu0
  %v4105 = vadd.f32 0.0, %v4104
  %v4106 = vpop.f32.mrb[0].mxu0
  %4107 = vdwg.mxu0
  %4108 = vrot.lane.b32.xlu0 %v523, 64
  %v4109 = vpop.permute.xlu0 %4108
  %v4112 = vsel %vm2179, %v2972, 0
  %4114 = vmatprep.subr.bf16.mxu0 0
  %4115 = vmatpush1.bf16.msra.mxu0 %v4109
  %4116 = vmatprep.subr.bf16.mxu0 0
  %4117 = vmatpush1.bf16.msra.mxu0 0
  %4118 = vmatprep.subr.bf16.mxu0 0
  %4119 = vmatpush1.bf16.msra.mxu0 0
  %4120 = vmatprep.subr.bf16.mxu0 0
  %4121 = vmatpush1.bf16.msra.mxu0 0
  %4122 = vmatprep.subr.bf16.mxu0 0
  %4123 = vmatpush1.bf16.msra.mxu0 0
  %4124 = vmatprep.subr.bf16.mxu0 0
  %4125 = vmatpush1.bf16.msra.mxu0 0
  %4126 = vmatprep.subr.bf16.mxu0 0
  %4127 = vmatpush1.bf16.msra.mxu0 0
  %4128 = vmatprep.subr.bf16.mxu0 0
  %4129 = vmatpush1.bf16.msra.mxu0 0
  %4130 = vmatprep.subr.bf16.mxu0 0
  %4131 = vmatpush1.bf16.msra.mxu0 0
  %4132 = vmatprep.subr.bf16.mxu0 0
  %4133 = vmatpush1.bf16.msra.mxu0 0
  %4134 = vmatprep.subr.bf16.mxu0 0
  %4135 = vmatpush1.bf16.msra.mxu0 0
  %4136 = vmatprep.subr.bf16.mxu0 0
  %4137 = vmatpush1.bf16.msra.mxu0 0
  %4138 = vmatprep.subr.bf16.mxu0 0
  %4139 = vmatpush1.bf16.msra.mxu0 0
  %4140 = vmatprep.subr.bf16.mxu0 0
  %4141 = vmatpush1.bf16.msra.mxu0 0
  %4142 = vmatprep.subr.bf16.mxu0 0
  %4143 = vmatpush1.bf16.msra.mxu0 0
  %4144 = vmatprep.subr.bf16.mxu0 0
  %4145 = vmatpush1.bf16.msra.mxu0 0
  %4146 = vmatprep.mubr.bf16.mxu0 0
  %4147 = vmatmul.mubr.bf16.gmra.mrb[0].mxu0 %v4112
  %v4148 = vpop.f32.mrb[0].mxu0
  %v4149 = vadd.f32 0.0, %v4148
  %v4150 = vpop.f32.mrb[0].mxu0
  %v4151 = vpop.f32.mrb[0].mxu0
  %v4152 = vadd.f32 0.0, %v4151
  %v4153 = vpop.f32.mrb[0].mxu0
  %4154 = vdwg.mxu0
  %4155 = vrot.lane.b32.xlu0 %v525, 64
  %v4156 = vpop.permute.xlu0 %4155
  %v4159 = vsel %vm2179, %v2973, 0
  %4161 = vmatprep.subr.bf16.mxu0 0
  %4162 = vmatpush1.bf16.msra.mxu0 %v4156
  %4163 = vmatprep.subr.bf16.mxu0 0
  %4164 = vmatpush1.bf16.msra.mxu0 0
  %4165 = vmatprep.subr.bf16.mxu0 0
  %4166 = vmatpush1.bf16.msra.mxu0 0
  %4167 = vmatprep.subr.bf16.mxu0 0
  %4168 = vmatpush1.bf16.msra.mxu0 0
  %4169 = vmatprep.subr.bf16.mxu0 0
  %4170 = vmatpush1.bf16.msra.mxu0 0
  %4171 = vmatprep.subr.bf16.mxu0 0
  %4172 = vmatpush1.bf16.msra.mxu0 0
  %4173 = vmatprep.subr.bf16.mxu0 0
  %4174 = vmatpush1.bf16.msra.mxu0 0
  %4175 = vmatprep.subr.bf16.mxu0 0
  %4176 = vmatpush1.bf16.msra.mxu0 0
  %4177 = vmatprep.subr.bf16.mxu0 0
  %4178 = vmatpush1.bf16.msra.mxu0 0
  %4179 = vmatprep.subr.bf16.mxu0 0
  %4180 = vmatpush1.bf16.msra.mxu0 0
  %4181 = vmatprep.subr.bf16.mxu0 0
  %4182 = vmatpush1.bf16.msra.mxu0 0
  %4183 = vmatprep.subr.bf16.mxu0 0
  %4184 = vmatpush1.bf16.msra.mxu0 0
  %4185 = vmatprep.subr.bf16.mxu0 0
  %4186 = vmatpush1.bf16.msra.mxu0 0
  %4187 = vmatprep.subr.bf16.mxu0 0
  %4188 = vmatpush1.bf16.msra.mxu0 0
  %4189 = vmatprep.subr.bf16.mxu0 0
  %4190 = vmatpush1.bf16.msra.mxu0 0
  %4191 = vmatprep.subr.bf16.mxu0 0
  %4192 = vmatpush1.bf16.msra.mxu0 0
  %4193 = vmatprep.mubr.bf16.mxu0 0
  %4194 = vmatmul.mubr.bf16.gmra.mrb[0].mxu0 %v4159
  %v4195 = vpop.f32.mrb[0].mxu0
  %v4196 = vadd.f32 0.0, %v4195
  %v4197 = vpop.f32.mrb[0].mxu0
  %v4198 = vpop.f32.mrb[0].mxu0
  %v4199 = vadd.f32 0.0, %v4198
  %v4200 = vpop.f32.mrb[0].mxu0
  %4201 = vdwg.mxu0
  %4202 = vrot.lane.b32.xlu0 %v527, 64
  %v4203 = vpop.permute.xlu0 %4202
  %v4206 = vsel %vm2179, %v2974, 0
  %4208 = vmatprep.subr.bf16.mxu0 0
  %4209 = vmatpush1.bf16.msra.mxu0 %v4203
  %4210 = vmatprep.subr.bf16.mxu0 0
  %4211 = vmatpush1.bf16.msra.mxu0 0
  %4212 = vmatprep.subr.bf16.mxu0 0
  %4213 = vmatpush1.bf16.msra.mxu0 0
  %4214 = vmatprep.subr.bf16.mxu0 0
  %4215 = vmatpush1.bf16.msra.mxu0 0
  %4216 = vmatprep.subr.bf16.mxu0 0
  %4217 = vmatpush1.bf16.msra.mxu0 0
  %4218 = vmatprep.subr.bf16.mxu0 0
  %4219 = vmatpush1.bf16.msra.mxu0 0
  %4220 = vmatprep.subr.bf16.mxu0 0
  %4221 = vmatpush1.bf16.msra.mxu0 0
  %4222 = vmatprep.subr.bf16.mxu0 0
  %4223 = vmatpush1.bf16.msra.mxu0 0
  %4224 = vmatprep.subr.bf16.mxu0 0
  %4225 = vmatpush1.bf16.msra.mxu0 0
  %4226 = vmatprep.subr.bf16.mxu0 0
  %4227 = vmatpush1.bf16.msra.mxu0 0
  %4228 = vmatprep.subr.bf16.mxu0 0
  %4229 = vmatpush1.bf16.msra.mxu0 0
  %4230 = vmatprep.subr.bf16.mxu0 0
  %4231 = vmatpush1.bf16.msra.mxu0 0
  %4232 = vmatprep.subr.bf16.mxu0 0
  %4233 = vmatpush1.bf16.msra.mxu0 0
  %4234 = vmatprep.subr.bf16.mxu0 0
  %4235 = vmatpush1.bf16.msra.mxu0 0
  %4236 = vmatprep.subr.bf16.mxu0 0
  %4237 = vmatpush1.bf16.msra.mxu0 0
  %4238 = vmatprep.subr.bf16.mxu0 0
  %4239 = vmatpush1.bf16.msra.mxu0 0
  %4240 = vmatprep.mubr.bf16.mxu0 0
  %4241 = vmatmul.mubr.bf16.gmra.mrb[0].mxu0 %v4206
  %v4242 = vpop.f32.mrb[0].mxu0
  %v4243 = vadd.f32 0.0, %v4242
  %v4244 = vpop.f32.mrb[0].mxu0
  %v4245 = vpop.f32.mrb[0].mxu0
  %v4246 = vadd.f32 0.0, %v4245
  %v4247 = vpop.f32.mrb[0].mxu0
  %4248 = vdwg.mxu0
  %4249 = vrot.lane.b32.xlu0 %v529, 64
  %v4250 = vpop.permute.xlu0 %4249
  %v4253 = vsel %vm2179, %v2975, 0
  %4255 = vmatprep.subr.bf16.mxu0 0
  %4256 = vmatpush1.bf16.msra.mxu0 %v4250
  %4257 = vmatprep.subr.bf16.mxu0 0
  %4258 = vmatpush1.bf16.msra.mxu0 0
  %4259 = vmatprep.subr.bf16.mxu0 0
  %4260 = vmatpush1.bf16.msra.mxu0 0
  %4261 = vmatprep.subr.bf16.mxu0 0
  %4262 = vmatpush1.bf16.msra.mxu0 0
  %4263 = vmatprep.subr.bf16.mxu0 0
  %4264 = vmatpush1.bf16.msra.mxu0 0
  %4265 = vmatprep.subr.bf16.mxu0 0
  %4266 = vmatpush1.bf16.msra.mxu0 0
  %4267 = vmatprep.subr.bf16.mxu0 0
  %4268 = vmatpush1.bf16.msra.mxu0 0
  %4269 = vmatprep.subr.bf16.mxu0 0
  %4270 = vmatpush1.bf16.msra.mxu0 0
  %4271 = vmatprep.subr.bf16.mxu0 0
  %4272 = vmatpush1.bf16.msra.mxu0 0
  %4273 = vmatprep.subr.bf16.mxu0 0
  %4274 = vmatpush1.bf16.msra.mxu0 0
  %4275 = vmatprep.subr.bf16.mxu0 0
  %4276 = vmatpush1.bf16.msra.mxu0 0
  %4277 = vmatprep.subr.bf16.mxu0 0
  %4278 = vmatpush1.bf16.msra.mxu0 0
  %4279 = vmatprep.subr.bf16.mxu0 0
  %4280 = vmatpush1.bf16.msra.mxu0 0
  %4281 = vmatprep.subr.bf16.mxu0 0
  %4282 = vmatpush1.bf16.msra.mxu0 0
  %4283 = vmatprep.subr.bf16.mxu0 0
  %4284 = vmatpush1.bf16.msra.mxu0 0
  %4285 = vmatprep.subr.bf16.mxu0 0
  %4286 = vmatpush1.bf16.msra.mxu0 0
  %4287 = vmatprep.mubr.bf16.mxu0 0
  %4288 = vmatmul.mubr.bf16.gmra.mrb[0].mxu0 %v4253
  %v4289 = vpop.f32.mrb[0].mxu0
  %v4290 = vadd.f32 0.0, %v4289
  %v4291 = vpop.f32.mrb[0].mxu0
  %v4292 = vpop.f32.mrb[0].mxu0
  %v4293 = vadd.f32 0.0, %v4292
  %v4294 = vpop.f32.mrb[0].mxu0
  %4295 = vdwg.mxu0
  %4296 = vrot.lane.b32.xlu0 %v531, 64
  %v4297 = vpop.permute.xlu0 %4296
  %v4300 = vsel %vm2179, %v2976, 0
  %4302 = vmatprep.subr.bf16.mxu0 0
  %4303 = vmatpush1.bf16.msra.mxu0 %v4297
  %4304 = vmatprep.subr.bf16.mxu0 0
  %4305 = vmatpush1.bf16.msra.mxu0 0
  %4306 = vmatprep.subr.bf16.mxu0 0
  %4307 = vmatpush1.bf16.msra.mxu0 0
  %4308 = vmatprep.subr.bf16.mxu0 0
  %4309 = vmatpush1.bf16.msra.mxu0 0
  %4310 = vmatprep.subr.bf16.mxu0 0
  %4311 = vmatpush1.bf16.msra.mxu0 0
  %4312 = vmatprep.subr.bf16.mxu0 0
  %4313 = vmatpush1.bf16.msra.mxu0 0
  %4314 = vmatprep.subr.bf16.mxu0 0
  %4315 = vmatpush1.bf16.msra.mxu0 0
  %4316 = vmatprep.subr.bf16.mxu0 0
  %4317 = vmatpush1.bf16.msra.mxu0 0
  %4318 = vmatprep.subr.bf16.mxu0 0
  %4319 = vmatpush1.bf16.msra.mxu0 0
  %4320 = vmatprep.subr.bf16.mxu0 0
  %4321 = vmatpush1.bf16.msra.mxu0 0
  %4322 = vmatprep.subr.bf16.mxu0 0
  %4323 = vmatpush1.bf16.msra.mxu0 0
  %4324 = vmatprep.subr.bf16.mxu0 0
  %4325 = vmatpush1.bf16.msra.mxu0 0
  %4326 = vmatprep.subr.bf16.mxu0 0
  %4327 = vmatpush1.bf16.msra.mxu0 0
  %4328 = vmatprep.subr.bf16.mxu0 0
  %4329 = vmatpush1.bf16.msra.mxu0 0
  %4330 = vmatprep.subr.bf16.mxu0 0
  %4331 = vmatpush1.bf16.msra.mxu0 0
  %4332 = vmatprep.subr.bf16.mxu0 0
  %4333 = vmatpush1.bf16.msra.mxu0 0
  %4334 = vmatprep.mubr.bf16.mxu0 0
  %4335 = vmatmul.mubr.bf16.gmra.mrb[0].mxu0 %v4300
  %v4336 = vpop.f32.mrb[0].mxu0
  %v4337 = vadd.f32 0.0, %v4336
  %v4338 = vpop.f32.mrb[0].mxu0
  %v4339 = vpop.f32.mrb[0].mxu0
  %v4340 = vadd.f32 0.0, %v4339
  %v4341 = vpop.f32.mrb[0].mxu0
  %4342 = vdwg.mxu0
  %4343 = vrot.lane.b32.xlu0 %v533, 64
  %v4344 = vpop.permute.xlu0 %4343
  %v4347 = vsel %vm2179, %v2977, 0
  %4349 = vmatprep.subr.bf16.mxu0 0
  %4350 = vmatpush1.bf16.msra.mxu0 %v4344
  %4351 = vmatprep.subr.bf16.mxu0 0
  %4352 = vmatpush1.bf16.msra.mxu0 0
  %4353 = vmatprep.subr.bf16.mxu0 0
  %4354 = vmatpush1.bf16.msra.mxu0 0
  %4355 = vmatprep.subr.bf16.mxu0 0
  %4356 = vmatpush1.bf16.msra.mxu0 0
  %4357 = vmatprep.subr.bf16.mxu0 0
  %4358 = vmatpush1.bf16.msra.mxu0 0
  %4359 = vmatprep.subr.bf16.mxu0 0
  %4360 = vmatpush1.bf16.msra.mxu0 0
  %4361 = vmatprep.subr.bf16.mxu0 0
  %4362 = vmatpush1.bf16.msra.mxu0 0
  %4363 = vmatprep.subr.bf16.mxu0 0
  %4364 = vmatpush1.bf16.msra.mxu0 0
  %4365 = vmatprep.subr.bf16.mxu0 0
  %4366 = vmatpush1.bf16.msra.mxu0 0
  %4367 = vmatprep.subr.bf16.mxu0 0
  %4368 = vmatpush1.bf16.msra.mxu0 0
  %4369 = vmatprep.subr.bf16.mxu0 0
  %4370 = vmatpush1.bf16.msra.mxu0 0
  %4371 = vmatprep.subr.bf16.mxu0 0
  %4372 = vmatpush1.bf16.msra.mxu0 0
  %4373 = vmatprep.subr.bf16.mxu0 0
  %4374 = vmatpush1.bf16.msra.mxu0 0
  %4375 = vmatprep.subr.bf16.mxu0 0
  %4376 = vmatpush1.bf16.msra.mxu0 0
  %4377 = vmatprep.subr.bf16.mxu0 0
  %4378 = vmatpush1.bf16.msra.mxu0 0
  %4379 = vmatprep.subr.bf16.mxu0 0
  %4380 = vmatpush1.bf16.msra.mxu0 0
  %4381 = vmatprep.mubr.bf16.mxu0 0
  %4382 = vmatmul.mubr.bf16.gmra.mrb[0].mxu0 %v4347
  %v4383 = vpop.f32.mrb[0].mxu0
  %v4384 = vadd.f32 0.0, %v4383
  %v4385 = vpop.f32.mrb[0].mxu0
  %v4386 = vpop.f32.mrb[0].mxu0
  %v4387 = vadd.f32 0.0, %v4386
  %v4388 = vpop.f32.mrb[0].mxu0
  %4389 = vdwg.mxu0
  %4390 = vrot.lane.b32.xlu0 %v535, 64
  %v4391 = vpop.permute.xlu0 %4390
  %v4394 = vsel %vm2179, %v2978, 0
  %4396 = vmatprep.subr.bf16.mxu0 0
  %4397 = vmatpush1.bf16.msra.mxu0 %v4391
  %4398 = vmatprep.subr.bf16.mxu0 0
  %4399 = vmatpush1.bf16.msra.mxu0 0
  %4400 = vmatprep.subr.bf16.mxu0 0
  %4401 = vmatpush1.bf16.msra.mxu0 0
  %4402 = vmatprep.subr.bf16.mxu0 0
  %4403 = vmatpush1.bf16.msra.mxu0 0
  %4404 = vmatprep.subr.bf16.mxu0 0
  %4405 = vmatpush1.bf16.msra.mxu0 0
  %4406 = vmatprep.subr.bf16.mxu0 0
  %4407 = vmatpush1.bf16.msra.mxu0 0
  %4408 = vmatprep.subr.bf16.mxu0 0
  %4409 = vmatpush1.bf16.msra.mxu0 0
  %4410 = vmatprep.subr.bf16.mxu0 0
  %4411 = vmatpush1.bf16.msra.mxu0 0
  %4412 = vmatprep.subr.bf16.mxu0 0
  %4413 = vmatpush1.bf16.msra.mxu0 0
  %4414 = vmatprep.subr.bf16.mxu0 0
  %4415 = vmatpush1.bf16.msra.mxu0 0
  %4416 = vmatprep.subr.bf16.mxu0 0
  %4417 = vmatpush1.bf16.msra.mxu0 0
  %4418 = vmatprep.subr.bf16.mxu0 0
  %4419 = vmatpush1.bf16.msra.mxu0 0
  %4420 = vmatprep.subr.bf16.mxu0 0
  %4421 = vmatpush1.bf16.msra.mxu0 0
  %4422 = vmatprep.subr.bf16.mxu0 0
  %4423 = vmatpush1.bf16.msra.mxu0 0
  %4424 = vmatprep.subr.bf16.mxu0 0
  %4425 = vmatpush1.bf16.msra.mxu0 0
  %4426 = vmatprep.subr.bf16.mxu0 0
  %4427 = vmatpush1.bf16.msra.mxu0 0
  %4428 = vmatprep.mubr.bf16.mxu0 0
  %4429 = vmatmul.mubr.bf16.gmra.mrb[0].mxu0 %v4394
  %v4430 = vpop.f32.mrb[0].mxu0
  %v4431 = vadd.f32 0.0, %v4430
  %v4432 = vpop.f32.mrb[0].mxu0
  %v4433 = vpop.f32.mrb[0].mxu0
  %v4434 = vadd.f32 0.0, %v4433
  %v4435 = vpop.f32.mrb[0].mxu0
  %4436 = vdwg.mxu0
  %4437 = vrot.lane.b32.xlu0 %v537, 64
  %v4438 = vpop.permute.xlu0 %4437
  %v4441 = vsel %vm2179, %v2979, 0
  %4443 = vmatprep.subr.bf16.mxu0 0
  %4444 = vmatpush1.bf16.msra.mxu0 %v4438
  %4445 = vmatprep.subr.bf16.mxu0 0
  %4446 = vmatpush1.bf16.msra.mxu0 0
  %4447 = vmatprep.subr.bf16.mxu0 0
  %4448 = vmatpush1.bf16.msra.mxu0 0
  %4449 = vmatprep.subr.bf16.mxu0 0
  %4450 = vmatpush1.bf16.msra.mxu0 0
  %4451 = vmatprep.subr.bf16.mxu0 0
  %4452 = vmatpush1.bf16.msra.mxu0 0
  %4453 = vmatprep.subr.bf16.mxu0 0
  %4454 = vmatpush1.bf16.msra.mxu0 0
  %4455 = vmatprep.subr.bf16.mxu0 0
  %4456 = vmatpush1.bf16.msra.mxu0 0
  %4457 = vmatprep.subr.bf16.mxu0 0
  %4458 = vmatpush1.bf16.msra.mxu0 0
  %4459 = vmatprep.subr.bf16.mxu0 0
  %4460 = vmatpush1.bf16.msra.mxu0 0
  %4461 = vmatprep.subr.bf16.mxu0 0
  %4462 = vmatpush1.bf16.msra.mxu0 0
  %4463 = vmatprep.subr.bf16.mxu0 0
  %4464 = vmatpush1.bf16.msra.mxu0 0
  %4465 = vmatprep.subr.bf16.mxu0 0
  %4466 = vmatpush1.bf16.msra.mxu0 0
  %4467 = vmatprep.subr.bf16.mxu0 0
  %4468 = vmatpush1.bf16.msra.mxu0 0
  %4469 = vmatprep.subr.bf16.mxu0 0
  %4470 = vmatpush1.bf16.msra.mxu0 0
  %4471 = vmatprep.subr.bf16.mxu0 0
  %4472 = vmatpush1.bf16.msra.mxu0 0
  %4473 = vmatprep.subr.bf16.mxu0 0
  %4474 = vmatpush1.bf16.msra.mxu0 0
  %4475 = vmatprep.mubr.bf16.mxu0 0
  %4476 = vmatmul.mubr.bf16.gmra.mrb[0].mxu0 %v4441
  %v4477 = vpop.f32.mrb[0].mxu0
  %v4478 = vadd.f32 0.0, %v4477
  %v4479 = vpop.f32.mrb[0].mxu0
  %v4480 = vpop.f32.mrb[0].mxu0
  %v4481 = vadd.f32 0.0, %v4480
  %v4482 = vpop.f32.mrb[0].mxu0
  %4483 = vdwg.mxu0
  %4500 = vrot.lane.b32.xlu0 %v3397, 8
  %v4501 = vpop.permute.xlu0 %4500
  %4502 = vrot.lane.b32.xlu0 %v3400, 8
  %v4503 = vpop.permute.xlu0 %4502
  %4504 = vrot.lane.b32.xlu0 %v3444, 8
  %v4505 = vpop.permute.xlu0 %4504
  %4506 = vrot.lane.b32.xlu0 %v3447, 8
  %v4507 = vpop.permute.xlu0 %4506
  %4508 = vrot.lane.b32.xlu0 %v3491, 8
  %v4509 = vpop.permute.xlu0 %4508
  %4510 = vrot.lane.b32.xlu0 %v3494, 8
  %v4511 = vpop.permute.xlu0 %4510
  %4512 = vrot.lane.b32.xlu0 %v3538, 8
  %v4513 = vpop.permute.xlu0 %4512
  %4514 = vrot.lane.b32.xlu0 %v3541, 8
  %v4515 = vpop.permute.xlu0 %4514
  %4516 = vrot.lane.b32.xlu0 %v3585, 8
  %v4517 = vpop.permute.xlu0 %4516
  %4518 = vrot.lane.b32.xlu0 %v3588, 8
  %v4519 = vpop.permute.xlu0 %4518
  %4520 = vrot.lane.b32.xlu0 %v3632, 8
  %v4521 = vpop.permute.xlu0 %4520
  %4522 = vrot.lane.b32.xlu0 %v3635, 8
  %v4523 = vpop.permute.xlu0 %4522
  %4524 = vrot.lane.b32.xlu0 %v3679, 8
  %v4525 = vpop.permute.xlu0 %4524
  %4526 = vrot.lane.b32.xlu0 %v3682, 8
  %v4527 = vpop.permute.xlu0 %4526
  %4528 = vrot.lane.b32.xlu0 %v3726, 8
  %v4529 = vpop.permute.xlu0 %4528
  %4530 = vrot.lane.b32.xlu0 %v3729, 8
  %v4531 = vpop.permute.xlu0 %4530
  %4564 = vrot.lane.b32.xlu0 %v3773, 16
  %v4565 = vpop.permute.xlu0 %4564
  %4566 = vrot.lane.b32.xlu0 %v3776, 16
  %v4567 = vpop.permute.xlu0 %4566
  %4568 = vrot.lane.b32.xlu0 %v3820, 16
  %v4569 = vpop.permute.xlu0 %4568
  %4570 = vrot.lane.b32.xlu0 %v3823, 16
  %v4571 = vpop.permute.xlu0 %4570
  %4572 = vrot.lane.b32.xlu0 %v3867, 16
  %v4573 = vpop.permute.xlu0 %4572
  %4574 = vrot.lane.b32.xlu0 %v3870, 16
  %v4575 = vpop.permute.xlu0 %4574
  %4576 = vrot.lane.b32.xlu0 %v3914, 16
  %v4577 = vpop.permute.xlu0 %4576
  %4578 = vrot.lane.b32.xlu0 %v3917, 16
  %v4579 = vpop.permute.xlu0 %4578
  %4580 = vrot.lane.b32.xlu0 %v3961, 16
  %v4581 = vpop.permute.xlu0 %4580
  %4582 = vrot.lane.b32.xlu0 %v3964, 16
  %v4583 = vpop.permute.xlu0 %4582
  %4584 = vrot.lane.b32.xlu0 %v4008, 16
  %v4585 = vpop.permute.xlu0 %4584
  %4586 = vrot.lane.b32.xlu0 %v4011, 16
  %v4587 = vpop.permute.xlu0 %4586
  %4588 = vrot.lane.b32.xlu0 %v4055, 16
  %v4589 = vpop.permute.xlu0 %4588
  %4590 = vrot.lane.b32.xlu0 %v4058, 16
  %v4591 = vpop.permute.xlu0 %4590
  %4592 = vrot.lane.b32.xlu0 %v4102, 16
  %v4593 = vpop.permute.xlu0 %4592
  %4594 = vrot.lane.b32.xlu0 %v4105, 16
  %v4595 = vpop.permute.xlu0 %4594
  %4628 = vrot.lane.b32.xlu0 %v4149, 24
  %v4629 = vpop.permute.xlu0 %4628
  %4630 = vrot.lane.b32.xlu0 %v4152, 24
  %v4631 = vpop.permute.xlu0 %4630
  %4632 = vrot.lane.b32.xlu0 %v4196, 24
  %v4633 = vpop.permute.xlu0 %4632
  %4634 = vrot.lane.b32.xlu0 %v4199, 24
  %v4635 = vpop.permute.xlu0 %4634
  %4636 = vrot.lane.b32.xlu0 %v4243, 24
  %v4637 = vpop.permute.xlu0 %4636
  %4638 = vrot.lane.b32.xlu0 %v4246, 24
  %v4639 = vpop.permute.xlu0 %4638
  %4640 = vrot.lane.b32.xlu0 %v4290, 24
  %v4641 = vpop.permute.xlu0 %4640
  %4642 = vrot.lane.b32.xlu0 %v4293, 24
  %v4643 = vpop.permute.xlu0 %4642
  %4644 = vrot.lane.b32.xlu0 %v4337, 24
  %v4645 = vpop.permute.xlu0 %4644
  %4646 = vrot.lane.b32.xlu0 %v4340, 24
  %v4647 = vpop.permute.xlu0 %4646
  %4648 = vrot.lane.b32.xlu0 %v4384, 24
  %v4649 = vpop.permute.xlu0 %4648
  %4650 = vrot.lane.b32.xlu0 %v4387, 24
  %v4651 = vpop.permute.xlu0 %4650
  %4652 = vrot.lane.b32.xlu0 %v4431, 24
  %v4653 = vpop.permute.xlu0 %4652
  %4654 = vrot.lane.b32.xlu0 %v4434, 24
  %v4655 = vpop.permute.xlu0 %4654
  %4656 = vrot.lane.b32.xlu0 %v4478, 24
  %v4657 = vpop.permute.xlu0 %4656
  %4658 = vrot.lane.b32.xlu0 %v4481, 24
  %v4659 = vpop.permute.xlu0 %4658
  %v4676 = vsel %vm540, %v3021, %v4501
  %v4677 = vsel %vm540, %v3024, %v4503
  %v4678 = vsel %vm540, %v3068, %v4505
  %v4679 = vsel %vm540, %v3071, %v4507
  %v4680 = vsel %vm540, %v3115, %v4509
  %v4681 = vsel %vm540, %v3118, %v4511
  %v4682 = vsel %vm540, %v3162, %v4513
  %v4683 = vsel %vm540, %v3165, %v4515
  %v4684 = vsel %vm540, %v3209, %v4517
  %v4685 = vsel %vm540, %v3212, %v4519
  %v4686 = vsel %vm540, %v3256, %v4521
  %v4687 = vsel %vm540, %v3259, %v4523
  %v4688 = vsel %vm540, %v3303, %v4525
  %v4689 = vsel %vm540, %v3306, %v4527
  %v4690 = vsel %vm540, %v3350, %v4529
  %v4691 = vsel %vm540, %v3353, %v4531
  %v4692 = vsel %vm2179, %v4676, %v4565
  %v4693 = vsel %vm2179, %v4677, %v4567
  %v4694 = vsel %vm2179, %v4678, %v4569
  %v4695 = vsel %vm2179, %v4679, %v4571
  %v4696 = vsel %vm2179, %v4680, %v4573
  %v4697 = vsel %vm2179, %v4681, %v4575
  %v4698 = vsel %vm2179, %v4682, %v4577
  %v4699 = vsel %vm2179, %v4683, %v4579
  %v4700 = vsel %vm2179, %v4684, %v4581
  %v4701 = vsel %vm2179, %v4685, %v4583
  %v4702 = vsel %vm2179, %v4686, %v4585
  %v4703 = vsel %vm2179, %v4687, %v4587
  %v4704 = vsel %vm2179, %v4688, %v4589
  %v4705 = vsel %vm2179, %v4689, %v4591
  %v4706 = vsel %vm2179, %v4690, %v4593
  %v4707 = vsel %vm2179, %v4691, %v4595
  %vm4708 = vcmask 195584
  %v4709 = vsel %vm4708, %v4692, %v4629
  %v4710 = vsel %vm4708, %v4693, %v4631
  %v4711 = vsel %vm4708, %v4694, %v4633
  %v4712 = vsel %vm4708, %v4695, %v4635
  %v4713 = vsel %vm4708, %v4696, %v4637
  %v4714 = vsel %vm4708, %v4697, %v4639
  %v4715 = vsel %vm4708, %v4698, %v4641
  %v4716 = vsel %vm4708, %v4699, %v4643
  %v4717 = vsel %vm4708, %v4700, %v4645
  %v4718 = vsel %vm4708, %v4701, %v4647
  %v4719 = vsel %vm4708, %v4702, %v4649
  %v4720 = vsel %vm4708, %v4703, %v4651
  %v4721 = vsel %vm4708, %v4704, %v4653
  %v4722 = vsel %vm4708, %v4705, %v4655
  %v4723 = vsel %vm4708, %v4706, %v4657
  %v4724 = vsel %vm4708, %v4707, %v4659
  %v4725 = vpack.c.bf16 %v4710, %v4709
  %v4726 = vpack.c.bf16 %v4712, %v4711
  %v4727 = vpack.c.bf16 %v4714, %v4713
  %v4728 = vpack.c.bf16 %v4716, %v4715
  %v4729 = vpack.c.bf16 %v4718, %v4717
  %v4730 = vpack.c.bf16 %v4720, %v4719
  %v4731 = vpack.c.bf16 %v4722, %v4721
  %v4732 = vpack.c.bf16 %v4724, %v4723
  %v4733 = vld [vmem:[%s6] sm:$0xf]
  %v4734 = vld [vmem:[%s6 + $0x4] sm:$0xf]
  %v4735 = vld [vmem:[%s6 + $0x8] sm:$0xf]
  %v4736 = vld [vmem:[%s6 + $0xc] sm:$0xf]
  %v4737 = vld [vmem:[%s7] sm:$0x1]
  %v4739 = vlaneseq
  %v4740 = vshrl.u32 %v4739, 7
  %v4741 = vsub.s32 0, %v4740
  %v4742 = vrot.slane %v4737, %v4741
  %v4748 = vunpack.c.l.b16 %v4733
  %v4749 = vunpack.c.l.b16 %v4734
  %v4750 = vunpack.c.l.b16 %v4735
  %v4751 = vunpack.c.l.b16 %v4736
  %v4752 = vpack.c.b16 %v4749, %v4748
  %v4753 = vpack.c.b16 %v4751, %v4750
  %v4757 = vsel %vm66, %v4725, 0
  %v4760 = vsel %vm66, %v4726, 0
  %v4763 = vsel %vm66, %v4727, 0
  %v4766 = vsel %vm66, %v4728, 0
  %v4769 = vsel %vm66, %v4729, 0
  %v4772 = vsel %vm66, %v4730, 0
  %v4775 = vsel %vm66, %v4731, 0
  %v4778 = vsel %vm66, %v4732, 0
  %4780 = vmatprep.subr.bf16.mxu0 0
  %4781 = vmatpush1.bf16.msra.mxu0 %v4752
  %4782 = vmatprep.subr.bf16.mxu0 0
  %4783 = vmatpush1.bf16.msra.mxu0 %v4753
  %4784 = vmatprep.subr.bf16.mxu0 0
  %4785 = vmatpush1.bf16.msra.mxu0 0
  %4786 = vmatprep.subr.bf16.mxu0 0
  %4787 = vmatpush1.bf16.msra.mxu0 0
  %4788 = vmatprep.subr.bf16.mxu0 0
  %4789 = vmatpush1.bf16.msra.mxu0 0
  %4790 = vmatprep.subr.bf16.mxu0 0
  %4791 = vmatpush1.bf16.msra.mxu0 0
  %4792 = vmatprep.subr.bf16.mxu0 0
  %4793 = vmatpush1.bf16.msra.mxu0 0
  %4794 = vmatprep.subr.bf16.mxu0 0
  %4795 = vmatpush1.bf16.msra.mxu0 0
  %4796 = vmatprep.subr.bf16.mxu0 0
  %4797 = vmatpush1.bf16.msra.mxu0 0
  %4798 = vmatprep.subr.bf16.mxu0 0
  %4799 = vmatpush1.bf16.msra.mxu0 0
  %4800 = vmatprep.subr.bf16.mxu0 0
  %4801 = vmatpush1.bf16.msra.mxu0 0
  %4802 = vmatprep.subr.bf16.mxu0 0
  %4803 = vmatpush1.bf16.msra.mxu0 0
  %4804 = vmatprep.subr.bf16.mxu0 0
  %4805 = vmatpush1.bf16.msra.mxu0 0
  %4806 = vmatprep.subr.bf16.mxu0 0
  %4807 = vmatpush1.bf16.msra.mxu0 0
  %4808 = vmatprep.subr.bf16.mxu0 0
  %4809 = vmatpush1.bf16.msra.mxu0 0
  %4810 = vmatprep.subr.bf16.mxu0 0
  %4811 = vmatpush1.bf16.msra.mxu0 0
  %4812 = vmatprep.mubr.bf16.mxu0 0
  %4813 = vmatmul.mubr.bf16.gmra.mrb[0].mxu0 %v4757
  %v4814 = vpop.f32.mrb[0].mxu0
  %v4815 = vadd.f32 %v4742, %v4814
  %v4816 = vpop.f32.mrb[0].mxu0
  %v4817 = vpop.f32.mrb[0].mxu0
  %v4818 = vadd.f32 %v4742, %v4817
  %v4819 = vpop.f32.mrb[0].mxu0
  %4820 = vmatprep.mubr.bf16.mxu0 0
  %4821 = vmatmul.mubr.bf16.gmra.mrb[0].mxu0 %v4760
  %v4822 = vpop.f32.mrb[0].mxu0
  %v4823 = vadd.f32 %v4742, %v4822
  %v4824 = vpop.f32.mrb[0].mxu0
  %v4825 = vpop.f32.mrb[0].mxu0
  %v4826 = vadd.f32 %v4742, %v4825
  %v4827 = vpop.f32.mrb[0].mxu0
  %4828 = vmatprep.mubr.bf16.mxu0 0
  %4829 = vmatmul.mubr.bf16.gmra.mrb[0].mxu0 %v4763
  %v4830 = vpop.f32.mrb[0].mxu0
  %v4831 = vadd.f32 %v4742, %v4830
  %v4832 = vpop.f32.mrb[0].mxu0
  %v4833 = vpop.f32.mrb[0].mxu0
  %v4834 = vadd.f32 %v4742, %v4833
  %v4835 = vpop.f32.mrb[0].mxu0
  %4836 = vmatprep.mubr.bf16.mxu0 0
  %4837 = vmatmul.mubr.bf16.gmra.mrb[0].mxu0 %v4766
  %v4838 = vpop.f32.mrb[0].mxu0
  %v4839 = vadd.f32 %v4742, %v4838
  %v4840 = vpop.f32.mrb[0].mxu0
  %v4841 = vpop.f32.mrb[0].mxu0
  %v4842 = vadd.f32 %v4742, %v4841
  %v4843 = vpop.f32.mrb[0].mxu0
  %4844 = vmatprep.mubr.bf16.mxu0 0
  %4845 = vmatmul.mubr.bf16.gmra.mrb[0].mxu0 %v4769
  %v4846 = vpop.f32.mrb[0].mxu0
  %v4847 = vadd.f32 %v4742, %v4846
  %v4848 = vpop.f32.mrb[0].mxu0
  %v4849 = vpop.f32.mrb[0].mxu0
  %v4850 = vadd.f32 %v4742, %v4849
  %v4851 = vpop.f32.mrb[0].mxu0
  %4852 = vmatprep.mubr.bf16.mxu0 0
  %4853 = vmatmul.mubr.bf16.gmra.mrb[0].mxu0 %v4772
  %v4854 = vpop.f32.mrb[0].mxu0
  %v4855 = vadd.f32 %v4742, %v4854
  %v4856 = vpop.f32.mrb[0].mxu0
  %v4857 = vpop.f32.mrb[0].mxu0
  %v4858 = vadd.f32 %v4742, %v4857
  %v4859 = vpop.f32.mrb[0].mxu0
  %4860 = vmatprep.mubr.bf16.mxu0 0
  %4861 = vmatmul.mubr.bf16.gmra.mrb[0].mxu0 %v4775
  %v4862 = vpop.f32.mrb[0].mxu0
  %v4863 = vadd.f32 %v4742, %v4862
  %v4864 = vpop.f32.mrb[0].mxu0
  %v4865 = vpop.f32.mrb[0].mxu0
  %v4866 = vadd.f32 %v4742, %v4865
  %v4867 = vpop.f32.mrb[0].mxu0
  %4868 = vmatprep.mubr.bf16.mxu0 0
  %4869 = vmatmul.mubr.bf16.gmra.mrb[0].mxu0 %v4778
  %v4870 = vpop.f32.mrb[0].mxu0
  %v4871 = vadd.f32 %v4742, %v4870
  %v4872 = vpop.f32.mrb[0].mxu0
  %v4873 = vpop.f32.mrb[0].mxu0
  %v4874 = vadd.f32 %v4742, %v4873
  %v4875 = vpop.f32.mrb[0].mxu0
  %4876 = vdwg.mxu0
  %v4877 = vadd.f32 %v50, %v4815
  %v4878 = vadd.f32 %v51, %v4818
  %v4879 = vadd.f32 %v52, %v4823
  %v4880 = vadd.f32 %v53, %v4826
  %v4881 = vadd.f32 %v54, %v4831
  %v4882 = vadd.f32 %v55, %v4834
  %v4883 = vadd.f32 %v56, %v4839
  %v4884 = vadd.f32 %v57, %v4842
  %v4885 = vadd.f32 %v58, %v4847
  %v4886 = vadd.f32 %v59, %v4850
  %v4887 = vadd.f32 %v60, %v4855
  %v4888 = vadd.f32 %v61, %v4858
  %v4889 = vadd.f32 %v62, %v4863
  %v4890 = vadd.f32 %v63, %v4866
  %v4891 = vadd.f32 %v64, %v4871
  %v4892 = vadd.f32 %v65, %v4874
  %v4893 = vsel %vm66, %v4877, 0.0
  %4894 = vadd.xlane.f32.xlu0 %v4893
  %v4895 = vpop.xlane.xlu0 %4894
  %v4896 = vsel %vm66, %v4878, 0.0
  %4897 = vadd.xlane.f32.xlu0 %v4896
  %v4898 = vpop.xlane.xlu0 %4897
  %v4899 = vsel %vm66, %v4879, 0.0
  %4900 = vadd.xlane.f32.xlu0 %v4899
  %v4901 = vpop.xlane.xlu0 %4900
  %v4902 = vsel %vm66, %v4880, 0.0
  %4903 = vadd.xlane.f32.xlu0 %v4902
  %v4904 = vpop.xlane.xlu0 %4903
  %v4905 = vsel %vm66, %v4881, 0.0
  %4906 = vadd.xlane.f32.xlu0 %v4905
  %v4907 = vpop.xlane.xlu0 %4906
  %v4908 = vsel %vm66, %v4882, 0.0
  %4909 = vadd.xlane.f32.xlu0 %v4908
  %v4910 = vpop.xlane.xlu0 %4909
  %v4911 = vsel %vm66, %v4883, 0.0
  %4912 = vadd.xlane.f32.xlu0 %v4911
  %v4913 = vpop.xlane.xlu0 %4912
  %v4914 = vsel %vm66, %v4884, 0.0
  %4915 = vadd.xlane.f32.xlu0 %v4914
  %v4916 = vpop.xlane.xlu0 %4915
  %v4917 = vsel %vm66, %v4885, 0.0
  %4918 = vadd.xlane.f32.xlu0 %v4917
  %v4919 = vpop.xlane.xlu0 %4918
  %v4920 = vsel %vm66, %v4886, 0.0
  %4921 = vadd.xlane.f32.xlu0 %v4920
  %v4922 = vpop.xlane.xlu0 %4921
  %v4923 = vsel %vm66, %v4887, 0.0
  %4924 = vadd.xlane.f32.xlu0 %v4923
  %v4925 = vpop.xlane.xlu0 %4924
  %v4926 = vsel %vm66, %v4888, 0.0
  %4927 = vadd.xlane.f32.xlu0 %v4926
  %v4928 = vpop.xlane.xlu0 %4927
  %v4929 = vsel %vm66, %v4889, 0.0
  %4930 = vadd.xlane.f32.xlu0 %v4929
  %v4931 = vpop.xlane.xlu0 %4930
  %v4932 = vsel %vm66, %v4890, 0.0
  %4933 = vadd.xlane.f32.xlu0 %v4932
  %v4934 = vpop.xlane.xlu0 %4933
  %v4935 = vsel %vm66, %v4891, 0.0
  %4936 = vadd.xlane.f32.xlu0 %v4935
  %v4937 = vpop.xlane.xlu0 %4936
  %v4938 = vsel %vm66, %v4892, 0.0
  %4939 = vadd.xlane.f32.xlu0 %v4938
  %v4940 = vpop.xlane.xlu0 %4939
  %v4941 = vmul.f32 %v4895, %v115
  %v4942 = vmul.f32 %v4898, %v115
  %v4943 = vmul.f32 %v4901, %v115
  %v4944 = vmul.f32 %v4904, %v115
  %v4945 = vmul.f32 %v4907, %v115
  %v4946 = vmul.f32 %v4910, %v115
  %v4947 = vmul.f32 %v4913, %v115
  %v4948 = vmul.f32 %v4916, %v115
  %v4949 = vmul.f32 %v4919, %v115
  %v4950 = vmul.f32 %v4922, %v115
  %v4951 = vmul.f32 %v4925, %v115
  %v4952 = vmul.f32 %v4928, %v115
  %v4953 = vmul.f32 %v4931, %v115
  %v4954 = vmul.f32 %v4934, %v115
  %v4955 = vmul.f32 %v4937, %v115
  %v4956 = vmul.f32 %v4940, %v115
  %v4957 = vsub.f32 %v4877, %v4941
  %v4958 = vsub.f32 %v4878, %v4942
  %v4959 = vsub.f32 %v4879, %v4943
  %v4960 = vsub.f32 %v4880, %v4944
  %v4961 = vsub.f32 %v4881, %v4945
  %v4962 = vsub.f32 %v4882, %v4946
  %v4963 = vsub.f32 %v4883, %v4947
  %v4964 = vsub.f32 %v4884, %v4948
  %v4965 = vsub.f32 %v4885, %v4949
  %v4966 = vsub.f32 %v4886, %v4950
  %v4967 = vsub.f32 %v4887, %v4951
  %v4968 = vsub.f32 %v4888, %v4952
  %v4969 = vsub.f32 %v4889, %v4953
  %v4970 = vsub.f32 %v4890, %v4954
  %v4971 = vsub.f32 %v4891, %v4955
  %v4972 = vsub.f32 %v4892, %v4956
  %v4973 = vmul.f32 %v4957, %v4957
  %v4974 = vmul.f32 %v4958, %v4958
  %v4975 = vmul.f32 %v4959, %v4959
  %v4976 = vmul.f32 %v4960, %v4960
  %v4977 = vmul.f32 %v4961, %v4961
  %v4978 = vmul.f32 %v4962, %v4962
  %v4979 = vmul.f32 %v4963, %v4963
  %v4980 = vmul.f32 %v4964, %v4964
  %v4981 = vmul.f32 %v4965, %v4965
  %v4982 = vmul.f32 %v4966, %v4966
  %v4983 = vmul.f32 %v4967, %v4967
  %v4984 = vmul.f32 %v4968, %v4968
  %v4985 = vmul.f32 %v4969, %v4969
  %v4986 = vmul.f32 %v4970, %v4970
  %v4987 = vmul.f32 %v4971, %v4971
  %v4988 = vmul.f32 %v4972, %v4972
  %v4989 = vsel %vm66, %v4973, 0.0
  %4990 = vadd.xlane.f32.xlu0 %v4989
  %v4991 = vpop.xlane.xlu0 %4990
  %v4992 = vsel %vm66, %v4974, 0.0
  %4993 = vadd.xlane.f32.xlu0 %v4992
  %v4994 = vpop.xlane.xlu0 %4993
  %v4995 = vsel %vm66, %v4975, 0.0
  %4996 = vadd.xlane.f32.xlu0 %v4995
  %v4997 = vpop.xlane.xlu0 %4996
  %v4998 = vsel %vm66, %v4976, 0.0
  %4999 = vadd.xlane.f32.xlu0 %v4998
  %v5000 = vpop.xlane.xlu0 %4999
  %v5001 = vsel %vm66, %v4977, 0.0
  %5002 = vadd.xlane.f32.xlu0 %v5001
  %v5003 = vpop.xlane.xlu0 %5002
  %v5004 = vsel %vm66, %v4978, 0.0
  %5005 = vadd.xlane.f32.xlu0 %v5004
  %v5006 = vpop.xlane.xlu0 %5005
  %v5007 = vsel %vm66, %v4979, 0.0
  %5008 = vadd.xlane.f32.xlu0 %v5007
  %v5009 = vpop.xlane.xlu0 %5008
  %v5010 = vsel %vm66, %v4980, 0.0
  %5011 = vadd.xlane.f32.xlu0 %v5010
  %v5012 = vpop.xlane.xlu0 %5011
  %v5013 = vsel %vm66, %v4981, 0.0
  %5014 = vadd.xlane.f32.xlu0 %v5013
  %v5015 = vpop.xlane.xlu0 %5014
  %v5016 = vsel %vm66, %v4982, 0.0
  %5017 = vadd.xlane.f32.xlu0 %v5016
  %v5018 = vpop.xlane.xlu0 %5017
  %v5019 = vsel %vm66, %v4983, 0.0
  %5020 = vadd.xlane.f32.xlu0 %v5019
  %v5021 = vpop.xlane.xlu0 %5020
  %v5022 = vsel %vm66, %v4984, 0.0
  %5023 = vadd.xlane.f32.xlu0 %v5022
  %v5024 = vpop.xlane.xlu0 %5023
  %v5025 = vsel %vm66, %v4985, 0.0
  %5026 = vadd.xlane.f32.xlu0 %v5025
  %v5027 = vpop.xlane.xlu0 %5026
  %v5028 = vsel %vm66, %v4986, 0.0
  %5029 = vadd.xlane.f32.xlu0 %v5028
  %v5030 = vpop.xlane.xlu0 %5029
  %v5031 = vsel %vm66, %v4987, 0.0
  %5032 = vadd.xlane.f32.xlu0 %v5031
  %v5033 = vpop.xlane.xlu0 %5032
  %v5034 = vsel %vm66, %v4988, 0.0
  %5035 = vadd.xlane.f32.xlu0 %v5034
  %v5036 = vpop.xlane.xlu0 %5035
  %v5037 = vmul.f32 %v4991, %v115
  %v5038 = vmul.f32 %v4994, %v115
  %v5039 = vmul.f32 %v4997, %v115
  %v5040 = vmul.f32 %v5000, %v115
  %v5041 = vmul.f32 %v5003, %v115
  %v5042 = vmul.f32 %v5006, %v115
  %v5043 = vmul.f32 %v5009, %v115
  %v5044 = vmul.f32 %v5012, %v115
  %v5045 = vmul.f32 %v5015, %v115
  %v5046 = vmul.f32 %v5018, %v115
  %v5047 = vmul.f32 %v5021, %v115
  %v5048 = vmul.f32 %v5024, %v115
  %v5049 = vmul.f32 %v5027, %v115
  %v5050 = vmul.f32 %v5030, %v115
  %v5051 = vmul.f32 %v5033, %v115
  %v5052 = vmul.f32 %v5036, %v115
  %v5053 = vadd.f32 %v5037, 1e-05
  %v5054 = vadd.f32 %v5038, 1e-05
  %v5055 = vadd.f32 %v5039, 1e-05
  %v5056 = vadd.f32 %v5040, 1e-05
  %v5057 = vadd.f32 %v5041, 1e-05
  %v5058 = vadd.f32 %v5042, 1e-05
  %v5059 = vadd.f32 %v5043, 1e-05
  %v5060 = vadd.f32 %v5044, 1e-05
  %v5061 = vadd.f32 %v5045, 1e-05
  %v5062 = vadd.f32 %v5046, 1e-05
  %v5063 = vadd.f32 %v5047, 1e-05
  %v5064 = vadd.f32 %v5048, 1e-05
  %v5065 = vadd.f32 %v5049, 1e-05
  %v5066 = vadd.f32 %v5050, 1e-05
  %v5067 = vadd.f32 %v5051, 1e-05
  %v5068 = vadd.f32 %v5052, 1e-05
  %v5069 = vrsqrt.pop %v5053
  %v5070 = vrsqrt.pop %v5054
  %v5071 = vrsqrt.pop %v5055
  %v5072 = vrsqrt.pop %v5056
  %v5073 = vrsqrt.pop %v5057
  %v5074 = vrsqrt.pop %v5058
  %v5075 = vrsqrt.pop %v5059
  %v5076 = vrsqrt.pop %v5060
  %v5077 = vrsqrt.pop %v5061
  %v5078 = vrsqrt.pop %v5062
  %v5079 = vrsqrt.pop %v5063
  %v5080 = vrsqrt.pop %v5064
  %v5081 = vrsqrt.pop %v5065
  %v5082 = vrsqrt.pop %v5066
  %v5083 = vrsqrt.pop %v5067
  %v5084 = vrsqrt.pop %v5068
  %v5085 = vmul.f32 %v4957, %v5069
  %v5086 = vmul.f32 %v4958, %v5070
  %v5087 = vmul.f32 %v4959, %v5071
  %v5088 = vmul.f32 %v4960, %v5072
  %v5089 = vmul.f32 %v4961, %v5073
  %v5090 = vmul.f32 %v4962, %v5074
  %v5091 = vmul.f32 %v4963, %v5075
  %v5092 = vmul.f32 %v4964, %v5076
  %v5093 = vmul.f32 %v4965, %v5077
  %v5094 = vmul.f32 %v4966, %v5078
  %v5095 = vmul.f32 %v4967, %v5079
  %v5096 = vmul.f32 %v4968, %v5080
  %v5097 = vmul.f32 %v4969, %v5081
  %v5098 = vmul.f32 %v4970, %v5082
  %v5099 = vmul.f32 %v4971, %v5083
  %v5100 = vmul.f32 %v4972, %v5084
  %v5101 = vld [vmem:[%s8] sm:$0x1]
  %v5103 = vlaneseq
  %v5104 = vshrl.u32 %v5103, 7
  %v5105 = vsub.s32 0, %v5104
  %v5106 = vrot.slane %v5101, %v5105
  %v5108 = vmul.f32 %v5085, %v5106
  %v5109 = vmul.f32 %v5086, %v5106
  %v5110 = vmul.f32 %v5087, %v5106
  %v5111 = vmul.f32 %v5088, %v5106
  %v5112 = vmul.f32 %v5089, %v5106
  %v5113 = vmul.f32 %v5090, %v5106
  %v5114 = vmul.f32 %v5091, %v5106
  %v5115 = vmul.f32 %v5092, %v5106
  %v5116 = vmul.f32 %v5093, %v5106
  %v5117 = vmul.f32 %v5094, %v5106
  %v5118 = vmul.f32 %v5095, %v5106
  %v5119 = vmul.f32 %v5096, %v5106
  %v5120 = vmul.f32 %v5097, %v5106
  %v5121 = vmul.f32 %v5098, %v5106
  %v5122 = vmul.f32 %v5099, %v5106
  %v5123 = vmul.f32 %v5100, %v5106
  %v5124 = vld [vmem:[%s9] sm:$0x1]
  %v5126 = vlaneseq
  %v5127 = vshrl.u32 %v5126, 7
  %v5128 = vsub.s32 0, %v5127
  %v5129 = vrot.slane %v5124, %v5128
  %v5131 = vadd.f32 %v5108, %v5129
  %v5132 = vadd.f32 %v5109, %v5129
  %v5133 = vadd.f32 %v5110, %v5129
  %v5134 = vadd.f32 %v5111, %v5129
  %v5135 = vadd.f32 %v5112, %v5129
  %v5136 = vadd.f32 %v5113, %v5129
  %v5137 = vadd.f32 %v5114, %v5129
  %v5138 = vadd.f32 %v5115, %v5129
  %v5139 = vadd.f32 %v5116, %v5129
  %v5140 = vadd.f32 %v5117, %v5129
  %v5141 = vadd.f32 %v5118, %v5129
  %v5142 = vadd.f32 %v5119, %v5129
  %v5143 = vadd.f32 %v5120, %v5129
  %v5144 = vadd.f32 %v5121, %v5129
  %v5145 = vadd.f32 %v5122, %v5129
  %v5146 = vadd.f32 %v5123, %v5129
  %v5147 = vpack.c.bf16 %v5132, %v5131
  %v5148 = vpack.c.bf16 %v5134, %v5133
  %v5149 = vpack.c.bf16 %v5136, %v5135
  %v5150 = vpack.c.bf16 %v5138, %v5137
  %v5151 = vpack.c.bf16 %v5140, %v5139
  %v5152 = vpack.c.bf16 %v5142, %v5141
  %v5153 = vpack.c.bf16 %v5144, %v5143
  %v5154 = vpack.c.bf16 %v5146, %v5145
  %v5155 = vld [vmem:[%s10] sm:$0xf]
  %v5156 = vld [vmem:[%s10 + $0x4] sm:$0xf]
  %v5157 = vld [vmem:[%s10 + $0x8] sm:$0xf]
  %v5158 = vld [vmem:[%s10 + $0xc] sm:$0xf]
  %v5159 = vld [vmem:[%s11] sm:$0x1]
  %v5161 = vlaneseq
  %v5162 = vshrl.u32 %v5161, 7
  %v5163 = vsub.s32 0, %v5162
  %v5164 = vrot.slane %v5159, %v5163
  %v5170 = vunpack.c.l.b16 %v5155
  %v5171 = vunpack.c.l.b16 %v5156
  %v5172 = vunpack.c.l.b16 %v5157
  %v5173 = vunpack.c.l.b16 %v5158
  %v5174 = vpack.c.b16 %v5171, %v5170
  %v5175 = vpack.c.b16 %v5173, %v5172
  %v5179 = vsel %vm66, %v5147, 0
  %v5182 = vsel %vm66, %v5148, 0
  %v5185 = vsel %vm66, %v5149, 0
  %v5188 = vsel %vm66, %v5150, 0
  %v5191 = vsel %vm66, %v5151, 0
  %v5194 = vsel %vm66, %v5152, 0
  %v5197 = vsel %vm66, %v5153, 0
  %v5200 = vsel %vm66, %v5154, 0
  %5202 = vmatprep.subr.bf16.mxu0 0
  %5203 = vmatpush1.bf16.msra.mxu0 %v5174
  %5204 = vmatprep.subr.bf16.mxu0 0
  %5205 = vmatpush1.bf16.msra.mxu0 %v5175
  %5206 = vmatprep.subr.bf16.mxu0 0
  %5207 = vmatpush1.bf16.msra.mxu0 0
  %5208 = vmatprep.subr.bf16.mxu0 0
  %5209 = vmatpush1.bf16.msra.mxu0 0
  %5210 = vmatprep.subr.bf16.mxu0 0
  %5211 = vmatpush1.bf16.msra.mxu0 0
  %5212 = vmatprep.subr.bf16.mxu0 0
  %5213 = vmatpush1.bf16.msra.mxu0 0
  %5214 = vmatprep.subr.bf16.mxu0 0
  %5215 = vmatpush1.bf16.msra.mxu0 0
  %5216 = vmatprep.subr.bf16.mxu0 0
  %5217 = vmatpush1.bf16.msra.mxu0 0
  %5218 = vmatprep.subr.bf16.mxu0 0
  %5219 = vmatpush1.bf16.msra.mxu0 0
  %5220 = vmatprep.subr.bf16.mxu0 0
  %5221 = vmatpush1.bf16.msra.mxu0 0
  %5222 = vmatprep.subr.bf16.mxu0 0
  %5223 = vmatpush1.bf16.msra.mxu0 0
  %5224 = vmatprep.subr.bf16.mxu0 0
  %5225 = vmatpush1.bf16.msra.mxu0 0
  %5226 = vmatprep.subr.bf16.mxu0 0
  %5227 = vmatpush1.bf16.msra.mxu0 0
  %5228 = vmatprep.subr.bf16.mxu0 0
  %5229 = vmatpush1.bf16.msra.mxu0 0
  %5230 = vmatprep.subr.bf16.mxu0 0
  %5231 = vmatpush1.bf16.msra.mxu0 0
  %5232 = vmatprep.subr.bf16.mxu0 0
  %5233 = vmatpush1.bf16.msra.mxu0 0
  %5234 = vmatprep.mubr.bf16.mxu0 0
  %5235 = vmatmul.mubr.bf16.gmra.mrb[0].mxu0 %v5179
  %v5236 = vpop.f32.mrb[0].mxu0
  %v5237 = vadd.f32 %v5164, %v5236
  %v5238 = vpop.f32.mrb[0].mxu0
  %v5239 = vpop.f32.mrb[0].mxu0
  %v5240 = vadd.f32 %v5164, %v5239
  %v5241 = vpop.f32.mrb[0].mxu0
  %5242 = vmatprep.mubr.bf16.mxu0 0
  %5243 = vmatmul.mubr.bf16.gmra.mrb[0].mxu0 %v5182
  %v5244 = vpop.f32.mrb[0].mxu0
  %v5245 = vadd.f32 %v5164, %v5244
  %v5246 = vpop.f32.mrb[0].mxu0
  %v5247 = vpop.f32.mrb[0].mxu0
  %v5248 = vadd.f32 %v5164, %v5247
  %v5249 = vpop.f32.mrb[0].mxu0
  %5250 = vmatprep.mubr.bf16.mxu0 0
  %5251 = vmatmul.mubr.bf16.gmra.mrb[0].mxu0 %v5185
  %v5252 = vpop.f32.mrb[0].mxu0
  %v5253 = vadd.f32 %v5164, %v5252
  %v5254 = vpop.f32.mrb[0].mxu0
  %v5255 = vpop.f32.mrb[0].mxu0
  %v5256 = vadd.f32 %v5164, %v5255
  %v5257 = vpop.f32.mrb[0].mxu0
  %5258 = vmatprep.mubr.bf16.mxu0 0
  %5259 = vmatmul.mubr.bf16.gmra.mrb[0].mxu0 %v5188
  %v5260 = vpop.f32.mrb[0].mxu0
  %v5261 = vadd.f32 %v5164, %v5260
  %v5262 = vpop.f32.mrb[0].mxu0
  %v5263 = vpop.f32.mrb[0].mxu0
  %v5264 = vadd.f32 %v5164, %v5263
  %v5265 = vpop.f32.mrb[0].mxu0
  %5266 = vmatprep.mubr.bf16.mxu0 0
  %5267 = vmatmul.mubr.bf16.gmra.mrb[0].mxu0 %v5191
  %v5268 = vpop.f32.mrb[0].mxu0
  %v5269 = vadd.f32 %v5164, %v5268
  %v5270 = vpop.f32.mrb[0].mxu0
  %v5271 = vpop.f32.mrb[0].mxu0
  %v5272 = vadd.f32 %v5164, %v5271
  %v5273 = vpop.f32.mrb[0].mxu0
  %5274 = vmatprep.mubr.bf16.mxu0 0
  %5275 = vmatmul.mubr.bf16.gmra.mrb[0].mxu0 %v5194
  %v5276 = vpop.f32.mrb[0].mxu0
  %v5277 = vadd.f32 %v5164, %v5276
  %v5278 = vpop.f32.mrb[0].mxu0
  %v5279 = vpop.f32.mrb[0].mxu0
  %v5280 = vadd.f32 %v5164, %v5279
  %v5281 = vpop.f32.mrb[0].mxu0
  %5282 = vmatprep.mubr.bf16.mxu0 0
  %5283 = vmatmul.mubr.bf16.gmra.mrb[0].mxu0 %v5197
  %v5284 = vpop.f32.mrb[0].mxu0
  %v5285 = vadd.f32 %v5164, %v5284
  %v5286 = vpop.f32.mrb[0].mxu0
  %v5287 = vpop.f32.mrb[0].mxu0
  %v5288 = vadd.f32 %v5164, %v5287
  %v5289 = vpop.f32.mrb[0].mxu0
  %5290 = vmatprep.mubr.bf16.mxu0 0
  %5291 = vmatmul.mubr.bf16.gmra.mrb[0].mxu0 %v5200
  %v5292 = vpop.f32.mrb[0].mxu0
  %v5293 = vadd.f32 %v5164, %v5292
  %v5294 = vpop.f32.mrb[0].mxu0
  %v5295 = vpop.f32.mrb[0].mxu0
  %v5296 = vadd.f32 %v5164, %v5295
  %v5297 = vpop.f32.mrb[0].mxu0
  %5298 = vdwg.mxu0
  %v5299 = vmul.f32 %v5237, 0.5
  %v5300 = vmul.f32 %v5240, 0.5
  %v5301 = vmul.f32 %v5245, 0.5
  %v5302 = vmul.f32 %v5248, 0.5
  %v5303 = vmul.f32 %v5253, 0.5
  %v5304 = vmul.f32 %v5256, 0.5
  %v5305 = vmul.f32 %v5261, 0.5
  %v5306 = vmul.f32 %v5264, 0.5
  %v5307 = vmul.f32 %v5269, 0.5
  %v5308 = vmul.f32 %v5272, 0.5
  %v5309 = vmul.f32 %v5277, 0.5
  %v5310 = vmul.f32 %v5280, 0.5
  %v5311 = vmul.f32 %v5285, 0.5
  %v5312 = vmul.f32 %v5288, 0.5
  %v5313 = vmul.f32 %v5293, 0.5
  %v5314 = vmul.f32 %v5296, 0.5
  %v5315 = vmul.f32 %v5237, 0.044715
  %v5316 = vmul.f32 %v5240, 0.044715
  %v5317 = vmul.f32 %v5245, 0.044715
  %v5318 = vmul.f32 %v5248, 0.044715
  %v5319 = vmul.f32 %v5253, 0.044715
  %v5320 = vmul.f32 %v5256, 0.044715
  %v5321 = vmul.f32 %v5261, 0.044715
  %v5322 = vmul.f32 %v5264, 0.044715
  %v5323 = vmul.f32 %v5269, 0.044715
  %v5324 = vmul.f32 %v5272, 0.044715
  %v5325 = vmul.f32 %v5277, 0.044715
  %v5326 = vmul.f32 %v5280, 0.044715
  %v5327 = vmul.f32 %v5285, 0.044715
  %v5328 = vmul.f32 %v5288, 0.044715
  %v5329 = vmul.f32 %v5293, 0.044715
  %v5330 = vmul.f32 %v5296, 0.044715
  %v5331 = vmul.f32 %v5315, %v5237
  %v5332 = vmul.f32 %v5316, %v5240
  %v5333 = vmul.f32 %v5317, %v5245
  %v5334 = vmul.f32 %v5318, %v5248
  %v5335 = vmul.f32 %v5319, %v5253
  %v5336 = vmul.f32 %v5320, %v5256
  %v5337 = vmul.f32 %v5321, %v5261
  %v5338 = vmul.f32 %v5322, %v5264
  %v5339 = vmul.f32 %v5323, %v5269
  %v5340 = vmul.f32 %v5324, %v5272
  %v5341 = vmul.f32 %v5325, %v5277
  %v5342 = vmul.f32 %v5326, %v5280
  %v5343 = vmul.f32 %v5327, %v5285
  %v5344 = vmul.f32 %v5328, %v5288
  %v5345 = vmul.f32 %v5329, %v5293
  %v5346 = vmul.f32 %v5330, %v5296
  %v5347 = vmul.f32 %v5331, %v5237
  %v5348 = vmul.f32 %v5332, %v5240
  %v5349 = vmul.f32 %v5333, %v5245
  %v5350 = vmul.f32 %v5334, %v5248
  %v5351 = vmul.f32 %v5335, %v5253
  %v5352 = vmul.f32 %v5336, %v5256
  %v5353 = vmul.f32 %v5337, %v5261
  %v5354 = vmul.f32 %v5338, %v5264
  %v5355 = vmul.f32 %v5339, %v5269
  %v5356 = vmul.f32 %v5340, %v5272
  %v5357 = vmul.f32 %v5341, %v5277
  %v5358 = vmul.f32 %v5342, %v5280
  %v5359 = vmul.f32 %v5343, %v5285
  %v5360 = vmul.f32 %v5344, %v5288
  %v5361 = vmul.f32 %v5345, %v5293
  %v5362 = vmul.f32 %v5346, %v5296
  %v5363 = vadd.f32 %v5237, %v5347
  %v5364 = vadd.f32 %v5240, %v5348
  %v5365 = vadd.f32 %v5245, %v5349
  %v5366 = vadd.f32 %v5248, %v5350
  %v5367 = vadd.f32 %v5253, %v5351
  %v5368 = vadd.f32 %v5256, %v5352
  %v5369 = vadd.f32 %v5261, %v5353
  %v5370 = vadd.f32 %v5264, %v5354
  %v5371 = vadd.f32 %v5269, %v5355
  %v5372 = vadd.f32 %v5272, %v5356
  %v5373 = vadd.f32 %v5277, %v5357
  %v5374 = vadd.f32 %v5280, %v5358
  %v5375 = vadd.f32 %v5285, %v5359
  %v5376 = vadd.f32 %v5288, %v5360
  %v5377 = vadd.f32 %v5293, %v5361
  %v5378 = vadd.f32 %v5296, %v5362
  %v5379 = vmul.f32 %v5363, 0.7978846
  %v5380 = vmul.f32 %v5364, 0.7978846
  %v5381 = vmul.f32 %v5365, 0.7978846
  %v5382 = vmul.f32 %v5366, 0.7978846
  %v5383 = vmul.f32 %v5367, 0.7978846
  %v5384 = vmul.f32 %v5368, 0.7978846
  %v5385 = vmul.f32 %v5369, 0.7978846
  %v5386 = vmul.f32 %v5370, 0.7978846
  %v5387 = vmul.f32 %v5371, 0.7978846
  %v5388 = vmul.f32 %v5372, 0.7978846
  %v5389 = vmul.f32 %v5373, 0.7978846
  %v5390 = vmul.f32 %v5374, 0.7978846
  %v5391 = vmul.f32 %v5375, 0.7978846
  %v5392 = vmul.f32 %v5376, 0.7978846
  %v5393 = vmul.f32 %v5377, 0.7978846
  %v5394 = vmul.f32 %v5378, 0.7978846
  %v5395 = vtanh.pop %v5379
  %v5396 = vtanh.pop %v5380
  %v5397 = vtanh.pop %v5381
  %v5398 = vtanh.pop %v5382
  %v5399 = vtanh.pop %v5383
  %v5400 = vtanh.pop %v5384
  %v5401 = vtanh.pop %v5385
  %v5402 = vtanh.pop %v5386
  %v5403 = vtanh.pop %v5387
  %v5404 = vtanh.pop %v5388
  %v5405 = vtanh.pop %v5389
  %v5406 = vtanh.pop %v5390
  %v5407 = vtanh.pop %v5391
  %v5408 = vtanh.pop %v5392
  %v5409 = vtanh.pop %v5393
  %v5410 = vtanh.pop %v5394
  %v5411 = vadd.f32 %v5395, 1.0
  %v5412 = vadd.f32 %v5396, 1.0
  %v5413 = vadd.f32 %v5397, 1.0
  %v5414 = vadd.f32 %v5398, 1.0
  %v5415 = vadd.f32 %v5399, 1.0
  %v5416 = vadd.f32 %v5400, 1.0
  %v5417 = vadd.f32 %v5401, 1.0
  %v5418 = vadd.f32 %v5402, 1.0
  %v5419 = vadd.f32 %v5403, 1.0
  %v5420 = vadd.f32 %v5404, 1.0
  %v5421 = vadd.f32 %v5405, 1.0
  %v5422 = vadd.f32 %v5406, 1.0
  %v5423 = vadd.f32 %v5407, 1.0
  %v5424 = vadd.f32 %v5408, 1.0
  %v5425 = vadd.f32 %v5409, 1.0
  %v5426 = vadd.f32 %v5410, 1.0
  %v5427 = vmul.f32 %v5299, %v5411
  %v5428 = vmul.f32 %v5300, %v5412
  %v5429 = vmul.f32 %v5301, %v5413
  %v5430 = vmul.f32 %v5302, %v5414
  %v5431 = vmul.f32 %v5303, %v5415
  %v5432 = vmul.f32 %v5304, %v5416
  %v5433 = vmul.f32 %v5305, %v5417
  %v5434 = vmul.f32 %v5306, %v5418
  %v5435 = vmul.f32 %v5307, %v5419
  %v5436 = vmul.f32 %v5308, %v5420
  %v5437 = vmul.f32 %v5309, %v5421
  %v5438 = vmul.f32 %v5310, %v5422
  %v5439 = vmul.f32 %v5311, %v5423
  %v5440 = vmul.f32 %v5312, %v5424
  %v5441 = vmul.f32 %v5313, %v5425
  %v5442 = vmul.f32 %v5314, %v5426
  %v5443 = vpack.c.bf16 %v5428, %v5427
  %v5444 = vpack.c.bf16 %v5430, %v5429
  %v5445 = vpack.c.bf16 %v5432, %v5431
  %v5446 = vpack.c.bf16 %v5434, %v5433
  %v5447 = vpack.c.bf16 %v5436, %v5435
  %v5448 = vpack.c.bf16 %v5438, %v5437
  %v5449 = vpack.c.bf16 %v5440, %v5439
  %v5450 = vpack.c.bf16 %v5442, %v5441
  %v5451 = vld [vmem:[%s12] sm:$0xf]
  %v5452 = vld [vmem:[%s12 + $0x4] sm:$0xf]
  %v5453 = vld [vmem:[%s12 + $0x8] sm:$0xf]
  %v5454 = vld [vmem:[%s12 + $0xc] sm:$0xf]
  %v5455 = vld [vmem:[%s12 + $0x10] sm:$0xf]
  %v5456 = vld [vmem:[%s12 + $0x14] sm:$0xf]
  %v5457 = vld [vmem:[%s12 + $0x18] sm:$0xf]
  %v5458 = vld [vmem:[%s12 + $0x1c] sm:$0xf]
  %v5459 = vld [vmem:[%s12 + $0x20] sm:$0xf]
  %v5460 = vld [vmem:[%s12 + $0x24] sm:$0xf]
  %v5461 = vld [vmem:[%s12 + $0x28] sm:$0xf]
  %v5462 = vld [vmem:[%s12 + $0x2c] sm:$0xf]
  %v5463 = vld [vmem:[%s12 + $0x30] sm:$0xf]
  %v5464 = vld [vmem:[%s12 + $0x34] sm:$0xf]
  %v5465 = vld [vmem:[%s12 + $0x38] sm:$0xf]
  %v5466 = vld [vmem:[%s12 + $0x3c] sm:$0xf]
  %v5467 = vld [vmem:[%s13] sm:$0x1]
  %v5469 = vlaneseq
  %v5470 = vshrl.u32 %v5469, 7
  %v5471 = vsub.s32 0, %v5470
  %v5472 = vrot.slane %v5467, %v5471
  %v5490 = vunpack.c.l.b16 %v5451
  %v5491 = vunpack.c.l.b16 %v5452
  %v5492 = vunpack.c.l.b16 %v5453
  %v5493 = vunpack.c.l.b16 %v5454
  %v5494 = vunpack.c.l.b16 %v5455
  %v5495 = vunpack.c.l.b16 %v5456
  %v5496 = vunpack.c.l.b16 %v5457
  %v5497 = vunpack.c.l.b16 %v5458
  %v5498 = vunpack.c.l.b16 %v5459
  %v5499 = vunpack.c.l.b16 %v5460
  %v5500 = vunpack.c.l.b16 %v5461
  %v5501 = vunpack.c.l.b16 %v5462
  %v5502 = vunpack.c.l.b16 %v5463
  %v5503 = vunpack.c.l.b16 %v5464
  %v5504 = vunpack.c.l.b16 %v5465
  %v5505 = vunpack.c.l.b16 %v5466
  %v5506 = vpack.c.b16 %v5491, %v5490
  %v5507 = vpack.c.b16 %v5493, %v5492
  %v5508 = vpack.c.b16 %v5495, %v5494
  %v5509 = vpack.c.b16 %v5497, %v5496
  %v5510 = vpack.c.b16 %v5499, %v5498
  %v5511 = vpack.c.b16 %v5501, %v5500
  %v5512 = vpack.c.b16 %v5503, %v5502
  %v5513 = vpack.c.b16 %v5505, %v5504
  %5522 = vmatprep.subr.bf16.mxu0 0
  %5523 = vmatpush1.bf16.msra.mxu0 %v5506
  %5524 = vmatprep.subr.bf16.mxu0 0
  %5525 = vmatpush1.bf16.msra.mxu0 %v5507
  %5526 = vmatprep.subr.bf16.mxu0 0
  %5527 = vmatpush1.bf16.msra.mxu0 %v5508
  %5528 = vmatprep.subr.bf16.mxu0 0
  %5529 = vmatpush1.bf16.msra.mxu0 %v5509
  %5530 = vmatprep.subr.bf16.mxu0 0
  %5531 = vmatpush1.bf16.msra.mxu0 %v5510
  %5532 = vmatprep.subr.bf16.mxu0 0
  %5533 = vmatpush1.bf16.msra.mxu0 %v5511
  %5534 = vmatprep.subr.bf16.mxu0 0
  %5535 = vmatpush1.bf16.msra.mxu0 %v5512
  %5536 = vmatprep.subr.bf16.mxu0 0
  %5537 = vmatpush1.bf16.msra.mxu0 %v5513
  %5538 = vmatprep.subr.bf16.mxu0 0
  %5539 = vmatpush1.bf16.msra.mxu0 0
  %5540 = vmatprep.subr.bf16.mxu0 0
  %5541 = vmatpush1.bf16.msra.mxu0 0
  %5542 = vmatprep.subr.bf16.mxu0 0
  %5543 = vmatpush1.bf16.msra.mxu0 0
  %5544 = vmatprep.subr.bf16.mxu0 0
  %5545 = vmatpush1.bf16.msra.mxu0 0
  %5546 = vmatprep.subr.bf16.mxu0 0
  %5547 = vmatpush1.bf16.msra.mxu0 0
  %5548 = vmatprep.subr.bf16.mxu0 0
  %5549 = vmatpush1.bf16.msra.mxu0 0
  %5550 = vmatprep.subr.bf16.mxu0 0
  %5551 = vmatpush1.bf16.msra.mxu0 0
  %5552 = vmatprep.subr.bf16.mxu0 0
  %5553 = vmatpush1.bf16.msra.mxu0 0
  %5554 = vmatprep.mubr.bf16.mxu0 0
  %5555 = vmatmul.mubr.bf16.gmra.mrb[0].mxu0 %v5443
  %v5556 = vpop.f32.mrb[0].mxu0
  %v5557 = vadd.f32 %v5472, %v5556
  %v5558 = vpop.f32.mrb[0].mxu0
  %v5559 = vpop.f32.mrb[0].mxu0
  %v5560 = vadd.f32 %v5472, %v5559
  %v5561 = vpop.f32.mrb[0].mxu0
  %5562 = vmatprep.mubr.bf16.mxu0 0
  %5563 = vmatmul.mubr.bf16.gmra.mrb[0].mxu0 %v5444
  %v5564 = vpop.f32.mrb[0].mxu0
  %v5565 = vadd.f32 %v5472, %v5564
  %v5566 = vpop.f32.mrb[0].mxu0
  %v5567 = vpop.f32.mrb[0].mxu0
  %v5568 = vadd.f32 %v5472, %v5567
  %v5569 = vpop.f32.mrb[0].mxu0
  %5570 = vmatprep.mubr.bf16.mxu0 0
  %5571 = vmatmul.mubr.bf16.gmra.mrb[0].mxu0 %v5445
  %v5572 = vpop.f32.mrb[0].mxu0
  %v5573 = vadd.f32 %v5472, %v5572
  %v5574 = vpop.f32.mrb[0].mxu0
  %v5575 = vpop.f32.mrb[0].mxu0
  %v5576 = vadd.f32 %v5472, %v5575
  %v5577 = vpop.f32.mrb[0].mxu0
  %5578 = vmatprep.mubr.bf16.mxu0 0
  %5579 = vmatmul.mubr.bf16.gmra.mrb[0].mxu0 %v5446
  %v5580 = vpop.f32.mrb[0].mxu0
  %v5581 = vadd.f32 %v5472, %v5580
  %v5582 = vpop.f32.mrb[0].mxu0
  %v5583 = vpop.f32.mrb[0].mxu0
  %v5584 = vadd.f32 %v5472, %v5583
  %v5585 = vpop.f32.mrb[0].mxu0
  %5586 = vmatprep.mubr.bf16.mxu0 0
  %5587 = vmatmul.mubr.bf16.gmra.mrb[0].mxu0 %v5447
  %v5588 = vpop.f32.mrb[0].mxu0
  %v5589 = vadd.f32 %v5472, %v5588
  %v5590 = vpop.f32.mrb[0].mxu0
  %v5591 = vpop.f32.mrb[0].mxu0
  %v5592 = vadd.f32 %v5472, %v5591
  %v5593 = vpop.f32.mrb[0].mxu0
  %5594 = vmatprep.mubr.bf16.mxu0 0
  %5595 = vmatmul.mubr.bf16.gmra.mrb[0].mxu0 %v5448
  %v5596 = vpop.f32.mrb[0].mxu0
  %v5597 = vadd.f32 %v5472, %v5596
  %v5598 = vpop.f32.mrb[0].mxu0
  %v5599 = vpop.f32.mrb[0].mxu0
  %v5600 = vadd.f32 %v5472, %v5599
  %v5601 = vpop.f32.mrb[0].mxu0
  %5602 = vmatprep.mubr.bf16.mxu0 0
  %5603 = vmatmul.mubr.bf16.gmra.mrb[0].mxu0 %v5449
  %v5604 = vpop.f32.mrb[0].mxu0
  %v5605 = vadd.f32 %v5472, %v5604
  %v5606 = vpop.f32.mrb[0].mxu0
  %v5607 = vpop.f32.mrb[0].mxu0
  %v5608 = vadd.f32 %v5472, %v5607
  %v5609 = vpop.f32.mrb[0].mxu0
  %5610 = vmatprep.mubr.bf16.mxu0 0
  %5611 = vmatmul.mubr.bf16.gmra.mrb[0].mxu0 %v5450
  %v5612 = vpop.f32.mrb[0].mxu0
  %v5613 = vadd.f32 %v5472, %v5612
  %v5614 = vpop.f32.mrb[0].mxu0
  %v5615 = vpop.f32.mrb[0].mxu0
  %v5616 = vadd.f32 %v5472, %v5615
  %v5617 = vpop.f32.mrb[0].mxu0
  %5618 = vdwg.mxu0
  %v5619 = vadd.f32 %v4877, %v5557
  %v5620 = vadd.f32 %v4878, %v5560
  %v5621 = vadd.f32 %v4879, %v5565
  %v5622 = vadd.f32 %v4880, %v5568
  %v5623 = vadd.f32 %v4881, %v5573
  %v5624 = vadd.f32 %v4882, %v5576
  %v5625 = vadd.f32 %v4883, %v5581
  %v5626 = vadd.f32 %v4884, %v5584
  %v5627 = vadd.f32 %v4885, %v5589
  %v5628 = vadd.f32 %v4886, %v5592
  %v5629 = vadd.f32 %v4887, %v5597
  %v5630 = vadd.f32 %v4888, %v5600
  %v5631 = vadd.f32 %v4889, %v5605
  %v5632 = vadd.f32 %v4890, %v5608
  %v5633 = vadd.f32 %v4891, %v5613
  %v5634 = vadd.f32 %v4892, %v5616
  %5635 = vst.msk [vmem:[%s14] sm:$0xff] %vm66, %v5619
  %5636 = vst.msk [vmem:[%s14 + $0x8] sm:$0xff] %vm66, %v5620
  %5637 = vst.msk [vmem:[%s14 + $0x10] sm:$0xff] %vm66, %v5621
  %5638 = vst.msk [vmem:[%s14 + $0x18] sm:$0xff] %vm66, %v5622
  %5639 = vst.msk [vmem:[%s14 + $0x20] sm:$0xff] %vm66, %v5623
  %5640 = vst.msk [vmem:[%s14 + $0x28] sm:$0xff] %vm66, %v5624
  %5641 = vst.msk [vmem:[%s14 + $0x30] sm:$0xff] %vm66, %v5625
  %5642 = vst.msk [vmem:[%s14 + $0x38] sm:$0xff] %vm66, %v5626
  %5643 = vst.msk [vmem:[%s14 + $0x40] sm:$0xff] %vm66, %v5627
  %5644 = vst.msk [vmem:[%s14 + $0x48] sm:$0xff] %vm66, %v5628
  %5645 = vst.msk [vmem:[%s14 + $0x50] sm:$0xff] %vm66, %v5629
  %5646 = vst.msk [vmem:[%s14 + $0x58] sm:$0xff] %vm66, %v5630
  %5647 = vst.msk [vmem:[%s14 + $0x60] sm:$0xff] %vm66, %v5631
  %5648 = vst.msk [vmem:[%s14 + $0x68] sm:$0xff] %vm66, %v5632
  %5649 = vst.msk [vmem:[%s14 + $0x70] sm:$0xff] %vm66, %v5633
  %5650 = vst.msk [vmem:[%s14 + $0x78] sm:$0xff] %vm66, %v5634
  // Predicated region
  $region58: #{maxvit_block.4} parent=0 // pred_check
    _
  $region59: #{maxvit_block.4} parent=0 // pred_check_branch
    %5652 = sbr.rel (0) target = $region61
  $region60: #{maxvit_block.4} parent=0 // pred_region
    _
  $region61: #{maxvit_block.4} parent=0 // pred_fallthru
    _
  // Predicated region
  $region62: #{maxvit_block.4} parent=0 // pred_check
    _
  $region63: #{maxvit_block.4} parent=0 // pred_check_branch
    %5654 = sbr.rel (0) target = $region65
  $region64: #{maxvit_block.4} parent=0 // pred_region
    _
  $region65: #{maxvit_block.4} parent=0 // pred_fallthru
    _
  // Predicated region
  $region66: #{maxvit_block.4} parent=0 // pred_check
    _
  $region67: #{maxvit_block.4} parent=0 // pred_check_branch
    %5656 = sbr.rel (0) target = $region69
  $region68: #{maxvit_block.4} parent=0 // pred_region
    _
  $region69: #{maxvit_block.4} parent=0 // pred_fallthru
    _
  // Predicated region
  $region70: #{maxvit_block.4} parent=0 // pred_check
    _
  $region71: #{maxvit_block.4} parent=0 // pred_check_branch
    %5658 = sbr.rel (0) target = $region73
  $region72: #{maxvit_block.4} parent=0 // pred_region
    _
  $region73: #{maxvit_block.4} parent=0 // pred_fallthru
    _

</llo_original>
